<compile_context>
chip_gen: v5e
topology: v5e:2x2
jax: 0.10.0
libtpu: 0.0.40
codegen_flags: <defaults>
</compile_context>

<pallas_src>
import functools

import jax
import jax.numpy as jnp
from jax.experimental import pallas as pl
from jax.experimental.pallas import tpu as pltpu


def _round_up(x, m):
    return ((x + m - 1) // m) * m


# ------------------------------ Pallas kernel -------------------------------

def _resize_conv_kernel(s, k, xm_ref, xh_ref, w_ref, b_ref, o_ref):
    """One (batch, row-tile) grid step.

    xm_ref : (1, TR,   W+2, Cin)      bf16  row tile of the 1px-zero-padded ORIGINAL-res image
    xh_ref : (1, 2,    W+2, Cin)      bf16  the next two padded rows (bottom halo)
    w_ref  : (Kp, Cp)                 bf16  (ky, kx, cin)-major packed conv weights
    b_ref  : (1, Cp)                  f32   conv bias (zero-padded lanes)
    o_ref  : (1, TR*s, W*s, Cout_p)   bf16  compact-channel output tile
    """
    tr, wp, cin = xm_ref.shape[1], xm_ref.shape[2], xm_ref.shape[3]
    tru, wu, cout_p = o_ref.shape[1], o_ref.shape[2], o_ref.shape[3]
    kp = w_ref.shape[0]

    # (TR+2, W+2, Cin): tile rows plus one original row of halo above and below
    # (the boundary tiles pick up the 1px zero border instead).
    x = jnp.concatenate([xm_ref[0], xh_ref[0]], axis=0)

    # Nearest-neighbour upsample entirely in VMEM/vregs (no HBM intermediate).
    if s > 1:
        thp = tr + 2
        x = jnp.broadcast_to(x[:, None, :, :], (thp, s, wp, cin))
        x = x.reshape(thp * s, wp, cin)                       # rows replicated
        x = jnp.broadcast_to(x[:, :, None, :], (thp * s, wp, s, cin))
        x = x.reshape(thp * s, wp * s, cin)                   # cols replicated

    # The 1px zero border of the ORIGINAL image supplies the conv's zero halo in
    # upsampled space: this window keeps exactly one of its s replicas.
    xu = x[s - 1: s - 1 + tru + 2, s - 1: s - 1 + wu + 2, :]  # (TRU+2, WU+2, Cin)

    # In-VMEM im2col: k*k shifted views concatenated along the lane axis.
    m = tru * wu
    taps = []
    for ky in range(k):
        for kx in range(k):
            taps.append(xu[ky:ky + tru, kx:kx + wu, :].reshape(m, cin))
    k_eff = k * k * cin
    if kp > k_eff:                                            # keep K lane-aligned at 128
        taps.append(jnp.zeros((m, kp - k_eff), jnp.bfloat16))
    patches = jnp.concatenate(taps, axis=-1)                  # (M, Kp) bf16

    # Single MXU matmul, f32 accumulation, bias fused into the epilogue.
    acc = jnp.dot(patches, w_ref[...], preferred_element_type=jnp.float32)
    acc = acc + b_ref[...]

    # Compact-channel bf16 writeback: only Cout_p of the 128 accumulator lanes.
    o_ref[0] = acc[:, :cout_p].reshape(tru, wu, cout_p).astype(o_ref.dtype)


# --------------------------- packing & tiling --------------------------------

def pack_resize_conv2d_params(w_oihw, bias):
    """Pack torch-layout Conv2d params once (outside the jitted forward):
    OIHW -> (k*k*Cin rounded to 128, Cout rounded to 128) bf16; bias -> (1, Cp) f32."""
    cout, cin, kh, kw = w_oihw.shape
    assert kh == kw
    k_eff = kh * kw * cin
    kp = _round_up(k_eff, 128)
    cp = _round_up(cout, 128)
    w_mat = jnp.transpose(w_oihw, (2, 3, 1, 0)).reshape(k_eff, cout)     # HWIO flat
    w_packed = jnp.pad(w_mat, ((0, kp - k_eff), (0, cp - cout))).astype(jnp.bfloat16)
    b_packed = jnp.pad(bias, (0, cp - cout)).reshape(1, cp).astype(jnp.float32)
    return w_packed, b_packed


def _pick_tile_rows(h, w, s, kp, cp, budget_bytes=6 * 1024 * 1024):
    """Largest even divisor of h whose per-step VMEM working set fits the budget."""
    divisors = [d for d in range(2, h + 1, 2) if h % d == 0]
    if not divisors:
        raise ValueError("row-tiled halo needs an even number of input rows")
    for tr in sorted(divisors, reverse=True):
        m = (tr * s) * (w * s)
        est = (m * kp * 2                                  # bf16 patches
               + m * cp * 4                                # f32 accumulator
               + (tr + 2) * s * (w + 2) * s * 128 * 2      # upsampled tile (lane-padded)
               + 4 * (tr + 2) * (w + 2) * 128 * 2          # double-buffered input blocks
               + 2 * m * 128 * 2)                          # double-buffered output block
        if est <= budget_bytes:
            return tr
    return divisors[0]


# --------------------------------- forward -----------------------------------

def resize_conv2d_forward(x_nchw, w_packed, b_packed, *, out_channels,
                          kernel_size, scale_factor, tile_rows=None):
    """F.interpolate(scale_factor, mode='nearest') + Conv2d(k=3, stride=1, padding=1)."""
    n, cin, h, w = x_nchw.shape
    assert float(scale_factor) == int(scale_factor), \
        "kernel supports integer nearest scale factors only"
    s = int(scale_factor)
    k = kernel_size
    assert k == 3, "module hard-codes padding=1; this kernel assumes kernel_size=3"
    # TODO(synk): generalize the halo window / output-size formula to other kernel_size.
    assert h % 2 == 0, "row-tiled halo path needs an even number of input rows"
    # TODO(synk): support odd H by using two single-row halo specs.

    kp, cp = w_packed.shape
    cout_p = _round_up(max(out_channels, 1), 8)            # compact output channel dim
    oh, ow = h * s, w * s

    if tile_rows is None:
        tile_rows = _pick_tile_rows(h, w, s, kp, cp)
    tr = int(tile_rows)
    assert h % tr == 0 and tr % 2 == 0
    t_tiles = h // tr
    tru = tr * s

    # NCHW -> NHWC bf16 with a 1px zero border.  This single original-resolution
    # pad is what becomes the conv's zero halo after the in-kernel upsample; no
    # upsampled/padded activation ever touches HBM.
    x = jnp.transpose(x_nchw, (0, 2, 3, 1)).astype(jnp.bfloat16)
    xp = jnp.pad(x, ((0, 0), (1, 1), (1, 1), (0, 0)))
    wp = w + 2

    out = pl.pallas_call(
        functools.partial(_resize_conv_kernel, s, k),
        out_shape=jax.ShapeDtypeStruct((n, oh, ow, cout_p), jnp.bfloat16),
        grid=(n, t_tiles),
        in_specs=[
            # main row tile of the padded original-resolution image
            pl.BlockSpec((1, tr, wp, cin), lambda b, t: (b, t, 0, 0)),
            # the two padded rows just below the tile (bottom halo / zero border)
            pl.BlockSpec((1, 2, wp, cin),
                         lambda b, t: (b, (t + 1) * (tr // 2), 0, 0)),
            pl.BlockSpec((kp, cp), lambda b, t: (0, 0)),        # resident weights
            pl.BlockSpec((1, cp), lambda b, t: (0, 0)),         # resident bias
        ],
        out_specs=pl.BlockSpec((1, tru, ow, cout_p), lambda b, t: (b, t, 0, 0)),
        compiler_params=pltpu.CompilerParams(
            dimension_semantics=("parallel", "parallel"),       # megacore-friendly
            vmem_limit_bytes=48 * 1024 * 1024),                 # > default scoped, < v7x physical
    )(xp, xp, w_packed, b_packed)

    # compact bf16 result -> NCHW f32 (single cheap XLA pass over valid channels)
    y = out[..., :out_channels].astype(jnp.float32)
    return jnp.transpose(y, (0, 3, 1, 2))


# ---------------------------------- main -------------------------------------

if __name__ == "__main__":
    in_channels, out_channels = 4, 8
    kernel_size, scale_factor = 3, 2
    batch, spatial = 2, 16

    key = jax.random.PRNGKey(0)
    kx_, kw_, kb_ = jax.random.split(key, 3)
    x = jax.random.normal(kx_, (batch, in_channels, spatial, spatial), jnp.float32)

    # torch-style Conv2d parameters (OIHW weight, per-channel bias)
    fan_in = in_channels * kernel_size * kernel_size
    bound = 1.0 / (fan_in ** 0.5)
    w_oihw = jax.random.uniform(
        kw_, (out_channels, in_channels, kernel_size, kernel_size),
        jnp.float32, -bound, bound)
    bias = jax.random.uniform(kb_, (out_channels,), jnp.float32, -bound, bound)

    # pack once, outside the per-call path
    w_packed, b_packed = pack_resize_conv2d_params(w_oihw, bias)

    fwd = jax.jit(functools.partial(resize_conv2d_forward,
                                    out_channels=out_channels,
                                    kernel_size=kernel_size,
                                    scale_factor=scale_factor,
                                    tile_rows=8))   # 2 row tiles per image: exercises the halo path
    y = fwd(x, w_packed, b_packed)
    jax.block_until_ready(y)
    assert y.shape == (batch, out_channels,
                       spatial * scale_factor, spatial * scale_factor)

    # pure-JAX reference on identically bf16-rounded operands (f32 accumulation,
    # bf16-rounded output to match the kernel's writeback dtype)
    s = scale_factor
    xr = jnp.transpose(x, (0, 2, 3, 1)).astype(jnp.bfloat16).astype(jnp.float32)
    xr = jnp.broadcast_to(
        xr[:, :, None, :, None, :],
        (batch, spatial, s, spatial, s, in_channels))
    xr = xr.reshape(batch, spatial * s, spatial * s, in_channels)
    wr = jnp.transpose(w_oihw, (2, 3, 1, 0)).astype(jnp.bfloat16).astype(jnp.float32)
    ref = jax.lax.conv_general_dilated(
        xr, wr, window_strides=(1, 1), padding=((1, 1), (1, 1)),
        dimension_numbers=("NHWC", "HWIO", "NHWC"),
        precision=jax.lax.Precision.HIGHEST) + bias
    ref = ref.astype(jnp.bfloat16).astype(jnp.float32)
    ref = jnp.transpose(ref, (0, 3, 1, 2))
    err = float(jnp.max(jnp.abs(y - ref)))
    assert err < 2e-2, f"max abs error vs reference: {err}"

    print("KERNEL_OK")
</pallas_src>

<mosaic_0001>
module attributes {stable_mosaic.version = 11 : i64} {
  func.func @_resize_conv_kernel(%arg0: i32, %arg1: i32, %arg2: memref<1x8x18x4xbf16, #tpu.memory_space<vmem>>, %arg3: memref<1x2x18x4xbf16, #tpu.memory_space<vmem>>, %arg4: memref<128x128xbf16, #tpu.memory_space<vmem>>, %arg5: memref<1x128xf32, #tpu.memory_space<vmem>>, %arg6: memref<1x16x32x8xbf16, #tpu.memory_space<vmem>>) attributes {dimension_semantics = [#tpu.dimension_semantics<parallel>, #tpu.dimension_semantics<parallel>], iteration_bounds = array<i64: 2, 2>, scalar_prefetch = 0 : i64, scratch_operands = 0 : i64, tpu.core_type = #tpu.core_type<tc>, window_params = [{transform_indices = @transform_0, window_bounds = array<i64: 1, 8, 18, 4>}, {transform_indices = @transform_1, window_bounds = array<i64: 1, 2, 18, 4>}, {pipeline_mode = #tpu.pipeline_mode<synchronous>, transform_indices = @transform_2, window_bounds = array<i64: 128, 128>}, {pipeline_mode = #tpu.pipeline_mode<synchronous>, transform_indices = @transform_3, window_bounds = array<i64: 1, 128>}, {transform_indices = @transform_4, window_bounds = array<i64: 1, 16, 32, 8>}]} {
    %c0 = arith.constant 0 : index
    %c0_0 = arith.constant 0 : index
    %c0_1 = arith.constant 0 : index
    %c0_2 = arith.constant 0 : index
    %0 = vector.load %arg2[%c0, %c0_0, %c0_1, %c0_2] : memref<1x8x18x4xbf16, #tpu.memory_space<vmem>>, vector<1x8x18x4xbf16>
    %1 = vector.shape_cast %0 : vector<1x8x18x4xbf16> to vector<8x18x4xbf16>
    %c0_3 = arith.constant 0 : index
    %c0_4 = arith.constant 0 : index
    %c0_5 = arith.constant 0 : index
    %c0_6 = arith.constant 0 : index
    %2 = vector.load %arg3[%c0_3, %c0_4, %c0_5, %c0_6] : memref<1x2x18x4xbf16, #tpu.memory_space<vmem>>, vector<1x2x18x4xbf16>
    %3 = vector.shape_cast %2 : vector<1x2x18x4xbf16> to vector<2x18x4xbf16>
    %4 = tpu.concatenate %1, %3 in 0 : vector<8x18x4xbf16>, vector<2x18x4xbf16> -> vector<10x18x4xbf16>
    %5 = vector.shape_cast %4 : vector<10x18x4xbf16> to vector<10x1x18x4xbf16>
    %6 = vector.shape_cast %5 : vector<10x1x18x4xbf16> to vector<10x1x18x4xbf16>
    %7 = vector.broadcast %6 : vector<10x1x18x4xbf16> to vector<10x2x18x4xbf16>
    %8 = vector.shape_cast %7 : vector<10x2x18x4xbf16> to vector<20x18x4xbf16>
    %9 = vector.shape_cast %8 : vector<20x18x4xbf16> to vector<20x18x1x4xbf16>
    %10 = vector.shape_cast %9 : vector<20x18x1x4xbf16> to vector<20x18x1x4xbf16>
    %11 = vector.broadcast %10 : vector<20x18x1x4xbf16> to vector<20x18x2x4xbf16>
    %12 = vector.shape_cast %11 : vector<20x18x2x4xbf16> to vector<20x36x4xbf16>
    %13 = vector.extract_strided_slice %12 {offsets = [1, 1, 0], sizes = [18, 34, 4], strides = [1, 1, 1]} : vector<20x36x4xbf16> to vector<18x34x4xbf16>
    %14 = vector.extract_strided_slice %13 {offsets = [0, 0, 0], sizes = [16, 32, 4], strides = [1, 1, 1]} : vector<18x34x4xbf16> to vector<16x32x4xbf16>
    %15 = vector.shape_cast %14 : vector<16x32x4xbf16> to vector<512x4xbf16>
    %16 = vector.extract_strided_slice %13 {offsets = [0, 1, 0], sizes = [16, 32, 4], strides = [1, 1, 1]} : vector<18x34x4xbf16> to vector<16x32x4xbf16>
    %17 = vector.shape_cast %16 : vector<16x32x4xbf16> to vector<512x4xbf16>
    %18 = vector.extract_strided_slice %13 {offsets = [0, 2, 0], sizes = [16, 32, 4], strides = [1, 1, 1]} : vector<18x34x4xbf16> to vector<16x32x4xbf16>
    %19 = vector.shape_cast %18 : vector<16x32x4xbf16> to vector<512x4xbf16>
    %20 = vector.extract_strided_slice %13 {offsets = [1, 0, 0], sizes = [16, 32, 4], strides = [1, 1, 1]} : vector<18x34x4xbf16> to vector<16x32x4xbf16>
    %21 = vector.shape_cast %20 : vector<16x32x4xbf16> to vector<512x4xbf16>
    %22 = vector.extract_strided_slice %13 {offsets = [1, 1, 0], sizes = [16, 32, 4], strides = [1, 1, 1]} : vector<18x34x4xbf16> to vector<16x32x4xbf16>
    %23 = vector.shape_cast %22 : vector<16x32x4xbf16> to vector<512x4xbf16>
    %24 = vector.extract_strided_slice %13 {offsets = [1, 2, 0], sizes = [16, 32, 4], strides = [1, 1, 1]} : vector<18x34x4xbf16> to vector<16x32x4xbf16>
    %25 = vector.shape_cast %24 : vector<16x32x4xbf16> to vector<512x4xbf16>
    %26 = vector.extract_strided_slice %13 {offsets = [2, 0, 0], sizes = [16, 32, 4], strides = [1, 1, 1]} : vector<18x34x4xbf16> to vector<16x32x4xbf16>
    %27 = vector.shape_cast %26 : vector<16x32x4xbf16> to vector<512x4xbf16>
    %28 = vector.extract_strided_slice %13 {offsets = [2, 1, 0], sizes = [16, 32, 4], strides = [1, 1, 1]} : vector<18x34x4xbf16> to vector<16x32x4xbf16>
    %29 = vector.shape_cast %28 : vector<16x32x4xbf16> to vector<512x4xbf16>
    %30 = vector.extract_strided_slice %13 {offsets = [2, 2, 0], sizes = [16, 32, 4], strides = [1, 1, 1]} : vector<18x34x4xbf16> to vector<16x32x4xbf16>
    %31 = vector.shape_cast %30 : vector<16x32x4xbf16> to vector<512x4xbf16>
    %cst = arith.constant 0.000000e+00 : bf16
    %32 = vector.broadcast %cst : bf16 to vector<512x92xbf16>
    %33 = tpu.concatenate %15, %17, %19, %21, %23, %25, %27, %29, %31, %32 in 1 : vector<512x4xbf16>, vector<512x4xbf16>, vector<512x4xbf16>, vector<512x4xbf16>, vector<512x4xbf16>, vector<512x4xbf16>, vector<512x4xbf16>, vector<512x4xbf16>, vector<512x4xbf16>, vector<512x92xbf16> -> vector<512x128xbf16>
    %c0_7 = arith.constant 0 : index
    %c0_8 = arith.constant 0 : index
    %34 = vector.load %arg4[%c0_7, %c0_8] : memref<128x128xbf16, #tpu.memory_space<vmem>>, vector<128x128xbf16>
    %cst_9 = arith.constant dense<0.000000e+00> : vector<512x128xf32>
    %35 = tpu.matmul %33, %34, %cst_9 {dimension_numbers = #tpu.dot_dimension_numbers<[1], [0], [0], [1], [0, 0, 1, 1], [], []>} : vector<512x128xbf16>, vector<128x128xbf16>, vector<512x128xf32> -> vector<512x128xf32>
    %c0_10 = arith.constant 0 : index
    %c0_11 = arith.constant 0 : index
    %36 = vector.load %arg5[%c0_10, %c0_11] : memref<1x128xf32, #tpu.memory_space<vmem>>, vector<1x128xf32>
    %37 = vector.broadcast %36 : vector<1x128xf32> to vector<512x128xf32>
    %38 = arith.addf %35, %37 : vector<512x128xf32>
    %39 = vector.extract_strided_slice %38 {offsets = [0, 0], sizes = [512, 8], strides = [1, 1]} : vector<512x128xf32> to vector<512x8xf32>
    %40 = vector.shape_cast %39 : vector<512x8xf32> to vector<16x32x8xf32>
    %41 = arith.truncf %40 : vector<16x32x8xf32> to vector<16x32x8xbf16>
    %c0_12 = arith.constant 0 : index
    %c0_13 = arith.constant 0 : index
    %c0_14 = arith.constant 0 : index
    %c0_15 = arith.constant 0 : index
    %42 = vector.load %arg6[%c0_12, %c0_13, %c0_14, %c0_15] : memref<1x16x32x8xbf16, #tpu.memory_space<vmem>>, vector<1x16x32x8xbf16>
    %43 = vector.shape_cast %42 : vector<1x16x32x8xbf16> to vector<16x32x8xbf16>
    %44 = vector.shape_cast %41 : vector<16x32x8xbf16> to vector<1x16x32x8xbf16>
    tpu.vector_store %arg6[%c0_12, %c0_13, %c0_14, %c0_15], %44 {strides = array<i32>} : memref<1x16x32x8xbf16, #tpu.memory_space<vmem>>, vector<1x16x32x8xbf16>,
    return
  }
  func.func @transform_0(%arg0: i32, %arg1: i32) -> (i32, i32, i32, i32) {
    %c0_i32 = arith.constant 0 : i32
    %c0_i32_0 = arith.constant 0 : i32
    %c0_i32_1 = arith.constant 0 : i32
    return %arg0, %arg1, %c0_i32, %c0_i32_0 : i32, i32, i32, i32
  }
  func.func @transform_1(%arg0: i32, %arg1: i32) -> (i32, i32, i32, i32) {
    %c1_i32 = arith.constant 1 : i32
    %0 = arith.addi %arg1, %c1_i32 : i32
    %c4_i32 = arith.constant 4 : i32
    %1 = arith.muli %0, %c4_i32 : i32
    %c0_i32 = arith.constant 0 : i32
    %c0_i32_0 = arith.constant 0 : i32
    %c0_i32_1 = arith.constant 0 : i32
    return %arg0, %1, %c0_i32, %c0_i32_0 : i32, i32, i32, i32
  }
  func.func @transform_2(%arg0: i32, %arg1: i32) -> (i32, i32) {
    %c0_i32 = arith.constant 0 : i32
    %c0_i32_0 = arith.constant 0 : i32
    %c0_i32_1 = arith.constant 0 : i32
    return %c0_i32, %c0_i32_0 : i32, i32
  }
  func.func @transform_3(%arg0: i32, %arg1: i32) -> (i32, i32) {
    %c0_i32 = arith.constant 0 : i32
    %c0_i32_0 = arith.constant 0 : i32
    %c0_i32_1 = arith.constant 0 : i32
    return %c0_i32, %c0_i32_0 : i32, i32
  }
  func.func @transform_4(%arg0: i32, %arg1: i32) -> (i32, i32, i32, i32) {
    %c0_i32 = arith.constant 0 : i32
    %c0_i32_0 = arith.constant 0 : i32
    %c0_i32_1 = arith.constant 0 : i32
    return %arg0, %arg1, %c0_i32, %c0_i32_0 : i32, i32, i32, i32
  }
}

</mosaic_0001>

<llo_original>
// kernel: resize_conv2d_forward.1
$region0: #{resize_conv2d_forward.1}
  #allocation0 [shape = 'u32[]', space=smem, size = 0x4, offset = 0x4, fixed_abs, tag = 'smem constant byte address 0x4 - core index']
  #allocation1 [shape = 'u32[72,128]{1,0:T(1,128)}', space=vmem, size = 0x9000, scoped, tag = 'internal scratch']
  %s0 = inlined_call_operand.vmem [shape: bf16[2,18,18,4], index: 0, kind: input, shape index: {}, may-alias: {0,1}]
  %s1 = inlined_call_operand.vmem [shape: bf16[2,18,18,4], index: 1, kind: input, shape index: {}, may-alias: {0,1}]
  %s2 = inlined_call_operand.vmem [shape: bf16[128,128], index: 2, kind: input, shape index: {}]
  %s3 = inlined_call_operand.vmem [shape: f32[1,128], index: 3, kind: input, shape index: {}]
  %s4 = inlined_call_operand.vmem [shape: bf16[2,32,32,8], index: 4, kind: output, shape index: {}]
  %s5 = sld [smem:[#allocation0]]
  $region49: #{resize_conv2d_forward.1} parent=0
    _
  %s7 = ssub.s32 1, %s5
  %s8 = scalar_select 0, %s7, %s5
  loop: start=0, step=1, limit=6
  $region2: #{resize_conv2d_forward.1} parent=0 // loop_pre_header
    _
  $region3: #{resize_conv2d_forward.1} parent=0 // loop_header
    %s10 = sphi 0, %s14
    %p11 = scmp.ge.s32.totalorder %s10, 6
    %s17 = sphi 0, %s29
    %s18 = sphi 0, %s25
    %s19 = sphi 0, %s17
    %s20 = sphi 0, %s18
    %s21 = sphi 0, %s19
    %s22 = sphi 0, %s20
    %s34 = sphi 0, %s36
    %s37 = sphi 0, %s34
    %s38 = sphi 0, %s37
    %s54 = sphi 0, %s38
    %s66 = sphi 0, %s68
    %s69 = sphi 0, %s66
    %s70 = sphi 0, %s69
    %s86 = sphi 0, %s70
    %s90 = sphi 0, %s90
    %s92 = sphi 0, %s90
    %s93 = sphi 0, %s92
    %s107 = sphi 0, %s93
    %s111 = sphi 0, %s111
    %s113 = sphi 0, %s111
    %s114 = sphi 0, %s113
    %s128 = sphi 0, %s114
    %s136 = sphi 0, %s138
    %s139 = sphi 0, %s136
    %s140 = sphi 0, %s139
    %s156 = sphi 0, %s140
  $region4: #{resize_conv2d_forward.1} parent=0 // loop_header_branch
    %13 = sbr.rel (%p11) target = $region8
  $region5: #{resize_conv2d_forward.1} parent=0 // loop_body
    %s15 = ssub.s32 %s10, 1
    %s16 = ssub.s32 %s10, 2
    %s23 = sadd.s32 1, %s18
    %p24 = scmp.ge.s32.totalorder %s23, 2
    %s25 = scalar_select %p24, 0, %s23
    %s26 = sadd.s32 1, %s17
    %s27 = scalar_select %p24, %s26, %s17
    %p28 = scmp.ge.s32.totalorder %s27, 2
    %s29 = scalar_select %p28, 0, %s27
    %s30 = ssub.s32 %s17, %s29
    %s31 = ssub.s32 %s18, %s25
    %s32 = sor.u32 %s30, %s31
    %p33 = scmp.eq.s32.totalorder %s32, 0
    %s35 = sadd.s32 %s34, 1
    %s36 = scalar_select %p33, %s34, %s35
    %p39 = pneg %p33
    %p40 = scmp.eq.s32.totalorder %s10, 3
    %p41 = por %p39, %p40
    %p42 = scmp.ne.s32.totalorder %s34, %s37
    %p43 = scmp.eq.s32.totalorder %s10, 0
    %p44 = por %p42, %p43
    %p45 = scmp.ne.s32.totalorder %s34, %s37
    %p46 = scmp.eq.s32.totalorder %s15, 3
    %p47 = por %p45, %p46
    %p48 = scmp.ne.s32.totalorder %s37, %s38
    %p49 = scmp.eq.s32.totalorder %s15, 0
    %p50 = por %p48, %p49
    %p51 = scmp.ne.s32.totalorder %s37, %s38
    %p52 = scmp.eq.s32.totalorder %s16, 3
    %p53 = por %p51, %p52
    %p55 = scmp.ne.s32.totalorder %s38, %s54
    %p56 = scmp.eq.s32.totalorder %s16, 0
    %p57 = por %p55, %p56
    %s58 = sadd.s32 %s18, 1
    %s59 = smul.u32 %s58, 4
    %s60 = sadd.s32 %s25, 1
    %s61 = smul.u32 %s60, 4
    %s62 = ssub.s32 %s17, %s29
    %s63 = ssub.s32 %s59, %s61
    %s64 = sor.u32 %s62, %s63
    %p65 = scmp.eq.s32.totalorder %s64, 0
    %s67 = sadd.s32 %s66, 1
    %s68 = scalar_select %p65, %s66, %s67
    %p71 = pneg %p65
    %p72 = scmp.eq.s32.totalorder %s10, 3
    %p73 = por %p71, %p72
    %p74 = scmp.ne.s32.totalorder %s66, %s69
    %p75 = scmp.eq.s32.totalorder %s10, 0
    %p76 = por %p74, %p75
    %p77 = scmp.ne.s32.totalorder %s66, %s69
    %p78 = scmp.eq.s32.totalorder %s15, 3
    %p79 = por %p77, %p78
    %p80 = scmp.ne.s32.totalorder %s69, %s70
    %p81 = scmp.eq.s32.totalorder %s15, 0
    %p82 = por %p80, %p81
    %p83 = scmp.ne.s32.totalorder %s69, %s70
    %p84 = scmp.eq.s32.totalorder %s16, 3
    %p85 = por %p83, %p84
    %p87 = scmp.ne.s32.totalorder %s70, %s86
    %p88 = scmp.eq.s32.totalorder %s16, 0
    %p89 = por %p87, %p88
    %s91 = sadd.s32 %s90, 1
    %p94 = scmp.eq.s32.totalorder %s10, 3
    %p95 = scmp.ne.s32.totalorder %s90, %s92
    %p96 = scmp.eq.s32.totalorder %s10, 0
    %p97 = por %p95, %p96
    %p98 = scmp.ne.s32.totalorder %s90, %s92
    %p99 = scmp.eq.s32.totalorder %s15, 3
    %p100 = por %p98, %p99
    %p101 = scmp.ne.s32.totalorder %s92, %s93
    %p102 = scmp.eq.s32.totalorder %s15, 0
    %p103 = por %p101, %p102
    %p104 = scmp.ne.s32.totalorder %s92, %s93
    %p105 = scmp.eq.s32.totalorder %s16, 3
    %p106 = por %p104, %p105
    %p108 = scmp.ne.s32.totalorder %s93, %s107
    %p109 = scmp.eq.s32.totalorder %s16, 0
    %p110 = por %p108, %p109
    %s112 = sadd.s32 %s111, 1
    %p115 = scmp.eq.s32.totalorder %s10, 3
    %p116 = scmp.ne.s32.totalorder %s111, %s113
    %p117 = scmp.eq.s32.totalorder %s10, 0
    %p118 = por %p116, %p117
    %p119 = scmp.ne.s32.totalorder %s111, %s113
    %p120 = scmp.eq.s32.totalorder %s15, 3
    %p121 = por %p119, %p120
    %p122 = scmp.ne.s32.totalorder %s113, %s114
    %p123 = scmp.eq.s32.totalorder %s15, 0
    %p124 = por %p122, %p123
    %p125 = scmp.ne.s32.totalorder %s113, %s114
    %p126 = scmp.eq.s32.totalorder %s16, 3
    %p127 = por %p125, %p126
    %p129 = scmp.ne.s32.totalorder %s114, %s128
    %p130 = scmp.eq.s32.totalorder %s16, 0
    %p131 = por %p129, %p130
    %s132 = ssub.s32 %s17, %s29
    %s133 = ssub.s32 %s18, %s25
    %s134 = sor.u32 %s132, %s133
    %p135 = scmp.eq.s32.totalorder %s134, 0
    %s137 = sadd.s32 %s136, 1
    %s138 = scalar_select %p135, %s136, %s137
    %p141 = pneg %p135
    %p142 = scmp.eq.s32.totalorder %s10, 3
    %p143 = por %p141, %p142
    %p144 = scmp.ne.s32.totalorder %s136, %s139
    %p145 = scmp.eq.s32.totalorder %s10, 0
    %p146 = por %p144, %p145
    %p147 = scmp.ne.s32.totalorder %s136, %s139
    %p148 = scmp.eq.s32.totalorder %s15, 3
    %p149 = por %p147, %p148
    %p150 = scmp.ne.s32.totalorder %s139, %s140
    %p151 = scmp.eq.s32.totalorder %s15, 0
    %p152 = por %p150, %p151
    %p153 = scmp.ne.s32.totalorder %s139, %s140
    %p154 = scmp.eq.s32.totalorder %s16, 3
    %p155 = por %p153, %p154
    %p157 = scmp.ne.s32.totalorder %s140, %s156
    %p158 = scmp.eq.s32.totalorder %s16, 0
    %p159 = por %p157, %p158
    %p160 = scmp.le.s32.totalorder 1, %s10
    %p161 = scmp.lt.s32.totalorder %s10, 5
    %p162 = pnand %p160, %p161
    %p163 = pneg %p162
    // Predicated region
    $region9: #{resize_conv2d_forward.1} parent=5 // pred_check
      _
    $region10: #{resize_conv2d_forward.1} parent=5 // pred_check_branch
      %165 = sbr.rel (%p162) target = $region12
    $region11: #{resize_conv2d_forward.1} parent=5 // pred_region
      %s166 = ssub.s32 %s10, 1
      // Predicated region
      $region13: #{resize_conv2d_forward.1} parent=11 // pred_check
        %p167 = pneg %p103
      $region14: #{resize_conv2d_forward.1} parent=11 // pred_check_branch
        %169 = sbr.rel (%p167) target = $region16
      $region15: #{resize_conv2d_forward.1} parent=11 // pred_region
        _
      $region16: #{resize_conv2d_forward.1} parent=11 // pred_fallthru
        _
      // Predicated region
      $region17: #{resize_conv2d_forward.1} parent=11 // pred_check
        %p170 = pneg %p124
      $region18: #{resize_conv2d_forward.1} parent=11 // pred_check_branch
        %172 = sbr.rel (%p170) target = $region20
      $region19: #{resize_conv2d_forward.1} parent=11 // pred_region
        _
      $region20: #{resize_conv2d_forward.1} parent=11 // pred_fallthru
        _
    $region12: #{resize_conv2d_forward.1} parent=5 // pred_fallthru
      _
    %p173 = scmp.lt.s32.totalorder %s10, 4
    // Predicated region
    $region21: #{resize_conv2d_forward.1} parent=5 // pred_check
      %p174 = pneg %p173
    $region22: #{resize_conv2d_forward.1} parent=5 // pred_check_branch
      %176 = sbr.rel (%p174) target = $region24
    $region23: #{resize_conv2d_forward.1} parent=5 // pred_region
      // Predicated region
      $region25: #{resize_conv2d_forward.1} parent=23 // pred_check
        %p177 = pneg %p44
      $region26: #{resize_conv2d_forward.1} parent=23 // pred_check_branch
        %179 = sbr.rel (%p177) target = $region28
      $region27: #{resize_conv2d_forward.1} parent=23 // pred_region
        %s180 = smul.u32 8, %s18
        %s181 = ssub.s32 18, %s180
        %p182 = scmp.lt.s32.totalorder %s181, 8
        %s183 = scalar_select %p182, %s181, 8
        %s184 = smul.u32 4, %s183
        %s185 = smul.u32 %s184, 3
        %p186 = scmp.lt.s32.totalorder %s17, 1
        %s187 = scalar_select %p186, %s17, 1
        %p188 = scmp.lt.s32.totalorder %s180, 17
        %s189 = scalar_select %p188, %s180, 17
        %s190 = smul.addr %s189, 3
        %s191 = smul.addr %s187, 54
        %s192 = sadd.s32 %s190, %s191
        %s193 = smul.addr %s192, 4
        %s194 = scalar_lea.vmem %s0, %s193
        %s195 = smul.u32 8, %s18
        %s196 = ssub.s32 18, %s195
        %p197 = scmp.lt.s32.totalorder %s196, 8
        %s198 = scalar_select %p197, %s196, 8
        %s199 = smul.u32 4, %s198
        %s200 = smul.u32 %s199, 3
      $region28: #{resize_conv2d_forward.1} parent=23 // pred_fallthru
        _
      // Predicated region
      $region29: #{resize_conv2d_forward.1} parent=23 // pred_check
        %p201 = pneg %p76
      $region30: #{resize_conv2d_forward.1} parent=23 // pred_check_branch
        %203 = sbr.rel (%p201) target = $region32
      $region31: #{resize_conv2d_forward.1} parent=23 // pred_region
        %s204 = sadd.s32 %s18, 1
        %s205 = smul.u32 %s204, 4
        %s206 = smul.u32 2, %s205
        %p207 = scmp.lt.s32.totalorder %s17, 1
        %s208 = scalar_select %p207, %s17, 1
        %p209 = scmp.lt.s32.totalorder %s206, 17
        %s210 = scalar_select %p209, %s206, 17
        %s211 = smul.addr %s210, 3
        %s212 = smul.addr %s208, 54
        %s213 = sadd.s32 %s211, %s212
        %s214 = smul.addr %s213, 4
        %s215 = scalar_lea.vmem %s1, %s214
        %s216 = sadd.s32 %s18, 1
        %s217 = smul.u32 %s216, 4
        %s218 = smul.u32 2, %s217
      $region32: #{resize_conv2d_forward.1} parent=23 // pred_fallthru
        _
    $region24: #{resize_conv2d_forward.1} parent=5 // pred_fallthru
      _
    %p219 = scmp.le.s32.totalorder 1, %s10
    %p220 = scmp.lt.s32.totalorder %s10, 5
    %p221 = pnand %p219, %p220
    %p222 = pneg %p221
    // Predicated region
    $region33: #{resize_conv2d_forward.1} parent=5 // pred_check
      _
    $region34: #{resize_conv2d_forward.1} parent=5 // pred_check_branch
      %224 = sbr.rel (%p221) target = $region36
    $region35: #{resize_conv2d_forward.1} parent=5 // pred_region
      %s225 = ssub.s32 %s10, 1
      %s226 = smul.u32 8, %s20
      %s227 = ssub.s32 18, %s226
      %p228 = scmp.lt.s32.totalorder %s227, 8
      %s229 = scalar_select %p228, %s227, 8
      %s230 = smul.u32 4, %s229
      %s231 = smul.u32 %s230, 3
      %p232 = scmp.lt.s32.totalorder %s19, 1
      %s233 = scalar_select %p232, %s19, 1
      %p234 = scmp.lt.s32.totalorder %s226, 17
      %s235 = scalar_select %p234, %s226, 17
      %s236 = smul.addr %s235, 3
      %s237 = smul.addr %s233, 54
      %s238 = sadd.s32 %s236, %s237
      %s239 = smul.addr %s238, 4
      %s240 = scalar_lea.vmem %s0, %s239
      %p241 = pneg %p50
      %p242 = pneg %p47
      %s243 = sadd.s32 %s20, 1
      %s244 = smul.u32 %s243, 4
      %s245 = smul.u32 2, %s244
      %p246 = scmp.lt.s32.totalorder %s19, 1
      %s247 = scalar_select %p246, %s19, 1
      %p248 = scmp.lt.s32.totalorder %s245, 17
      %s249 = scalar_select %p248, %s245, 17
      %s250 = smul.addr %s249, 3
      %s251 = smul.addr %s247, 54
      %s252 = sadd.s32 %s250, %s251
      %s253 = smul.addr %s252, 4
      %s254 = scalar_lea.vmem %s1, %s253
      %p255 = pneg %p82
      %p256 = pneg %p79
      %p257 = pneg %p103
      %p258 = pneg %p100
      %p259 = pneg %p124
      %p260 = pneg %p121
      %p261 = pneg %p152
      %p262 = pneg %p149
      %s263 = smul.u32 16, %s20
      %p264 = scmp.lt.s32.totalorder %s19, 1
      %s265 = scalar_select %p264, %s19, 1
      %p266 = scmp.lt.s32.totalorder %s263, 31
      %s267 = scalar_select %p266, %s263, 31
      %s268 = smul.addr %s267, 4
      %s269 = smul.addr %s265, 128
      %s270 = sadd.s32 %s268, %s269
      %s271 = smul.addr %s270, 4
      %s272 = scalar_lea.vmem %s4, %s271
      %s273 = smul.u32 8, %s20
      %s274 = ssub.s32 18, %s273
      %p275 = scmp.lt.s32.totalorder %s274, 8
      %s276 = scalar_select %p275, %s274, 8
      %s277 = smul.u32 4, %s276
      %s278 = smul.u32 %s277, 3
      %p279 = scmp.lt.s32.totalorder %s19, 1
      %s280 = scalar_select %p279, %s19, 1
      %p281 = scmp.lt.s32.totalorder %s273, 17
      %s282 = scalar_select %p281, %s273, 17
      %s283 = smul.addr %s282, 3
      %s284 = smul.addr %s280, 54
      %s285 = sadd.s32 %s283, %s284
      %s286 = smul.addr %s285, 4
      %s287 = scalar_lea.vmem %s0, %s286
      %s288 = smul.u32 8, %s20
      %s289 = ssub.s32 18, %s288
      %p290 = scmp.lt.s32.totalorder %s289, 8
      %s291 = scalar_select %p290, %s289, 8
      %s292 = smul.u32 4, %s291
      %s293 = smul.u32 %s292, 3
      %s294 = sadd.s32 %s20, 1
      %s295 = smul.u32 %s294, 4
      %s296 = smul.u32 2, %s295
      %p297 = scmp.lt.s32.totalorder %s19, 1
      %s298 = scalar_select %p297, %s19, 1
      %p299 = scmp.lt.s32.totalorder %s296, 17
      %s300 = scalar_select %p299, %s296, 17
      %s301 = smul.addr %s300, 3
      %s302 = smul.addr %s298, 54
      %s303 = sadd.s32 %s301, %s302
      %s304 = smul.addr %s303, 4
      %s305 = scalar_lea.vmem %s1, %s304
      %s306 = sadd.s32 %s20, 1
      %s307 = smul.u32 %s306, 4
      %s308 = smul.u32 2, %s307
      %s309 = smul.u32 16, %s20
      %p310 = scmp.lt.s32.totalorder %s19, 1
      %s311 = scalar_select %p310, %s19, 1
      %p312 = scmp.lt.s32.totalorder %s309, 31
      %s313 = scalar_select %p312, %s309, 31
      %s314 = smul.addr %s313, 4
      %s315 = smul.addr %s311, 128
      %s316 = sadd.s32 %s314, %s315
      %s317 = smul.addr %s316, 4
      %s318 = scalar_lea.vmem %s4, %s317
      %s319 = smul.u32 16, %s20
      %v321 = vld [vmem:[%s287] sm:$0xf]
      %v322 = vld [vmem:[%s287 + $0x4] sm:$0xf]
      %v323 = vld [vmem:[%s287 + $0x8] sm:$0x1]
      %v324 = vld [vmem:[%s287 + $0xc] sm:$0xf]
      %v325 = vld [vmem:[%s287 + $0x10] sm:$0xf]
      %v326 = vld [vmem:[%s287 + $0x14] sm:$0x1]
      %v327 = vld [vmem:[%s287 + $0x18] sm:$0xf]
      %v328 = vld [vmem:[%s287 + $0x1c] sm:$0xf]
      %v329 = vld [vmem:[%s287 + $0x20] sm:$0x1]
      %v330 = vld [vmem:[%s287 + $0x24] sm:$0xf]
      %v331 = vld [vmem:[%s287 + $0x28] sm:$0xf]
      %v332 = vld [vmem:[%s287 + $0x2c] sm:$0x1]
      %v333 = vld [vmem:[%s287 + $0x30] sm:$0xf]
      %v334 = vld [vmem:[%s287 + $0x34] sm:$0xf]
      %v335 = vld [vmem:[%s287 + $0x38] sm:$0x1]
      %v336 = vld [vmem:[%s287 + $0x3c] sm:$0xf]
      %v337 = vld [vmem:[%s287 + $0x40] sm:$0xf]
      %v338 = vld [vmem:[%s287 + $0x44] sm:$0x1]
      %v339 = vld [vmem:[%s287 + $0x48] sm:$0xf]
      %v340 = vld [vmem:[%s287 + $0x4c] sm:$0xf]
      %v341 = vld [vmem:[%s287 + $0x50] sm:$0x1]
      %v342 = vld [vmem:[%s287 + $0x54] sm:$0xf]
      %v343 = vld [vmem:[%s287 + $0x58] sm:$0xf]
      %v344 = vld [vmem:[%s287 + $0x5c] sm:$0x1]
      %v345 = vld [vmem:[%s305] sm:$0xf]
      %v346 = vld [vmem:[%s305 + $0x4] sm:$0xf]
      %v347 = vld [vmem:[%s305 + $0x8] sm:$0x1]
      %v348 = vld [vmem:[%s305 + $0xc] sm:$0xf]
      %v349 = vld [vmem:[%s305 + $0x10] sm:$0xf]
      %v350 = vld [vmem:[%s305 + $0x14] sm:$0x1]
      %v381 = vrot.slane %v321, 3
      %v382 = vrot.slane %v322, 3
      %v383 = vrot.slane %v323, 3
      %v384 = vrot.slane %v324, 3
      %v385 = vrot.slane %v325, 3
      %v386 = vrot.slane %v326, 3
      %v387 = vrot.slane %v327, 3
      %v388 = vrot.slane %v328, 3
      %v389 = vrot.slane %v329, 3
      %v390 = vrot.slane %v330, 3
      %v391 = vrot.slane %v331, 3
      %v392 = vrot.slane %v332, 3
      %v393 = vrot.slane %v333, 3
      %v394 = vrot.slane %v334, 3
      %v395 = vrot.slane %v335, 3
      %v396 = vrot.slane %v336, 3
      %v397 = vrot.slane %v337, 3
      %v398 = vrot.slane %v338, 3
      %v399 = vrot.slane %v339, 3
      %v400 = vrot.slane %v340, 3
      %v401 = vrot.slane %v341, 3
      %v402 = vrot.slane %v342, 3
      %v403 = vrot.slane %v343, 3
      %v404 = vrot.slane %v344, 3
      %v405 = vrot.slane %v345, 3
      %v406 = vrot.slane %v346, 3
      %v407 = vrot.slane %v347, 3
      %v408 = vrot.slane %v348, 3
      %v409 = vrot.slane %v349, 3
      %v410 = vrot.slane %v350, 3
      %vm411 = vcmask 1040384
      %v414 = vsel %vm411, %v321, %v381
      %vm416 = vcmask 1041409
      %v417 = vsel %vm416, %v321, %v381
      %v419 = vrot.slane %v417, 1
      %vm420 = vcmask 1042434
      %v421 = vsel %vm420, %v321, %v381
      %v423 = vrot.slane %v421, 2
      %vm424 = vcmask 1043459
      %v425 = vsel %vm424, %v321, %v381
      %v427 = vrot.slane %v425, 3
      %v430 = vsel %vm411, %v322, %v382
      %v432 = vsel %vm416, %v322, %v382
      %v434 = vrot.slane %v432, 1
      %v435 = vsel %vm420, %v322, %v382
      %v437 = vrot.slane %v435, 2
      %v438 = vsel %vm424, %v322, %v382
      %v440 = vrot.slane %v438, 3
      %v443 = vsel %vm411, %v323, %v383
      %v447 = vsel %vm411, %v324, %v384
      %v449 = vsel %vm416, %v324, %v384
      %v451 = vrot.slane %v449, 1
      %v452 = vsel %vm420, %v324, %v384
      %v454 = vrot.slane %v452, 2
      %v455 = vsel %vm424, %v324, %v384
      %v457 = vrot.slane %v455, 3
      %v460 = vsel %vm411, %v325, %v385
      %v462 = vsel %vm416, %v325, %v385
      %v464 = vrot.slane %v462, 1
      %v465 = vsel %vm420, %v325, %v385
      %v467 = vrot.slane %v465, 2
      %v468 = vsel %vm424, %v325, %v385
      %v470 = vrot.slane %v468, 3
      %v473 = vsel %vm411, %v326, %v386
      %v477 = vsel %vm411, %v327, %v387
      %v479 = vsel %vm416, %v327, %v387
      %v481 = vrot.slane %v479, 1
      %v482 = vsel %vm420, %v327, %v387
      %v484 = vrot.slane %v482, 2
      %v485 = vsel %vm424, %v327, %v387
      %v487 = vrot.slane %v485, 3
      %v490 = vsel %vm411, %v328, %v388
      %v492 = vsel %vm416, %v328, %v388
      %v494 = vrot.slane %v492, 1
      %v495 = vsel %vm420, %v328, %v388
      %v497 = vrot.slane %v495, 2
      %v498 = vsel %vm424, %v328, %v388
      %v500 = vrot.slane %v498, 3
      %v503 = vsel %vm411, %v329, %v389
      %v507 = vsel %vm411, %v330, %v390
      %v509 = vsel %vm416, %v330, %v390
      %v511 = vrot.slane %v509, 1
      %v512 = vsel %vm420, %v330, %v390
      %v514 = vrot.slane %v512, 2
      %v515 = vsel %vm424, %v330, %v390
      %v517 = vrot.slane %v515, 3
      %v520 = vsel %vm411, %v331, %v391
      %v522 = vsel %vm416, %v331, %v391
      %v524 = vrot.slane %v522, 1
      %v525 = vsel %vm420, %v331, %v391
      %v527 = vrot.slane %v525, 2
      %v528 = vsel %vm424, %v331, %v391
      %v530 = vrot.slane %v528, 3
      %v533 = vsel %vm411, %v332, %v392
      %v537 = vsel %vm411, %v333, %v393
      %v539 = vsel %vm416, %v333, %v393
      %v541 = vrot.slane %v539, 1
      %v542 = vsel %vm420, %v333, %v393
      %v544 = vrot.slane %v542, 2
      %v545 = vsel %vm424, %v333, %v393
      %v547 = vrot.slane %v545, 3
      %v550 = vsel %vm411, %v334, %v394
      %v552 = vsel %vm416, %v334, %v394
      %v554 = vrot.slane %v552, 1
      %v555 = vsel %vm420, %v334, %v394
      %v557 = vrot.slane %v555, 2
      %v558 = vsel %vm424, %v334, %v394
      %v560 = vrot.slane %v558, 3
      %v563 = vsel %vm411, %v335, %v395
      %v567 = vsel %vm411, %v336, %v396
      %v569 = vsel %vm416, %v336, %v396
      %v571 = vrot.slane %v569, 1
      %v572 = vsel %vm420, %v336, %v396
      %v574 = vrot.slane %v572, 2
      %v575 = vsel %vm424, %v336, %v396
      %v577 = vrot.slane %v575, 3
      %v580 = vsel %vm411, %v337, %v397
      %v582 = vsel %vm416, %v337, %v397
      %v584 = vrot.slane %v582, 1
      %v585 = vsel %vm420, %v337, %v397
      %v587 = vrot.slane %v585, 2
      %v588 = vsel %vm424, %v337, %v397
      %v590 = vrot.slane %v588, 3
      %v593 = vsel %vm411, %v338, %v398
      %v597 = vsel %vm411, %v339, %v399
      %v599 = vsel %vm416, %v339, %v399
      %v601 = vrot.slane %v599, 1
      %v602 = vsel %vm420, %v339, %v399
      %v604 = vrot.slane %v602, 2
      %v605 = vsel %vm424, %v339, %v399
      %v607 = vrot.slane %v605, 3
      %v610 = vsel %vm411, %v340, %v400
      %v612 = vsel %vm416, %v340, %v400
      %v614 = vrot.slane %v612, 1
      %v615 = vsel %vm420, %v340, %v400
      %v617 = vrot.slane %v615, 2
      %v618 = vsel %vm424, %v340, %v400
      %v620 = vrot.slane %v618, 3
      %v623 = vsel %vm411, %v341, %v401
      %v627 = vsel %vm411, %v342, %v402
      %v629 = vsel %vm416, %v342, %v402
      %v631 = vrot.slane %v629, 1
      %v632 = vsel %vm420, %v342, %v402
      %v634 = vrot.slane %v632, 2
      %v635 = vsel %vm424, %v342, %v402
      %v637 = vrot.slane %v635, 3
      %v640 = vsel %vm411, %v343, %v403
      %v642 = vsel %vm416, %v343, %v403
      %v644 = vrot.slane %v642, 1
      %v645 = vsel %vm420, %v343, %v403
      %v647 = vrot.slane %v645, 2
      %v648 = vsel %vm424, %v343, %v403
      %v650 = vrot.slane %v648, 3
      %v653 = vsel %vm411, %v344, %v404
      %v657 = vsel %vm411, %v345, %v405
      %v659 = vsel %vm416, %v345, %v405
      %v661 = vrot.slane %v659, 1
      %v662 = vsel %vm420, %v345, %v405
      %v664 = vrot.slane %v662, 2
      %v665 = vsel %vm424, %v345, %v405
      %v667 = vrot.slane %v665, 3
      %v670 = vsel %vm411, %v346, %v406
      %v672 = vsel %vm416, %v346, %v406
      %v674 = vrot.slane %v672, 1
      %v675 = vsel %vm420, %v346, %v406
      %v677 = vrot.slane %v675, 2
      %v678 = vsel %vm424, %v346, %v406
      %v680 = vrot.slane %v678, 3
      %v683 = vsel %vm411, %v347, %v407
      %v687 = vsel %vm411, %v348, %v408
      %v689 = vsel %vm416, %v348, %v408
      %v691 = vrot.slane %v689, 1
      %v692 = vsel %vm420, %v348, %v408
      %v694 = vrot.slane %v692, 2
      %v695 = vsel %vm424, %v348, %v408
      %v697 = vrot.slane %v695, 3
      %v700 = vsel %vm411, %v349, %v409
      %v702 = vsel %vm416, %v349, %v409
      %v704 = vrot.slane %v702, 1
      %v705 = vsel %vm420, %v349, %v409
      %v707 = vrot.slane %v705, 2
      %v708 = vsel %vm424, %v349, %v409
      %v710 = vrot.slane %v708, 3
      %v713 = vsel %vm411, %v350, %v410
      %v715 = vunpack.i.l.s16 %v414
      %v716 = vunpack.i.h.s16 %v414
      %v717 = vunpack.i.l.s16 %v419
      %v718 = vunpack.i.h.s16 %v419
      %v719 = vunpack.i.l.s16 %v423
      %v720 = vunpack.i.h.s16 %v423
      %v721 = vunpack.i.l.s16 %v427
      %v722 = vunpack.i.h.s16 %v427
      %v723 = vunpack.i.l.s16 %v430
      %v724 = vunpack.i.h.s16 %v430
      %v725 = vunpack.i.l.s16 %v434
      %v726 = vunpack.i.h.s16 %v434
      %v727 = vunpack.i.l.s16 %v437
      %v728 = vunpack.i.h.s16 %v437
      %v729 = vunpack.i.l.s16 %v440
      %v730 = vunpack.i.h.s16 %v440
      %v731 = vunpack.i.l.s16 %v443
      %v732 = vunpack.i.h.s16 %v443
      %v733 = vunpack.i.l.s16 %v447
      %v734 = vunpack.i.h.s16 %v447
      %v735 = vunpack.i.l.s16 %v451
      %v736 = vunpack.i.h.s16 %v451
      %v737 = vunpack.i.l.s16 %v454
      %v738 = vunpack.i.h.s16 %v454
      %v739 = vunpack.i.l.s16 %v457
      %v740 = vunpack.i.h.s16 %v457
      %v741 = vunpack.i.l.s16 %v460
      %v742 = vunpack.i.h.s16 %v460
      %v743 = vunpack.i.l.s16 %v464
      %v744 = vunpack.i.h.s16 %v464
      %v745 = vunpack.i.l.s16 %v467
      %v746 = vunpack.i.h.s16 %v467
      %v747 = vunpack.i.l.s16 %v470
      %v748 = vunpack.i.h.s16 %v470
      %v749 = vunpack.i.l.s16 %v473
      %v750 = vunpack.i.h.s16 %v473
      %v751 = vunpack.i.l.s16 %v477
      %v752 = vunpack.i.h.s16 %v477
      %v753 = vunpack.i.l.s16 %v481
      %v754 = vunpack.i.h.s16 %v481
      %v755 = vunpack.i.l.s16 %v484
      %v756 = vunpack.i.h.s16 %v484
      %v757 = vunpack.i.l.s16 %v487
      %v758 = vunpack.i.h.s16 %v487
      %v759 = vunpack.i.l.s16 %v490
      %v760 = vunpack.i.h.s16 %v490
      %v761 = vunpack.i.l.s16 %v494
      %v762 = vunpack.i.h.s16 %v494
      %v763 = vunpack.i.l.s16 %v497
      %v764 = vunpack.i.h.s16 %v497
      %v765 = vunpack.i.l.s16 %v500
      %v766 = vunpack.i.h.s16 %v500
      %v767 = vunpack.i.l.s16 %v503
      %v768 = vunpack.i.h.s16 %v503
      %v769 = vunpack.i.l.s16 %v507
      %v770 = vunpack.i.h.s16 %v507
      %v771 = vunpack.i.l.s16 %v511
      %v772 = vunpack.i.h.s16 %v511
      %v773 = vunpack.i.l.s16 %v514
      %v774 = vunpack.i.h.s16 %v514
      %v775 = vunpack.i.l.s16 %v517
      %v776 = vunpack.i.h.s16 %v517
      %v777 = vunpack.i.l.s16 %v520
      %v778 = vunpack.i.h.s16 %v520
      %v779 = vunpack.i.l.s16 %v524
      %v780 = vunpack.i.h.s16 %v524
      %v781 = vunpack.i.l.s16 %v527
      %v782 = vunpack.i.h.s16 %v527
      %v783 = vunpack.i.l.s16 %v530
      %v784 = vunpack.i.h.s16 %v530
      %v785 = vunpack.i.l.s16 %v533
      %v786 = vunpack.i.h.s16 %v533
      %v787 = vunpack.i.l.s16 %v537
      %v788 = vunpack.i.h.s16 %v537
      %v789 = vunpack.i.l.s16 %v541
      %v790 = vunpack.i.h.s16 %v541
      %v791 = vunpack.i.l.s16 %v544
      %v792 = vunpack.i.h.s16 %v544
      %v793 = vunpack.i.l.s16 %v547
      %v794 = vunpack.i.h.s16 %v547
      %v795 = vunpack.i.l.s16 %v550
      %v796 = vunpack.i.h.s16 %v550
      %v797 = vunpack.i.l.s16 %v554
      %v798 = vunpack.i.h.s16 %v554
      %v799 = vunpack.i.l.s16 %v557
      %v800 = vunpack.i.h.s16 %v557
      %v801 = vunpack.i.l.s16 %v560
      %v802 = vunpack.i.h.s16 %v560
      %v803 = vunpack.i.l.s16 %v563
      %v804 = vunpack.i.h.s16 %v563
      %v805 = vunpack.i.l.s16 %v567
      %v806 = vunpack.i.h.s16 %v567
      %v807 = vunpack.i.l.s16 %v571
      %v808 = vunpack.i.h.s16 %v571
      %v809 = vunpack.i.l.s16 %v574
      %v810 = vunpack.i.h.s16 %v574
      %v811 = vunpack.i.l.s16 %v577
      %v812 = vunpack.i.h.s16 %v577
      %v813 = vunpack.i.l.s16 %v580
      %v814 = vunpack.i.h.s16 %v580
      %v815 = vunpack.i.l.s16 %v584
      %v816 = vunpack.i.h.s16 %v584
      %v817 = vunpack.i.l.s16 %v587
      %v818 = vunpack.i.h.s16 %v587
      %v819 = vunpack.i.l.s16 %v590
      %v820 = vunpack.i.h.s16 %v590
      %v821 = vunpack.i.l.s16 %v593
      %v822 = vunpack.i.h.s16 %v593
      %v823 = vunpack.i.l.s16 %v597
      %v824 = vunpack.i.h.s16 %v597
      %v825 = vunpack.i.l.s16 %v601
      %v826 = vunpack.i.h.s16 %v601
      %v827 = vunpack.i.l.s16 %v604
      %v828 = vunpack.i.h.s16 %v604
      %v829 = vunpack.i.l.s16 %v607
      %v830 = vunpack.i.h.s16 %v607
      %v831 = vunpack.i.l.s16 %v610
      %v832 = vunpack.i.h.s16 %v610
      %v833 = vunpack.i.l.s16 %v614
      %v834 = vunpack.i.h.s16 %v614
      %v835 = vunpack.i.l.s16 %v617
      %v836 = vunpack.i.h.s16 %v617
      %v837 = vunpack.i.l.s16 %v620
      %v838 = vunpack.i.h.s16 %v620
      %v839 = vunpack.i.l.s16 %v623
      %v840 = vunpack.i.h.s16 %v623
      %v841 = vunpack.i.l.s16 %v627
      %v842 = vunpack.i.h.s16 %v627
      %v843 = vunpack.i.l.s16 %v631
      %v844 = vunpack.i.h.s16 %v631
      %v845 = vunpack.i.l.s16 %v634
      %v846 = vunpack.i.h.s16 %v634
      %v847 = vunpack.i.l.s16 %v637
      %v848 = vunpack.i.h.s16 %v637
      %v849 = vunpack.i.l.s16 %v640
      %v850 = vunpack.i.h.s16 %v640
      %v851 = vunpack.i.l.s16 %v644
      %v852 = vunpack.i.h.s16 %v644
      %v853 = vunpack.i.l.s16 %v647
      %v854 = vunpack.i.h.s16 %v647
      %v855 = vunpack.i.l.s16 %v650
      %v856 = vunpack.i.h.s16 %v650
      %v857 = vunpack.i.l.s16 %v653
      %v858 = vunpack.i.h.s16 %v653
      %v859 = vunpack.i.l.s16 %v657
      %v860 = vunpack.i.h.s16 %v657
      %v861 = vunpack.i.l.s16 %v661
      %v862 = vunpack.i.h.s16 %v661
      %v863 = vunpack.i.l.s16 %v664
      %v864 = vunpack.i.h.s16 %v664
      %v865 = vunpack.i.l.s16 %v667
      %v866 = vunpack.i.h.s16 %v667
      %v867 = vunpack.i.l.s16 %v670
      %v868 = vunpack.i.h.s16 %v670
      %v869 = vunpack.i.l.s16 %v674
      %v870 = vunpack.i.h.s16 %v674
      %v871 = vunpack.i.l.s16 %v677
      %v872 = vunpack.i.h.s16 %v677
      %v873 = vunpack.i.l.s16 %v680
      %v874 = vunpack.i.h.s16 %v680
      %v875 = vunpack.i.l.s16 %v683
      %v876 = vunpack.i.h.s16 %v683
      %v877 = vunpack.i.l.s16 %v687
      %v878 = vunpack.i.h.s16 %v687
      %v879 = vunpack.i.l.s16 %v691
      %v880 = vunpack.i.h.s16 %v691
      %v881 = vunpack.i.l.s16 %v694
      %v882 = vunpack.i.h.s16 %v694
      %v883 = vunpack.i.l.s16 %v697
      %v884 = vunpack.i.h.s16 %v697
      %v885 = vunpack.i.l.s16 %v700
      %v886 = vunpack.i.h.s16 %v700
      %v887 = vunpack.i.l.s16 %v704
      %v888 = vunpack.i.h.s16 %v704
      %v889 = vunpack.i.l.s16 %v707
      %v890 = vunpack.i.h.s16 %v707
      %v891 = vunpack.i.l.s16 %v710
      %v892 = vunpack.i.h.s16 %v710
      %v893 = vunpack.i.l.s16 %v713
      %v894 = vunpack.i.h.s16 %v713
      %v895 = vpack.i.b16 %v715, %v715
      %v896 = vpack.i.b16 %v716, %v716
      %v897 = vpack.i.b16 %v717, %v717
      %v898 = vpack.i.b16 %v718, %v718
      %v899 = vpack.i.b16 %v719, %v719
      %v900 = vpack.i.b16 %v720, %v720
      %v901 = vpack.i.b16 %v721, %v721
      %v902 = vpack.i.b16 %v722, %v722
      %v903 = vpack.i.b16 %v723, %v723
      %v904 = vpack.i.b16 %v724, %v724
      %v905 = vpack.i.b16 %v725, %v725
      %v906 = vpack.i.b16 %v726, %v726
      %v907 = vpack.i.b16 %v727, %v727
      %v908 = vpack.i.b16 %v728, %v728
      %v909 = vpack.i.b16 %v729, %v729
      %v910 = vpack.i.b16 %v730, %v730
      %v911 = vpack.i.b16 %v731, %v731
      %v912 = vpack.i.b16 %v732, %v732
      %v913 = vpack.i.b16 %v733, %v733
      %v914 = vpack.i.b16 %v734, %v734
      %v915 = vpack.i.b16 %v735, %v735
      %v916 = vpack.i.b16 %v736, %v736
      %v917 = vpack.i.b16 %v737, %v737
      %v918 = vpack.i.b16 %v738, %v738
      %v919 = vpack.i.b16 %v739, %v739
      %v920 = vpack.i.b16 %v740, %v740
      %v921 = vpack.i.b16 %v741, %v741
      %v922 = vpack.i.b16 %v742, %v742
      %v923 = vpack.i.b16 %v743, %v743
      %v924 = vpack.i.b16 %v744, %v744
      %v925 = vpack.i.b16 %v745, %v745
      %v926 = vpack.i.b16 %v746, %v746
      %v927 = vpack.i.b16 %v747, %v747
      %v928 = vpack.i.b16 %v748, %v748
      %v929 = vpack.i.b16 %v749, %v749
      %v930 = vpack.i.b16 %v750, %v750
      %v931 = vpack.i.b16 %v751, %v751
      %v932 = vpack.i.b16 %v752, %v752
      %v933 = vpack.i.b16 %v753, %v753
      %v934 = vpack.i.b16 %v754, %v754
      %v935 = vpack.i.b16 %v755, %v755
      %v936 = vpack.i.b16 %v756, %v756
      %v937 = vpack.i.b16 %v757, %v757
      %v938 = vpack.i.b16 %v758, %v758
      %v939 = vpack.i.b16 %v759, %v759
      %v940 = vpack.i.b16 %v760, %v760
      %v941 = vpack.i.b16 %v761, %v761
      %v942 = vpack.i.b16 %v762, %v762
      %v943 = vpack.i.b16 %v763, %v763
      %v944 = vpack.i.b16 %v764, %v764
      %v945 = vpack.i.b16 %v765, %v765
      %v946 = vpack.i.b16 %v766, %v766
      %v947 = vpack.i.b16 %v767, %v767
      %v948 = vpack.i.b16 %v768, %v768
      %v949 = vpack.i.b16 %v769, %v769
      %v950 = vpack.i.b16 %v770, %v770
      %v951 = vpack.i.b16 %v771, %v771
      %v952 = vpack.i.b16 %v772, %v772
      %v953 = vpack.i.b16 %v773, %v773
      %v954 = vpack.i.b16 %v774, %v774
      %v955 = vpack.i.b16 %v775, %v775
      %v956 = vpack.i.b16 %v776, %v776
      %v957 = vpack.i.b16 %v777, %v777
      %v958 = vpack.i.b16 %v778, %v778
      %v959 = vpack.i.b16 %v779, %v779
      %v960 = vpack.i.b16 %v780, %v780
      %v961 = vpack.i.b16 %v781, %v781
      %v962 = vpack.i.b16 %v782, %v782
      %v963 = vpack.i.b16 %v783, %v783
      %v964 = vpack.i.b16 %v784, %v784
      %v965 = vpack.i.b16 %v785, %v785
      %v966 = vpack.i.b16 %v786, %v786
      %v967 = vpack.i.b16 %v787, %v787
      %v968 = vpack.i.b16 %v788, %v788
      %v969 = vpack.i.b16 %v789, %v789
      %v970 = vpack.i.b16 %v790, %v790
      %v971 = vpack.i.b16 %v791, %v791
      %v972 = vpack.i.b16 %v792, %v792
      %v973 = vpack.i.b16 %v793, %v793
      %v974 = vpack.i.b16 %v794, %v794
      %v975 = vpack.i.b16 %v795, %v795
      %v976 = vpack.i.b16 %v796, %v796
      %v977 = vpack.i.b16 %v797, %v797
      %v978 = vpack.i.b16 %v798, %v798
      %v979 = vpack.i.b16 %v799, %v799
      %v980 = vpack.i.b16 %v800, %v800
      %v981 = vpack.i.b16 %v801, %v801
      %v982 = vpack.i.b16 %v802, %v802
      %v983 = vpack.i.b16 %v803, %v803
      %v984 = vpack.i.b16 %v804, %v804
      %v985 = vpack.i.b16 %v805, %v805
      %v986 = vpack.i.b16 %v806, %v806
      %v987 = vpack.i.b16 %v807, %v807
      %v988 = vpack.i.b16 %v808, %v808
      %v989 = vpack.i.b16 %v809, %v809
      %v990 = vpack.i.b16 %v810, %v810
      %v991 = vpack.i.b16 %v811, %v811
      %v992 = vpack.i.b16 %v812, %v812
      %v993 = vpack.i.b16 %v813, %v813
      %v994 = vpack.i.b16 %v814, %v814
      %v995 = vpack.i.b16 %v815, %v815
      %v996 = vpack.i.b16 %v816, %v816
      %v997 = vpack.i.b16 %v817, %v817
      %v998 = vpack.i.b16 %v818, %v818
      %v999 = vpack.i.b16 %v819, %v819
      %v1000 = vpack.i.b16 %v820, %v820
      %v1001 = vpack.i.b16 %v821, %v821
      %v1002 = vpack.i.b16 %v822, %v822
      %v1003 = vpack.i.b16 %v823, %v823
      %v1004 = vpack.i.b16 %v824, %v824
      %v1005 = vpack.i.b16 %v825, %v825
      %v1006 = vpack.i.b16 %v826, %v826
      %v1007 = vpack.i.b16 %v827, %v827
      %v1008 = vpack.i.b16 %v828, %v828
      %v1009 = vpack.i.b16 %v829, %v829
      %v1010 = vpack.i.b16 %v830, %v830
      %v1011 = vpack.i.b16 %v831, %v831
      %v1012 = vpack.i.b16 %v832, %v832
      %v1013 = vpack.i.b16 %v833, %v833
      %v1014 = vpack.i.b16 %v834, %v834
      %v1015 = vpack.i.b16 %v835, %v835
      %v1016 = vpack.i.b16 %v836, %v836
      %v1017 = vpack.i.b16 %v837, %v837
      %v1018 = vpack.i.b16 %v838, %v838
      %v1019 = vpack.i.b16 %v839, %v839
      %v1020 = vpack.i.b16 %v840, %v840
      %v1021 = vpack.i.b16 %v841, %v841
      %v1022 = vpack.i.b16 %v842, %v842
      %v1023 = vpack.i.b16 %v843, %v843
      %v1024 = vpack.i.b16 %v844, %v844
      %v1025 = vpack.i.b16 %v845, %v845
      %v1026 = vpack.i.b16 %v846, %v846
      %v1027 = vpack.i.b16 %v847, %v847
      %v1028 = vpack.i.b16 %v848, %v848
      %v1029 = vpack.i.b16 %v849, %v849
      %v1030 = vpack.i.b16 %v850, %v850
      %v1031 = vpack.i.b16 %v851, %v851
      %v1032 = vpack.i.b16 %v852, %v852
      %v1033 = vpack.i.b16 %v853, %v853
      %v1034 = vpack.i.b16 %v854, %v854
      %v1035 = vpack.i.b16 %v855, %v855
      %v1036 = vpack.i.b16 %v856, %v856
      %v1037 = vpack.i.b16 %v857, %v857
      %v1038 = vpack.i.b16 %v858, %v858
      %v1039 = vpack.i.b16 %v859, %v859
      %v1040 = vpack.i.b16 %v860, %v860
      %v1041 = vpack.i.b16 %v861, %v861
      %v1042 = vpack.i.b16 %v862, %v862
      %v1043 = vpack.i.b16 %v863, %v863
      %v1044 = vpack.i.b16 %v864, %v864
      %v1045 = vpack.i.b16 %v865, %v865
      %v1046 = vpack.i.b16 %v866, %v866
      %v1047 = vpack.i.b16 %v867, %v867
      %v1048 = vpack.i.b16 %v868, %v868
      %v1049 = vpack.i.b16 %v869, %v869
      %v1050 = vpack.i.b16 %v870, %v870
      %v1051 = vpack.i.b16 %v871, %v871
      %v1052 = vpack.i.b16 %v872, %v872
      %v1053 = vpack.i.b16 %v873, %v873
      %v1054 = vpack.i.b16 %v874, %v874
      %v1055 = vpack.i.b16 %v875, %v875
      %v1056 = vpack.i.b16 %v876, %v876
      %v1057 = vpack.i.b16 %v877, %v877
      %v1058 = vpack.i.b16 %v878, %v878
      %v1059 = vpack.i.b16 %v879, %v879
      %v1060 = vpack.i.b16 %v880, %v880
      %v1061 = vpack.i.b16 %v881, %v881
      %v1062 = vpack.i.b16 %v882, %v882
      %v1063 = vpack.i.b16 %v883, %v883
      %v1064 = vpack.i.b16 %v884, %v884
      %v1065 = vpack.i.b16 %v885, %v885
      %v1066 = vpack.i.b16 %v886, %v886
      %v1067 = vpack.i.b16 %v887, %v887
      %v1068 = vpack.i.b16 %v888, %v888
      %v1069 = vpack.i.b16 %v889, %v889
      %v1070 = vpack.i.b16 %v890, %v890
      %v1071 = vpack.i.b16 %v891, %v891
      %v1072 = vpack.i.b16 %v892, %v892
      %v1073 = vpack.i.b16 %v893, %v893
      %v1074 = vpack.i.b16 %v894, %v894
      %v1075 = vperm.slane %v895, 0
      %v1076 = vperm.slane %v896, 0
      %v1077 = vperm.slane %v897, 0
      %v1078 = vperm.slane %v898, 0
      %v1079 = vperm.slane %v899, 0
      %v1080 = vperm.slane %v900, 0
      %v1081 = vperm.slane %v901, 0
      %v1082 = vperm.slane %v902, 0
      %v1083 = vperm.slane %v903, 0
      %v1084 = vperm.slane %v904, 0
      %v1085 = vperm.slane %v905, 0
      %v1086 = vperm.slane %v906, 0
      %v1087 = vperm.slane %v907, 0
      %v1088 = vperm.slane %v908, 0
      %v1089 = vperm.slane %v909, 0
      %v1090 = vperm.slane %v910, 0
      %v1091 = vperm.slane %v911, 0
      %v1092 = vperm.slane %v912, 0
      %v1093 = vperm.slane %v913, 0
      %v1094 = vperm.slane %v914, 0
      %v1095 = vperm.slane %v915, 0
      %v1096 = vperm.slane %v916, 0
      %v1097 = vperm.slane %v917, 0
      %v1098 = vperm.slane %v918, 0
      %v1099 = vperm.slane %v919, 0
      %v1100 = vperm.slane %v920, 0
      %v1101 = vperm.slane %v921, 0
      %v1102 = vperm.slane %v922, 0
      %v1103 = vperm.slane %v923, 0
      %v1104 = vperm.slane %v924, 0
      %v1105 = vperm.slane %v925, 0
      %v1106 = vperm.slane %v926, 0
      %v1107 = vperm.slane %v927, 0
      %v1108 = vperm.slane %v928, 0
      %v1109 = vperm.slane %v929, 0
      %v1110 = vperm.slane %v930, 0
      %v1111 = vperm.slane %v931, 0
      %v1112 = vperm.slane %v932, 0
      %v1113 = vperm.slane %v933, 0
      %v1114 = vperm.slane %v934, 0
      %v1115 = vperm.slane %v935, 0
      %v1116 = vperm.slane %v936, 0
      %v1117 = vperm.slane %v937, 0
      %v1118 = vperm.slane %v938, 0
      %v1119 = vperm.slane %v939, 0
      %v1120 = vperm.slane %v940, 0
      %v1121 = vperm.slane %v941, 0
      %v1122 = vperm.slane %v942, 0
      %v1123 = vperm.slane %v943, 0
      %v1124 = vperm.slane %v944, 0
      %v1125 = vperm.slane %v945, 0
      %v1126 = vperm.slane %v946, 0
      %v1127 = vperm.slane %v947, 0
      %v1128 = vperm.slane %v948, 0
      %v1129 = vperm.slane %v949, 0
      %v1130 = vperm.slane %v950, 0
      %v1131 = vperm.slane %v951, 0
      %v1132 = vperm.slane %v952, 0
      %v1133 = vperm.slane %v953, 0
      %v1134 = vperm.slane %v954, 0
      %v1135 = vperm.slane %v955, 0
      %v1136 = vperm.slane %v956, 0
      %v1137 = vperm.slane %v957, 0
      %v1138 = vperm.slane %v958, 0
      %v1139 = vperm.slane %v959, 0
      %v1140 = vperm.slane %v960, 0
      %v1141 = vperm.slane %v961, 0
      %v1142 = vperm.slane %v962, 0
      %v1143 = vperm.slane %v963, 0
      %v1144 = vperm.slane %v964, 0
      %v1145 = vperm.slane %v965, 0
      %v1146 = vperm.slane %v966, 0
      %v1147 = vperm.slane %v967, 0
      %v1148 = vperm.slane %v968, 0
      %v1149 = vperm.slane %v969, 0
      %v1150 = vperm.slane %v970, 0
      %v1151 = vperm.slane %v971, 0
      %v1152 = vperm.slane %v972, 0
      %v1153 = vperm.slane %v973, 0
      %v1154 = vperm.slane %v974, 0
      %v1155 = vperm.slane %v975, 0
      %v1156 = vperm.slane %v976, 0
      %v1157 = vperm.slane %v977, 0
      %v1158 = vperm.slane %v978, 0
      %v1159 = vperm.slane %v979, 0
      %v1160 = vperm.slane %v980, 0
      %v1161 = vperm.slane %v981, 0
      %v1162 = vperm.slane %v982, 0
      %v1163 = vperm.slane %v983, 0
      %v1164 = vperm.slane %v984, 0
      %v1165 = vperm.slane %v985, 0
      %v1166 = vperm.slane %v986, 0
      %v1167 = vperm.slane %v987, 0
      %v1168 = vperm.slane %v988, 0
      %v1169 = vperm.slane %v989, 0
      %v1170 = vperm.slane %v990, 0
      %v1171 = vperm.slane %v991, 0
      %v1172 = vperm.slane %v992, 0
      %v1173 = vperm.slane %v993, 0
      %v1174 = vperm.slane %v994, 0
      %v1175 = vperm.slane %v995, 0
      %v1176 = vperm.slane %v996, 0
      %v1177 = vperm.slane %v997, 0
      %v1178 = vperm.slane %v998, 0
      %v1179 = vperm.slane %v999, 0
      %v1180 = vperm.slane %v1000, 0
      %v1181 = vperm.slane %v1001, 0
      %v1182 = vperm.slane %v1002, 0
      %v1183 = vperm.slane %v1003, 0
      %v1184 = vperm.slane %v1004, 0
      %v1185 = vperm.slane %v1005, 0
      %v1186 = vperm.slane %v1006, 0
      %v1187 = vperm.slane %v1007, 0
      %v1188 = vperm.slane %v1008, 0
      %v1189 = vperm.slane %v1009, 0
      %v1190 = vperm.slane %v1010, 0
      %v1191 = vperm.slane %v1011, 0
      %v1192 = vperm.slane %v1012, 0
      %v1193 = vperm.slane %v1013, 0
      %v1194 = vperm.slane %v1014, 0
      %v1195 = vperm.slane %v1015, 0
      %v1196 = vperm.slane %v1016, 0
      %v1197 = vperm.slane %v1017, 0
      %v1198 = vperm.slane %v1018, 0
      %v1199 = vperm.slane %v1019, 0
      %v1200 = vperm.slane %v1020, 0
      %v1201 = vperm.slane %v1021, 0
      %v1202 = vperm.slane %v1022, 0
      %v1203 = vperm.slane %v1023, 0
      %v1204 = vperm.slane %v1024, 0
      %v1205 = vperm.slane %v1025, 0
      %v1206 = vperm.slane %v1026, 0
      %v1207 = vperm.slane %v1027, 0
      %v1208 = vperm.slane %v1028, 0
      %v1209 = vperm.slane %v1029, 0
      %v1210 = vperm.slane %v1030, 0
      %v1211 = vperm.slane %v1031, 0
      %v1212 = vperm.slane %v1032, 0
      %v1213 = vperm.slane %v1033, 0
      %v1214 = vperm.slane %v1034, 0
      %v1215 = vperm.slane %v1035, 0
      %v1216 = vperm.slane %v1036, 0
      %v1217 = vperm.slane %v1037, 0
      %v1218 = vperm.slane %v1038, 0
      %v1219 = vperm.slane %v1039, 0
      %v1220 = vperm.slane %v1040, 0
      %v1221 = vperm.slane %v1041, 0
      %v1222 = vperm.slane %v1042, 0
      %v1223 = vperm.slane %v1043, 0
      %v1224 = vperm.slane %v1044, 0
      %v1225 = vperm.slane %v1045, 0
      %v1226 = vperm.slane %v1046, 0
      %v1227 = vperm.slane %v1047, 0
      %v1228 = vperm.slane %v1048, 0
      %v1229 = vperm.slane %v1049, 0
      %v1230 = vperm.slane %v1050, 0
      %v1231 = vperm.slane %v1051, 0
      %v1232 = vperm.slane %v1052, 0
      %v1233 = vperm.slane %v1053, 0
      %v1234 = vperm.slane %v1054, 0
      %v1235 = vperm.slane %v1055, 0
      %v1236 = vperm.slane %v1056, 0
      %v1237 = vperm.slane %v1057, 0
      %v1238 = vperm.slane %v1058, 0
      %v1239 = vperm.slane %v1059, 0
      %v1240 = vperm.slane %v1060, 0
      %v1241 = vperm.slane %v1061, 0
      %v1242 = vperm.slane %v1062, 0
      %v1243 = vperm.slane %v1063, 0
      %v1244 = vperm.slane %v1064, 0
      %v1245 = vperm.slane %v1065, 0
      %v1246 = vperm.slane %v1066, 0
      %v1247 = vperm.slane %v1067, 0
      %v1248 = vperm.slane %v1068, 0
      %v1249 = vperm.slane %v1069, 0
      %v1250 = vperm.slane %v1070, 0
      %v1251 = vperm.slane %v1071, 0
      %v1252 = vperm.slane %v1072, 0
      %v1253 = vperm.slane %v1073, 0
      %v1254 = vperm.slane %v1074, 0
      %v1256 = vpack.i.b16 %v1075, %v1075
      %v1258 = vperm.slane %v1256, 0
      %v1260 = vpack.i.b16 %v1076, %v1076
      %v1262 = vperm.slane %v1260, 0
      %v1264 = vpack.i.b16 %v1077, %v1077
      %v1266 = vperm.slane %v1264, 0
      %v1268 = vpack.i.b16 %v1078, %v1078
      %v1270 = vperm.slane %v1268, 0
      %v1272 = vpack.i.b16 %v1079, %v1079
      %v1274 = vperm.slane %v1272, 0
      %v1276 = vpack.i.b16 %v1080, %v1080
      %v1278 = vperm.slane %v1276, 0
      %v1280 = vpack.i.b16 %v1081, %v1081
      %v1282 = vperm.slane %v1280, 0
      %v1284 = vpack.i.b16 %v1082, %v1082
      %v1286 = vperm.slane %v1284, 0
      %v1288 = vpack.i.b16 %v1083, %v1083
      %v1290 = vperm.slane %v1288, 0
      %v1292 = vpack.i.b16 %v1084, %v1084
      %v1294 = vperm.slane %v1292, 0
      %v1296 = vpack.i.b16 %v1085, %v1085
      %v1298 = vperm.slane %v1296, 0
      %v1300 = vpack.i.b16 %v1086, %v1086
      %v1302 = vperm.slane %v1300, 0
      %v1304 = vpack.i.b16 %v1087, %v1087
      %v1306 = vperm.slane %v1304, 0
      %v1308 = vpack.i.b16 %v1088, %v1088
      %v1310 = vperm.slane %v1308, 0
      %v1312 = vpack.i.b16 %v1089, %v1089
      %v1314 = vperm.slane %v1312, 0
      %v1316 = vpack.i.b16 %v1090, %v1090
      %v1318 = vperm.slane %v1316, 0
      %v1320 = vpack.i.b16 %v1091, %v1091
      %v1322 = vperm.slane %v1320, 0
      %v1324 = vpack.i.b16 %v1092, %v1092
      %v1326 = vperm.slane %v1324, 0
      %v1328 = vpack.i.b16 %v1093, %v1093
      %v1330 = vperm.slane %v1328, 0
      %v1332 = vpack.i.b16 %v1094, %v1094
      %v1334 = vperm.slane %v1332, 0
      %v1336 = vpack.i.b16 %v1095, %v1095
      %v1338 = vperm.slane %v1336, 0
      %v1340 = vpack.i.b16 %v1096, %v1096
      %v1342 = vperm.slane %v1340, 0
      %v1344 = vpack.i.b16 %v1097, %v1097
      %v1346 = vperm.slane %v1344, 0
      %v1348 = vpack.i.b16 %v1098, %v1098
      %v1350 = vperm.slane %v1348, 0
      %v1352 = vpack.i.b16 %v1099, %v1099
      %v1354 = vperm.slane %v1352, 0
      %v1356 = vpack.i.b16 %v1100, %v1100
      %v1358 = vperm.slane %v1356, 0
      %v1360 = vpack.i.b16 %v1101, %v1101
      %v1362 = vperm.slane %v1360, 0
      %v1364 = vpack.i.b16 %v1102, %v1102
      %v1366 = vperm.slane %v1364, 0
      %v1368 = vpack.i.b16 %v1103, %v1103
      %v1370 = vperm.slane %v1368, 0
      %v1372 = vpack.i.b16 %v1104, %v1104
      %v1374 = vperm.slane %v1372, 0
      %v1376 = vpack.i.b16 %v1105, %v1105
      %v1378 = vperm.slane %v1376, 0
      %v1380 = vpack.i.b16 %v1106, %v1106
      %v1382 = vperm.slane %v1380, 0
      %v1384 = vpack.i.b16 %v1107, %v1107
      %v1386 = vperm.slane %v1384, 0
      %v1388 = vpack.i.b16 %v1108, %v1108
      %v1390 = vperm.slane %v1388, 0
      %v1392 = vpack.i.b16 %v1109, %v1109
      %v1394 = vperm.slane %v1392, 0
      %v1396 = vpack.i.b16 %v1110, %v1110
      %v1398 = vperm.slane %v1396, 0
      %v1400 = vpack.i.b16 %v1111, %v1111
      %v1402 = vperm.slane %v1400, 0
      %v1404 = vpack.i.b16 %v1112, %v1112
      %v1406 = vperm.slane %v1404, 0
      %v1408 = vpack.i.b16 %v1113, %v1113
      %v1410 = vperm.slane %v1408, 0
      %v1412 = vpack.i.b16 %v1114, %v1114
      %v1414 = vperm.slane %v1412, 0
      %v1416 = vpack.i.b16 %v1115, %v1115
      %v1418 = vperm.slane %v1416, 0
      %v1420 = vpack.i.b16 %v1116, %v1116
      %v1422 = vperm.slane %v1420, 0
      %v1424 = vpack.i.b16 %v1117, %v1117
      %v1426 = vperm.slane %v1424, 0
      %v1428 = vpack.i.b16 %v1118, %v1118
      %v1430 = vperm.slane %v1428, 0
      %v1432 = vpack.i.b16 %v1119, %v1119
      %v1434 = vperm.slane %v1432, 0
      %v1436 = vpack.i.b16 %v1120, %v1120
      %v1438 = vperm.slane %v1436, 0
      %v1440 = vpack.i.b16 %v1121, %v1121
      %v1442 = vperm.slane %v1440, 0
      %v1444 = vpack.i.b16 %v1122, %v1122
      %v1446 = vperm.slane %v1444, 0
      %v1448 = vpack.i.b16 %v1123, %v1123
      %v1450 = vperm.slane %v1448, 0
      %v1452 = vpack.i.b16 %v1124, %v1124
      %v1454 = vperm.slane %v1452, 0
      %v1456 = vpack.i.b16 %v1125, %v1125
      %v1458 = vperm.slane %v1456, 0
      %v1460 = vpack.i.b16 %v1126, %v1126
      %v1462 = vperm.slane %v1460, 0
      %v1464 = vpack.i.b16 %v1127, %v1127
      %v1466 = vperm.slane %v1464, 0
      %v1468 = vpack.i.b16 %v1128, %v1128
      %v1470 = vperm.slane %v1468, 0
      %v1472 = vpack.i.b16 %v1129, %v1129
      %v1474 = vperm.slane %v1472, 0
      %v1476 = vpack.i.b16 %v1130, %v1130
      %v1478 = vperm.slane %v1476, 0
      %v1480 = vpack.i.b16 %v1131, %v1131
      %v1482 = vperm.slane %v1480, 0
      %v1484 = vpack.i.b16 %v1132, %v1132
      %v1486 = vperm.slane %v1484, 0
      %v1488 = vpack.i.b16 %v1133, %v1133
      %v1490 = vperm.slane %v1488, 0
      %v1492 = vpack.i.b16 %v1134, %v1134
      %v1494 = vperm.slane %v1492, 0
      %v1496 = vpack.i.b16 %v1135, %v1135
      %v1498 = vperm.slane %v1496, 0
      %v1500 = vpack.i.b16 %v1136, %v1136
      %v1502 = vperm.slane %v1500, 0
      %v1504 = vpack.i.b16 %v1137, %v1137
      %v1506 = vperm.slane %v1504, 0
      %v1508 = vpack.i.b16 %v1138, %v1138
      %v1510 = vperm.slane %v1508, 0
      %v1512 = vpack.i.b16 %v1139, %v1139
      %v1514 = vperm.slane %v1512, 0
      %v1516 = vpack.i.b16 %v1140, %v1140
      %v1518 = vperm.slane %v1516, 0
      %v1520 = vpack.i.b16 %v1141, %v1141
      %v1522 = vperm.slane %v1520, 0
      %v1524 = vpack.i.b16 %v1142, %v1142
      %v1526 = vperm.slane %v1524, 0
      %v1528 = vpack.i.b16 %v1143, %v1143
      %v1530 = vperm.slane %v1528, 0
      %v1532 = vpack.i.b16 %v1144, %v1144
      %v1534 = vperm.slane %v1532, 0
      %v1536 = vpack.i.b16 %v1145, %v1145
      %v1538 = vperm.slane %v1536, 0
      %v1540 = vpack.i.b16 %v1146, %v1146
      %v1542 = vperm.slane %v1540, 0
      %v1544 = vpack.i.b16 %v1147, %v1147
      %v1546 = vperm.slane %v1544, 0
      %v1548 = vpack.i.b16 %v1148, %v1148
      %v1550 = vperm.slane %v1548, 0
      %v1552 = vpack.i.b16 %v1149, %v1149
      %v1554 = vperm.slane %v1552, 0
      %v1556 = vpack.i.b16 %v1150, %v1150
      %v1558 = vperm.slane %v1556, 0
      %v1560 = vpack.i.b16 %v1151, %v1151
      %v1562 = vperm.slane %v1560, 0
      %v1564 = vpack.i.b16 %v1152, %v1152
      %v1566 = vperm.slane %v1564, 0
      %v1568 = vpack.i.b16 %v1153, %v1153
      %v1570 = vperm.slane %v1568, 0
      %v1572 = vpack.i.b16 %v1154, %v1154
      %v1574 = vperm.slane %v1572, 0
      %v1576 = vpack.i.b16 %v1155, %v1155
      %v1578 = vperm.slane %v1576, 0
      %v1580 = vpack.i.b16 %v1156, %v1156
      %v1582 = vperm.slane %v1580, 0
      %v1584 = vpack.i.b16 %v1157, %v1157
      %v1586 = vperm.slane %v1584, 0
      %v1588 = vpack.i.b16 %v1158, %v1158
      %v1590 = vperm.slane %v1588, 0
      %v1592 = vpack.i.b16 %v1159, %v1159
      %v1594 = vperm.slane %v1592, 0
      %v1596 = vpack.i.b16 %v1160, %v1160
      %v1598 = vperm.slane %v1596, 0
      %v1600 = vpack.i.b16 %v1161, %v1161
      %v1602 = vperm.slane %v1600, 0
      %v1604 = vpack.i.b16 %v1162, %v1162
      %v1606 = vperm.slane %v1604, 0
      %v1608 = vpack.i.b16 %v1163, %v1163
      %v1610 = vperm.slane %v1608, 0
      %v1612 = vpack.i.b16 %v1164, %v1164
      %v1614 = vperm.slane %v1612, 0
      %v1616 = vpack.i.b16 %v1165, %v1165
      %v1618 = vperm.slane %v1616, 0
      %v1620 = vpack.i.b16 %v1166, %v1166
      %v1622 = vperm.slane %v1620, 0
      %v1624 = vpack.i.b16 %v1167, %v1167
      %v1626 = vperm.slane %v1624, 0
      %v1628 = vpack.i.b16 %v1168, %v1168
      %v1630 = vperm.slane %v1628, 0
      %v1632 = vpack.i.b16 %v1169, %v1169
      %v1634 = vperm.slane %v1632, 0
      %v1636 = vpack.i.b16 %v1170, %v1170
      %v1638 = vperm.slane %v1636, 0
      %v1640 = vpack.i.b16 %v1171, %v1171
      %v1642 = vperm.slane %v1640, 0
      %v1644 = vpack.i.b16 %v1172, %v1172
      %v1646 = vperm.slane %v1644, 0
      %v1648 = vpack.i.b16 %v1173, %v1173
      %v1650 = vperm.slane %v1648, 0
      %v1652 = vpack.i.b16 %v1174, %v1174
      %v1654 = vperm.slane %v1652, 0
      %v1656 = vpack.i.b16 %v1175, %v1175
      %v1658 = vperm.slane %v1656, 0
      %v1660 = vpack.i.b16 %v1176, %v1176
      %v1662 = vperm.slane %v1660, 0
      %v1664 = vpack.i.b16 %v1177, %v1177
      %v1666 = vperm.slane %v1664, 0
      %v1668 = vpack.i.b16 %v1178, %v1178
      %v1670 = vperm.slane %v1668, 0
      %v1672 = vpack.i.b16 %v1179, %v1179
      %v1674 = vperm.slane %v1672, 0
      %v1676 = vpack.i.b16 %v1180, %v1180
      %v1678 = vperm.slane %v1676, 0
      %v1680 = vpack.i.b16 %v1181, %v1181
      %v1682 = vperm.slane %v1680, 0
      %v1684 = vpack.i.b16 %v1182, %v1182
      %v1686 = vperm.slane %v1684, 0
      %v1688 = vpack.i.b16 %v1183, %v1183
      %v1690 = vperm.slane %v1688, 0
      %v1692 = vpack.i.b16 %v1184, %v1184
      %v1694 = vperm.slane %v1692, 0
      %v1696 = vpack.i.b16 %v1185, %v1185
      %v1698 = vperm.slane %v1696, 0
      %v1700 = vpack.i.b16 %v1186, %v1186
      %v1702 = vperm.slane %v1700, 0
      %v1704 = vpack.i.b16 %v1187, %v1187
      %v1706 = vperm.slane %v1704, 0
      %v1708 = vpack.i.b16 %v1188, %v1188
      %v1710 = vperm.slane %v1708, 0
      %v1712 = vpack.i.b16 %v1189, %v1189
      %v1714 = vperm.slane %v1712, 0
      %v1716 = vpack.i.b16 %v1190, %v1190
      %v1718 = vperm.slane %v1716, 0
      %v1720 = vpack.i.b16 %v1191, %v1191
      %v1722 = vperm.slane %v1720, 0
      %v1724 = vpack.i.b16 %v1192, %v1192
      %v1726 = vperm.slane %v1724, 0
      %v1728 = vpack.i.b16 %v1193, %v1193
      %v1730 = vperm.slane %v1728, 0
      %v1732 = vpack.i.b16 %v1194, %v1194
      %v1734 = vperm.slane %v1732, 0
      %v1736 = vpack.i.b16 %v1195, %v1195
      %v1738 = vperm.slane %v1736, 0
      %v1740 = vpack.i.b16 %v1196, %v1196
      %v1742 = vperm.slane %v1740, 0
      %v1744 = vpack.i.b16 %v1197, %v1197
      %v1746 = vperm.slane %v1744, 0
      %v1748 = vpack.i.b16 %v1198, %v1198
      %v1750 = vperm.slane %v1748, 0
      %v1752 = vpack.i.b16 %v1199, %v1199
      %v1754 = vperm.slane %v1752, 0
      %v1756 = vpack.i.b16 %v1200, %v1200
      %v1758 = vperm.slane %v1756, 0
      %v1760 = vpack.i.b16 %v1201, %v1201
      %v1762 = vperm.slane %v1760, 0
      %v1764 = vpack.i.b16 %v1202, %v1202
      %v1766 = vperm.slane %v1764, 0
      %v1768 = vpack.i.b16 %v1203, %v1203
      %v1770 = vperm.slane %v1768, 0
      %v1772 = vpack.i.b16 %v1204, %v1204
      %v1774 = vperm.slane %v1772, 0
      %v1776 = vpack.i.b16 %v1205, %v1205
      %v1778 = vperm.slane %v1776, 0
      %v1780 = vpack.i.b16 %v1206, %v1206
      %v1782 = vperm.slane %v1780, 0
      %v1784 = vpack.i.b16 %v1207, %v1207
      %v1786 = vperm.slane %v1784, 0
      %v1788 = vpack.i.b16 %v1208, %v1208
      %v1790 = vperm.slane %v1788, 0
      %v1792 = vpack.i.b16 %v1209, %v1209
      %v1794 = vperm.slane %v1792, 0
      %v1796 = vpack.i.b16 %v1210, %v1210
      %v1798 = vperm.slane %v1796, 0
      %v1800 = vpack.i.b16 %v1211, %v1211
      %v1802 = vperm.slane %v1800, 0
      %v1804 = vpack.i.b16 %v1212, %v1212
      %v1806 = vperm.slane %v1804, 0
      %v1808 = vpack.i.b16 %v1213, %v1213
      %v1810 = vperm.slane %v1808, 0
      %v1812 = vpack.i.b16 %v1214, %v1214
      %v1814 = vperm.slane %v1812, 0
      %v1816 = vpack.i.b16 %v1215, %v1215
      %v1818 = vperm.slane %v1816, 0
      %v1820 = vpack.i.b16 %v1216, %v1216
      %v1822 = vperm.slane %v1820, 0
      %v1824 = vpack.i.b16 %v1217, %v1217
      %v1826 = vperm.slane %v1824, 0
      %v1828 = vpack.i.b16 %v1218, %v1218
      %v1830 = vperm.slane %v1828, 0
      %v1832 = vpack.i.b16 %v1219, %v1219
      %v1834 = vperm.slane %v1832, 0
      %v1836 = vpack.i.b16 %v1220, %v1220
      %v1838 = vperm.slane %v1836, 0
      %v1840 = vpack.i.b16 %v1221, %v1221
      %v1842 = vperm.slane %v1840, 0
      %v1844 = vpack.i.b16 %v1222, %v1222
      %v1846 = vperm.slane %v1844, 0
      %v1848 = vpack.i.b16 %v1223, %v1223
      %v1850 = vperm.slane %v1848, 0
      %v1852 = vpack.i.b16 %v1224, %v1224
      %v1854 = vperm.slane %v1852, 0
      %v1856 = vpack.i.b16 %v1225, %v1225
      %v1858 = vperm.slane %v1856, 0
      %v1860 = vpack.i.b16 %v1226, %v1226
      %v1862 = vperm.slane %v1860, 0
      %v1864 = vpack.i.b16 %v1227, %v1227
      %v1866 = vperm.slane %v1864, 0
      %v1868 = vpack.i.b16 %v1228, %v1228
      %v1870 = vperm.slane %v1868, 0
      %v1872 = vpack.i.b16 %v1229, %v1229
      %v1874 = vperm.slane %v1872, 0
      %v1876 = vpack.i.b16 %v1230, %v1230
      %v1878 = vperm.slane %v1876, 0
      %v1880 = vpack.i.b16 %v1231, %v1231
      %v1882 = vperm.slane %v1880, 0
      %v1884 = vpack.i.b16 %v1232, %v1232
      %v1886 = vperm.slane %v1884, 0
      %v1888 = vpack.i.b16 %v1233, %v1233
      %v1890 = vperm.slane %v1888, 0
      %v1892 = vpack.i.b16 %v1234, %v1234
      %v1894 = vperm.slane %v1892, 0
      %v1896 = vpack.i.b16 %v1235, %v1235
      %v1898 = vperm.slane %v1896, 0
      %v1900 = vpack.i.b16 %v1236, %v1236
      %v1902 = vperm.slane %v1900, 0
      %v1904 = vpack.i.b16 %v1237, %v1237
      %v1906 = vperm.slane %v1904, 0
      %v1908 = vpack.i.b16 %v1238, %v1238
      %v1910 = vperm.slane %v1908, 0
      %v1912 = vpack.i.b16 %v1239, %v1239
      %v1914 = vperm.slane %v1912, 0
      %v1916 = vpack.i.b16 %v1240, %v1240
      %v1918 = vperm.slane %v1916, 0
      %v1920 = vpack.i.b16 %v1241, %v1241
      %v1922 = vperm.slane %v1920, 0
      %v1924 = vpack.i.b16 %v1242, %v1242
      %v1926 = vperm.slane %v1924, 0
      %v1928 = vpack.i.b16 %v1243, %v1243
      %v1930 = vperm.slane %v1928, 0
      %v1932 = vpack.i.b16 %v1244, %v1244
      %v1934 = vperm.slane %v1932, 0
      %v1936 = vpack.i.b16 %v1245, %v1245
      %v1938 = vperm.slane %v1936, 0
      %v1940 = vpack.i.b16 %v1246, %v1246
      %v1942 = vperm.slane %v1940, 0
      %v1944 = vpack.i.b16 %v1247, %v1247
      %v1946 = vperm.slane %v1944, 0
      %v1948 = vpack.i.b16 %v1248, %v1248
      %v1950 = vperm.slane %v1948, 0
      %v1952 = vpack.i.b16 %v1249, %v1249
      %v1954 = vperm.slane %v1952, 0
      %v1956 = vpack.i.b16 %v1250, %v1250
      %v1958 = vperm.slane %v1956, 0
      %v1960 = vpack.i.b16 %v1251, %v1251
      %v1962 = vperm.slane %v1960, 0
      %v1964 = vpack.i.b16 %v1252, %v1252
      %v1966 = vperm.slane %v1964, 0
      %v1968 = vpack.i.b16 %v1253, %v1253
      %v1970 = vperm.slane %v1968, 0
      %v1972 = vpack.i.b16 %v1254, %v1254
      %v1974 = vperm.slane %v1972, 0
      %vm1975 = vsmask.f32 256
      %vm1976 = vsmask.f32 1284
      %vm1977 = vmor %vm1975, %vm1976
      %vm1978 = vsmask.f32 2312
      %vm1979 = vmor %vm1977, %vm1978
      %vm1980 = vsmask.f32 3340
      %vm1981 = vmor %vm1979, %vm1980
      %vm1982 = vsmask.f32 4368
      %vm1983 = vmor %vm1981, %vm1982
      %vm1984 = vsmask.f32 5396
      %vm1985 = vmor %vm1983, %vm1984
      %vm1986 = vsmask.f32 6424
      %vm1987 = vmor %vm1985, %vm1986
      %vm1988 = vsmask.f32 7452
      %vm1989 = vmor %vm1987, %vm1988
      %v1991 = vshrl.u32 %v1258, 16
      %v1993 = vrot.slane %v1991, 7
      %v1994 = vrot.slane %v1993, 1
      %v1996 = vshll.u32 %v1262, 16
      %v1998 = vsel %vm1989, %v1994, %v1996
      %v1999 = vshrl.u32 %v1262, 16
      %v2001 = vrot.slane %v1999, 7
      %v2002 = vrot.slane %v2001, 1
      %v2004 = vshll.u32 %v1266, 16
      %v2006 = vsel %vm1989, %v2002, %v2004
      %v2007 = vshrl.u32 %v1266, 16
      %v2009 = vrot.slane %v2007, 7
      %v2010 = vrot.slane %v2009, 1
      %v2012 = vshll.u32 %v1270, 16
      %v2014 = vsel %vm1989, %v2010, %v2012
      %v2015 = vshrl.u32 %v1270, 16
      %v2017 = vrot.slane %v2015, 7
      %v2018 = vrot.slane %v2017, 1
      %v2020 = vshll.u32 %v1274, 16
      %v2022 = vsel %vm1989, %v2018, %v2020
      %v2023 = vshrl.u32 %v1274, 16
      %v2025 = vrot.slane %v2023, 7
      %v2026 = vrot.slane %v2025, 1
      %v2028 = vshll.u32 %v1278, 16
      %v2030 = vsel %vm1989, %v2026, %v2028
      %v2031 = vshrl.u32 %v1278, 16
      %v2033 = vrot.slane %v2031, 7
      %v2034 = vrot.slane %v2033, 1
      %v2036 = vshll.u32 %v1282, 16
      %v2038 = vsel %vm1989, %v2034, %v2036
      %v2039 = vshrl.u32 %v1282, 16
      %v2041 = vrot.slane %v2039, 7
      %v2042 = vrot.slane %v2041, 1
      %v2044 = vshll.u32 %v1286, 16
      %v2046 = vsel %vm1989, %v2042, %v2044
      %v2047 = vshrl.u32 %v1286, 16
      %v2049 = vrot.slane %v2047, 7
      %v2050 = vrot.slane %v2049, 1
      %v2052 = vshll.u32 %v1290, 16
      %v2054 = vsel %vm1989, %v2050, %v2052
      %v2055 = vshrl.u32 %v1290, 16
      %v2057 = vrot.slane %v2055, 7
      %v2058 = vrot.slane %v2057, 1
      %v2060 = vshll.u32 %v1294, 16
      %v2062 = vsel %vm1989, %v2058, %v2060
      %v2063 = vshrl.u32 %v1294, 16
      %v2065 = vrot.slane %v2063, 7
      %v2066 = vrot.slane %v2065, 1
      %v2068 = vshll.u32 %v1298, 16
      %v2070 = vsel %vm1989, %v2066, %v2068
      %v2071 = vshrl.u32 %v1298, 16
      %v2073 = vrot.slane %v2071, 7
      %v2074 = vrot.slane %v2073, 1
      %v2076 = vshll.u32 %v1302, 16
      %v2078 = vsel %vm1989, %v2074, %v2076
      %v2079 = vshrl.u32 %v1302, 16
      %v2081 = vrot.slane %v2079, 7
      %v2082 = vrot.slane %v2081, 1
      %v2084 = vshll.u32 %v1306, 16
      %v2086 = vsel %vm1989, %v2082, %v2084
      %v2087 = vshrl.u32 %v1306, 16
      %v2089 = vrot.slane %v2087, 7
      %v2090 = vrot.slane %v2089, 1
      %v2092 = vshll.u32 %v1310, 16
      %v2094 = vsel %vm1989, %v2090, %v2092
      %v2095 = vshrl.u32 %v1310, 16
      %v2097 = vrot.slane %v2095, 7
      %v2098 = vrot.slane %v2097, 1
      %v2100 = vshll.u32 %v1314, 16
      %v2102 = vsel %vm1989, %v2098, %v2100
      %v2103 = vshrl.u32 %v1314, 16
      %v2105 = vrot.slane %v2103, 7
      %v2106 = vrot.slane %v2105, 1
      %v2108 = vshll.u32 %v1318, 16
      %v2110 = vsel %vm1989, %v2106, %v2108
      %v2111 = vshrl.u32 %v1318, 16
      %v2113 = vrot.slane %v2111, 7
      %v2114 = vrot.slane %v2113, 1
      %v2116 = vshll.u32 %v1322, 16
      %v2118 = vsel %vm1989, %v2114, %v2116
      %v2120 = vshrl.u32 %v1330, 16
      %v2122 = vrot.slane %v2120, 7
      %v2123 = vrot.slane %v2122, 1
      %v2125 = vshll.u32 %v1334, 16
      %v2127 = vsel %vm1989, %v2123, %v2125
      %v2128 = vshrl.u32 %v1334, 16
      %v2130 = vrot.slane %v2128, 7
      %v2131 = vrot.slane %v2130, 1
      %v2133 = vshll.u32 %v1338, 16
      %v2135 = vsel %vm1989, %v2131, %v2133
      %v2136 = vshrl.u32 %v1338, 16
      %v2138 = vrot.slane %v2136, 7
      %v2139 = vrot.slane %v2138, 1
      %v2141 = vshll.u32 %v1342, 16
      %v2143 = vsel %vm1989, %v2139, %v2141
      %v2144 = vshrl.u32 %v1342, 16
      %v2146 = vrot.slane %v2144, 7
      %v2147 = vrot.slane %v2146, 1
      %v2149 = vshll.u32 %v1346, 16
      %v2151 = vsel %vm1989, %v2147, %v2149
      %v2152 = vshrl.u32 %v1346, 16
      %v2154 = vrot.slane %v2152, 7
      %v2155 = vrot.slane %v2154, 1
      %v2157 = vshll.u32 %v1350, 16
      %v2159 = vsel %vm1989, %v2155, %v2157
      %v2160 = vshrl.u32 %v1350, 16
      %v2162 = vrot.slane %v2160, 7
      %v2163 = vrot.slane %v2162, 1
      %v2165 = vshll.u32 %v1354, 16
      %v2167 = vsel %vm1989, %v2163, %v2165
      %v2168 = vshrl.u32 %v1354, 16
      %v2170 = vrot.slane %v2168, 7
      %v2171 = vrot.slane %v2170, 1
      %v2173 = vshll.u32 %v1358, 16
      %v2175 = vsel %vm1989, %v2171, %v2173
      %v2176 = vshrl.u32 %v1358, 16
      %v2178 = vrot.slane %v2176, 7
      %v2179 = vrot.slane %v2178, 1
      %v2181 = vshll.u32 %v1362, 16
      %v2183 = vsel %vm1989, %v2179, %v2181
      %v2184 = vshrl.u32 %v1362, 16
      %v2186 = vrot.slane %v2184, 7
      %v2187 = vrot.slane %v2186, 1
      %v2189 = vshll.u32 %v1366, 16
      %v2191 = vsel %vm1989, %v2187, %v2189
      %v2192 = vshrl.u32 %v1366, 16
      %v2194 = vrot.slane %v2192, 7
      %v2195 = vrot.slane %v2194, 1
      %v2197 = vshll.u32 %v1370, 16
      %v2199 = vsel %vm1989, %v2195, %v2197
      %v2200 = vshrl.u32 %v1370, 16
      %v2202 = vrot.slane %v2200, 7
      %v2203 = vrot.slane %v2202, 1
      %v2205 = vshll.u32 %v1374, 16
      %v2207 = vsel %vm1989, %v2203, %v2205
      %v2208 = vshrl.u32 %v1374, 16
      %v2210 = vrot.slane %v2208, 7
      %v2211 = vrot.slane %v2210, 1
      %v2213 = vshll.u32 %v1378, 16
      %v2215 = vsel %vm1989, %v2211, %v2213
      %v2216 = vshrl.u32 %v1378, 16
      %v2218 = vrot.slane %v2216, 7
      %v2219 = vrot.slane %v2218, 1
      %v2221 = vshll.u32 %v1382, 16
      %v2223 = vsel %vm1989, %v2219, %v2221
      %v2224 = vshrl.u32 %v1382, 16
      %v2226 = vrot.slane %v2224, 7
      %v2227 = vrot.slane %v2226, 1
      %v2229 = vshll.u32 %v1386, 16
      %v2231 = vsel %vm1989, %v2227, %v2229
      %v2232 = vshrl.u32 %v1386, 16
      %v2234 = vrot.slane %v2232, 7
      %v2235 = vrot.slane %v2234, 1
      %v2237 = vshll.u32 %v1390, 16
      %v2239 = vsel %vm1989, %v2235, %v2237
      %v2240 = vshrl.u32 %v1390, 16
      %v2242 = vrot.slane %v2240, 7
      %v2243 = vrot.slane %v2242, 1
      %v2245 = vshll.u32 %v1394, 16
      %v2247 = vsel %vm1989, %v2243, %v2245
      %v2249 = vshrl.u32 %v1402, 16
      %v2251 = vrot.slane %v2249, 7
      %v2252 = vrot.slane %v2251, 1
      %v2254 = vshll.u32 %v1406, 16
      %v2256 = vsel %vm1989, %v2252, %v2254
      %v2257 = vshrl.u32 %v1406, 16
      %v2259 = vrot.slane %v2257, 7
      %v2260 = vrot.slane %v2259, 1
      %v2262 = vshll.u32 %v1410, 16
      %v2264 = vsel %vm1989, %v2260, %v2262
      %v2265 = vshrl.u32 %v1410, 16
      %v2267 = vrot.slane %v2265, 7
      %v2268 = vrot.slane %v2267, 1
      %v2270 = vshll.u32 %v1414, 16
      %v2272 = vsel %vm1989, %v2268, %v2270
      %v2273 = vshrl.u32 %v1414, 16
      %v2275 = vrot.slane %v2273, 7
      %v2276 = vrot.slane %v2275, 1
      %v2278 = vshll.u32 %v1418, 16
      %v2280 = vsel %vm1989, %v2276, %v2278
      %v2281 = vshrl.u32 %v1418, 16
      %v2283 = vrot.slane %v2281, 7
      %v2284 = vrot.slane %v2283, 1
      %v2286 = vshll.u32 %v1422, 16
      %v2288 = vsel %vm1989, %v2284, %v2286
      %v2289 = vshrl.u32 %v1422, 16
      %v2291 = vrot.slane %v2289, 7
      %v2292 = vrot.slane %v2291, 1
      %v2294 = vshll.u32 %v1426, 16
      %v2296 = vsel %vm1989, %v2292, %v2294
      %v2297 = vshrl.u32 %v1426, 16
      %v2299 = vrot.slane %v2297, 7
      %v2300 = vrot.slane %v2299, 1
      %v2302 = vshll.u32 %v1430, 16
      %v2304 = vsel %vm1989, %v2300, %v2302
      %v2305 = vshrl.u32 %v1430, 16
      %v2307 = vrot.slane %v2305, 7
      %v2308 = vrot.slane %v2307, 1
      %v2310 = vshll.u32 %v1434, 16
      %v2312 = vsel %vm1989, %v2308, %v2310
      %v2313 = vshrl.u32 %v1434, 16
      %v2315 = vrot.slane %v2313, 7
      %v2316 = vrot.slane %v2315, 1
      %v2318 = vshll.u32 %v1438, 16
      %v2320 = vsel %vm1989, %v2316, %v2318
      %v2321 = vshrl.u32 %v1438, 16
      %v2323 = vrot.slane %v2321, 7
      %v2324 = vrot.slane %v2323, 1
      %v2326 = vshll.u32 %v1442, 16
      %v2328 = vsel %vm1989, %v2324, %v2326
      %v2329 = vshrl.u32 %v1442, 16
      %v2331 = vrot.slane %v2329, 7
      %v2332 = vrot.slane %v2331, 1
      %v2334 = vshll.u32 %v1446, 16
      %v2336 = vsel %vm1989, %v2332, %v2334
      %v2337 = vshrl.u32 %v1446, 16
      %v2339 = vrot.slane %v2337, 7
      %v2340 = vrot.slane %v2339, 1
      %v2342 = vshll.u32 %v1450, 16
      %v2344 = vsel %vm1989, %v2340, %v2342
      %v2345 = vshrl.u32 %v1450, 16
      %v2347 = vrot.slane %v2345, 7
      %v2348 = vrot.slane %v2347, 1
      %v2350 = vshll.u32 %v1454, 16
      %v2352 = vsel %vm1989, %v2348, %v2350
      %v2353 = vshrl.u32 %v1454, 16
      %v2355 = vrot.slane %v2353, 7
      %v2356 = vrot.slane %v2355, 1
      %v2358 = vshll.u32 %v1458, 16
      %v2360 = vsel %vm1989, %v2356, %v2358
      %v2361 = vshrl.u32 %v1458, 16
      %v2363 = vrot.slane %v2361, 7
      %v2364 = vrot.slane %v2363, 1
      %v2366 = vshll.u32 %v1462, 16
      %v2368 = vsel %vm1989, %v2364, %v2366
      %v2369 = vshrl.u32 %v1462, 16
      %v2371 = vrot.slane %v2369, 7
      %v2372 = vrot.slane %v2371, 1
      %v2374 = vshll.u32 %v1466, 16
      %v2376 = vsel %vm1989, %v2372, %v2374
      %v2378 = vshrl.u32 %v1474, 16
      %v2380 = vrot.slane %v2378, 7
      %v2381 = vrot.slane %v2380, 1
      %v2383 = vshll.u32 %v1478, 16
      %v2385 = vsel %vm1989, %v2381, %v2383
      %v2386 = vshrl.u32 %v1478, 16
      %v2388 = vrot.slane %v2386, 7
      %v2389 = vrot.slane %v2388, 1
      %v2391 = vshll.u32 %v1482, 16
      %v2393 = vsel %vm1989, %v2389, %v2391
      %v2394 = vshrl.u32 %v1482, 16
      %v2396 = vrot.slane %v2394, 7
      %v2397 = vrot.slane %v2396, 1
      %v2399 = vshll.u32 %v1486, 16
      %v2401 = vsel %vm1989, %v2397, %v2399
      %v2402 = vshrl.u32 %v1486, 16
      %v2404 = vrot.slane %v2402, 7
      %v2405 = vrot.slane %v2404, 1
      %v2407 = vshll.u32 %v1490, 16
      %v2409 = vsel %vm1989, %v2405, %v2407
      %v2410 = vshrl.u32 %v1490, 16
      %v2412 = vrot.slane %v2410, 7
      %v2413 = vrot.slane %v2412, 1
      %v2415 = vshll.u32 %v1494, 16
      %v2417 = vsel %vm1989, %v2413, %v2415
      %v2418 = vshrl.u32 %v1494, 16
      %v2420 = vrot.slane %v2418, 7
      %v2421 = vrot.slane %v2420, 1
      %v2423 = vshll.u32 %v1498, 16
      %v2425 = vsel %vm1989, %v2421, %v2423
      %v2426 = vshrl.u32 %v1498, 16
      %v2428 = vrot.slane %v2426, 7
      %v2429 = vrot.slane %v2428, 1
      %v2431 = vshll.u32 %v1502, 16
      %v2433 = vsel %vm1989, %v2429, %v2431
      %v2434 = vshrl.u32 %v1502, 16
      %v2436 = vrot.slane %v2434, 7
      %v2437 = vrot.slane %v2436, 1
      %v2439 = vshll.u32 %v1506, 16
      %v2441 = vsel %vm1989, %v2437, %v2439
      %v2442 = vshrl.u32 %v1506, 16
      %v2444 = vrot.slane %v2442, 7
      %v2445 = vrot.slane %v2444, 1
      %v2447 = vshll.u32 %v1510, 16
      %v2449 = vsel %vm1989, %v2445, %v2447
      %v2450 = vshrl.u32 %v1510, 16
      %v2452 = vrot.slane %v2450, 7
      %v2453 = vrot.slane %v2452, 1
      %v2455 = vshll.u32 %v1514, 16
      %v2457 = vsel %vm1989, %v2453, %v2455
      %v2458 = vshrl.u32 %v1514, 16
      %v2460 = vrot.slane %v2458, 7
      %v2461 = vrot.slane %v2460, 1
      %v2463 = vshll.u32 %v1518, 16
      %v2465 = vsel %vm1989, %v2461, %v2463
      %v2466 = vshrl.u32 %v1518, 16
      %v2468 = vrot.slane %v2466, 7
      %v2469 = vrot.slane %v2468, 1
      %v2471 = vshll.u32 %v1522, 16
      %v2473 = vsel %vm1989, %v2469, %v2471
      %v2474 = vshrl.u32 %v1522, 16
      %v2476 = vrot.slane %v2474, 7
      %v2477 = vrot.slane %v2476, 1
      %v2479 = vshll.u32 %v1526, 16
      %v2481 = vsel %vm1989, %v2477, %v2479
      %v2482 = vshrl.u32 %v1526, 16
      %v2484 = vrot.slane %v2482, 7
      %v2485 = vrot.slane %v2484, 1
      %v2487 = vshll.u32 %v1530, 16
      %v2489 = vsel %vm1989, %v2485, %v2487
      %v2490 = vshrl.u32 %v1530, 16
      %v2492 = vrot.slane %v2490, 7
      %v2493 = vrot.slane %v2492, 1
      %v2495 = vshll.u32 %v1534, 16
      %v2497 = vsel %vm1989, %v2493, %v2495
      %v2498 = vshrl.u32 %v1534, 16
      %v2500 = vrot.slane %v2498, 7
      %v2501 = vrot.slane %v2500, 1
      %v2503 = vshll.u32 %v1538, 16
      %v2505 = vsel %vm1989, %v2501, %v2503
      %v2507 = vshrl.u32 %v1546, 16
      %v2509 = vrot.slane %v2507, 7
      %v2510 = vrot.slane %v2509, 1
      %v2512 = vshll.u32 %v1550, 16
      %v2514 = vsel %vm1989, %v2510, %v2512
      %v2515 = vshrl.u32 %v1550, 16
      %v2517 = vrot.slane %v2515, 7
      %v2518 = vrot.slane %v2517, 1
      %v2520 = vshll.u32 %v1554, 16
      %v2522 = vsel %vm1989, %v2518, %v2520
      %v2523 = vshrl.u32 %v1554, 16
      %v2525 = vrot.slane %v2523, 7
      %v2526 = vrot.slane %v2525, 1
      %v2528 = vshll.u32 %v1558, 16
      %v2530 = vsel %vm1989, %v2526, %v2528
      %v2531 = vshrl.u32 %v1558, 16
      %v2533 = vrot.slane %v2531, 7
      %v2534 = vrot.slane %v2533, 1
      %v2536 = vshll.u32 %v1562, 16
      %v2538 = vsel %vm1989, %v2534, %v2536
      %v2539 = vshrl.u32 %v1562, 16
      %v2541 = vrot.slane %v2539, 7
      %v2542 = vrot.slane %v2541, 1
      %v2544 = vshll.u32 %v1566, 16
      %v2546 = vsel %vm1989, %v2542, %v2544
      %v2547 = vshrl.u32 %v1566, 16
      %v2549 = vrot.slane %v2547, 7
      %v2550 = vrot.slane %v2549, 1
      %v2552 = vshll.u32 %v1570, 16
      %v2554 = vsel %vm1989, %v2550, %v2552
      %v2555 = vshrl.u32 %v1570, 16
      %v2557 = vrot.slane %v2555, 7
      %v2558 = vrot.slane %v2557, 1
      %v2560 = vshll.u32 %v1574, 16
      %v2562 = vsel %vm1989, %v2558, %v2560
      %v2563 = vshrl.u32 %v1574, 16
      %v2565 = vrot.slane %v2563, 7
      %v2566 = vrot.slane %v2565, 1
      %v2568 = vshll.u32 %v1578, 16
      %v2570 = vsel %vm1989, %v2566, %v2568
      %v2571 = vshrl.u32 %v1578, 16
      %v2573 = vrot.slane %v2571, 7
      %v2574 = vrot.slane %v2573, 1
      %v2576 = vshll.u32 %v1582, 16
      %v2578 = vsel %vm1989, %v2574, %v2576
      %v2579 = vshrl.u32 %v1582, 16
      %v2581 = vrot.slane %v2579, 7
      %v2582 = vrot.slane %v2581, 1
      %v2584 = vshll.u32 %v1586, 16
      %v2586 = vsel %vm1989, %v2582, %v2584
      %v2587 = vshrl.u32 %v1586, 16
      %v2589 = vrot.slane %v2587, 7
      %v2590 = vrot.slane %v2589, 1
      %v2592 = vshll.u32 %v1590, 16
      %v2594 = vsel %vm1989, %v2590, %v2592
      %v2595 = vshrl.u32 %v1590, 16
      %v2597 = vrot.slane %v2595, 7
      %v2598 = vrot.slane %v2597, 1
      %v2600 = vshll.u32 %v1594, 16
      %v2602 = vsel %vm1989, %v2598, %v2600
      %v2603 = vshrl.u32 %v1594, 16
      %v2605 = vrot.slane %v2603, 7
      %v2606 = vrot.slane %v2605, 1
      %v2608 = vshll.u32 %v1598, 16
      %v2610 = vsel %vm1989, %v2606, %v2608
      %v2611 = vshrl.u32 %v1598, 16
      %v2613 = vrot.slane %v2611, 7
      %v2614 = vrot.slane %v2613, 1
      %v2616 = vshll.u32 %v1602, 16
      %v2618 = vsel %vm1989, %v2614, %v2616
      %v2619 = vshrl.u32 %v1602, 16
      %v2621 = vrot.slane %v2619, 7
      %v2622 = vrot.slane %v2621, 1
      %v2624 = vshll.u32 %v1606, 16
      %v2626 = vsel %vm1989, %v2622, %v2624
      %v2627 = vshrl.u32 %v1606, 16
      %v2629 = vrot.slane %v2627, 7
      %v2630 = vrot.slane %v2629, 1
      %v2632 = vshll.u32 %v1610, 16
      %v2634 = vsel %vm1989, %v2630, %v2632
      %v2636 = vshrl.u32 %v1618, 16
      %v2638 = vrot.slane %v2636, 7
      %v2639 = vrot.slane %v2638, 1
      %v2641 = vshll.u32 %v1622, 16
      %v2643 = vsel %vm1989, %v2639, %v2641
      %v2644 = vshrl.u32 %v1622, 16
      %v2646 = vrot.slane %v2644, 7
      %v2647 = vrot.slane %v2646, 1
      %v2649 = vshll.u32 %v1626, 16
      %v2651 = vsel %vm1989, %v2647, %v2649
      %v2652 = vshrl.u32 %v1626, 16
      %v2654 = vrot.slane %v2652, 7
      %v2655 = vrot.slane %v2654, 1
      %v2657 = vshll.u32 %v1630, 16
      %v2659 = vsel %vm1989, %v2655, %v2657
      %v2660 = vshrl.u32 %v1630, 16
      %v2662 = vrot.slane %v2660, 7
      %v2663 = vrot.slane %v2662, 1
      %v2665 = vshll.u32 %v1634, 16
      %v2667 = vsel %vm1989, %v2663, %v2665
      %v2668 = vshrl.u32 %v1634, 16
      %v2670 = vrot.slane %v2668, 7
      %v2671 = vrot.slane %v2670, 1
      %v2673 = vshll.u32 %v1638, 16
      %v2675 = vsel %vm1989, %v2671, %v2673
      %v2676 = vshrl.u32 %v1638, 16
      %v2678 = vrot.slane %v2676, 7
      %v2679 = vrot.slane %v2678, 1
      %v2681 = vshll.u32 %v1642, 16
      %v2683 = vsel %vm1989, %v2679, %v2681
      %v2684 = vshrl.u32 %v1642, 16
      %v2686 = vrot.slane %v2684, 7
      %v2687 = vrot.slane %v2686, 1
      %v2689 = vshll.u32 %v1646, 16
      %v2691 = vsel %vm1989, %v2687, %v2689
      %v2692 = vshrl.u32 %v1646, 16
      %v2694 = vrot.slane %v2692, 7
      %v2695 = vrot.slane %v2694, 1
      %v2697 = vshll.u32 %v1650, 16
      %v2699 = vsel %vm1989, %v2695, %v2697
      %v2700 = vshrl.u32 %v1650, 16
      %v2702 = vrot.slane %v2700, 7
      %v2703 = vrot.slane %v2702, 1
      %v2705 = vshll.u32 %v1654, 16
      %v2707 = vsel %vm1989, %v2703, %v2705
      %v2708 = vshrl.u32 %v1654, 16
      %v2710 = vrot.slane %v2708, 7
      %v2711 = vrot.slane %v2710, 1
      %v2713 = vshll.u32 %v1658, 16
      %v2715 = vsel %vm1989, %v2711, %v2713
      %v2716 = vshrl.u32 %v1658, 16
      %v2718 = vrot.slane %v2716, 7
      %v2719 = vrot.slane %v2718, 1
      %v2721 = vshll.u32 %v1662, 16
      %v2723 = vsel %vm1989, %v2719, %v2721
      %v2724 = vshrl.u32 %v1662, 16
      %v2726 = vrot.slane %v2724, 7
      %v2727 = vrot.slane %v2726, 1
      %v2729 = vshll.u32 %v1666, 16
      %v2731 = vsel %vm1989, %v2727, %v2729
      %v2732 = vshrl.u32 %v1666, 16
      %v2734 = vrot.slane %v2732, 7
      %v2735 = vrot.slane %v2734, 1
      %v2737 = vshll.u32 %v1670, 16
      %v2739 = vsel %vm1989, %v2735, %v2737
      %v2740 = vshrl.u32 %v1670, 16
      %v2742 = vrot.slane %v2740, 7
      %v2743 = vrot.slane %v2742, 1
      %v2745 = vshll.u32 %v1674, 16
      %v2747 = vsel %vm1989, %v2743, %v2745
      %v2748 = vshrl.u32 %v1674, 16
      %v2750 = vrot.slane %v2748, 7
      %v2751 = vrot.slane %v2750, 1
      %v2753 = vshll.u32 %v1678, 16
      %v2755 = vsel %vm1989, %v2751, %v2753
      %v2756 = vshrl.u32 %v1678, 16
      %v2758 = vrot.slane %v2756, 7
      %v2759 = vrot.slane %v2758, 1
      %v2761 = vshll.u32 %v1682, 16
      %v2763 = vsel %vm1989, %v2759, %v2761
      %v2765 = vshrl.u32 %v1690, 16
      %v2767 = vrot.slane %v2765, 7
      %v2768 = vrot.slane %v2767, 1
      %v2770 = vshll.u32 %v1694, 16
      %v2772 = vsel %vm1989, %v2768, %v2770
      %v2773 = vshrl.u32 %v1694, 16
      %v2775 = vrot.slane %v2773, 7
      %v2776 = vrot.slane %v2775, 1
      %v2778 = vshll.u32 %v1698, 16
      %v2780 = vsel %vm1989, %v2776, %v2778
      %v2781 = vshrl.u32 %v1698, 16
      %v2783 = vrot.slane %v2781, 7
      %v2784 = vrot.slane %v2783, 1
      %v2786 = vshll.u32 %v1702, 16
      %v2788 = vsel %vm1989, %v2784, %v2786
      %v2789 = vshrl.u32 %v1702, 16
      %v2791 = vrot.slane %v2789, 7
      %v2792 = vrot.slane %v2791, 1
      %v2794 = vshll.u32 %v1706, 16
      %v2796 = vsel %vm1989, %v2792, %v2794
      %v2797 = vshrl.u32 %v1706, 16
      %v2799 = vrot.slane %v2797, 7
      %v2800 = vrot.slane %v2799, 1
      %v2802 = vshll.u32 %v1710, 16
      %v2804 = vsel %vm1989, %v2800, %v2802
      %v2805 = vshrl.u32 %v1710, 16
      %v2807 = vrot.slane %v2805, 7
      %v2808 = vrot.slane %v2807, 1
      %v2810 = vshll.u32 %v1714, 16
      %v2812 = vsel %vm1989, %v2808, %v2810
      %v2813 = vshrl.u32 %v1714, 16
      %v2815 = vrot.slane %v2813, 7
      %v2816 = vrot.slane %v2815, 1
      %v2818 = vshll.u32 %v1718, 16
      %v2820 = vsel %vm1989, %v2816, %v2818
      %v2821 = vshrl.u32 %v1718, 16
      %v2823 = vrot.slane %v2821, 7
      %v2824 = vrot.slane %v2823, 1
      %v2826 = vshll.u32 %v1722, 16
      %v2828 = vsel %vm1989, %v2824, %v2826
      %v2829 = vshrl.u32 %v1722, 16
      %v2831 = vrot.slane %v2829, 7
      %v2832 = vrot.slane %v2831, 1
      %v2834 = vshll.u32 %v1726, 16
      %v2836 = vsel %vm1989, %v2832, %v2834
      %v2837 = vshrl.u32 %v1726, 16
      %v2839 = vrot.slane %v2837, 7
      %v2840 = vrot.slane %v2839, 1
      %v2842 = vshll.u32 %v1730, 16
      %v2844 = vsel %vm1989, %v2840, %v2842
      %v2845 = vshrl.u32 %v1730, 16
      %v2847 = vrot.slane %v2845, 7
      %v2848 = vrot.slane %v2847, 1
      %v2850 = vshll.u32 %v1734, 16
      %v2852 = vsel %vm1989, %v2848, %v2850
      %v2853 = vshrl.u32 %v1734, 16
      %v2855 = vrot.slane %v2853, 7
      %v2856 = vrot.slane %v2855, 1
      %v2858 = vshll.u32 %v1738, 16
      %v2860 = vsel %vm1989, %v2856, %v2858
      %v2861 = vshrl.u32 %v1738, 16
      %v2863 = vrot.slane %v2861, 7
      %v2864 = vrot.slane %v2863, 1
      %v2866 = vshll.u32 %v1742, 16
      %v2868 = vsel %vm1989, %v2864, %v2866
      %v2869 = vshrl.u32 %v1742, 16
      %v2871 = vrot.slane %v2869, 7
      %v2872 = vrot.slane %v2871, 1
      %v2874 = vshll.u32 %v1746, 16
      %v2876 = vsel %vm1989, %v2872, %v2874
      %v2877 = vshrl.u32 %v1746, 16
      %v2879 = vrot.slane %v2877, 7
      %v2880 = vrot.slane %v2879, 1
      %v2882 = vshll.u32 %v1750, 16
      %v2884 = vsel %vm1989, %v2880, %v2882
      %v2885 = vshrl.u32 %v1750, 16
      %v2887 = vrot.slane %v2885, 7
      %v2888 = vrot.slane %v2887, 1
      %v2890 = vshll.u32 %v1754, 16
      %v2892 = vsel %vm1989, %v2888, %v2890
      %v2894 = vshrl.u32 %v1762, 16
      %v2896 = vrot.slane %v2894, 7
      %v2897 = vrot.slane %v2896, 1
      %v2899 = vshll.u32 %v1766, 16
      %v2901 = vsel %vm1989, %v2897, %v2899
      %v2902 = vshrl.u32 %v1766, 16
      %v2904 = vrot.slane %v2902, 7
      %v2905 = vrot.slane %v2904, 1
      %v2907 = vshll.u32 %v1770, 16
      %v2909 = vsel %vm1989, %v2905, %v2907
      %v2910 = vshrl.u32 %v1770, 16
      %v2912 = vrot.slane %v2910, 7
      %v2913 = vrot.slane %v2912, 1
      %v2915 = vshll.u32 %v1774, 16
      %v2917 = vsel %vm1989, %v2913, %v2915
      %v2918 = vshrl.u32 %v1774, 16
      %v2920 = vrot.slane %v2918, 7
      %v2921 = vrot.slane %v2920, 1
      %v2923 = vshll.u32 %v1778, 16
      %v2925 = vsel %vm1989, %v2921, %v2923
      %v2926 = vshrl.u32 %v1778, 16
      %v2928 = vrot.slane %v2926, 7
      %v2929 = vrot.slane %v2928, 1
      %v2931 = vshll.u32 %v1782, 16
      %v2933 = vsel %vm1989, %v2929, %v2931
      %v2934 = vshrl.u32 %v1782, 16
      %v2936 = vrot.slane %v2934, 7
      %v2937 = vrot.slane %v2936, 1
      %v2939 = vshll.u32 %v1786, 16
      %v2941 = vsel %vm1989, %v2937, %v2939
      %v2942 = vshrl.u32 %v1786, 16
      %v2944 = vrot.slane %v2942, 7
      %v2945 = vrot.slane %v2944, 1
      %v2947 = vshll.u32 %v1790, 16
      %v2949 = vsel %vm1989, %v2945, %v2947
      %v2950 = vshrl.u32 %v1790, 16
      %v2952 = vrot.slane %v2950, 7
      %v2953 = vrot.slane %v2952, 1
      %v2955 = vshll.u32 %v1794, 16
      %v2957 = vsel %vm1989, %v2953, %v2955
      %v2958 = vshrl.u32 %v1794, 16
      %v2960 = vrot.slane %v2958, 7
      %v2961 = vrot.slane %v2960, 1
      %v2963 = vshll.u32 %v1798, 16
      %v2965 = vsel %vm1989, %v2961, %v2963
      %v2966 = vshrl.u32 %v1798, 16
      %v2968 = vrot.slane %v2966, 7
      %v2969 = vrot.slane %v2968, 1
      %v2971 = vshll.u32 %v1802, 16
      %v2973 = vsel %vm1989, %v2969, %v2971
      %v2974 = vshrl.u32 %v1802, 16
      %v2976 = vrot.slane %v2974, 7
      %v2977 = vrot.slane %v2976, 1
      %v2979 = vshll.u32 %v1806, 16
      %v2981 = vsel %vm1989, %v2977, %v2979
      %v2982 = vshrl.u32 %v1806, 16
      %v2984 = vrot.slane %v2982, 7
      %v2985 = vrot.slane %v2984, 1
      %v2987 = vshll.u32 %v1810, 16
      %v2989 = vsel %vm1989, %v2985, %v2987
      %v2990 = vshrl.u32 %v1810, 16
      %v2992 = vrot.slane %v2990, 7
      %v2993 = vrot.slane %v2992, 1
      %v2995 = vshll.u32 %v1814, 16
      %v2997 = vsel %vm1989, %v2993, %v2995
      %v2998 = vshrl.u32 %v1814, 16
      %v3000 = vrot.slane %v2998, 7
      %v3001 = vrot.slane %v3000, 1
      %v3003 = vshll.u32 %v1818, 16
      %v3005 = vsel %vm1989, %v3001, %v3003
      %v3006 = vshrl.u32 %v1818, 16
      %v3008 = vrot.slane %v3006, 7
      %v3009 = vrot.slane %v3008, 1
      %v3011 = vshll.u32 %v1822, 16
      %v3013 = vsel %vm1989, %v3009, %v3011
      %v3014 = vshrl.u32 %v1822, 16
      %v3016 = vrot.slane %v3014, 7
      %v3017 = vrot.slane %v3016, 1
      %v3019 = vshll.u32 %v1826, 16
      %v3021 = vsel %vm1989, %v3017, %v3019
      %v3023 = vshrl.u32 %v1834, 16
      %v3025 = vrot.slane %v3023, 7
      %v3026 = vrot.slane %v3025, 1
      %v3028 = vshll.u32 %v1838, 16
      %v3030 = vsel %vm1989, %v3026, %v3028
      %v3031 = vshrl.u32 %v1838, 16
      %v3033 = vrot.slane %v3031, 7
      %v3034 = vrot.slane %v3033, 1
      %v3036 = vshll.u32 %v1842, 16
      %v3038 = vsel %vm1989, %v3034, %v3036
      %v3039 = vshrl.u32 %v1842, 16
      %v3041 = vrot.slane %v3039, 7
      %v3042 = vrot.slane %v3041, 1
      %v3044 = vshll.u32 %v1846, 16
      %v3046 = vsel %vm1989, %v3042, %v3044
      %v3047 = vshrl.u32 %v1846, 16
      %v3049 = vrot.slane %v3047, 7
      %v3050 = vrot.slane %v3049, 1
      %v3052 = vshll.u32 %v1850, 16
      %v3054 = vsel %vm1989, %v3050, %v3052
      %v3055 = vshrl.u32 %v1850, 16
      %v3057 = vrot.slane %v3055, 7
      %v3058 = vrot.slane %v3057, 1
      %v3060 = vshll.u32 %v1854, 16
      %v3062 = vsel %vm1989, %v3058, %v3060
      %v3063 = vshrl.u32 %v1854, 16
      %v3065 = vrot.slane %v3063, 7
      %v3066 = vrot.slane %v3065, 1
      %v3068 = vshll.u32 %v1858, 16
      %v3070 = vsel %vm1989, %v3066, %v3068
      %v3071 = vshrl.u32 %v1858, 16
      %v3073 = vrot.slane %v3071, 7
      %v3074 = vrot.slane %v3073, 1
      %v3076 = vshll.u32 %v1862, 16
      %v3078 = vsel %vm1989, %v3074, %v3076
      %v3079 = vshrl.u32 %v1862, 16
      %v3081 = vrot.slane %v3079, 7
      %v3082 = vrot.slane %v3081, 1
      %v3084 = vshll.u32 %v1866, 16
      %v3086 = vsel %vm1989, %v3082, %v3084
      %v3087 = vshrl.u32 %v1866, 16
      %v3089 = vrot.slane %v3087, 7
      %v3090 = vrot.slane %v3089, 1
      %v3092 = vshll.u32 %v1870, 16
      %v3094 = vsel %vm1989, %v3090, %v3092
      %v3095 = vshrl.u32 %v1870, 16
      %v3097 = vrot.slane %v3095, 7
      %v3098 = vrot.slane %v3097, 1
      %v3100 = vshll.u32 %v1874, 16
      %v3102 = vsel %vm1989, %v3098, %v3100
      %v3103 = vshrl.u32 %v1874, 16
      %v3105 = vrot.slane %v3103, 7
      %v3106 = vrot.slane %v3105, 1
      %v3108 = vshll.u32 %v1878, 16
      %v3110 = vsel %vm1989, %v3106, %v3108
      %v3111 = vshrl.u32 %v1878, 16
      %v3113 = vrot.slane %v3111, 7
      %v3114 = vrot.slane %v3113, 1
      %v3116 = vshll.u32 %v1882, 16
      %v3118 = vsel %vm1989, %v3114, %v3116
      %v3119 = vshrl.u32 %v1882, 16
      %v3121 = vrot.slane %v3119, 7
      %v3122 = vrot.slane %v3121, 1
      %v3124 = vshll.u32 %v1886, 16
      %v3126 = vsel %vm1989, %v3122, %v3124
      %v3127 = vshrl.u32 %v1886, 16
      %v3129 = vrot.slane %v3127, 7
      %v3130 = vrot.slane %v3129, 1
      %v3132 = vshll.u32 %v1890, 16
      %v3134 = vsel %vm1989, %v3130, %v3132
      %v3135 = vshrl.u32 %v1890, 16
      %v3137 = vrot.slane %v3135, 7
      %v3138 = vrot.slane %v3137, 1
      %v3140 = vshll.u32 %v1894, 16
      %v3142 = vsel %vm1989, %v3138, %v3140
      %v3143 = vshrl.u32 %v1894, 16
      %v3145 = vrot.slane %v3143, 7
      %v3146 = vrot.slane %v3145, 1
      %v3148 = vshll.u32 %v1898, 16
      %v3150 = vsel %vm1989, %v3146, %v3148
      %v3151 = vshrl.u32 %v1322, 16
      %v3153 = vrot.slane %v3151, 7
      %v3154 = vrot.slane %v3153, 1
      %v3156 = vshll.u32 %v1326, 16
      %v3158 = vsel %vm1989, %v3154, %v3156
      %v3159 = vshrl.u32 %v1394, 16
      %v3161 = vrot.slane %v3159, 7
      %v3162 = vrot.slane %v3161, 1
      %v3164 = vshll.u32 %v1398, 16
      %v3166 = vsel %vm1989, %v3162, %v3164
      %v3167 = vshrl.u32 %v1466, 16
      %v3169 = vrot.slane %v3167, 7
      %v3170 = vrot.slane %v3169, 1
      %v3172 = vshll.u32 %v1470, 16
      %v3174 = vsel %vm1989, %v3170, %v3172
      %v3175 = vshrl.u32 %v1538, 16
      %v3177 = vrot.slane %v3175, 7
      %v3178 = vrot.slane %v3177, 1
      %v3180 = vshll.u32 %v1542, 16
      %v3182 = vsel %vm1989, %v3178, %v3180
      %v3183 = vshrl.u32 %v1610, 16
      %v3185 = vrot.slane %v3183, 7
      %v3186 = vrot.slane %v3185, 1
      %v3188 = vshll.u32 %v1614, 16
      %v3190 = vsel %vm1989, %v3186, %v3188
      %v3191 = vshrl.u32 %v1682, 16
      %v3193 = vrot.slane %v3191, 7
      %v3194 = vrot.slane %v3193, 1
      %v3196 = vshll.u32 %v1686, 16
      %v3198 = vsel %vm1989, %v3194, %v3196
      %v3199 = vshrl.u32 %v1754, 16
      %v3201 = vrot.slane %v3199, 7
      %v3202 = vrot.slane %v3201, 1
      %v3204 = vshll.u32 %v1758, 16
      %v3206 = vsel %vm1989, %v3202, %v3204
      %v3207 = vshrl.u32 %v1826, 16
      %v3209 = vrot.slane %v3207, 7
      %v3210 = vrot.slane %v3209, 1
      %v3212 = vshll.u32 %v1830, 16
      %v3214 = vsel %vm1989, %v3210, %v3212
      %v3215 = vshrl.u32 %v1898, 16
      %v3217 = vrot.slane %v3215, 7
      %v3218 = vrot.slane %v3217, 1
      %v3220 = vshll.u32 %v1902, 16
      %v3222 = vsel %vm1989, %v3218, %v3220
      %v3224 = vshrl.u32 %v1906, 16
      %v3226 = vrot.slane %v3224, 7
      %v3227 = vrot.slane %v3226, 1
      %v3229 = vshll.u32 %v1910, 16
      %v3231 = vsel %vm1989, %v3227, %v3229
      %v3232 = vshrl.u32 %v1910, 16
      %v3234 = vrot.slane %v3232, 7
      %v3235 = vrot.slane %v3234, 1
      %v3237 = vshll.u32 %v1914, 16
      %v3239 = vsel %vm1989, %v3235, %v3237
      %v3240 = vshrl.u32 %v1914, 16
      %v3242 = vrot.slane %v3240, 7
      %v3243 = vrot.slane %v3242, 1
      %v3245 = vshll.u32 %v1918, 16
      %v3247 = vsel %vm1989, %v3243, %v3245
      %v3248 = vshrl.u32 %v1918, 16
      %v3250 = vrot.slane %v3248, 7
      %v3251 = vrot.slane %v3250, 1
      %v3253 = vshll.u32 %v1922, 16
      %v3255 = vsel %vm1989, %v3251, %v3253
      %v3256 = vshrl.u32 %v1922, 16
      %v3258 = vrot.slane %v3256, 7
      %v3259 = vrot.slane %v3258, 1
      %v3261 = vshll.u32 %v1926, 16
      %v3263 = vsel %vm1989, %v3259, %v3261
      %v3264 = vshrl.u32 %v1926, 16
      %v3266 = vrot.slane %v3264, 7
      %v3267 = vrot.slane %v3266, 1
      %v3269 = vshll.u32 %v1930, 16
      %v3271 = vsel %vm1989, %v3267, %v3269
      %v3272 = vshrl.u32 %v1930, 16
      %v3274 = vrot.slane %v3272, 7
      %v3275 = vrot.slane %v3274, 1
      %v3277 = vshll.u32 %v1934, 16
      %v3279 = vsel %vm1989, %v3275, %v3277
      %v3280 = vshrl.u32 %v1934, 16
      %v3282 = vrot.slane %v3280, 7
      %v3283 = vrot.slane %v3282, 1
      %v3285 = vshll.u32 %v1938, 16
      %v3287 = vsel %vm1989, %v3283, %v3285
      %v3288 = vshrl.u32 %v1938, 16
      %v3290 = vrot.slane %v3288, 7
      %v3291 = vrot.slane %v3290, 1
      %v3293 = vshll.u32 %v1942, 16
      %v3295 = vsel %vm1989, %v3291, %v3293
      %v3296 = vshrl.u32 %v1942, 16
      %v3298 = vrot.slane %v3296, 7
      %v3299 = vrot.slane %v3298, 1
      %v3301 = vshll.u32 %v1946, 16
      %v3303 = vsel %vm1989, %v3299, %v3301
      %v3304 = vshrl.u32 %v1946, 16
      %v3306 = vrot.slane %v3304, 7
      %v3307 = vrot.slane %v3306, 1
      %v3309 = vshll.u32 %v1950, 16
      %v3311 = vsel %vm1989, %v3307, %v3309
      %v3312 = vshrl.u32 %v1950, 16
      %v3314 = vrot.slane %v3312, 7
      %v3315 = vrot.slane %v3314, 1
      %v3317 = vshll.u32 %v1954, 16
      %v3319 = vsel %vm1989, %v3315, %v3317
      %v3320 = vshrl.u32 %v1954, 16
      %v3322 = vrot.slane %v3320, 7
      %v3323 = vrot.slane %v3322, 1
      %v3325 = vshll.u32 %v1958, 16
      %v3327 = vsel %vm1989, %v3323, %v3325
      %v3328 = vshrl.u32 %v1958, 16
      %v3330 = vrot.slane %v3328, 7
      %v3331 = vrot.slane %v3330, 1
      %v3333 = vshll.u32 %v1962, 16
      %v3335 = vsel %vm1989, %v3331, %v3333
      %v3336 = vshrl.u32 %v1962, 16
      %v3338 = vrot.slane %v3336, 7
      %v3339 = vrot.slane %v3338, 1
      %v3341 = vshll.u32 %v1966, 16
      %v3343 = vsel %vm1989, %v3339, %v3341
      %v3344 = vshrl.u32 %v1966, 16
      %v3346 = vrot.slane %v3344, 7
      %v3347 = vrot.slane %v3346, 1
      %v3349 = vshll.u32 %v1970, 16
      %v3351 = vsel %vm1989, %v3347, %v3349
      %v3352 = vshrl.u32 %v1970, 16
      %v3354 = vrot.slane %v3352, 7
      %v3355 = vrot.slane %v3354, 1
      %v3357 = vshll.u32 %v1974, 16
      %v3359 = vsel %vm1989, %v3355, %v3357
      %3361 = vst [vmem:[#allocation1] ss:$9 sm:$0xff] %v1998
      %s3363 = scalar_lea.vmem [#allocation1], 1
      %3364 = vst [vmem:[%s3363] ss:$9 sm:$0xff] %v2006
      %s3366 = scalar_lea.vmem [#allocation1], 2
      %3367 = vst [vmem:[%s3366] ss:$9 sm:$0xff] %v2014
      %s3369 = scalar_lea.vmem [#allocation1], 3
      %3370 = vst [vmem:[%s3369] ss:$9 sm:$0xff] %v2022
      %s3372 = scalar_lea.vmem [#allocation1], 4
      %3373 = vst [vmem:[%s3372] ss:$9 sm:$0xff] %v2030
      %s3375 = scalar_lea.vmem [#allocation1], 5
      %3376 = vst [vmem:[%s3375] ss:$9 sm:$0xff] %v2038
      %s3378 = scalar_lea.vmem [#allocation1], 6
      %3379 = vst [vmem:[%s3378] ss:$9 sm:$0xff] %v2046
      %s3381 = scalar_lea.vmem [#allocation1], 7
      %3382 = vst [vmem:[%s3381] ss:$9 sm:$0xff] %v2054
      %v3383 = vld [vmem:[#allocation1] sm:$0xff]
      %3385 = vst [vmem:[#allocation1] ss:$9 sm:$0xff] %v2062
      %3387 = vst [vmem:[%s3363] ss:$9 sm:$0xff] %v2070
      %3389 = vst [vmem:[%s3366] ss:$9 sm:$0xff] %v2078
      %3391 = vst [vmem:[%s3369] ss:$9 sm:$0xff] %v2086
      %3393 = vst [vmem:[%s3372] ss:$9 sm:$0xff] %v2094
      %3395 = vst [vmem:[%s3375] ss:$9 sm:$0xff] %v2102
      %3397 = vst [vmem:[%s3378] ss:$9 sm:$0xff] %v2110
      %3399 = vst [vmem:[%s3381] ss:$9 sm:$0xff] %v2118
      %v3400 = vld [vmem:[#allocation1] sm:$0xff]
      %3402 = vst [vmem:[#allocation1] ss:$9 sm:$0xff] %v2127
      %3404 = vst [vmem:[%s3363] ss:$9 sm:$0xff] %v2135
      %3406 = vst [vmem:[%s3366] ss:$9 sm:$0xff] %v2143
      %3408 = vst [vmem:[%s3369] ss:$9 sm:$0xff] %v2151
      %3410 = vst [vmem:[%s3372] ss:$9 sm:$0xff] %v2159
      %3412 = vst [vmem:[%s3375] ss:$9 sm:$0xff] %v2167
      %3414 = vst [vmem:[%s3378] ss:$9 sm:$0xff] %v2175
      %3416 = vst [vmem:[%s3381] ss:$9 sm:$0xff] %v2183
      %v3417 = vld [vmem:[#allocation1] sm:$0xff]
      %3419 = vst [vmem:[#allocation1] ss:$9 sm:$0xff] %v2191
      %3421 = vst [vmem:[%s3363] ss:$9 sm:$0xff] %v2199
      %3423 = vst [vmem:[%s3366] ss:$9 sm:$0xff] %v2207
      %3425 = vst [vmem:[%s3369] ss:$9 sm:$0xff] %v2215
      %3427 = vst [vmem:[%s3372] ss:$9 sm:$0xff] %v2223
      %3429 = vst [vmem:[%s3375] ss:$9 sm:$0xff] %v2231
      %3431 = vst [vmem:[%s3378] ss:$9 sm:$0xff] %v2239
      %3433 = vst [vmem:[%s3381] ss:$9 sm:$0xff] %v2247
      %v3434 = vld [vmem:[#allocation1] sm:$0xff]
      %3435 = vst [vmem:[#allocation1] ss:$9 sm:$0xff] %v2127
      %3436 = vst [vmem:[%s3363] ss:$9 sm:$0xff] %v2135
      %3437 = vst [vmem:[%s3366] ss:$9 sm:$0xff] %v2143
      %3438 = vst [vmem:[%s3369] ss:$9 sm:$0xff] %v2151
      %3439 = vst [vmem:[%s3372] ss:$9 sm:$0xff] %v2159
      %3440 = vst [vmem:[%s3375] ss:$9 sm:$0xff] %v2167
      %3441 = vst [vmem:[%s3378] ss:$9 sm:$0xff] %v2175
      %3442 = vst [vmem:[%s3381] ss:$9 sm:$0xff] %v2183
      %v3443 = vld [vmem:[#allocation1] sm:$0xff]
      %3444 = vst [vmem:[#allocation1] ss:$9 sm:$0xff] %v2191
      %3445 = vst [vmem:[%s3363] ss:$9 sm:$0xff] %v2199
      %3446 = vst [vmem:[%s3366] ss:$9 sm:$0xff] %v2207
      %3447 = vst [vmem:[%s3369] ss:$9 sm:$0xff] %v2215
      %3448 = vst [vmem:[%s3372] ss:$9 sm:$0xff] %v2223
      %3449 = vst [vmem:[%s3375] ss:$9 sm:$0xff] %v2231
      %3450 = vst [vmem:[%s3378] ss:$9 sm:$0xff] %v2239
      %3451 = vst [vmem:[%s3381] ss:$9 sm:$0xff] %v2247
      %v3452 = vld [vmem:[#allocation1] sm:$0xff]
      %3454 = vst [vmem:[#allocation1] ss:$9 sm:$0xff] %v2256
      %3456 = vst [vmem:[%s3363] ss:$9 sm:$0xff] %v2264
      %3458 = vst [vmem:[%s3366] ss:$9 sm:$0xff] %v2272
      %3460 = vst [vmem:[%s3369] ss:$9 sm:$0xff] %v2280
      %3462 = vst [vmem:[%s3372] ss:$9 sm:$0xff] %v2288
      %3464 = vst [vmem:[%s3375] ss:$9 sm:$0xff] %v2296
      %3466 = vst [vmem:[%s3378] ss:$9 sm:$0xff] %v2304
      %3468 = vst [vmem:[%s3381] ss:$9 sm:$0xff] %v2312
      %v3469 = vld [vmem:[#allocation1] sm:$0xff]
      %3471 = vst [vmem:[#allocation1] ss:$9 sm:$0xff] %v2320
      %3473 = vst [vmem:[%s3363] ss:$9 sm:$0xff] %v2328
      %3475 = vst [vmem:[%s3366] ss:$9 sm:$0xff] %v2336
      %3477 = vst [vmem:[%s3369] ss:$9 sm:$0xff] %v2344
      %3479 = vst [vmem:[%s3372] ss:$9 sm:$0xff] %v2352
      %3481 = vst [vmem:[%s3375] ss:$9 sm:$0xff] %v2360
      %3483 = vst [vmem:[%s3378] ss:$9 sm:$0xff] %v2368
      %3485 = vst [vmem:[%s3381] ss:$9 sm:$0xff] %v2376
      %v3486 = vld [vmem:[#allocation1] sm:$0xff]
      %3487 = vst [vmem:[#allocation1] ss:$9 sm:$0xff] %v2256
      %3488 = vst [vmem:[%s3363] ss:$9 sm:$0xff] %v2264
      %3489 = vst [vmem:[%s3366] ss:$9 sm:$0xff] %v2272
      %3490 = vst [vmem:[%s3369] ss:$9 sm:$0xff] %v2280
      %3491 = vst [vmem:[%s3372] ss:$9 sm:$0xff] %v2288
      %3492 = vst [vmem:[%s3375] ss:$9 sm:$0xff] %v2296
      %3493 = vst [vmem:[%s3378] ss:$9 sm:$0xff] %v2304
      %3494 = vst [vmem:[%s3381] ss:$9 sm:$0xff] %v2312
      %v3495 = vld [vmem:[#allocation1] sm:$0xff]
      %3496 = vst [vmem:[#allocation1] ss:$9 sm:$0xff] %v2320
      %3497 = vst [vmem:[%s3363] ss:$9 sm:$0xff] %v2328
      %3498 = vst [vmem:[%s3366] ss:$9 sm:$0xff] %v2336
      %3499 = vst [vmem:[%s3369] ss:$9 sm:$0xff] %v2344
      %3500 = vst [vmem:[%s3372] ss:$9 sm:$0xff] %v2352
      %3501 = vst [vmem:[%s3375] ss:$9 sm:$0xff] %v2360
      %3502 = vst [vmem:[%s3378] ss:$9 sm:$0xff] %v2368
      %3503 = vst [vmem:[%s3381] ss:$9 sm:$0xff] %v2376
      %v3504 = vld [vmem:[#allocation1] sm:$0xff]
      %3506 = vst [vmem:[#allocation1] ss:$9 sm:$0xff] %v2385
      %3508 = vst [vmem:[%s3363] ss:$9 sm:$0xff] %v2393
      %3510 = vst [vmem:[%s3366] ss:$9 sm:$0xff] %v2401
      %3512 = vst [vmem:[%s3369] ss:$9 sm:$0xff] %v2409
      %3514 = vst [vmem:[%s3372] ss:$9 sm:$0xff] %v2417
      %3516 = vst [vmem:[%s3375] ss:$9 sm:$0xff] %v2425
      %3518 = vst [vmem:[%s3378] ss:$9 sm:$0xff] %v2433
      %3520 = vst [vmem:[%s3381] ss:$9 sm:$0xff] %v2441
      %v3521 = vld [vmem:[#allocation1] sm:$0xff]
      %3523 = vst [vmem:[#allocation1] ss:$9 sm:$0xff] %v2449
      %3525 = vst [vmem:[%s3363] ss:$9 sm:$0xff] %v2457
      %3527 = vst [vmem:[%s3366] ss:$9 sm:$0xff] %v2465
      %3529 = vst [vmem:[%s3369] ss:$9 sm:$0xff] %v2473
      %3531 = vst [vmem:[%s3372] ss:$9 sm:$0xff] %v2481
      %3533 = vst [vmem:[%s3375] ss:$9 sm:$0xff] %v2489
      %3535 = vst [vmem:[%s3378] ss:$9 sm:$0xff] %v2497
      %3537 = vst [vmem:[%s3381] ss:$9 sm:$0xff] %v2505
      %v3538 = vld [vmem:[#allocation1] sm:$0xff]
      %3539 = vst [vmem:[#allocation1] ss:$9 sm:$0xff] %v2385
      %3540 = vst [vmem:[%s3363] ss:$9 sm:$0xff] %v2393
      %3541 = vst [vmem:[%s3366] ss:$9 sm:$0xff] %v2401
      %3542 = vst [vmem:[%s3369] ss:$9 sm:$0xff] %v2409
      %3543 = vst [vmem:[%s3372] ss:$9 sm:$0xff] %v2417
      %3544 = vst [vmem:[%s3375] ss:$9 sm:$0xff] %v2425
      %3545 = vst [vmem:[%s3378] ss:$9 sm:$0xff] %v2433
      %3546 = vst [vmem:[%s3381] ss:$9 sm:$0xff] %v2441
      %v3547 = vld [vmem:[#allocation1] sm:$0xff]
      %3548 = vst [vmem:[#allocation1] ss:$9 sm:$0xff] %v2449
      %3549 = vst [vmem:[%s3363] ss:$9 sm:$0xff] %v2457
      %3550 = vst [vmem:[%s3366] ss:$9 sm:$0xff] %v2465
      %3551 = vst [vmem:[%s3369] ss:$9 sm:$0xff] %v2473
      %3552 = vst [vmem:[%s3372] ss:$9 sm:$0xff] %v2481
      %3553 = vst [vmem:[%s3375] ss:$9 sm:$0xff] %v2489
      %3554 = vst [vmem:[%s3378] ss:$9 sm:$0xff] %v2497
      %3555 = vst [vmem:[%s3381] ss:$9 sm:$0xff] %v2505
      %v3556 = vld [vmem:[#allocation1] sm:$0xff]
      %3558 = vst [vmem:[#allocation1] ss:$9 sm:$0xff] %v2514
      %3560 = vst [vmem:[%s3363] ss:$9 sm:$0xff] %v2522
      %3562 = vst [vmem:[%s3366] ss:$9 sm:$0xff] %v2530
      %3564 = vst [vmem:[%s3369] ss:$9 sm:$0xff] %v2538
      %3566 = vst [vmem:[%s3372] ss:$9 sm:$0xff] %v2546
      %3568 = vst [vmem:[%s3375] ss:$9 sm:$0xff] %v2554
      %3570 = vst [vmem:[%s3378] ss:$9 sm:$0xff] %v2562
      %3572 = vst [vmem:[%s3381] ss:$9 sm:$0xff] %v2570
      %v3573 = vld [vmem:[#allocation1] sm:$0xff]
      %3575 = vst [vmem:[#allocation1] ss:$9 sm:$0xff] %v2578
      %3577 = vst [vmem:[%s3363] ss:$9 sm:$0xff] %v2586
      %3579 = vst [vmem:[%s3366] ss:$9 sm:$0xff] %v2594
      %3581 = vst [vmem:[%s3369] ss:$9 sm:$0xff] %v2602
      %3583 = vst [vmem:[%s3372] ss:$9 sm:$0xff] %v2610
      %3585 = vst [vmem:[%s3375] ss:$9 sm:$0xff] %v2618
      %3587 = vst [vmem:[%s3378] ss:$9 sm:$0xff] %v2626
      %3589 = vst [vmem:[%s3381] ss:$9 sm:$0xff] %v2634
      %v3590 = vld [vmem:[#allocation1] sm:$0xff]
      %3591 = vst [vmem:[#allocation1] ss:$9 sm:$0xff] %v2514
      %3592 = vst [vmem:[%s3363] ss:$9 sm:$0xff] %v2522
      %3593 = vst [vmem:[%s3366] ss:$9 sm:$0xff] %v2530
      %3594 = vst [vmem:[%s3369] ss:$9 sm:$0xff] %v2538
      %3595 = vst [vmem:[%s3372] ss:$9 sm:$0xff] %v2546
      %3596 = vst [vmem:[%s3375] ss:$9 sm:$0xff] %v2554
      %3597 = vst [vmem:[%s3378] ss:$9 sm:$0xff] %v2562
      %3598 = vst [vmem:[%s3381] ss:$9 sm:$0xff] %v2570
      %v3599 = vld [vmem:[#allocation1] sm:$0xff]
      %3600 = vst [vmem:[#allocation1] ss:$9 sm:$0xff] %v2578
      %3601 = vst [vmem:[%s3363] ss:$9 sm:$0xff] %v2586
      %3602 = vst [vmem:[%s3366] ss:$9 sm:$0xff] %v2594
      %3603 = vst [vmem:[%s3369] ss:$9 sm:$0xff] %v2602
      %3604 = vst [vmem:[%s3372] ss:$9 sm:$0xff] %v2610
      %3605 = vst [vmem:[%s3375] ss:$9 sm:$0xff] %v2618
      %3606 = vst [vmem:[%s3378] ss:$9 sm:$0xff] %v2626
      %3607 = vst [vmem:[%s3381] ss:$9 sm:$0xff] %v2634
      %v3608 = vld [vmem:[#allocation1] sm:$0xff]
      %3610 = vst [vmem:[#allocation1] ss:$9 sm:$0xff] %v2643
      %3612 = vst [vmem:[%s3363] ss:$9 sm:$0xff] %v2651
      %3614 = vst [vmem:[%s3366] ss:$9 sm:$0xff] %v2659
      %3616 = vst [vmem:[%s3369] ss:$9 sm:$0xff] %v2667
      %3618 = vst [vmem:[%s3372] ss:$9 sm:$0xff] %v2675
      %3620 = vst [vmem:[%s3375] ss:$9 sm:$0xff] %v2683
      %3622 = vst [vmem:[%s3378] ss:$9 sm:$0xff] %v2691
      %3624 = vst [vmem:[%s3381] ss:$9 sm:$0xff] %v2699
      %v3625 = vld [vmem:[#allocation1] sm:$0xff]
      %3627 = vst [vmem:[#allocation1] ss:$9 sm:$0xff] %v2707
      %3629 = vst [vmem:[%s3363] ss:$9 sm:$0xff] %v2715
      %3631 = vst [vmem:[%s3366] ss:$9 sm:$0xff] %v2723
      %3633 = vst [vmem:[%s3369] ss:$9 sm:$0xff] %v2731
      %3635 = vst [vmem:[%s3372] ss:$9 sm:$0xff] %v2739
      %3637 = vst [vmem:[%s3375] ss:$9 sm:$0xff] %v2747
      %3639 = vst [vmem:[%s3378] ss:$9 sm:$0xff] %v2755
      %3641 = vst [vmem:[%s3381] ss:$9 sm:$0xff] %v2763
      %v3642 = vld [vmem:[#allocation1] sm:$0xff]
      %3643 = vst [vmem:[#allocation1] ss:$9 sm:$0xff] %v2643
      %3644 = vst [vmem:[%s3363] ss:$9 sm:$0xff] %v2651
      %3645 = vst [vmem:[%s3366] ss:$9 sm:$0xff] %v2659
      %3646 = vst [vmem:[%s3369] ss:$9 sm:$0xff] %v2667
      %3647 = vst [vmem:[%s3372] ss:$9 sm:$0xff] %v2675
      %3648 = vst [vmem:[%s3375] ss:$9 sm:$0xff] %v2683
      %3649 = vst [vmem:[%s3378] ss:$9 sm:$0xff] %v2691
      %3650 = vst [vmem:[%s3381] ss:$9 sm:$0xff] %v2699
      %v3651 = vld [vmem:[#allocation1] sm:$0xff]
      %3652 = vst [vmem:[#allocation1] ss:$9 sm:$0xff] %v2707
      %3653 = vst [vmem:[%s3363] ss:$9 sm:$0xff] %v2715
      %3654 = vst [vmem:[%s3366] ss:$9 sm:$0xff] %v2723
      %3655 = vst [vmem:[%s3369] ss:$9 sm:$0xff] %v2731
      %3656 = vst [vmem:[%s3372] ss:$9 sm:$0xff] %v2739
      %3657 = vst [vmem:[%s3375] ss:$9 sm:$0xff] %v2747
      %3658 = vst [vmem:[%s3378] ss:$9 sm:$0xff] %v2755
      %3659 = vst [vmem:[%s3381] ss:$9 sm:$0xff] %v2763
      %v3660 = vld [vmem:[#allocation1] sm:$0xff]
      %3662 = vst [vmem:[#allocation1] ss:$9 sm:$0xff] %v2772
      %3664 = vst [vmem:[%s3363] ss:$9 sm:$0xff] %v2780
      %3666 = vst [vmem:[%s3366] ss:$9 sm:$0xff] %v2788
      %3668 = vst [vmem:[%s3369] ss:$9 sm:$0xff] %v2796
      %3670 = vst [vmem:[%s3372] ss:$9 sm:$0xff] %v2804
      %3672 = vst [vmem:[%s3375] ss:$9 sm:$0xff] %v2812
      %3674 = vst [vmem:[%s3378] ss:$9 sm:$0xff] %v2820
      %3676 = vst [vmem:[%s3381] ss:$9 sm:$0xff] %v2828
      %v3677 = vld [vmem:[#allocation1] sm:$0xff]
      %3679 = vst [vmem:[#allocation1] ss:$9 sm:$0xff] %v2836
      %3681 = vst [vmem:[%s3363] ss:$9 sm:$0xff] %v2844
      %3683 = vst [vmem:[%s3366] ss:$9 sm:$0xff] %v2852
      %3685 = vst [vmem:[%s3369] ss:$9 sm:$0xff] %v2860
      %3687 = vst [vmem:[%s3372] ss:$9 sm:$0xff] %v2868
      %3689 = vst [vmem:[%s3375] ss:$9 sm:$0xff] %v2876
      %3691 = vst [vmem:[%s3378] ss:$9 sm:$0xff] %v2884
      %3693 = vst [vmem:[%s3381] ss:$9 sm:$0xff] %v2892
      %v3694 = vld [vmem:[#allocation1] sm:$0xff]
      %3695 = vst [vmem:[#allocation1] ss:$9 sm:$0xff] %v2772
      %3696 = vst [vmem:[%s3363] ss:$9 sm:$0xff] %v2780
      %3697 = vst [vmem:[%s3366] ss:$9 sm:$0xff] %v2788
      %3698 = vst [vmem:[%s3369] ss:$9 sm:$0xff] %v2796
      %3699 = vst [vmem:[%s3372] ss:$9 sm:$0xff] %v2804
      %3700 = vst [vmem:[%s3375] ss:$9 sm:$0xff] %v2812
      %3701 = vst [vmem:[%s3378] ss:$9 sm:$0xff] %v2820
      %3702 = vst [vmem:[%s3381] ss:$9 sm:$0xff] %v2828
      %v3703 = vld [vmem:[#allocation1] sm:$0xff]
      %3704 = vst [vmem:[#allocation1] ss:$9 sm:$0xff] %v2836
      %3705 = vst [vmem:[%s3363] ss:$9 sm:$0xff] %v2844
      %3706 = vst [vmem:[%s3366] ss:$9 sm:$0xff] %v2852
      %3707 = vst [vmem:[%s3369] ss:$9 sm:$0xff] %v2860
      %3708 = vst [vmem:[%s3372] ss:$9 sm:$0xff] %v2868
      %3709 = vst [vmem:[%s3375] ss:$9 sm:$0xff] %v2876
      %3710 = vst [vmem:[%s3378] ss:$9 sm:$0xff] %v2884
      %3711 = vst [vmem:[%s3381] ss:$9 sm:$0xff] %v2892
      %v3712 = vld [vmem:[#allocation1] sm:$0xff]
      %3714 = vst [vmem:[#allocation1] ss:$9 sm:$0xff] %v2901
      %3716 = vst [vmem:[%s3363] ss:$9 sm:$0xff] %v2909
      %3718 = vst [vmem:[%s3366] ss:$9 sm:$0xff] %v2917
      %3720 = vst [vmem:[%s3369] ss:$9 sm:$0xff] %v2925
      %3722 = vst [vmem:[%s3372] ss:$9 sm:$0xff] %v2933
      %3724 = vst [vmem:[%s3375] ss:$9 sm:$0xff] %v2941
      %3726 = vst [vmem:[%s3378] ss:$9 sm:$0xff] %v2949
      %3728 = vst [vmem:[%s3381] ss:$9 sm:$0xff] %v2957
      %v3729 = vld [vmem:[#allocation1] sm:$0xff]
      %3731 = vst [vmem:[#allocation1] ss:$9 sm:$0xff] %v2965
      %3733 = vst [vmem:[%s3363] ss:$9 sm:$0xff] %v2973
      %3735 = vst [vmem:[%s3366] ss:$9 sm:$0xff] %v2981
      %3737 = vst [vmem:[%s3369] ss:$9 sm:$0xff] %v2989
      %3739 = vst [vmem:[%s3372] ss:$9 sm:$0xff] %v2997
      %3741 = vst [vmem:[%s3375] ss:$9 sm:$0xff] %v3005
      %3743 = vst [vmem:[%s3378] ss:$9 sm:$0xff] %v3013
      %3745 = vst [vmem:[%s3381] ss:$9 sm:$0xff] %v3021
      %v3746 = vld [vmem:[#allocation1] sm:$0xff]
      %3747 = vst [vmem:[#allocation1] ss:$9 sm:$0xff] %v2901
      %3748 = vst [vmem:[%s3363] ss:$9 sm:$0xff] %v2909
      %3749 = vst [vmem:[%s3366] ss:$9 sm:$0xff] %v2917
      %3750 = vst [vmem:[%s3369] ss:$9 sm:$0xff] %v2925
      %3751 = vst [vmem:[%s3372] ss:$9 sm:$0xff] %v2933
      %3752 = vst [vmem:[%s3375] ss:$9 sm:$0xff] %v2941
      %3753 = vst [vmem:[%s3378] ss:$9 sm:$0xff] %v2949
      %3754 = vst [vmem:[%s3381] ss:$9 sm:$0xff] %v2957
      %v3755 = vld [vmem:[#allocation1] sm:$0xff]
      %3756 = vst [vmem:[#allocation1] ss:$9 sm:$0xff] %v2965
      %3757 = vst [vmem:[%s3363] ss:$9 sm:$0xff] %v2973
      %3758 = vst [vmem:[%s3366] ss:$9 sm:$0xff] %v2981
      %3759 = vst [vmem:[%s3369] ss:$9 sm:$0xff] %v2989
      %3760 = vst [vmem:[%s3372] ss:$9 sm:$0xff] %v2997
      %3761 = vst [vmem:[%s3375] ss:$9 sm:$0xff] %v3005
      %3762 = vst [vmem:[%s3378] ss:$9 sm:$0xff] %v3013
      %3763 = vst [vmem:[%s3381] ss:$9 sm:$0xff] %v3021
      %v3764 = vld [vmem:[#allocation1] sm:$0xff]
      %3766 = vst [vmem:[#allocation1] ss:$9 sm:$0xff] %v3030
      %3768 = vst [vmem:[%s3363] ss:$9 sm:$0xff] %v3038
      %3770 = vst [vmem:[%s3366] ss:$9 sm:$0xff] %v3046
      %3772 = vst [vmem:[%s3369] ss:$9 sm:$0xff] %v3054
      %3774 = vst [vmem:[%s3372] ss:$9 sm:$0xff] %v3062
      %3776 = vst [vmem:[%s3375] ss:$9 sm:$0xff] %v3070
      %3778 = vst [vmem:[%s3378] ss:$9 sm:$0xff] %v3078
      %3780 = vst [vmem:[%s3381] ss:$9 sm:$0xff] %v3086
      %v3781 = vld [vmem:[#allocation1] sm:$0xff]
      %3783 = vst [vmem:[#allocation1] ss:$9 sm:$0xff] %v3094
      %3785 = vst [vmem:[%s3363] ss:$9 sm:$0xff] %v3102
      %3787 = vst [vmem:[%s3366] ss:$9 sm:$0xff] %v3110
      %3789 = vst [vmem:[%s3369] ss:$9 sm:$0xff] %v3118
      %3791 = vst [vmem:[%s3372] ss:$9 sm:$0xff] %v3126
      %3793 = vst [vmem:[%s3375] ss:$9 sm:$0xff] %v3134
      %3795 = vst [vmem:[%s3378] ss:$9 sm:$0xff] %v3142
      %3797 = vst [vmem:[%s3381] ss:$9 sm:$0xff] %v3150
      %v3798 = vld [vmem:[#allocation1] sm:$0xff]
      %3799 = vst [vmem:[#allocation1] ss:$9 sm:$0xff] %v1262
      %s3800 = scalar_lea.vmem [#allocation1], 1
      %3801 = vst [vmem:[%s3800] ss:$9 sm:$0xff] %v1266
      %s3802 = scalar_lea.vmem [#allocation1], 2
      %3803 = vst [vmem:[%s3802] ss:$9 sm:$0xff] %v1270
      %s3804 = scalar_lea.vmem [#allocation1], 3
      %3805 = vst [vmem:[%s3804] ss:$9 sm:$0xff] %v1274
      %s3806 = scalar_lea.vmem [#allocation1], 4
      %3807 = vst [vmem:[%s3806] ss:$9 sm:$0xff] %v1278
      %s3808 = scalar_lea.vmem [#allocation1], 5
      %3809 = vst [vmem:[%s3808] ss:$9 sm:$0xff] %v1282
      %s3810 = scalar_lea.vmem [#allocation1], 6
      %3811 = vst [vmem:[%s3810] ss:$9 sm:$0xff] %v1286
      %s3812 = scalar_lea.vmem [#allocation1], 7
      %3813 = vst [vmem:[%s3812] ss:$9 sm:$0xff] %v1290
      %v3814 = vld [vmem:[#allocation1] sm:$0xff]
      %3816 = vst [vmem:[#allocation1] ss:$9 sm:$0xff] %v1294
      %3817 = vst [vmem:[%s3800] ss:$9 sm:$0xff] %v1298
      %3818 = vst [vmem:[%s3802] ss:$9 sm:$0xff] %v1302
      %3819 = vst [vmem:[%s3804] ss:$9 sm:$0xff] %v1306
      %3820 = vst [vmem:[%s3806] ss:$9 sm:$0xff] %v1310
      %3821 = vst [vmem:[%s3808] ss:$9 sm:$0xff] %v1314
      %3822 = vst [vmem:[%s3810] ss:$9 sm:$0xff] %v1318
      %3823 = vst [vmem:[%s3812] ss:$9 sm:$0xff] %v1322
      %v3824 = vld [vmem:[#allocation1] sm:$0xff]
      %3826 = vst [vmem:[#allocation1] ss:$9 sm:$0xff] %v1334
      %3827 = vst [vmem:[%s3800] ss:$9 sm:$0xff] %v1338
      %3828 = vst [vmem:[%s3802] ss:$9 sm:$0xff] %v1342
      %3829 = vst [vmem:[%s3804] ss:$9 sm:$0xff] %v1346
      %3830 = vst [vmem:[%s3806] ss:$9 sm:$0xff] %v1350
      %3831 = vst [vmem:[%s3808] ss:$9 sm:$0xff] %v1354
      %3832 = vst [vmem:[%s3810] ss:$9 sm:$0xff] %v1358
      %3833 = vst [vmem:[%s3812] ss:$9 sm:$0xff] %v1362
      %v3834 = vld [vmem:[#allocation1] sm:$0xff]
      %3836 = vst [vmem:[#allocation1] ss:$9 sm:$0xff] %v1366
      %3837 = vst [vmem:[%s3800] ss:$9 sm:$0xff] %v1370
      %3838 = vst [vmem:[%s3802] ss:$9 sm:$0xff] %v1374
      %3839 = vst [vmem:[%s3804] ss:$9 sm:$0xff] %v1378
      %3840 = vst [vmem:[%s3806] ss:$9 sm:$0xff] %v1382
      %3841 = vst [vmem:[%s3808] ss:$9 sm:$0xff] %v1386
      %3842 = vst [vmem:[%s3810] ss:$9 sm:$0xff] %v1390
      %3843 = vst [vmem:[%s3812] ss:$9 sm:$0xff] %v1394
      %v3844 = vld [vmem:[#allocation1] sm:$0xff]
      %3846 = vst [vmem:[#allocation1] ss:$9 sm:$0xff] %v1334
      %3847 = vst [vmem:[%s3800] ss:$9 sm:$0xff] %v1338
      %3848 = vst [vmem:[%s3802] ss:$9 sm:$0xff] %v1342
      %3849 = vst [vmem:[%s3804] ss:$9 sm:$0xff] %v1346
      %3850 = vst [vmem:[%s3806] ss:$9 sm:$0xff] %v1350
      %3851 = vst [vmem:[%s3808] ss:$9 sm:$0xff] %v1354
      %3852 = vst [vmem:[%s3810] ss:$9 sm:$0xff] %v1358
      %3853 = vst [vmem:[%s3812] ss:$9 sm:$0xff] %v1362
      %v3854 = vld [vmem:[#allocation1] sm:$0xff]
      %3856 = vst [vmem:[#allocation1] ss:$9 sm:$0xff] %v1366
      %3857 = vst [vmem:[%s3800] ss:$9 sm:$0xff] %v1370
      %3858 = vst [vmem:[%s3802] ss:$9 sm:$0xff] %v1374
      %3859 = vst [vmem:[%s3804] ss:$9 sm:$0xff] %v1378
      %3860 = vst [vmem:[%s3806] ss:$9 sm:$0xff] %v1382
      %3861 = vst [vmem:[%s3808] ss:$9 sm:$0xff] %v1386
      %3862 = vst [vmem:[%s3810] ss:$9 sm:$0xff] %v1390
      %3863 = vst [vmem:[%s3812] ss:$9 sm:$0xff] %v1394
      %v3864 = vld [vmem:[#allocation1] sm:$0xff]
      %3866 = vst [vmem:[#allocation1] ss:$9 sm:$0xff] %v1406
      %3867 = vst [vmem:[%s3800] ss:$9 sm:$0xff] %v1410
      %3868 = vst [vmem:[%s3802] ss:$9 sm:$0xff] %v1414
      %3869 = vst [vmem:[%s3804] ss:$9 sm:$0xff] %v1418
      %3870 = vst [vmem:[%s3806] ss:$9 sm:$0xff] %v1422
      %3871 = vst [vmem:[%s3808] ss:$9 sm:$0xff] %v1426
      %3872 = vst [vmem:[%s3810] ss:$9 sm:$0xff] %v1430
      %3873 = vst [vmem:[%s3812] ss:$9 sm:$0xff] %v1434
      %v3874 = vld [vmem:[#allocation1] sm:$0xff]
      %3876 = vst [vmem:[#allocation1] ss:$9 sm:$0xff] %v1438
      %3877 = vst [vmem:[%s3800] ss:$9 sm:$0xff] %v1442
      %3878 = vst [vmem:[%s3802] ss:$9 sm:$0xff] %v1446
      %3879 = vst [vmem:[%s3804] ss:$9 sm:$0xff] %v1450
      %3880 = vst [vmem:[%s3806] ss:$9 sm:$0xff] %v1454
      %3881 = vst [vmem:[%s3808] ss:$9 sm:$0xff] %v1458
      %3882 = vst [vmem:[%s3810] ss:$9 sm:$0xff] %v1462
      %3883 = vst [vmem:[%s3812] ss:$9 sm:$0xff] %v1466
      %v3884 = vld [vmem:[#allocation1] sm:$0xff]
      %3886 = vst [vmem:[#allocation1] ss:$9 sm:$0xff] %v1406
      %3887 = vst [vmem:[%s3800] ss:$9 sm:$0xff] %v1410
      %3888 = vst [vmem:[%s3802] ss:$9 sm:$0xff] %v1414
      %3889 = vst [vmem:[%s3804] ss:$9 sm:$0xff] %v1418
      %3890 = vst [vmem:[%s3806] ss:$9 sm:$0xff] %v1422
      %3891 = vst [vmem:[%s3808] ss:$9 sm:$0xff] %v1426
      %3892 = vst [vmem:[%s3810] ss:$9 sm:$0xff] %v1430
      %3893 = vst [vmem:[%s3812] ss:$9 sm:$0xff] %v1434
      %v3894 = vld [vmem:[#allocation1] sm:$0xff]
      %3896 = vst [vmem:[#allocation1] ss:$9 sm:$0xff] %v1438
      %3897 = vst [vmem:[%s3800] ss:$9 sm:$0xff] %v1442
      %3898 = vst [vmem:[%s3802] ss:$9 sm:$0xff] %v1446
      %3899 = vst [vmem:[%s3804] ss:$9 sm:$0xff] %v1450
      %3900 = vst [vmem:[%s3806] ss:$9 sm:$0xff] %v1454
      %3901 = vst [vmem:[%s3808] ss:$9 sm:$0xff] %v1458
      %3902 = vst [vmem:[%s3810] ss:$9 sm:$0xff] %v1462
      %3903 = vst [vmem:[%s3812] ss:$9 sm:$0xff] %v1466
      %v3904 = vld [vmem:[#allocation1] sm:$0xff]
      %3906 = vst [vmem:[#allocation1] ss:$9 sm:$0xff] %v1478
      %3907 = vst [vmem:[%s3800] ss:$9 sm:$0xff] %v1482
      %3908 = vst [vmem:[%s3802] ss:$9 sm:$0xff] %v1486
      %3909 = vst [vmem:[%s3804] ss:$9 sm:$0xff] %v1490
      %3910 = vst [vmem:[%s3806] ss:$9 sm:$0xff] %v1494
      %3911 = vst [vmem:[%s3808] ss:$9 sm:$0xff] %v1498
      %3912 = vst [vmem:[%s3810] ss:$9 sm:$0xff] %v1502
      %3913 = vst [vmem:[%s3812] ss:$9 sm:$0xff] %v1506
      %v3914 = vld [vmem:[#allocation1] sm:$0xff]
      %3916 = vst [vmem:[#allocation1] ss:$9 sm:$0xff] %v1510
      %3917 = vst [vmem:[%s3800] ss:$9 sm:$0xff] %v1514
      %3918 = vst [vmem:[%s3802] ss:$9 sm:$0xff] %v1518
      %3919 = vst [vmem:[%s3804] ss:$9 sm:$0xff] %v1522
      %3920 = vst [vmem:[%s3806] ss:$9 sm:$0xff] %v1526
      %3921 = vst [vmem:[%s3808] ss:$9 sm:$0xff] %v1530
      %3922 = vst [vmem:[%s3810] ss:$9 sm:$0xff] %v1534
      %3923 = vst [vmem:[%s3812] ss:$9 sm:$0xff] %v1538
      %v3924 = vld [vmem:[#allocation1] sm:$0xff]
      %3926 = vst [vmem:[#allocation1] ss:$9 sm:$0xff] %v1478
      %3927 = vst [vmem:[%s3800] ss:$9 sm:$0xff] %v1482
      %3928 = vst [vmem:[%s3802] ss:$9 sm:$0xff] %v1486
      %3929 = vst [vmem:[%s3804] ss:$9 sm:$0xff] %v1490
      %3930 = vst [vmem:[%s3806] ss:$9 sm:$0xff] %v1494
      %3931 = vst [vmem:[%s3808] ss:$9 sm:$0xff] %v1498
      %3932 = vst [vmem:[%s3810] ss:$9 sm:$0xff] %v1502
      %3933 = vst [vmem:[%s3812] ss:$9 sm:$0xff] %v1506
      %v3934 = vld [vmem:[#allocation1] sm:$0xff]
      %3936 = vst [vmem:[#allocation1] ss:$9 sm:$0xff] %v1510
      %3937 = vst [vmem:[%s3800] ss:$9 sm:$0xff] %v1514
      %3938 = vst [vmem:[%s3802] ss:$9 sm:$0xff] %v1518
      %3939 = vst [vmem:[%s3804] ss:$9 sm:$0xff] %v1522
      %3940 = vst [vmem:[%s3806] ss:$9 sm:$0xff] %v1526
      %3941 = vst [vmem:[%s3808] ss:$9 sm:$0xff] %v1530
      %3942 = vst [vmem:[%s3810] ss:$9 sm:$0xff] %v1534
      %3943 = vst [vmem:[%s3812] ss:$9 sm:$0xff] %v1538
      %v3944 = vld [vmem:[#allocation1] sm:$0xff]
      %3946 = vst [vmem:[#allocation1] ss:$9 sm:$0xff] %v1550
      %3947 = vst [vmem:[%s3800] ss:$9 sm:$0xff] %v1554
      %3948 = vst [vmem:[%s3802] ss:$9 sm:$0xff] %v1558
      %3949 = vst [vmem:[%s3804] ss:$9 sm:$0xff] %v1562
      %3950 = vst [vmem:[%s3806] ss:$9 sm:$0xff] %v1566
      %3951 = vst [vmem:[%s3808] ss:$9 sm:$0xff] %v1570
      %3952 = vst [vmem:[%s3810] ss:$9 sm:$0xff] %v1574
      %3953 = vst [vmem:[%s3812] ss:$9 sm:$0xff] %v1578
      %v3954 = vld [vmem:[#allocation1] sm:$0xff]
      %3956 = vst [vmem:[#allocation1] ss:$9 sm:$0xff] %v1582
      %3957 = vst [vmem:[%s3800] ss:$9 sm:$0xff] %v1586
      %3958 = vst [vmem:[%s3802] ss:$9 sm:$0xff] %v1590
      %3959 = vst [vmem:[%s3804] ss:$9 sm:$0xff] %v1594
      %3960 = vst [vmem:[%s3806] ss:$9 sm:$0xff] %v1598
      %3961 = vst [vmem:[%s3808] ss:$9 sm:$0xff] %v1602
      %3962 = vst [vmem:[%s3810] ss:$9 sm:$0xff] %v1606
      %3963 = vst [vmem:[%s3812] ss:$9 sm:$0xff] %v1610
      %v3964 = vld [vmem:[#allocation1] sm:$0xff]
      %3966 = vst [vmem:[#allocation1] ss:$9 sm:$0xff] %v1550
      %3967 = vst [vmem:[%s3800] ss:$9 sm:$0xff] %v1554
      %3968 = vst [vmem:[%s3802] ss:$9 sm:$0xff] %v1558
      %3969 = vst [vmem:[%s3804] ss:$9 sm:$0xff] %v1562
      %3970 = vst [vmem:[%s3806] ss:$9 sm:$0xff] %v1566
      %3971 = vst [vmem:[%s3808] ss:$9 sm:$0xff] %v1570
      %3972 = vst [vmem:[%s3810] ss:$9 sm:$0xff] %v1574
      %3973 = vst [vmem:[%s3812] ss:$9 sm:$0xff] %v1578
      %v3974 = vld [vmem:[#allocation1] sm:$0xff]
      %3976 = vst [vmem:[#allocation1] ss:$9 sm:$0xff] %v1582
      %3977 = vst [vmem:[%s3800] ss:$9 sm:$0xff] %v1586
      %3978 = vst [vmem:[%s3802] ss:$9 sm:$0xff] %v1590
      %3979 = vst [vmem:[%s3804] ss:$9 sm:$0xff] %v1594
      %3980 = vst [vmem:[%s3806] ss:$9 sm:$0xff] %v1598
      %3981 = vst [vmem:[%s3808] ss:$9 sm:$0xff] %v1602
      %3982 = vst [vmem:[%s3810] ss:$9 sm:$0xff] %v1606
      %3983 = vst [vmem:[%s3812] ss:$9 sm:$0xff] %v1610
      %v3984 = vld [vmem:[#allocation1] sm:$0xff]
      %3986 = vst [vmem:[#allocation1] ss:$9 sm:$0xff] %v1622
      %3987 = vst [vmem:[%s3800] ss:$9 sm:$0xff] %v1626
      %3988 = vst [vmem:[%s3802] ss:$9 sm:$0xff] %v1630
      %3989 = vst [vmem:[%s3804] ss:$9 sm:$0xff] %v1634
      %3990 = vst [vmem:[%s3806] ss:$9 sm:$0xff] %v1638
      %3991 = vst [vmem:[%s3808] ss:$9 sm:$0xff] %v1642
      %3992 = vst [vmem:[%s3810] ss:$9 sm:$0xff] %v1646
      %3993 = vst [vmem:[%s3812] ss:$9 sm:$0xff] %v1650
      %v3994 = vld [vmem:[#allocation1] sm:$0xff]
      %3996 = vst [vmem:[#allocation1] ss:$9 sm:$0xff] %v1654
      %3997 = vst [vmem:[%s3800] ss:$9 sm:$0xff] %v1658
      %3998 = vst [vmem:[%s3802] ss:$9 sm:$0xff] %v1662
      %3999 = vst [vmem:[%s3804] ss:$9 sm:$0xff] %v1666
      %4000 = vst [vmem:[%s3806] ss:$9 sm:$0xff] %v1670
      %4001 = vst [vmem:[%s3808] ss:$9 sm:$0xff] %v1674
      %4002 = vst [vmem:[%s3810] ss:$9 sm:$0xff] %v1678
      %4003 = vst [vmem:[%s3812] ss:$9 sm:$0xff] %v1682
      %v4004 = vld [vmem:[#allocation1] sm:$0xff]
      %4006 = vst [vmem:[#allocation1] ss:$9 sm:$0xff] %v1622
      %4007 = vst [vmem:[%s3800] ss:$9 sm:$0xff] %v1626
      %4008 = vst [vmem:[%s3802] ss:$9 sm:$0xff] %v1630
      %4009 = vst [vmem:[%s3804] ss:$9 sm:$0xff] %v1634
      %4010 = vst [vmem:[%s3806] ss:$9 sm:$0xff] %v1638
      %4011 = vst [vmem:[%s3808] ss:$9 sm:$0xff] %v1642
      %4012 = vst [vmem:[%s3810] ss:$9 sm:$0xff] %v1646
      %4013 = vst [vmem:[%s3812] ss:$9 sm:$0xff] %v1650
      %v4014 = vld [vmem:[#allocation1] sm:$0xff]
      %4016 = vst [vmem:[#allocation1] ss:$9 sm:$0xff] %v1654
      %4017 = vst [vmem:[%s3800] ss:$9 sm:$0xff] %v1658
      %4018 = vst [vmem:[%s3802] ss:$9 sm:$0xff] %v1662
      %4019 = vst [vmem:[%s3804] ss:$9 sm:$0xff] %v1666
      %4020 = vst [vmem:[%s3806] ss:$9 sm:$0xff] %v1670
      %4021 = vst [vmem:[%s3808] ss:$9 sm:$0xff] %v1674
      %4022 = vst [vmem:[%s3810] ss:$9 sm:$0xff] %v1678
      %4023 = vst [vmem:[%s3812] ss:$9 sm:$0xff] %v1682
      %v4024 = vld [vmem:[#allocation1] sm:$0xff]
      %4026 = vst [vmem:[#allocation1] ss:$9 sm:$0xff] %v1694
      %4027 = vst [vmem:[%s3800] ss:$9 sm:$0xff] %v1698
      %4028 = vst [vmem:[%s3802] ss:$9 sm:$0xff] %v1702
      %4029 = vst [vmem:[%s3804] ss:$9 sm:$0xff] %v1706
      %4030 = vst [vmem:[%s3806] ss:$9 sm:$0xff] %v1710
      %4031 = vst [vmem:[%s3808] ss:$9 sm:$0xff] %v1714
      %4032 = vst [vmem:[%s3810] ss:$9 sm:$0xff] %v1718
      %4033 = vst [vmem:[%s3812] ss:$9 sm:$0xff] %v1722
      %v4034 = vld [vmem:[#allocation1] sm:$0xff]
      %4036 = vst [vmem:[#allocation1] ss:$9 sm:$0xff] %v1726
      %4037 = vst [vmem:[%s3800] ss:$9 sm:$0xff] %v1730
      %4038 = vst [vmem:[%s3802] ss:$9 sm:$0xff] %v1734
      %4039 = vst [vmem:[%s3804] ss:$9 sm:$0xff] %v1738
      %4040 = vst [vmem:[%s3806] ss:$9 sm:$0xff] %v1742
      %4041 = vst [vmem:[%s3808] ss:$9 sm:$0xff] %v1746
      %4042 = vst [vmem:[%s3810] ss:$9 sm:$0xff] %v1750
      %4043 = vst [vmem:[%s3812] ss:$9 sm:$0xff] %v1754
      %v4044 = vld [vmem:[#allocation1] sm:$0xff]
      %4046 = vst [vmem:[#allocation1] ss:$9 sm:$0xff] %v1694
      %4047 = vst [vmem:[%s3800] ss:$9 sm:$0xff] %v1698
      %4048 = vst [vmem:[%s3802] ss:$9 sm:$0xff] %v1702
      %4049 = vst [vmem:[%s3804] ss:$9 sm:$0xff] %v1706
      %4050 = vst [vmem:[%s3806] ss:$9 sm:$0xff] %v1710
      %4051 = vst [vmem:[%s3808] ss:$9 sm:$0xff] %v1714
      %4052 = vst [vmem:[%s3810] ss:$9 sm:$0xff] %v1718
      %4053 = vst [vmem:[%s3812] ss:$9 sm:$0xff] %v1722
      %v4054 = vld [vmem:[#allocation1] sm:$0xff]
      %4056 = vst [vmem:[#allocation1] ss:$9 sm:$0xff] %v1726
      %4057 = vst [vmem:[%s3800] ss:$9 sm:$0xff] %v1730
      %4058 = vst [vmem:[%s3802] ss:$9 sm:$0xff] %v1734
      %4059 = vst [vmem:[%s3804] ss:$9 sm:$0xff] %v1738
      %4060 = vst [vmem:[%s3806] ss:$9 sm:$0xff] %v1742
      %4061 = vst [vmem:[%s3808] ss:$9 sm:$0xff] %v1746
      %4062 = vst [vmem:[%s3810] ss:$9 sm:$0xff] %v1750
      %4063 = vst [vmem:[%s3812] ss:$9 sm:$0xff] %v1754
      %v4064 = vld [vmem:[#allocation1] sm:$0xff]
      %4066 = vst [vmem:[#allocation1] ss:$9 sm:$0xff] %v1766
      %4067 = vst [vmem:[%s3800] ss:$9 sm:$0xff] %v1770
      %4068 = vst [vmem:[%s3802] ss:$9 sm:$0xff] %v1774
      %4069 = vst [vmem:[%s3804] ss:$9 sm:$0xff] %v1778
      %4070 = vst [vmem:[%s3806] ss:$9 sm:$0xff] %v1782
      %4071 = vst [vmem:[%s3808] ss:$9 sm:$0xff] %v1786
      %4072 = vst [vmem:[%s3810] ss:$9 sm:$0xff] %v1790
      %4073 = vst [vmem:[%s3812] ss:$9 sm:$0xff] %v1794
      %v4074 = vld [vmem:[#allocation1] sm:$0xff]
      %4076 = vst [vmem:[#allocation1] ss:$9 sm:$0xff] %v1798
      %4077 = vst [vmem:[%s3800] ss:$9 sm:$0xff] %v1802
      %4078 = vst [vmem:[%s3802] ss:$9 sm:$0xff] %v1806
      %4079 = vst [vmem:[%s3804] ss:$9 sm:$0xff] %v1810
      %4080 = vst [vmem:[%s3806] ss:$9 sm:$0xff] %v1814
      %4081 = vst [vmem:[%s3808] ss:$9 sm:$0xff] %v1818
      %4082 = vst [vmem:[%s3810] ss:$9 sm:$0xff] %v1822
      %4083 = vst [vmem:[%s3812] ss:$9 sm:$0xff] %v1826
      %v4084 = vld [vmem:[#allocation1] sm:$0xff]
      %4086 = vst [vmem:[#allocation1] ss:$9 sm:$0xff] %v1766
      %4087 = vst [vmem:[%s3800] ss:$9 sm:$0xff] %v1770
      %4088 = vst [vmem:[%s3802] ss:$9 sm:$0xff] %v1774
      %4089 = vst [vmem:[%s3804] ss:$9 sm:$0xff] %v1778
      %4090 = vst [vmem:[%s3806] ss:$9 sm:$0xff] %v1782
      %4091 = vst [vmem:[%s3808] ss:$9 sm:$0xff] %v1786
      %4092 = vst [vmem:[%s3810] ss:$9 sm:$0xff] %v1790
      %4093 = vst [vmem:[%s3812] ss:$9 sm:$0xff] %v1794
      %v4094 = vld [vmem:[#allocation1] sm:$0xff]
      %4096 = vst [vmem:[#allocation1] ss:$9 sm:$0xff] %v1798
      %4097 = vst [vmem:[%s3800] ss:$9 sm:$0xff] %v1802
      %4098 = vst [vmem:[%s3802] ss:$9 sm:$0xff] %v1806
      %4099 = vst [vmem:[%s3804] ss:$9 sm:$0xff] %v1810
      %4100 = vst [vmem:[%s3806] ss:$9 sm:$0xff] %v1814
      %4101 = vst [vmem:[%s3808] ss:$9 sm:$0xff] %v1818
      %4102 = vst [vmem:[%s3810] ss:$9 sm:$0xff] %v1822
      %4103 = vst [vmem:[%s3812] ss:$9 sm:$0xff] %v1826
      %v4104 = vld [vmem:[#allocation1] sm:$0xff]
      %4106 = vst [vmem:[#allocation1] ss:$9 sm:$0xff] %v1838
      %4107 = vst [vmem:[%s3800] ss:$9 sm:$0xff] %v1842
      %4108 = vst [vmem:[%s3802] ss:$9 sm:$0xff] %v1846
      %4109 = vst [vmem:[%s3804] ss:$9 sm:$0xff] %v1850
      %4110 = vst [vmem:[%s3806] ss:$9 sm:$0xff] %v1854
      %4111 = vst [vmem:[%s3808] ss:$9 sm:$0xff] %v1858
      %4112 = vst [vmem:[%s3810] ss:$9 sm:$0xff] %v1862
      %4113 = vst [vmem:[%s3812] ss:$9 sm:$0xff] %v1866
      %v4114 = vld [vmem:[#allocation1] sm:$0xff]
      %4116 = vst [vmem:[#allocation1] ss:$9 sm:$0xff] %v1870
      %4117 = vst [vmem:[%s3800] ss:$9 sm:$0xff] %v1874
      %4118 = vst [vmem:[%s3802] ss:$9 sm:$0xff] %v1878
      %4119 = vst [vmem:[%s3804] ss:$9 sm:$0xff] %v1882
      %4120 = vst [vmem:[%s3806] ss:$9 sm:$0xff] %v1886
      %4121 = vst [vmem:[%s3808] ss:$9 sm:$0xff] %v1890
      %4122 = vst [vmem:[%s3810] ss:$9 sm:$0xff] %v1894
      %4123 = vst [vmem:[%s3812] ss:$9 sm:$0xff] %v1898
      %v4124 = vld [vmem:[#allocation1] sm:$0xff]
      %4126 = vrot.lane.b32.xlu0 %v3814, 4
      %v4127 = vpop.permute.xlu0 %4126
      %4128 = vrot.lane.b32.xlu0 %v3824, 4
      %v4129 = vpop.permute.xlu0 %4128
      %4130 = vrot.lane.b32.xlu0 %v3834, 4
      %v4131 = vpop.permute.xlu0 %4130
      %4132 = vrot.lane.b32.xlu0 %v3844, 4
      %v4133 = vpop.permute.xlu0 %4132
      %4134 = vrot.lane.b32.xlu0 %v3854, 4
      %v4135 = vpop.permute.xlu0 %4134
      %4136 = vrot.lane.b32.xlu0 %v3864, 4
      %v4137 = vpop.permute.xlu0 %4136
      %4138 = vrot.lane.b32.xlu0 %v3874, 4
      %v4139 = vpop.permute.xlu0 %4138
      %4140 = vrot.lane.b32.xlu0 %v3884, 4
      %v4141 = vpop.permute.xlu0 %4140
      %4142 = vrot.lane.b32.xlu0 %v3894, 4
      %v4143 = vpop.permute.xlu0 %4142
      %4144 = vrot.lane.b32.xlu0 %v3904, 4
      %v4145 = vpop.permute.xlu0 %4144
      %4146 = vrot.lane.b32.xlu0 %v3914, 4
      %v4147 = vpop.permute.xlu0 %4146
      %4148 = vrot.lane.b32.xlu0 %v3924, 4
      %v4149 = vpop.permute.xlu0 %4148
      %4150 = vrot.lane.b32.xlu0 %v3934, 4
      %v4151 = vpop.permute.xlu0 %4150
      %4152 = vrot.lane.b32.xlu0 %v3944, 4
      %v4153 = vpop.permute.xlu0 %4152
      %4154 = vrot.lane.b32.xlu0 %v3954, 4
      %v4155 = vpop.permute.xlu0 %4154
      %4156 = vrot.lane.b32.xlu0 %v3964, 4
      %v4157 = vpop.permute.xlu0 %4156
      %4158 = vrot.lane.b32.xlu0 %v3974, 4
      %v4159 = vpop.permute.xlu0 %4158
      %4160 = vrot.lane.b32.xlu0 %v3984, 4
      %v4161 = vpop.permute.xlu0 %4160
      %4162 = vrot.lane.b32.xlu0 %v3994, 4
      %v4163 = vpop.permute.xlu0 %4162
      %4164 = vrot.lane.b32.xlu0 %v4004, 4
      %v4165 = vpop.permute.xlu0 %4164
      %4166 = vrot.lane.b32.xlu0 %v4014, 4
      %v4167 = vpop.permute.xlu0 %4166
      %4168 = vrot.lane.b32.xlu0 %v4024, 4
      %v4169 = vpop.permute.xlu0 %4168
      %4170 = vrot.lane.b32.xlu0 %v4034, 4
      %v4171 = vpop.permute.xlu0 %4170
      %4172 = vrot.lane.b32.xlu0 %v4044, 4
      %v4173 = vpop.permute.xlu0 %4172
      %4174 = vrot.lane.b32.xlu0 %v4054, 4
      %v4175 = vpop.permute.xlu0 %4174
      %4176 = vrot.lane.b32.xlu0 %v4064, 4
      %v4177 = vpop.permute.xlu0 %4176
      %4178 = vrot.lane.b32.xlu0 %v4074, 4
      %v4179 = vpop.permute.xlu0 %4178
      %4180 = vrot.lane.b32.xlu0 %v4084, 4
      %v4181 = vpop.permute.xlu0 %4180
      %4182 = vrot.lane.b32.xlu0 %v4094, 4
      %v4183 = vpop.permute.xlu0 %4182
      %4184 = vrot.lane.b32.xlu0 %v4104, 4
      %v4185 = vpop.permute.xlu0 %4184
      %4186 = vrot.lane.b32.xlu0 %v4114, 4
      %v4187 = vpop.permute.xlu0 %4186
      %4188 = vrot.lane.b32.xlu0 %v4124, 4
      %v4189 = vpop.permute.xlu0 %4188
      %4190 = vst [vmem:[#allocation1] ss:$9 sm:$0xff] %v2006
      %s4191 = scalar_lea.vmem [#allocation1], 1
      %4192 = vst [vmem:[%s4191] ss:$9 sm:$0xff] %v2014
      %s4193 = scalar_lea.vmem [#allocation1], 2
      %4194 = vst [vmem:[%s4193] ss:$9 sm:$0xff] %v2022
      %s4195 = scalar_lea.vmem [#allocation1], 3
      %4196 = vst [vmem:[%s4195] ss:$9 sm:$0xff] %v2030
      %s4197 = scalar_lea.vmem [#allocation1], 4
      %4198 = vst [vmem:[%s4197] ss:$9 sm:$0xff] %v2038
      %s4199 = scalar_lea.vmem [#allocation1], 5
      %4200 = vst [vmem:[%s4199] ss:$9 sm:$0xff] %v2046
      %s4201 = scalar_lea.vmem [#allocation1], 6
      %4202 = vst [vmem:[%s4201] ss:$9 sm:$0xff] %v2054
      %s4203 = scalar_lea.vmem [#allocation1], 7
      %4204 = vst [vmem:[%s4203] ss:$9 sm:$0xff] %v2062
      %v4205 = vld [vmem:[#allocation1] sm:$0xff]
      %4207 = vst [vmem:[#allocation1] ss:$9 sm:$0xff] %v2070
      %4208 = vst [vmem:[%s4191] ss:$9 sm:$0xff] %v2078
      %4209 = vst [vmem:[%s4193] ss:$9 sm:$0xff] %v2086
      %4210 = vst [vmem:[%s4195] ss:$9 sm:$0xff] %v2094
      %4211 = vst [vmem:[%s4197] ss:$9 sm:$0xff] %v2102
      %4212 = vst [vmem:[%s4199] ss:$9 sm:$0xff] %v2110
      %4213 = vst [vmem:[%s4201] ss:$9 sm:$0xff] %v2118
      %4215 = vst [vmem:[%s4203] ss:$9 sm:$0xff] %v3158
      %v4216 = vld [vmem:[#allocation1] sm:$0xff]
      %4218 = vst [vmem:[#allocation1] ss:$9 sm:$0xff] %v2135
      %4219 = vst [vmem:[%s4191] ss:$9 sm:$0xff] %v2143
      %4220 = vst [vmem:[%s4193] ss:$9 sm:$0xff] %v2151
      %4221 = vst [vmem:[%s4195] ss:$9 sm:$0xff] %v2159
      %4222 = vst [vmem:[%s4197] ss:$9 sm:$0xff] %v2167
      %4223 = vst [vmem:[%s4199] ss:$9 sm:$0xff] %v2175
      %4224 = vst [vmem:[%s4201] ss:$9 sm:$0xff] %v2183
      %4225 = vst [vmem:[%s4203] ss:$9 sm:$0xff] %v2191
      %v4226 = vld [vmem:[#allocation1] sm:$0xff]
      %4228 = vst [vmem:[#allocation1] ss:$9 sm:$0xff] %v2199
      %4229 = vst [vmem:[%s4191] ss:$9 sm:$0xff] %v2207
      %4230 = vst [vmem:[%s4193] ss:$9 sm:$0xff] %v2215
      %4231 = vst [vmem:[%s4195] ss:$9 sm:$0xff] %v2223
      %4232 = vst [vmem:[%s4197] ss:$9 sm:$0xff] %v2231
      %4233 = vst [vmem:[%s4199] ss:$9 sm:$0xff] %v2239
      %4234 = vst [vmem:[%s4201] ss:$9 sm:$0xff] %v2247
      %4236 = vst [vmem:[%s4203] ss:$9 sm:$0xff] %v3166
      %v4237 = vld [vmem:[#allocation1] sm:$0xff]
      %4239 = vst [vmem:[#allocation1] ss:$9 sm:$0xff] %v2135
      %4240 = vst [vmem:[%s4191] ss:$9 sm:$0xff] %v2143
      %4241 = vst [vmem:[%s4193] ss:$9 sm:$0xff] %v2151
      %4242 = vst [vmem:[%s4195] ss:$9 sm:$0xff] %v2159
      %4243 = vst [vmem:[%s4197] ss:$9 sm:$0xff] %v2167
      %4244 = vst [vmem:[%s4199] ss:$9 sm:$0xff] %v2175
      %4245 = vst [vmem:[%s4201] ss:$9 sm:$0xff] %v2183
      %4246 = vst [vmem:[%s4203] ss:$9 sm:$0xff] %v2191
      %v4247 = vld [vmem:[#allocation1] sm:$0xff]
      %4249 = vst [vmem:[#allocation1] ss:$9 sm:$0xff] %v2199
      %4250 = vst [vmem:[%s4191] ss:$9 sm:$0xff] %v2207
      %4251 = vst [vmem:[%s4193] ss:$9 sm:$0xff] %v2215
      %4252 = vst [vmem:[%s4195] ss:$9 sm:$0xff] %v2223
      %4253 = vst [vmem:[%s4197] ss:$9 sm:$0xff] %v2231
      %4254 = vst [vmem:[%s4199] ss:$9 sm:$0xff] %v2239
      %4255 = vst [vmem:[%s4201] ss:$9 sm:$0xff] %v2247
      %4256 = vst [vmem:[%s4203] ss:$9 sm:$0xff] %v3166
      %v4257 = vld [vmem:[#allocation1] sm:$0xff]
      %4259 = vst [vmem:[#allocation1] ss:$9 sm:$0xff] %v2264
      %4260 = vst [vmem:[%s4191] ss:$9 sm:$0xff] %v2272
      %4261 = vst [vmem:[%s4193] ss:$9 sm:$0xff] %v2280
      %4262 = vst [vmem:[%s4195] ss:$9 sm:$0xff] %v2288
      %4263 = vst [vmem:[%s4197] ss:$9 sm:$0xff] %v2296
      %4264 = vst [vmem:[%s4199] ss:$9 sm:$0xff] %v2304
      %4265 = vst [vmem:[%s4201] ss:$9 sm:$0xff] %v2312
      %4266 = vst [vmem:[%s4203] ss:$9 sm:$0xff] %v2320
      %v4267 = vld [vmem:[#allocation1] sm:$0xff]
      %4269 = vst [vmem:[#allocation1] ss:$9 sm:$0xff] %v2328
      %4270 = vst [vmem:[%s4191] ss:$9 sm:$0xff] %v2336
      %4271 = vst [vmem:[%s4193] ss:$9 sm:$0xff] %v2344
      %4272 = vst [vmem:[%s4195] ss:$9 sm:$0xff] %v2352
      %4273 = vst [vmem:[%s4197] ss:$9 sm:$0xff] %v2360
      %4274 = vst [vmem:[%s4199] ss:$9 sm:$0xff] %v2368
      %4275 = vst [vmem:[%s4201] ss:$9 sm:$0xff] %v2376
      %4277 = vst [vmem:[%s4203] ss:$9 sm:$0xff] %v3174
      %v4278 = vld [vmem:[#allocation1] sm:$0xff]
      %4280 = vst [vmem:[#allocation1] ss:$9 sm:$0xff] %v2264
      %4281 = vst [vmem:[%s4191] ss:$9 sm:$0xff] %v2272
      %4282 = vst [vmem:[%s4193] ss:$9 sm:$0xff] %v2280
      %4283 = vst [vmem:[%s4195] ss:$9 sm:$0xff] %v2288
      %4284 = vst [vmem:[%s4197] ss:$9 sm:$0xff] %v2296
      %4285 = vst [vmem:[%s4199] ss:$9 sm:$0xff] %v2304
      %4286 = vst [vmem:[%s4201] ss:$9 sm:$0xff] %v2312
      %4287 = vst [vmem:[%s4203] ss:$9 sm:$0xff] %v2320
      %v4288 = vld [vmem:[#allocation1] sm:$0xff]
      %4290 = vst [vmem:[#allocation1] ss:$9 sm:$0xff] %v2328
      %4291 = vst [vmem:[%s4191] ss:$9 sm:$0xff] %v2336
      %4292 = vst [vmem:[%s4193] ss:$9 sm:$0xff] %v2344
      %4293 = vst [vmem:[%s4195] ss:$9 sm:$0xff] %v2352
      %4294 = vst [vmem:[%s4197] ss:$9 sm:$0xff] %v2360
      %4295 = vst [vmem:[%s4199] ss:$9 sm:$0xff] %v2368
      %4296 = vst [vmem:[%s4201] ss:$9 sm:$0xff] %v2376
      %4297 = vst [vmem:[%s4203] ss:$9 sm:$0xff] %v3174
      %v4298 = vld [vmem:[#allocation1] sm:$0xff]
      %4300 = vst [vmem:[#allocation1] ss:$9 sm:$0xff] %v2393
      %4301 = vst [vmem:[%s4191] ss:$9 sm:$0xff] %v2401
      %4302 = vst [vmem:[%s4193] ss:$9 sm:$0xff] %v2409
      %4303 = vst [vmem:[%s4195] ss:$9 sm:$0xff] %v2417
      %4304 = vst [vmem:[%s4197] ss:$9 sm:$0xff] %v2425
      %4305 = vst [vmem:[%s4199] ss:$9 sm:$0xff] %v2433
      %4306 = vst [vmem:[%s4201] ss:$9 sm:$0xff] %v2441
      %4307 = vst [vmem:[%s4203] ss:$9 sm:$0xff] %v2449
      %v4308 = vld [vmem:[#allocation1] sm:$0xff]
      %4310 = vst [vmem:[#allocation1] ss:$9 sm:$0xff] %v2457
      %4311 = vst [vmem:[%s4191] ss:$9 sm:$0xff] %v2465
      %4312 = vst [vmem:[%s4193] ss:$9 sm:$0xff] %v2473
      %4313 = vst [vmem:[%s4195] ss:$9 sm:$0xff] %v2481
      %4314 = vst [vmem:[%s4197] ss:$9 sm:$0xff] %v2489
      %4315 = vst [vmem:[%s4199] ss:$9 sm:$0xff] %v2497
      %4316 = vst [vmem:[%s4201] ss:$9 sm:$0xff] %v2505
      %4318 = vst [vmem:[%s4203] ss:$9 sm:$0xff] %v3182
      %v4319 = vld [vmem:[#allocation1] sm:$0xff]
      %4321 = vst [vmem:[#allocation1] ss:$9 sm:$0xff] %v2393
      %4322 = vst [vmem:[%s4191] ss:$9 sm:$0xff] %v2401
      %4323 = vst [vmem:[%s4193] ss:$9 sm:$0xff] %v2409
      %4324 = vst [vmem:[%s4195] ss:$9 sm:$0xff] %v2417
      %4325 = vst [vmem:[%s4197] ss:$9 sm:$0xff] %v2425
      %4326 = vst [vmem:[%s4199] ss:$9 sm:$0xff] %v2433
      %4327 = vst [vmem:[%s4201] ss:$9 sm:$0xff] %v2441
      %4328 = vst [vmem:[%s4203] ss:$9 sm:$0xff] %v2449
      %v4329 = vld [vmem:[#allocation1] sm:$0xff]
      %4331 = vst [vmem:[#allocation1] ss:$9 sm:$0xff] %v2457
      %4332 = vst [vmem:[%s4191] ss:$9 sm:$0xff] %v2465
      %4333 = vst [vmem:[%s4193] ss:$9 sm:$0xff] %v2473
      %4334 = vst [vmem:[%s4195] ss:$9 sm:$0xff] %v2481
      %4335 = vst [vmem:[%s4197] ss:$9 sm:$0xff] %v2489
      %4336 = vst [vmem:[%s4199] ss:$9 sm:$0xff] %v2497
      %4337 = vst [vmem:[%s4201] ss:$9 sm:$0xff] %v2505
      %4338 = vst [vmem:[%s4203] ss:$9 sm:$0xff] %v3182
      %v4339 = vld [vmem:[#allocation1] sm:$0xff]
      %4341 = vst [vmem:[#allocation1] ss:$9 sm:$0xff] %v2522
      %4342 = vst [vmem:[%s4191] ss:$9 sm:$0xff] %v2530
      %4343 = vst [vmem:[%s4193] ss:$9 sm:$0xff] %v2538
      %4344 = vst [vmem:[%s4195] ss:$9 sm:$0xff] %v2546
      %4345 = vst [vmem:[%s4197] ss:$9 sm:$0xff] %v2554
      %4346 = vst [vmem:[%s4199] ss:$9 sm:$0xff] %v2562
      %4347 = vst [vmem:[%s4201] ss:$9 sm:$0xff] %v2570
      %4348 = vst [vmem:[%s4203] ss:$9 sm:$0xff] %v2578
      %v4349 = vld [vmem:[#allocation1] sm:$0xff]
      %4351 = vst [vmem:[#allocation1] ss:$9 sm:$0xff] %v2586
      %4352 = vst [vmem:[%s4191] ss:$9 sm:$0xff] %v2594
      %4353 = vst [vmem:[%s4193] ss:$9 sm:$0xff] %v2602
      %4354 = vst [vmem:[%s4195] ss:$9 sm:$0xff] %v2610
      %4355 = vst [vmem:[%s4197] ss:$9 sm:$0xff] %v2618
      %4356 = vst [vmem:[%s4199] ss:$9 sm:$0xff] %v2626
      %4357 = vst [vmem:[%s4201] ss:$9 sm:$0xff] %v2634
      %4359 = vst [vmem:[%s4203] ss:$9 sm:$0xff] %v3190
      %v4360 = vld [vmem:[#allocation1] sm:$0xff]
      %4362 = vst [vmem:[#allocation1] ss:$9 sm:$0xff] %v2522
      %4363 = vst [vmem:[%s4191] ss:$9 sm:$0xff] %v2530
      %4364 = vst [vmem:[%s4193] ss:$9 sm:$0xff] %v2538
      %4365 = vst [vmem:[%s4195] ss:$9 sm:$0xff] %v2546
      %4366 = vst [vmem:[%s4197] ss:$9 sm:$0xff] %v2554
      %4367 = vst [vmem:[%s4199] ss:$9 sm:$0xff] %v2562
      %4368 = vst [vmem:[%s4201] ss:$9 sm:$0xff] %v2570
      %4369 = vst [vmem:[%s4203] ss:$9 sm:$0xff] %v2578
      %v4370 = vld [vmem:[#allocation1] sm:$0xff]
      %4372 = vst [vmem:[#allocation1] ss:$9 sm:$0xff] %v2586
      %4373 = vst [vmem:[%s4191] ss:$9 sm:$0xff] %v2594
      %4374 = vst [vmem:[%s4193] ss:$9 sm:$0xff] %v2602
      %4375 = vst [vmem:[%s4195] ss:$9 sm:$0xff] %v2610
      %4376 = vst [vmem:[%s4197] ss:$9 sm:$0xff] %v2618
      %4377 = vst [vmem:[%s4199] ss:$9 sm:$0xff] %v2626
      %4378 = vst [vmem:[%s4201] ss:$9 sm:$0xff] %v2634
      %4379 = vst [vmem:[%s4203] ss:$9 sm:$0xff] %v3190
      %v4380 = vld [vmem:[#allocation1] sm:$0xff]
      %4382 = vst [vmem:[#allocation1] ss:$9 sm:$0xff] %v2651
      %4383 = vst [vmem:[%s4191] ss:$9 sm:$0xff] %v2659
      %4384 = vst [vmem:[%s4193] ss:$9 sm:$0xff] %v2667
      %4385 = vst [vmem:[%s4195] ss:$9 sm:$0xff] %v2675
      %4386 = vst [vmem:[%s4197] ss:$9 sm:$0xff] %v2683
      %4387 = vst [vmem:[%s4199] ss:$9 sm:$0xff] %v2691
      %4388 = vst [vmem:[%s4201] ss:$9 sm:$0xff] %v2699
      %4389 = vst [vmem:[%s4203] ss:$9 sm:$0xff] %v2707
      %v4390 = vld [vmem:[#allocation1] sm:$0xff]
      %4392 = vst [vmem:[#allocation1] ss:$9 sm:$0xff] %v2715
      %4393 = vst [vmem:[%s4191] ss:$9 sm:$0xff] %v2723
      %4394 = vst [vmem:[%s4193] ss:$9 sm:$0xff] %v2731
      %4395 = vst [vmem:[%s4195] ss:$9 sm:$0xff] %v2739
      %4396 = vst [vmem:[%s4197] ss:$9 sm:$0xff] %v2747
      %4397 = vst [vmem:[%s4199] ss:$9 sm:$0xff] %v2755
      %4398 = vst [vmem:[%s4201] ss:$9 sm:$0xff] %v2763
      %4400 = vst [vmem:[%s4203] ss:$9 sm:$0xff] %v3198
      %v4401 = vld [vmem:[#allocation1] sm:$0xff]
      %4403 = vst [vmem:[#allocation1] ss:$9 sm:$0xff] %v2651
      %4404 = vst [vmem:[%s4191] ss:$9 sm:$0xff] %v2659
      %4405 = vst [vmem:[%s4193] ss:$9 sm:$0xff] %v2667
      %4406 = vst [vmem:[%s4195] ss:$9 sm:$0xff] %v2675
      %4407 = vst [vmem:[%s4197] ss:$9 sm:$0xff] %v2683
      %4408 = vst [vmem:[%s4199] ss:$9 sm:$0xff] %v2691
      %4409 = vst [vmem:[%s4201] ss:$9 sm:$0xff] %v2699
      %4410 = vst [vmem:[%s4203] ss:$9 sm:$0xff] %v2707
      %v4411 = vld [vmem:[#allocation1] sm:$0xff]
      %4413 = vst [vmem:[#allocation1] ss:$9 sm:$0xff] %v2715
      %4414 = vst [vmem:[%s4191] ss:$9 sm:$0xff] %v2723
      %4415 = vst [vmem:[%s4193] ss:$9 sm:$0xff] %v2731
      %4416 = vst [vmem:[%s4195] ss:$9 sm:$0xff] %v2739
      %4417 = vst [vmem:[%s4197] ss:$9 sm:$0xff] %v2747
      %4418 = vst [vmem:[%s4199] ss:$9 sm:$0xff] %v2755
      %4419 = vst [vmem:[%s4201] ss:$9 sm:$0xff] %v2763
      %4420 = vst [vmem:[%s4203] ss:$9 sm:$0xff] %v3198
      %v4421 = vld [vmem:[#allocation1] sm:$0xff]
      %4423 = vst [vmem:[#allocation1] ss:$9 sm:$0xff] %v2780
      %4424 = vst [vmem:[%s4191] ss:$9 sm:$0xff] %v2788
      %4425 = vst [vmem:[%s4193] ss:$9 sm:$0xff] %v2796
      %4426 = vst [vmem:[%s4195] ss:$9 sm:$0xff] %v2804
      %4427 = vst [vmem:[%s4197] ss:$9 sm:$0xff] %v2812
      %4428 = vst [vmem:[%s4199] ss:$9 sm:$0xff] %v2820
      %4429 = vst [vmem:[%s4201] ss:$9 sm:$0xff] %v2828
      %4430 = vst [vmem:[%s4203] ss:$9 sm:$0xff] %v2836
      %v4431 = vld [vmem:[#allocation1] sm:$0xff]
      %4433 = vst [vmem:[#allocation1] ss:$9 sm:$0xff] %v2844
      %4434 = vst [vmem:[%s4191] ss:$9 sm:$0xff] %v2852
      %4435 = vst [vmem:[%s4193] ss:$9 sm:$0xff] %v2860
      %4436 = vst [vmem:[%s4195] ss:$9 sm:$0xff] %v2868
      %4437 = vst [vmem:[%s4197] ss:$9 sm:$0xff] %v2876
      %4438 = vst [vmem:[%s4199] ss:$9 sm:$0xff] %v2884
      %4439 = vst [vmem:[%s4201] ss:$9 sm:$0xff] %v2892
      %4441 = vst [vmem:[%s4203] ss:$9 sm:$0xff] %v3206
      %v4442 = vld [vmem:[#allocation1] sm:$0xff]
      %4444 = vst [vmem:[#allocation1] ss:$9 sm:$0xff] %v2780
      %4445 = vst [vmem:[%s4191] ss:$9 sm:$0xff] %v2788
      %4446 = vst [vmem:[%s4193] ss:$9 sm:$0xff] %v2796
      %4447 = vst [vmem:[%s4195] ss:$9 sm:$0xff] %v2804
      %4448 = vst [vmem:[%s4197] ss:$9 sm:$0xff] %v2812
      %4449 = vst [vmem:[%s4199] ss:$9 sm:$0xff] %v2820
      %4450 = vst [vmem:[%s4201] ss:$9 sm:$0xff] %v2828
      %4451 = vst [vmem:[%s4203] ss:$9 sm:$0xff] %v2836
      %v4452 = vld [vmem:[#allocation1] sm:$0xff]
      %4454 = vst [vmem:[#allocation1] ss:$9 sm:$0xff] %v2844
      %4455 = vst [vmem:[%s4191] ss:$9 sm:$0xff] %v2852
      %4456 = vst [vmem:[%s4193] ss:$9 sm:$0xff] %v2860
      %4457 = vst [vmem:[%s4195] ss:$9 sm:$0xff] %v2868
      %4458 = vst [vmem:[%s4197] ss:$9 sm:$0xff] %v2876
      %4459 = vst [vmem:[%s4199] ss:$9 sm:$0xff] %v2884
      %4460 = vst [vmem:[%s4201] ss:$9 sm:$0xff] %v2892
      %4461 = vst [vmem:[%s4203] ss:$9 sm:$0xff] %v3206
      %v4462 = vld [vmem:[#allocation1] sm:$0xff]
      %4464 = vst [vmem:[#allocation1] ss:$9 sm:$0xff] %v2909
      %4465 = vst [vmem:[%s4191] ss:$9 sm:$0xff] %v2917
      %4466 = vst [vmem:[%s4193] ss:$9 sm:$0xff] %v2925
      %4467 = vst [vmem:[%s4195] ss:$9 sm:$0xff] %v2933
      %4468 = vst [vmem:[%s4197] ss:$9 sm:$0xff] %v2941
      %4469 = vst [vmem:[%s4199] ss:$9 sm:$0xff] %v2949
      %4470 = vst [vmem:[%s4201] ss:$9 sm:$0xff] %v2957
      %4471 = vst [vmem:[%s4203] ss:$9 sm:$0xff] %v2965
      %v4472 = vld [vmem:[#allocation1] sm:$0xff]
      %4474 = vst [vmem:[#allocation1] ss:$9 sm:$0xff] %v2973
      %4475 = vst [vmem:[%s4191] ss:$9 sm:$0xff] %v2981
      %4476 = vst [vmem:[%s4193] ss:$9 sm:$0xff] %v2989
      %4477 = vst [vmem:[%s4195] ss:$9 sm:$0xff] %v2997
      %4478 = vst [vmem:[%s4197] ss:$9 sm:$0xff] %v3005
      %4479 = vst [vmem:[%s4199] ss:$9 sm:$0xff] %v3013
      %4480 = vst [vmem:[%s4201] ss:$9 sm:$0xff] %v3021
      %4482 = vst [vmem:[%s4203] ss:$9 sm:$0xff] %v3214
      %v4483 = vld [vmem:[#allocation1] sm:$0xff]
      %4485 = vst [vmem:[#allocation1] ss:$9 sm:$0xff] %v2909
      %4486 = vst [vmem:[%s4191] ss:$9 sm:$0xff] %v2917
      %4487 = vst [vmem:[%s4193] ss:$9 sm:$0xff] %v2925
      %4488 = vst [vmem:[%s4195] ss:$9 sm:$0xff] %v2933
      %4489 = vst [vmem:[%s4197] ss:$9 sm:$0xff] %v2941
      %4490 = vst [vmem:[%s4199] ss:$9 sm:$0xff] %v2949
      %4491 = vst [vmem:[%s4201] ss:$9 sm:$0xff] %v2957
      %4492 = vst [vmem:[%s4203] ss:$9 sm:$0xff] %v2965
      %v4493 = vld [vmem:[#allocation1] sm:$0xff]
      %4495 = vst [vmem:[#allocation1] ss:$9 sm:$0xff] %v2973
      %4496 = vst [vmem:[%s4191] ss:$9 sm:$0xff] %v2981
      %4497 = vst [vmem:[%s4193] ss:$9 sm:$0xff] %v2989
      %4498 = vst [vmem:[%s4195] ss:$9 sm:$0xff] %v2997
      %4499 = vst [vmem:[%s4197] ss:$9 sm:$0xff] %v3005
      %4500 = vst [vmem:[%s4199] ss:$9 sm:$0xff] %v3013
      %4501 = vst [vmem:[%s4201] ss:$9 sm:$0xff] %v3021
      %4502 = vst [vmem:[%s4203] ss:$9 sm:$0xff] %v3214
      %v4503 = vld [vmem:[#allocation1] sm:$0xff]
      %4505 = vst [vmem:[#allocation1] ss:$9 sm:$0xff] %v3038
      %4506 = vst [vmem:[%s4191] ss:$9 sm:$0xff] %v3046
      %4507 = vst [vmem:[%s4193] ss:$9 sm:$0xff] %v3054
      %4508 = vst [vmem:[%s4195] ss:$9 sm:$0xff] %v3062
      %4509 = vst [vmem:[%s4197] ss:$9 sm:$0xff] %v3070
      %4510 = vst [vmem:[%s4199] ss:$9 sm:$0xff] %v3078
      %4511 = vst [vmem:[%s4201] ss:$9 sm:$0xff] %v3086
      %4512 = vst [vmem:[%s4203] ss:$9 sm:$0xff] %v3094
      %v4513 = vld [vmem:[#allocation1] sm:$0xff]
      %4515 = vst [vmem:[#allocation1] ss:$9 sm:$0xff] %v3102
      %4516 = vst [vmem:[%s4191] ss:$9 sm:$0xff] %v3110
      %4517 = vst [vmem:[%s4193] ss:$9 sm:$0xff] %v3118
      %4518 = vst [vmem:[%s4195] ss:$9 sm:$0xff] %v3126
      %4519 = vst [vmem:[%s4197] ss:$9 sm:$0xff] %v3134
      %4520 = vst [vmem:[%s4199] ss:$9 sm:$0xff] %v3142
      %4521 = vst [vmem:[%s4201] ss:$9 sm:$0xff] %v3150
      %4523 = vst [vmem:[%s4203] ss:$9 sm:$0xff] %v3222
      %v4524 = vld [vmem:[#allocation1] sm:$0xff]
      %4526 = vrot.lane.b32.xlu0 %v4205, 8
      %v4527 = vpop.permute.xlu0 %4526
      %4528 = vrot.lane.b32.xlu0 %v4216, 8
      %v4529 = vpop.permute.xlu0 %4528
      %4530 = vrot.lane.b32.xlu0 %v4226, 8
      %v4531 = vpop.permute.xlu0 %4530
      %4532 = vrot.lane.b32.xlu0 %v4237, 8
      %v4533 = vpop.permute.xlu0 %4532
      %4534 = vrot.lane.b32.xlu0 %v4247, 8
      %v4535 = vpop.permute.xlu0 %4534
      %4536 = vrot.lane.b32.xlu0 %v4257, 8
      %v4537 = vpop.permute.xlu0 %4536
      %4538 = vrot.lane.b32.xlu0 %v4267, 8
      %v4539 = vpop.permute.xlu0 %4538
      %4540 = vrot.lane.b32.xlu0 %v4278, 8
      %v4541 = vpop.permute.xlu0 %4540
      %4542 = vrot.lane.b32.xlu0 %v4288, 8
      %v4543 = vpop.permute.xlu0 %4542
      %4544 = vrot.lane.b32.xlu0 %v4298, 8
      %v4545 = vpop.permute.xlu0 %4544
      %4546 = vrot.lane.b32.xlu0 %v4308, 8
      %v4547 = vpop.permute.xlu0 %4546
      %4548 = vrot.lane.b32.xlu0 %v4319, 8
      %v4549 = vpop.permute.xlu0 %4548
      %4550 = vrot.lane.b32.xlu0 %v4329, 8
      %v4551 = vpop.permute.xlu0 %4550
      %4552 = vrot.lane.b32.xlu0 %v4339, 8
      %v4553 = vpop.permute.xlu0 %4552
      %4554 = vrot.lane.b32.xlu0 %v4349, 8
      %v4555 = vpop.permute.xlu0 %4554
      %4556 = vrot.lane.b32.xlu0 %v4360, 8
      %v4557 = vpop.permute.xlu0 %4556
      %4558 = vrot.lane.b32.xlu0 %v4370, 8
      %v4559 = vpop.permute.xlu0 %4558
      %4560 = vrot.lane.b32.xlu0 %v4380, 8
      %v4561 = vpop.permute.xlu0 %4560
      %4562 = vrot.lane.b32.xlu0 %v4390, 8
      %v4563 = vpop.permute.xlu0 %4562
      %4564 = vrot.lane.b32.xlu0 %v4401, 8
      %v4565 = vpop.permute.xlu0 %4564
      %4566 = vrot.lane.b32.xlu0 %v4411, 8
      %v4567 = vpop.permute.xlu0 %4566
      %4568 = vrot.lane.b32.xlu0 %v4421, 8
      %v4569 = vpop.permute.xlu0 %4568
      %4570 = vrot.lane.b32.xlu0 %v4431, 8
      %v4571 = vpop.permute.xlu0 %4570
      %4572 = vrot.lane.b32.xlu0 %v4442, 8
      %v4573 = vpop.permute.xlu0 %4572
      %4574 = vrot.lane.b32.xlu0 %v4452, 8
      %v4575 = vpop.permute.xlu0 %4574
      %4576 = vrot.lane.b32.xlu0 %v4462, 8
      %v4577 = vpop.permute.xlu0 %4576
      %4578 = vrot.lane.b32.xlu0 %v4472, 8
      %v4579 = vpop.permute.xlu0 %4578
      %4580 = vrot.lane.b32.xlu0 %v4483, 8
      %v4581 = vpop.permute.xlu0 %4580
      %4582 = vrot.lane.b32.xlu0 %v4493, 8
      %v4583 = vpop.permute.xlu0 %4582
      %4584 = vrot.lane.b32.xlu0 %v4503, 8
      %v4585 = vpop.permute.xlu0 %4584
      %4586 = vrot.lane.b32.xlu0 %v4513, 8
      %v4587 = vpop.permute.xlu0 %4586
      %4588 = vrot.lane.b32.xlu0 %v4524, 8
      %v4589 = vpop.permute.xlu0 %4588
      %4590 = vst [vmem:[#allocation1] ss:$9 sm:$0xff] %v2127
      %s4591 = scalar_lea.vmem [#allocation1], 1
      %4592 = vst [vmem:[%s4591] ss:$9 sm:$0xff] %v2135
      %s4593 = scalar_lea.vmem [#allocation1], 2
      %4594 = vst [vmem:[%s4593] ss:$9 sm:$0xff] %v2143
      %s4595 = scalar_lea.vmem [#allocation1], 3
      %4596 = vst [vmem:[%s4595] ss:$9 sm:$0xff] %v2151
      %s4597 = scalar_lea.vmem [#allocation1], 4
      %4598 = vst [vmem:[%s4597] ss:$9 sm:$0xff] %v2159
      %s4599 = scalar_lea.vmem [#allocation1], 5
      %4600 = vst [vmem:[%s4599] ss:$9 sm:$0xff] %v2167
      %s4601 = scalar_lea.vmem [#allocation1], 6
      %4602 = vst [vmem:[%s4601] ss:$9 sm:$0xff] %v2175
      %s4603 = scalar_lea.vmem [#allocation1], 7
      %4604 = vst [vmem:[%s4603] ss:$9 sm:$0xff] %v2183
      %v4605 = vld [vmem:[#allocation1] sm:$0xff]
      %4607 = vst [vmem:[#allocation1] ss:$9 sm:$0xff] %v2191
      %4608 = vst [vmem:[%s4591] ss:$9 sm:$0xff] %v2199
      %4609 = vst [vmem:[%s4593] ss:$9 sm:$0xff] %v2207
      %4610 = vst [vmem:[%s4595] ss:$9 sm:$0xff] %v2215
      %4611 = vst [vmem:[%s4597] ss:$9 sm:$0xff] %v2223
      %4612 = vst [vmem:[%s4599] ss:$9 sm:$0xff] %v2231
      %4613 = vst [vmem:[%s4601] ss:$9 sm:$0xff] %v2239
      %4614 = vst [vmem:[%s4603] ss:$9 sm:$0xff] %v2247
      %v4615 = vld [vmem:[#allocation1] sm:$0xff]
      %4617 = vst [vmem:[#allocation1] ss:$9 sm:$0xff] %v2127
      %4618 = vst [vmem:[%s4591] ss:$9 sm:$0xff] %v2135
      %4619 = vst [vmem:[%s4593] ss:$9 sm:$0xff] %v2143
      %4620 = vst [vmem:[%s4595] ss:$9 sm:$0xff] %v2151
      %4621 = vst [vmem:[%s4597] ss:$9 sm:$0xff] %v2159
      %4622 = vst [vmem:[%s4599] ss:$9 sm:$0xff] %v2167
      %4623 = vst [vmem:[%s4601] ss:$9 sm:$0xff] %v2175
      %4624 = vst [vmem:[%s4603] ss:$9 sm:$0xff] %v2183
      %v4625 = vld [vmem:[#allocation1] sm:$0xff]
      %4627 = vst [vmem:[#allocation1] ss:$9 sm:$0xff] %v2191
      %4628 = vst [vmem:[%s4591] ss:$9 sm:$0xff] %v2199
      %4629 = vst [vmem:[%s4593] ss:$9 sm:$0xff] %v2207
      %4630 = vst [vmem:[%s4595] ss:$9 sm:$0xff] %v2215
      %4631 = vst [vmem:[%s4597] ss:$9 sm:$0xff] %v2223
      %4632 = vst [vmem:[%s4599] ss:$9 sm:$0xff] %v2231
      %4633 = vst [vmem:[%s4601] ss:$9 sm:$0xff] %v2239
      %4634 = vst [vmem:[%s4603] ss:$9 sm:$0xff] %v2247
      %v4635 = vld [vmem:[#allocation1] sm:$0xff]
      %4637 = vst [vmem:[#allocation1] ss:$9 sm:$0xff] %v2256
      %4638 = vst [vmem:[%s4591] ss:$9 sm:$0xff] %v2264
      %4639 = vst [vmem:[%s4593] ss:$9 sm:$0xff] %v2272
      %4640 = vst [vmem:[%s4595] ss:$9 sm:$0xff] %v2280
      %4641 = vst [vmem:[%s4597] ss:$9 sm:$0xff] %v2288
      %4642 = vst [vmem:[%s4599] ss:$9 sm:$0xff] %v2296
      %4643 = vst [vmem:[%s4601] ss:$9 sm:$0xff] %v2304
      %4644 = vst [vmem:[%s4603] ss:$9 sm:$0xff] %v2312
      %v4645 = vld [vmem:[#allocation1] sm:$0xff]
      %4647 = vst [vmem:[#allocation1] ss:$9 sm:$0xff] %v2320
      %4648 = vst [vmem:[%s4591] ss:$9 sm:$0xff] %v2328
      %4649 = vst [vmem:[%s4593] ss:$9 sm:$0xff] %v2336
      %4650 = vst [vmem:[%s4595] ss:$9 sm:$0xff] %v2344
      %4651 = vst [vmem:[%s4597] ss:$9 sm:$0xff] %v2352
      %4652 = vst [vmem:[%s4599] ss:$9 sm:$0xff] %v2360
      %4653 = vst [vmem:[%s4601] ss:$9 sm:$0xff] %v2368
      %4654 = vst [vmem:[%s4603] ss:$9 sm:$0xff] %v2376
      %v4655 = vld [vmem:[#allocation1] sm:$0xff]
      %4657 = vst [vmem:[#allocation1] ss:$9 sm:$0xff] %v2256
      %4658 = vst [vmem:[%s4591] ss:$9 sm:$0xff] %v2264
      %4659 = vst [vmem:[%s4593] ss:$9 sm:$0xff] %v2272
      %4660 = vst [vmem:[%s4595] ss:$9 sm:$0xff] %v2280
      %4661 = vst [vmem:[%s4597] ss:$9 sm:$0xff] %v2288
      %4662 = vst [vmem:[%s4599] ss:$9 sm:$0xff] %v2296
      %4663 = vst [vmem:[%s4601] ss:$9 sm:$0xff] %v2304
      %4664 = vst [vmem:[%s4603] ss:$9 sm:$0xff] %v2312
      %v4665 = vld [vmem:[#allocation1] sm:$0xff]
      %4667 = vst [vmem:[#allocation1] ss:$9 sm:$0xff] %v2320
      %4668 = vst [vmem:[%s4591] ss:$9 sm:$0xff] %v2328
      %4669 = vst [vmem:[%s4593] ss:$9 sm:$0xff] %v2336
      %4670 = vst [vmem:[%s4595] ss:$9 sm:$0xff] %v2344
      %4671 = vst [vmem:[%s4597] ss:$9 sm:$0xff] %v2352
      %4672 = vst [vmem:[%s4599] ss:$9 sm:$0xff] %v2360
      %4673 = vst [vmem:[%s4601] ss:$9 sm:$0xff] %v2368
      %4674 = vst [vmem:[%s4603] ss:$9 sm:$0xff] %v2376
      %v4675 = vld [vmem:[#allocation1] sm:$0xff]
      %4677 = vst [vmem:[#allocation1] ss:$9 sm:$0xff] %v2385
      %4678 = vst [vmem:[%s4591] ss:$9 sm:$0xff] %v2393
      %4679 = vst [vmem:[%s4593] ss:$9 sm:$0xff] %v2401
      %4680 = vst [vmem:[%s4595] ss:$9 sm:$0xff] %v2409
      %4681 = vst [vmem:[%s4597] ss:$9 sm:$0xff] %v2417
      %4682 = vst [vmem:[%s4599] ss:$9 sm:$0xff] %v2425
      %4683 = vst [vmem:[%s4601] ss:$9 sm:$0xff] %v2433
      %4684 = vst [vmem:[%s4603] ss:$9 sm:$0xff] %v2441
      %v4685 = vld [vmem:[#allocation1] sm:$0xff]
      %4687 = vst [vmem:[#allocation1] ss:$9 sm:$0xff] %v2449
      %4688 = vst [vmem:[%s4591] ss:$9 sm:$0xff] %v2457
      %4689 = vst [vmem:[%s4593] ss:$9 sm:$0xff] %v2465
      %4690 = vst [vmem:[%s4595] ss:$9 sm:$0xff] %v2473
      %4691 = vst [vmem:[%s4597] ss:$9 sm:$0xff] %v2481
      %4692 = vst [vmem:[%s4599] ss:$9 sm:$0xff] %v2489
      %4693 = vst [vmem:[%s4601] ss:$9 sm:$0xff] %v2497
      %4694 = vst [vmem:[%s4603] ss:$9 sm:$0xff] %v2505
      %v4695 = vld [vmem:[#allocation1] sm:$0xff]
      %4697 = vst [vmem:[#allocation1] ss:$9 sm:$0xff] %v2385
      %4698 = vst [vmem:[%s4591] ss:$9 sm:$0xff] %v2393
      %4699 = vst [vmem:[%s4593] ss:$9 sm:$0xff] %v2401
      %4700 = vst [vmem:[%s4595] ss:$9 sm:$0xff] %v2409
      %4701 = vst [vmem:[%s4597] ss:$9 sm:$0xff] %v2417
      %4702 = vst [vmem:[%s4599] ss:$9 sm:$0xff] %v2425
      %4703 = vst [vmem:[%s4601] ss:$9 sm:$0xff] %v2433
      %4704 = vst [vmem:[%s4603] ss:$9 sm:$0xff] %v2441
      %v4705 = vld [vmem:[#allocation1] sm:$0xff]
      %4707 = vst [vmem:[#allocation1] ss:$9 sm:$0xff] %v2449
      %4708 = vst [vmem:[%s4591] ss:$9 sm:$0xff] %v2457
      %4709 = vst [vmem:[%s4593] ss:$9 sm:$0xff] %v2465
      %4710 = vst [vmem:[%s4595] ss:$9 sm:$0xff] %v2473
      %4711 = vst [vmem:[%s4597] ss:$9 sm:$0xff] %v2481
      %4712 = vst [vmem:[%s4599] ss:$9 sm:$0xff] %v2489
      %4713 = vst [vmem:[%s4601] ss:$9 sm:$0xff] %v2497
      %4714 = vst [vmem:[%s4603] ss:$9 sm:$0xff] %v2505
      %v4715 = vld [vmem:[#allocation1] sm:$0xff]
      %4717 = vst [vmem:[#allocation1] ss:$9 sm:$0xff] %v2514
      %4718 = vst [vmem:[%s4591] ss:$9 sm:$0xff] %v2522
      %4719 = vst [vmem:[%s4593] ss:$9 sm:$0xff] %v2530
      %4720 = vst [vmem:[%s4595] ss:$9 sm:$0xff] %v2538
      %4721 = vst [vmem:[%s4597] ss:$9 sm:$0xff] %v2546
      %4722 = vst [vmem:[%s4599] ss:$9 sm:$0xff] %v2554
      %4723 = vst [vmem:[%s4601] ss:$9 sm:$0xff] %v2562
      %4724 = vst [vmem:[%s4603] ss:$9 sm:$0xff] %v2570
      %v4725 = vld [vmem:[#allocation1] sm:$0xff]
      %4727 = vst [vmem:[#allocation1] ss:$9 sm:$0xff] %v2578
      %4728 = vst [vmem:[%s4591] ss:$9 sm:$0xff] %v2586
      %4729 = vst [vmem:[%s4593] ss:$9 sm:$0xff] %v2594
      %4730 = vst [vmem:[%s4595] ss:$9 sm:$0xff] %v2602
      %4731 = vst [vmem:[%s4597] ss:$9 sm:$0xff] %v2610
      %4732 = vst [vmem:[%s4599] ss:$9 sm:$0xff] %v2618
      %4733 = vst [vmem:[%s4601] ss:$9 sm:$0xff] %v2626
      %4734 = vst [vmem:[%s4603] ss:$9 sm:$0xff] %v2634
      %v4735 = vld [vmem:[#allocation1] sm:$0xff]
      %4737 = vst [vmem:[#allocation1] ss:$9 sm:$0xff] %v2514
      %4738 = vst [vmem:[%s4591] ss:$9 sm:$0xff] %v2522
      %4739 = vst [vmem:[%s4593] ss:$9 sm:$0xff] %v2530
      %4740 = vst [vmem:[%s4595] ss:$9 sm:$0xff] %v2538
      %4741 = vst [vmem:[%s4597] ss:$9 sm:$0xff] %v2546
      %4742 = vst [vmem:[%s4599] ss:$9 sm:$0xff] %v2554
      %4743 = vst [vmem:[%s4601] ss:$9 sm:$0xff] %v2562
      %4744 = vst [vmem:[%s4603] ss:$9 sm:$0xff] %v2570
      %v4745 = vld [vmem:[#allocation1] sm:$0xff]
      %4747 = vst [vmem:[#allocation1] ss:$9 sm:$0xff] %v2578
      %4748 = vst [vmem:[%s4591] ss:$9 sm:$0xff] %v2586
      %4749 = vst [vmem:[%s4593] ss:$9 sm:$0xff] %v2594
      %4750 = vst [vmem:[%s4595] ss:$9 sm:$0xff] %v2602
      %4751 = vst [vmem:[%s4597] ss:$9 sm:$0xff] %v2610
      %4752 = vst [vmem:[%s4599] ss:$9 sm:$0xff] %v2618
      %4753 = vst [vmem:[%s4601] ss:$9 sm:$0xff] %v2626
      %4754 = vst [vmem:[%s4603] ss:$9 sm:$0xff] %v2634
      %v4755 = vld [vmem:[#allocation1] sm:$0xff]
      %4757 = vst [vmem:[#allocation1] ss:$9 sm:$0xff] %v2643
      %4758 = vst [vmem:[%s4591] ss:$9 sm:$0xff] %v2651
      %4759 = vst [vmem:[%s4593] ss:$9 sm:$0xff] %v2659
      %4760 = vst [vmem:[%s4595] ss:$9 sm:$0xff] %v2667
      %4761 = vst [vmem:[%s4597] ss:$9 sm:$0xff] %v2675
      %4762 = vst [vmem:[%s4599] ss:$9 sm:$0xff] %v2683
      %4763 = vst [vmem:[%s4601] ss:$9 sm:$0xff] %v2691
      %4764 = vst [vmem:[%s4603] ss:$9 sm:$0xff] %v2699
      %v4765 = vld [vmem:[#allocation1] sm:$0xff]
      %4767 = vst [vmem:[#allocation1] ss:$9 sm:$0xff] %v2707
      %4768 = vst [vmem:[%s4591] ss:$9 sm:$0xff] %v2715
      %4769 = vst [vmem:[%s4593] ss:$9 sm:$0xff] %v2723
      %4770 = vst [vmem:[%s4595] ss:$9 sm:$0xff] %v2731
      %4771 = vst [vmem:[%s4597] ss:$9 sm:$0xff] %v2739
      %4772 = vst [vmem:[%s4599] ss:$9 sm:$0xff] %v2747
      %4773 = vst [vmem:[%s4601] ss:$9 sm:$0xff] %v2755
      %4774 = vst [vmem:[%s4603] ss:$9 sm:$0xff] %v2763
      %v4775 = vld [vmem:[#allocation1] sm:$0xff]
      %4777 = vst [vmem:[#allocation1] ss:$9 sm:$0xff] %v2643
      %4778 = vst [vmem:[%s4591] ss:$9 sm:$0xff] %v2651
      %4779 = vst [vmem:[%s4593] ss:$9 sm:$0xff] %v2659
      %4780 = vst [vmem:[%s4595] ss:$9 sm:$0xff] %v2667
      %4781 = vst [vmem:[%s4597] ss:$9 sm:$0xff] %v2675
      %4782 = vst [vmem:[%s4599] ss:$9 sm:$0xff] %v2683
      %4783 = vst [vmem:[%s4601] ss:$9 sm:$0xff] %v2691
      %4784 = vst [vmem:[%s4603] ss:$9 sm:$0xff] %v2699
      %v4785 = vld [vmem:[#allocation1] sm:$0xff]
      %4787 = vst [vmem:[#allocation1] ss:$9 sm:$0xff] %v2707
      %4788 = vst [vmem:[%s4591] ss:$9 sm:$0xff] %v2715
      %4789 = vst [vmem:[%s4593] ss:$9 sm:$0xff] %v2723
      %4790 = vst [vmem:[%s4595] ss:$9 sm:$0xff] %v2731
      %4791 = vst [vmem:[%s4597] ss:$9 sm:$0xff] %v2739
      %4792 = vst [vmem:[%s4599] ss:$9 sm:$0xff] %v2747
      %4793 = vst [vmem:[%s4601] ss:$9 sm:$0xff] %v2755
      %4794 = vst [vmem:[%s4603] ss:$9 sm:$0xff] %v2763
      %v4795 = vld [vmem:[#allocation1] sm:$0xff]
      %4797 = vst [vmem:[#allocation1] ss:$9 sm:$0xff] %v2772
      %4798 = vst [vmem:[%s4591] ss:$9 sm:$0xff] %v2780
      %4799 = vst [vmem:[%s4593] ss:$9 sm:$0xff] %v2788
      %4800 = vst [vmem:[%s4595] ss:$9 sm:$0xff] %v2796
      %4801 = vst [vmem:[%s4597] ss:$9 sm:$0xff] %v2804
      %4802 = vst [vmem:[%s4599] ss:$9 sm:$0xff] %v2812
      %4803 = vst [vmem:[%s4601] ss:$9 sm:$0xff] %v2820
      %4804 = vst [vmem:[%s4603] ss:$9 sm:$0xff] %v2828
      %v4805 = vld [vmem:[#allocation1] sm:$0xff]
      %4807 = vst [vmem:[#allocation1] ss:$9 sm:$0xff] %v2836
      %4808 = vst [vmem:[%s4591] ss:$9 sm:$0xff] %v2844
      %4809 = vst [vmem:[%s4593] ss:$9 sm:$0xff] %v2852
      %4810 = vst [vmem:[%s4595] ss:$9 sm:$0xff] %v2860
      %4811 = vst [vmem:[%s4597] ss:$9 sm:$0xff] %v2868
      %4812 = vst [vmem:[%s4599] ss:$9 sm:$0xff] %v2876
      %4813 = vst [vmem:[%s4601] ss:$9 sm:$0xff] %v2884
      %4814 = vst [vmem:[%s4603] ss:$9 sm:$0xff] %v2892
      %v4815 = vld [vmem:[#allocation1] sm:$0xff]
      %4817 = vst [vmem:[#allocation1] ss:$9 sm:$0xff] %v2772
      %4818 = vst [vmem:[%s4591] ss:$9 sm:$0xff] %v2780
      %4819 = vst [vmem:[%s4593] ss:$9 sm:$0xff] %v2788
      %4820 = vst [vmem:[%s4595] ss:$9 sm:$0xff] %v2796
      %4821 = vst [vmem:[%s4597] ss:$9 sm:$0xff] %v2804
      %4822 = vst [vmem:[%s4599] ss:$9 sm:$0xff] %v2812
      %4823 = vst [vmem:[%s4601] ss:$9 sm:$0xff] %v2820
      %4824 = vst [vmem:[%s4603] ss:$9 sm:$0xff] %v2828
      %v4825 = vld [vmem:[#allocation1] sm:$0xff]
      %4827 = vst [vmem:[#allocation1] ss:$9 sm:$0xff] %v2836
      %4828 = vst [vmem:[%s4591] ss:$9 sm:$0xff] %v2844
      %4829 = vst [vmem:[%s4593] ss:$9 sm:$0xff] %v2852
      %4830 = vst [vmem:[%s4595] ss:$9 sm:$0xff] %v2860
      %4831 = vst [vmem:[%s4597] ss:$9 sm:$0xff] %v2868
      %4832 = vst [vmem:[%s4599] ss:$9 sm:$0xff] %v2876
      %4833 = vst [vmem:[%s4601] ss:$9 sm:$0xff] %v2884
      %4834 = vst [vmem:[%s4603] ss:$9 sm:$0xff] %v2892
      %v4835 = vld [vmem:[#allocation1] sm:$0xff]
      %4837 = vst [vmem:[#allocation1] ss:$9 sm:$0xff] %v2901
      %4838 = vst [vmem:[%s4591] ss:$9 sm:$0xff] %v2909
      %4839 = vst [vmem:[%s4593] ss:$9 sm:$0xff] %v2917
      %4840 = vst [vmem:[%s4595] ss:$9 sm:$0xff] %v2925
      %4841 = vst [vmem:[%s4597] ss:$9 sm:$0xff] %v2933
      %4842 = vst [vmem:[%s4599] ss:$9 sm:$0xff] %v2941
      %4843 = vst [vmem:[%s4601] ss:$9 sm:$0xff] %v2949
      %4844 = vst [vmem:[%s4603] ss:$9 sm:$0xff] %v2957
      %v4845 = vld [vmem:[#allocation1] sm:$0xff]
      %4847 = vst [vmem:[#allocation1] ss:$9 sm:$0xff] %v2965
      %4848 = vst [vmem:[%s4591] ss:$9 sm:$0xff] %v2973
      %4849 = vst [vmem:[%s4593] ss:$9 sm:$0xff] %v2981
      %4850 = vst [vmem:[%s4595] ss:$9 sm:$0xff] %v2989
      %4851 = vst [vmem:[%s4597] ss:$9 sm:$0xff] %v2997
      %4852 = vst [vmem:[%s4599] ss:$9 sm:$0xff] %v3005
      %4853 = vst [vmem:[%s4601] ss:$9 sm:$0xff] %v3013
      %4854 = vst [vmem:[%s4603] ss:$9 sm:$0xff] %v3021
      %v4855 = vld [vmem:[#allocation1] sm:$0xff]
      %4857 = vst [vmem:[#allocation1] ss:$9 sm:$0xff] %v2901
      %4858 = vst [vmem:[%s4591] ss:$9 sm:$0xff] %v2909
      %4859 = vst [vmem:[%s4593] ss:$9 sm:$0xff] %v2917
      %4860 = vst [vmem:[%s4595] ss:$9 sm:$0xff] %v2925
      %4861 = vst [vmem:[%s4597] ss:$9 sm:$0xff] %v2933
      %4862 = vst [vmem:[%s4599] ss:$9 sm:$0xff] %v2941
      %4863 = vst [vmem:[%s4601] ss:$9 sm:$0xff] %v2949
      %4864 = vst [vmem:[%s4603] ss:$9 sm:$0xff] %v2957
      %v4865 = vld [vmem:[#allocation1] sm:$0xff]
      %4867 = vst [vmem:[#allocation1] ss:$9 sm:$0xff] %v2965
      %4868 = vst [vmem:[%s4591] ss:$9 sm:$0xff] %v2973
      %4869 = vst [vmem:[%s4593] ss:$9 sm:$0xff] %v2981
      %4870 = vst [vmem:[%s4595] ss:$9 sm:$0xff] %v2989
      %4871 = vst [vmem:[%s4597] ss:$9 sm:$0xff] %v2997
      %4872 = vst [vmem:[%s4599] ss:$9 sm:$0xff] %v3005
      %4873 = vst [vmem:[%s4601] ss:$9 sm:$0xff] %v3013
      %4874 = vst [vmem:[%s4603] ss:$9 sm:$0xff] %v3021
      %v4875 = vld [vmem:[#allocation1] sm:$0xff]
      %4877 = vst [vmem:[#allocation1] ss:$9 sm:$0xff] %v3030
      %4878 = vst [vmem:[%s4591] ss:$9 sm:$0xff] %v3038
      %4879 = vst [vmem:[%s4593] ss:$9 sm:$0xff] %v3046
      %4880 = vst [vmem:[%s4595] ss:$9 sm:$0xff] %v3054
      %4881 = vst [vmem:[%s4597] ss:$9 sm:$0xff] %v3062
      %4882 = vst [vmem:[%s4599] ss:$9 sm:$0xff] %v3070
      %4883 = vst [vmem:[%s4601] ss:$9 sm:$0xff] %v3078
      %4884 = vst [vmem:[%s4603] ss:$9 sm:$0xff] %v3086
      %v4885 = vld [vmem:[#allocation1] sm:$0xff]
      %4887 = vst [vmem:[#allocation1] ss:$9 sm:$0xff] %v3094
      %4888 = vst [vmem:[%s4591] ss:$9 sm:$0xff] %v3102
      %4889 = vst [vmem:[%s4593] ss:$9 sm:$0xff] %v3110
      %4890 = vst [vmem:[%s4595] ss:$9 sm:$0xff] %v3118
      %4891 = vst [vmem:[%s4597] ss:$9 sm:$0xff] %v3126
      %4892 = vst [vmem:[%s4599] ss:$9 sm:$0xff] %v3134
      %4893 = vst [vmem:[%s4601] ss:$9 sm:$0xff] %v3142
      %4894 = vst [vmem:[%s4603] ss:$9 sm:$0xff] %v3150
      %v4895 = vld [vmem:[#allocation1] sm:$0xff]
      %4897 = vst [vmem:[#allocation1] ss:$9 sm:$0xff] %v3030
      %4898 = vst [vmem:[%s4591] ss:$9 sm:$0xff] %v3038
      %4899 = vst [vmem:[%s4593] ss:$9 sm:$0xff] %v3046
      %4900 = vst [vmem:[%s4595] ss:$9 sm:$0xff] %v3054
      %4901 = vst [vmem:[%s4597] ss:$9 sm:$0xff] %v3062
      %4902 = vst [vmem:[%s4599] ss:$9 sm:$0xff] %v3070
      %4903 = vst [vmem:[%s4601] ss:$9 sm:$0xff] %v3078
      %4904 = vst [vmem:[%s4603] ss:$9 sm:$0xff] %v3086
      %v4905 = vld [vmem:[#allocation1] sm:$0xff]
      %4907 = vst [vmem:[#allocation1] ss:$9 sm:$0xff] %v3094
      %4908 = vst [vmem:[%s4591] ss:$9 sm:$0xff] %v3102
      %4909 = vst [vmem:[%s4593] ss:$9 sm:$0xff] %v3110
      %4910 = vst [vmem:[%s4595] ss:$9 sm:$0xff] %v3118
      %4911 = vst [vmem:[%s4597] ss:$9 sm:$0xff] %v3126
      %4912 = vst [vmem:[%s4599] ss:$9 sm:$0xff] %v3134
      %4913 = vst [vmem:[%s4601] ss:$9 sm:$0xff] %v3142
      %4914 = vst [vmem:[%s4603] ss:$9 sm:$0xff] %v3150
      %v4915 = vld [vmem:[#allocation1] sm:$0xff]
      %4917 = vrot.lane.b32.xlu0 %v4605, 12
      %v4918 = vpop.permute.xlu0 %4917
      %4919 = vrot.lane.b32.xlu0 %v4615, 12
      %v4920 = vpop.permute.xlu0 %4919
      %4921 = vrot.lane.b32.xlu0 %v4625, 12
      %v4922 = vpop.permute.xlu0 %4921
      %4923 = vrot.lane.b32.xlu0 %v4635, 12
      %v4924 = vpop.permute.xlu0 %4923
      %4925 = vrot.lane.b32.xlu0 %v4645, 12
      %v4926 = vpop.permute.xlu0 %4925
      %4927 = vrot.lane.b32.xlu0 %v4655, 12
      %v4928 = vpop.permute.xlu0 %4927
      %4929 = vrot.lane.b32.xlu0 %v4665, 12
      %v4930 = vpop.permute.xlu0 %4929
      %4931 = vrot.lane.b32.xlu0 %v4675, 12
      %v4932 = vpop.permute.xlu0 %4931
      %4933 = vrot.lane.b32.xlu0 %v4685, 12
      %v4934 = vpop.permute.xlu0 %4933
      %4935 = vrot.lane.b32.xlu0 %v4695, 12
      %v4936 = vpop.permute.xlu0 %4935
      %4937 = vrot.lane.b32.xlu0 %v4705, 12
      %v4938 = vpop.permute.xlu0 %4937
      %4939 = vrot.lane.b32.xlu0 %v4715, 12
      %v4940 = vpop.permute.xlu0 %4939
      %4941 = vrot.lane.b32.xlu0 %v4725, 12
      %v4942 = vpop.permute.xlu0 %4941
      %4943 = vrot.lane.b32.xlu0 %v4735, 12
      %v4944 = vpop.permute.xlu0 %4943
      %4945 = vrot.lane.b32.xlu0 %v4745, 12
      %v4946 = vpop.permute.xlu0 %4945
      %4947 = vrot.lane.b32.xlu0 %v4755, 12
      %v4948 = vpop.permute.xlu0 %4947
      %4949 = vrot.lane.b32.xlu0 %v4765, 12
      %v4950 = vpop.permute.xlu0 %4949
      %4951 = vrot.lane.b32.xlu0 %v4775, 12
      %v4952 = vpop.permute.xlu0 %4951
      %4953 = vrot.lane.b32.xlu0 %v4785, 12
      %v4954 = vpop.permute.xlu0 %4953
      %4955 = vrot.lane.b32.xlu0 %v4795, 12
      %v4956 = vpop.permute.xlu0 %4955
      %4957 = vrot.lane.b32.xlu0 %v4805, 12
      %v4958 = vpop.permute.xlu0 %4957
      %4959 = vrot.lane.b32.xlu0 %v4815, 12
      %v4960 = vpop.permute.xlu0 %4959
      %4961 = vrot.lane.b32.xlu0 %v4825, 12
      %v4962 = vpop.permute.xlu0 %4961
      %4963 = vrot.lane.b32.xlu0 %v4835, 12
      %v4964 = vpop.permute.xlu0 %4963
      %4965 = vrot.lane.b32.xlu0 %v4845, 12
      %v4966 = vpop.permute.xlu0 %4965
      %4967 = vrot.lane.b32.xlu0 %v4855, 12
      %v4968 = vpop.permute.xlu0 %4967
      %4969 = vrot.lane.b32.xlu0 %v4865, 12
      %v4970 = vpop.permute.xlu0 %4969
      %4971 = vrot.lane.b32.xlu0 %v4875, 12
      %v4972 = vpop.permute.xlu0 %4971
      %4973 = vrot.lane.b32.xlu0 %v4885, 12
      %v4974 = vpop.permute.xlu0 %4973
      %4975 = vrot.lane.b32.xlu0 %v4895, 12
      %v4976 = vpop.permute.xlu0 %4975
      %4977 = vrot.lane.b32.xlu0 %v4905, 12
      %v4978 = vpop.permute.xlu0 %4977
      %4979 = vrot.lane.b32.xlu0 %v4915, 12
      %v4980 = vpop.permute.xlu0 %4979
      %4981 = vst [vmem:[#allocation1] ss:$9 sm:$0xff] %v1334
      %s4982 = scalar_lea.vmem [#allocation1], 1
      %4983 = vst [vmem:[%s4982] ss:$9 sm:$0xff] %v1338
      %s4984 = scalar_lea.vmem [#allocation1], 2
      %4985 = vst [vmem:[%s4984] ss:$9 sm:$0xff] %v1342
      %s4986 = scalar_lea.vmem [#allocation1], 3
      %4987 = vst [vmem:[%s4986] ss:$9 sm:$0xff] %v1346
      %s4988 = scalar_lea.vmem [#allocation1], 4
      %4989 = vst [vmem:[%s4988] ss:$9 sm:$0xff] %v1350
      %s4990 = scalar_lea.vmem [#allocation1], 5
      %4991 = vst [vmem:[%s4990] ss:$9 sm:$0xff] %v1354
      %s4992 = scalar_lea.vmem [#allocation1], 6
      %4993 = vst [vmem:[%s4992] ss:$9 sm:$0xff] %v1358
      %s4994 = scalar_lea.vmem [#allocation1], 7
      %4995 = vst [vmem:[%s4994] ss:$9 sm:$0xff] %v1362
      %v4996 = vld [vmem:[#allocation1] sm:$0xff]
      %4998 = vst [vmem:[#allocation1] ss:$9 sm:$0xff] %v1366
      %4999 = vst [vmem:[%s4982] ss:$9 sm:$0xff] %v1370
      %5000 = vst [vmem:[%s4984] ss:$9 sm:$0xff] %v1374
      %5001 = vst [vmem:[%s4986] ss:$9 sm:$0xff] %v1378
      %5002 = vst [vmem:[%s4988] ss:$9 sm:$0xff] %v1382
      %5003 = vst [vmem:[%s4990] ss:$9 sm:$0xff] %v1386
      %5004 = vst [vmem:[%s4992] ss:$9 sm:$0xff] %v1390
      %5005 = vst [vmem:[%s4994] ss:$9 sm:$0xff] %v1394
      %v5006 = vld [vmem:[#allocation1] sm:$0xff]
      %5008 = vst [vmem:[#allocation1] ss:$9 sm:$0xff] %v1334
      %5009 = vst [vmem:[%s4982] ss:$9 sm:$0xff] %v1338
      %5010 = vst [vmem:[%s4984] ss:$9 sm:$0xff] %v1342
      %5011 = vst [vmem:[%s4986] ss:$9 sm:$0xff] %v1346
      %5012 = vst [vmem:[%s4988] ss:$9 sm:$0xff] %v1350
      %5013 = vst [vmem:[%s4990] ss:$9 sm:$0xff] %v1354
      %5014 = vst [vmem:[%s4992] ss:$9 sm:$0xff] %v1358
      %5015 = vst [vmem:[%s4994] ss:$9 sm:$0xff] %v1362
      %v5016 = vld [vmem:[#allocation1] sm:$0xff]
      %5018 = vst [vmem:[#allocation1] ss:$9 sm:$0xff] %v1366
      %5019 = vst [vmem:[%s4982] ss:$9 sm:$0xff] %v1370
      %5020 = vst [vmem:[%s4984] ss:$9 sm:$0xff] %v1374
      %5021 = vst [vmem:[%s4986] ss:$9 sm:$0xff] %v1378
      %5022 = vst [vmem:[%s4988] ss:$9 sm:$0xff] %v1382
      %5023 = vst [vmem:[%s4990] ss:$9 sm:$0xff] %v1386
      %5024 = vst [vmem:[%s4992] ss:$9 sm:$0xff] %v1390
      %5025 = vst [vmem:[%s4994] ss:$9 sm:$0xff] %v1394
      %v5026 = vld [vmem:[#allocation1] sm:$0xff]
      %5028 = vst [vmem:[#allocation1] ss:$9 sm:$0xff] %v1406
      %5029 = vst [vmem:[%s4982] ss:$9 sm:$0xff] %v1410
      %5030 = vst [vmem:[%s4984] ss:$9 sm:$0xff] %v1414
      %5031 = vst [vmem:[%s4986] ss:$9 sm:$0xff] %v1418
      %5032 = vst [vmem:[%s4988] ss:$9 sm:$0xff] %v1422
      %5033 = vst [vmem:[%s4990] ss:$9 sm:$0xff] %v1426
      %5034 = vst [vmem:[%s4992] ss:$9 sm:$0xff] %v1430
      %5035 = vst [vmem:[%s4994] ss:$9 sm:$0xff] %v1434
      %v5036 = vld [vmem:[#allocation1] sm:$0xff]
      %5038 = vst [vmem:[#allocation1] ss:$9 sm:$0xff] %v1438
      %5039 = vst [vmem:[%s4982] ss:$9 sm:$0xff] %v1442
      %5040 = vst [vmem:[%s4984] ss:$9 sm:$0xff] %v1446
      %5041 = vst [vmem:[%s4986] ss:$9 sm:$0xff] %v1450
      %5042 = vst [vmem:[%s4988] ss:$9 sm:$0xff] %v1454
      %5043 = vst [vmem:[%s4990] ss:$9 sm:$0xff] %v1458
      %5044 = vst [vmem:[%s4992] ss:$9 sm:$0xff] %v1462
      %5045 = vst [vmem:[%s4994] ss:$9 sm:$0xff] %v1466
      %v5046 = vld [vmem:[#allocation1] sm:$0xff]
      %5048 = vst [vmem:[#allocation1] ss:$9 sm:$0xff] %v1406
      %5049 = vst [vmem:[%s4982] ss:$9 sm:$0xff] %v1410
      %5050 = vst [vmem:[%s4984] ss:$9 sm:$0xff] %v1414
      %5051 = vst [vmem:[%s4986] ss:$9 sm:$0xff] %v1418
      %5052 = vst [vmem:[%s4988] ss:$9 sm:$0xff] %v1422
      %5053 = vst [vmem:[%s4990] ss:$9 sm:$0xff] %v1426
      %5054 = vst [vmem:[%s4992] ss:$9 sm:$0xff] %v1430
      %5055 = vst [vmem:[%s4994] ss:$9 sm:$0xff] %v1434
      %v5056 = vld [vmem:[#allocation1] sm:$0xff]
      %5058 = vst [vmem:[#allocation1] ss:$9 sm:$0xff] %v1438
      %5059 = vst [vmem:[%s4982] ss:$9 sm:$0xff] %v1442
      %5060 = vst [vmem:[%s4984] ss:$9 sm:$0xff] %v1446
      %5061 = vst [vmem:[%s4986] ss:$9 sm:$0xff] %v1450
      %5062 = vst [vmem:[%s4988] ss:$9 sm:$0xff] %v1454
      %5063 = vst [vmem:[%s4990] ss:$9 sm:$0xff] %v1458
      %5064 = vst [vmem:[%s4992] ss:$9 sm:$0xff] %v1462
      %5065 = vst [vmem:[%s4994] ss:$9 sm:$0xff] %v1466
      %v5066 = vld [vmem:[#allocation1] sm:$0xff]
      %5068 = vst [vmem:[#allocation1] ss:$9 sm:$0xff] %v1478
      %5069 = vst [vmem:[%s4982] ss:$9 sm:$0xff] %v1482
      %5070 = vst [vmem:[%s4984] ss:$9 sm:$0xff] %v1486
      %5071 = vst [vmem:[%s4986] ss:$9 sm:$0xff] %v1490
      %5072 = vst [vmem:[%s4988] ss:$9 sm:$0xff] %v1494
      %5073 = vst [vmem:[%s4990] ss:$9 sm:$0xff] %v1498
      %5074 = vst [vmem:[%s4992] ss:$9 sm:$0xff] %v1502
      %5075 = vst [vmem:[%s4994] ss:$9 sm:$0xff] %v1506
      %v5076 = vld [vmem:[#allocation1] sm:$0xff]
      %5078 = vst [vmem:[#allocation1] ss:$9 sm:$0xff] %v1510
      %5079 = vst [vmem:[%s4982] ss:$9 sm:$0xff] %v1514
      %5080 = vst [vmem:[%s4984] ss:$9 sm:$0xff] %v1518
      %5081 = vst [vmem:[%s4986] ss:$9 sm:$0xff] %v1522
      %5082 = vst [vmem:[%s4988] ss:$9 sm:$0xff] %v1526
      %5083 = vst [vmem:[%s4990] ss:$9 sm:$0xff] %v1530
      %5084 = vst [vmem:[%s4992] ss:$9 sm:$0xff] %v1534
      %5085 = vst [vmem:[%s4994] ss:$9 sm:$0xff] %v1538
      %v5086 = vld [vmem:[#allocation1] sm:$0xff]
      %5088 = vst [vmem:[#allocation1] ss:$9 sm:$0xff] %v1478
      %5089 = vst [vmem:[%s4982] ss:$9 sm:$0xff] %v1482
      %5090 = vst [vmem:[%s4984] ss:$9 sm:$0xff] %v1486
      %5091 = vst [vmem:[%s4986] ss:$9 sm:$0xff] %v1490
      %5092 = vst [vmem:[%s4988] ss:$9 sm:$0xff] %v1494
      %5093 = vst [vmem:[%s4990] ss:$9 sm:$0xff] %v1498
      %5094 = vst [vmem:[%s4992] ss:$9 sm:$0xff] %v1502
      %5095 = vst [vmem:[%s4994] ss:$9 sm:$0xff] %v1506
      %v5096 = vld [vmem:[#allocation1] sm:$0xff]
      %5098 = vst [vmem:[#allocation1] ss:$9 sm:$0xff] %v1510
      %5099 = vst [vmem:[%s4982] ss:$9 sm:$0xff] %v1514
      %5100 = vst [vmem:[%s4984] ss:$9 sm:$0xff] %v1518
      %5101 = vst [vmem:[%s4986] ss:$9 sm:$0xff] %v1522
      %5102 = vst [vmem:[%s4988] ss:$9 sm:$0xff] %v1526
      %5103 = vst [vmem:[%s4990] ss:$9 sm:$0xff] %v1530
      %5104 = vst [vmem:[%s4992] ss:$9 sm:$0xff] %v1534
      %5105 = vst [vmem:[%s4994] ss:$9 sm:$0xff] %v1538
      %v5106 = vld [vmem:[#allocation1] sm:$0xff]
      %5108 = vst [vmem:[#allocation1] ss:$9 sm:$0xff] %v1550
      %5109 = vst [vmem:[%s4982] ss:$9 sm:$0xff] %v1554
      %5110 = vst [vmem:[%s4984] ss:$9 sm:$0xff] %v1558
      %5111 = vst [vmem:[%s4986] ss:$9 sm:$0xff] %v1562
      %5112 = vst [vmem:[%s4988] ss:$9 sm:$0xff] %v1566
      %5113 = vst [vmem:[%s4990] ss:$9 sm:$0xff] %v1570
      %5114 = vst [vmem:[%s4992] ss:$9 sm:$0xff] %v1574
      %5115 = vst [vmem:[%s4994] ss:$9 sm:$0xff] %v1578
      %v5116 = vld [vmem:[#allocation1] sm:$0xff]
      %5118 = vst [vmem:[#allocation1] ss:$9 sm:$0xff] %v1582
      %5119 = vst [vmem:[%s4982] ss:$9 sm:$0xff] %v1586
      %5120 = vst [vmem:[%s4984] ss:$9 sm:$0xff] %v1590
      %5121 = vst [vmem:[%s4986] ss:$9 sm:$0xff] %v1594
      %5122 = vst [vmem:[%s4988] ss:$9 sm:$0xff] %v1598
      %5123 = vst [vmem:[%s4990] ss:$9 sm:$0xff] %v1602
      %5124 = vst [vmem:[%s4992] ss:$9 sm:$0xff] %v1606
      %5125 = vst [vmem:[%s4994] ss:$9 sm:$0xff] %v1610
      %v5126 = vld [vmem:[#allocation1] sm:$0xff]
      %5128 = vst [vmem:[#allocation1] ss:$9 sm:$0xff] %v1550
      %5129 = vst [vmem:[%s4982] ss:$9 sm:$0xff] %v1554
      %5130 = vst [vmem:[%s4984] ss:$9 sm:$0xff] %v1558
      %5131 = vst [vmem:[%s4986] ss:$9 sm:$0xff] %v1562
      %5132 = vst [vmem:[%s4988] ss:$9 sm:$0xff] %v1566
      %5133 = vst [vmem:[%s4990] ss:$9 sm:$0xff] %v1570
      %5134 = vst [vmem:[%s4992] ss:$9 sm:$0xff] %v1574
      %5135 = vst [vmem:[%s4994] ss:$9 sm:$0xff] %v1578
      %v5136 = vld [vmem:[#allocation1] sm:$0xff]
      %5138 = vst [vmem:[#allocation1] ss:$9 sm:$0xff] %v1582
      %5139 = vst [vmem:[%s4982] ss:$9 sm:$0xff] %v1586
      %5140 = vst [vmem:[%s4984] ss:$9 sm:$0xff] %v1590
      %5141 = vst [vmem:[%s4986] ss:$9 sm:$0xff] %v1594
      %5142 = vst [vmem:[%s4988] ss:$9 sm:$0xff] %v1598
      %5143 = vst [vmem:[%s4990] ss:$9 sm:$0xff] %v1602
      %5144 = vst [vmem:[%s4992] ss:$9 sm:$0xff] %v1606
      %5145 = vst [vmem:[%s4994] ss:$9 sm:$0xff] %v1610
      %v5146 = vld [vmem:[#allocation1] sm:$0xff]
      %5148 = vst [vmem:[#allocation1] ss:$9 sm:$0xff] %v1622
      %5149 = vst [vmem:[%s4982] ss:$9 sm:$0xff] %v1626
      %5150 = vst [vmem:[%s4984] ss:$9 sm:$0xff] %v1630
      %5151 = vst [vmem:[%s4986] ss:$9 sm:$0xff] %v1634
      %5152 = vst [vmem:[%s4988] ss:$9 sm:$0xff] %v1638
      %5153 = vst [vmem:[%s4990] ss:$9 sm:$0xff] %v1642
      %5154 = vst [vmem:[%s4992] ss:$9 sm:$0xff] %v1646
      %5155 = vst [vmem:[%s4994] ss:$9 sm:$0xff] %v1650
      %v5156 = vld [vmem:[#allocation1] sm:$0xff]
      %5158 = vst [vmem:[#allocation1] ss:$9 sm:$0xff] %v1654
      %5159 = vst [vmem:[%s4982] ss:$9 sm:$0xff] %v1658
      %5160 = vst [vmem:[%s4984] ss:$9 sm:$0xff] %v1662
      %5161 = vst [vmem:[%s4986] ss:$9 sm:$0xff] %v1666
      %5162 = vst [vmem:[%s4988] ss:$9 sm:$0xff] %v1670
      %5163 = vst [vmem:[%s4990] ss:$9 sm:$0xff] %v1674
      %5164 = vst [vmem:[%s4992] ss:$9 sm:$0xff] %v1678
      %5165 = vst [vmem:[%s4994] ss:$9 sm:$0xff] %v1682
      %v5166 = vld [vmem:[#allocation1] sm:$0xff]
      %5168 = vst [vmem:[#allocation1] ss:$9 sm:$0xff] %v1622
      %5169 = vst [vmem:[%s4982] ss:$9 sm:$0xff] %v1626
      %5170 = vst [vmem:[%s4984] ss:$9 sm:$0xff] %v1630
      %5171 = vst [vmem:[%s4986] ss:$9 sm:$0xff] %v1634
      %5172 = vst [vmem:[%s4988] ss:$9 sm:$0xff] %v1638
      %5173 = vst [vmem:[%s4990] ss:$9 sm:$0xff] %v1642
      %5174 = vst [vmem:[%s4992] ss:$9 sm:$0xff] %v1646
      %5175 = vst [vmem:[%s4994] ss:$9 sm:$0xff] %v1650
      %v5176 = vld [vmem:[#allocation1] sm:$0xff]
      %5178 = vst [vmem:[#allocation1] ss:$9 sm:$0xff] %v1654
      %5179 = vst [vmem:[%s4982] ss:$9 sm:$0xff] %v1658
      %5180 = vst [vmem:[%s4984] ss:$9 sm:$0xff] %v1662
      %5181 = vst [vmem:[%s4986] ss:$9 sm:$0xff] %v1666
      %5182 = vst [vmem:[%s4988] ss:$9 sm:$0xff] %v1670
      %5183 = vst [vmem:[%s4990] ss:$9 sm:$0xff] %v1674
      %5184 = vst [vmem:[%s4992] ss:$9 sm:$0xff] %v1678
      %5185 = vst [vmem:[%s4994] ss:$9 sm:$0xff] %v1682
      %v5186 = vld [vmem:[#allocation1] sm:$0xff]
      %5188 = vst [vmem:[#allocation1] ss:$9 sm:$0xff] %v1694
      %5189 = vst [vmem:[%s4982] ss:$9 sm:$0xff] %v1698
      %5190 = vst [vmem:[%s4984] ss:$9 sm:$0xff] %v1702
      %5191 = vst [vmem:[%s4986] ss:$9 sm:$0xff] %v1706
      %5192 = vst [vmem:[%s4988] ss:$9 sm:$0xff] %v1710
      %5193 = vst [vmem:[%s4990] ss:$9 sm:$0xff] %v1714
      %5194 = vst [vmem:[%s4992] ss:$9 sm:$0xff] %v1718
      %5195 = vst [vmem:[%s4994] ss:$9 sm:$0xff] %v1722
      %v5196 = vld [vmem:[#allocation1] sm:$0xff]
      %5198 = vst [vmem:[#allocation1] ss:$9 sm:$0xff] %v1726
      %5199 = vst [vmem:[%s4982] ss:$9 sm:$0xff] %v1730
      %5200 = vst [vmem:[%s4984] ss:$9 sm:$0xff] %v1734
      %5201 = vst [vmem:[%s4986] ss:$9 sm:$0xff] %v1738
      %5202 = vst [vmem:[%s4988] ss:$9 sm:$0xff] %v1742
      %5203 = vst [vmem:[%s4990] ss:$9 sm:$0xff] %v1746
      %5204 = vst [vmem:[%s4992] ss:$9 sm:$0xff] %v1750
      %5205 = vst [vmem:[%s4994] ss:$9 sm:$0xff] %v1754
      %v5206 = vld [vmem:[#allocation1] sm:$0xff]
      %5208 = vst [vmem:[#allocation1] ss:$9 sm:$0xff] %v1694
      %5209 = vst [vmem:[%s4982] ss:$9 sm:$0xff] %v1698
      %5210 = vst [vmem:[%s4984] ss:$9 sm:$0xff] %v1702
      %5211 = vst [vmem:[%s4986] ss:$9 sm:$0xff] %v1706
      %5212 = vst [vmem:[%s4988] ss:$9 sm:$0xff] %v1710
      %5213 = vst [vmem:[%s4990] ss:$9 sm:$0xff] %v1714
      %5214 = vst [vmem:[%s4992] ss:$9 sm:$0xff] %v1718
      %5215 = vst [vmem:[%s4994] ss:$9 sm:$0xff] %v1722
      %v5216 = vld [vmem:[#allocation1] sm:$0xff]
      %5218 = vst [vmem:[#allocation1] ss:$9 sm:$0xff] %v1726
      %5219 = vst [vmem:[%s4982] ss:$9 sm:$0xff] %v1730
      %5220 = vst [vmem:[%s4984] ss:$9 sm:$0xff] %v1734
      %5221 = vst [vmem:[%s4986] ss:$9 sm:$0xff] %v1738
      %5222 = vst [vmem:[%s4988] ss:$9 sm:$0xff] %v1742
      %5223 = vst [vmem:[%s4990] ss:$9 sm:$0xff] %v1746
      %5224 = vst [vmem:[%s4992] ss:$9 sm:$0xff] %v1750
      %5225 = vst [vmem:[%s4994] ss:$9 sm:$0xff] %v1754
      %v5226 = vld [vmem:[#allocation1] sm:$0xff]
      %5228 = vst [vmem:[#allocation1] ss:$9 sm:$0xff] %v1766
      %5229 = vst [vmem:[%s4982] ss:$9 sm:$0xff] %v1770
      %5230 = vst [vmem:[%s4984] ss:$9 sm:$0xff] %v1774
      %5231 = vst [vmem:[%s4986] ss:$9 sm:$0xff] %v1778
      %5232 = vst [vmem:[%s4988] ss:$9 sm:$0xff] %v1782
      %5233 = vst [vmem:[%s4990] ss:$9 sm:$0xff] %v1786
      %5234 = vst [vmem:[%s4992] ss:$9 sm:$0xff] %v1790
      %5235 = vst [vmem:[%s4994] ss:$9 sm:$0xff] %v1794
      %v5236 = vld [vmem:[#allocation1] sm:$0xff]
      %5238 = vst [vmem:[#allocation1] ss:$9 sm:$0xff] %v1798
      %5239 = vst [vmem:[%s4982] ss:$9 sm:$0xff] %v1802
      %5240 = vst [vmem:[%s4984] ss:$9 sm:$0xff] %v1806
      %5241 = vst [vmem:[%s4986] ss:$9 sm:$0xff] %v1810
      %5242 = vst [vmem:[%s4988] ss:$9 sm:$0xff] %v1814
      %5243 = vst [vmem:[%s4990] ss:$9 sm:$0xff] %v1818
      %5244 = vst [vmem:[%s4992] ss:$9 sm:$0xff] %v1822
      %5245 = vst [vmem:[%s4994] ss:$9 sm:$0xff] %v1826
      %v5246 = vld [vmem:[#allocation1] sm:$0xff]
      %5248 = vst [vmem:[#allocation1] ss:$9 sm:$0xff] %v1766
      %5249 = vst [vmem:[%s4982] ss:$9 sm:$0xff] %v1770
      %5250 = vst [vmem:[%s4984] ss:$9 sm:$0xff] %v1774
      %5251 = vst [vmem:[%s4986] ss:$9 sm:$0xff] %v1778
      %5252 = vst [vmem:[%s4988] ss:$9 sm:$0xff] %v1782
      %5253 = vst [vmem:[%s4990] ss:$9 sm:$0xff] %v1786
      %5254 = vst [vmem:[%s4992] ss:$9 sm:$0xff] %v1790
      %5255 = vst [vmem:[%s4994] ss:$9 sm:$0xff] %v1794
      %v5256 = vld [vmem:[#allocation1] sm:$0xff]
      %5258 = vst [vmem:[#allocation1] ss:$9 sm:$0xff] %v1798
      %5259 = vst [vmem:[%s4982] ss:$9 sm:$0xff] %v1802
      %5260 = vst [vmem:[%s4984] ss:$9 sm:$0xff] %v1806
      %5261 = vst [vmem:[%s4986] ss:$9 sm:$0xff] %v1810
      %5262 = vst [vmem:[%s4988] ss:$9 sm:$0xff] %v1814
      %5263 = vst [vmem:[%s4990] ss:$9 sm:$0xff] %v1818
      %5264 = vst [vmem:[%s4992] ss:$9 sm:$0xff] %v1822
      %5265 = vst [vmem:[%s4994] ss:$9 sm:$0xff] %v1826
      %v5266 = vld [vmem:[#allocation1] sm:$0xff]
      %5268 = vst [vmem:[#allocation1] ss:$9 sm:$0xff] %v1838
      %5269 = vst [vmem:[%s4982] ss:$9 sm:$0xff] %v1842
      %5270 = vst [vmem:[%s4984] ss:$9 sm:$0xff] %v1846
      %5271 = vst [vmem:[%s4986] ss:$9 sm:$0xff] %v1850
      %5272 = vst [vmem:[%s4988] ss:$9 sm:$0xff] %v1854
      %5273 = vst [vmem:[%s4990] ss:$9 sm:$0xff] %v1858
      %5274 = vst [vmem:[%s4992] ss:$9 sm:$0xff] %v1862
      %5275 = vst [vmem:[%s4994] ss:$9 sm:$0xff] %v1866
      %v5276 = vld [vmem:[#allocation1] sm:$0xff]
      %5278 = vst [vmem:[#allocation1] ss:$9 sm:$0xff] %v1870
      %5279 = vst [vmem:[%s4982] ss:$9 sm:$0xff] %v1874
      %5280 = vst [vmem:[%s4984] ss:$9 sm:$0xff] %v1878
      %5281 = vst [vmem:[%s4986] ss:$9 sm:$0xff] %v1882
      %5282 = vst [vmem:[%s4988] ss:$9 sm:$0xff] %v1886
      %5283 = vst [vmem:[%s4990] ss:$9 sm:$0xff] %v1890
      %5284 = vst [vmem:[%s4992] ss:$9 sm:$0xff] %v1894
      %5285 = vst [vmem:[%s4994] ss:$9 sm:$0xff] %v1898
      %v5286 = vld [vmem:[#allocation1] sm:$0xff]
      %5288 = vst [vmem:[#allocation1] ss:$9 sm:$0xff] %v1838
      %5289 = vst [vmem:[%s4982] ss:$9 sm:$0xff] %v1842
      %5290 = vst [vmem:[%s4984] ss:$9 sm:$0xff] %v1846
      %5291 = vst [vmem:[%s4986] ss:$9 sm:$0xff] %v1850
      %5292 = vst [vmem:[%s4988] ss:$9 sm:$0xff] %v1854
      %5293 = vst [vmem:[%s4990] ss:$9 sm:$0xff] %v1858
      %5294 = vst [vmem:[%s4992] ss:$9 sm:$0xff] %v1862
      %5295 = vst [vmem:[%s4994] ss:$9 sm:$0xff] %v1866
      %v5296 = vld [vmem:[#allocation1] sm:$0xff]
      %5298 = vst [vmem:[#allocation1] ss:$9 sm:$0xff] %v1870
      %5299 = vst [vmem:[%s4982] ss:$9 sm:$0xff] %v1874
      %5300 = vst [vmem:[%s4984] ss:$9 sm:$0xff] %v1878
      %5301 = vst [vmem:[%s4986] ss:$9 sm:$0xff] %v1882
      %5302 = vst [vmem:[%s4988] ss:$9 sm:$0xff] %v1886
      %5303 = vst [vmem:[%s4990] ss:$9 sm:$0xff] %v1890
      %5304 = vst [vmem:[%s4992] ss:$9 sm:$0xff] %v1894
      %5305 = vst [vmem:[%s4994] ss:$9 sm:$0xff] %v1898
      %v5306 = vld [vmem:[#allocation1] sm:$0xff]
      %5308 = vrot.lane.b32.xlu0 %v4996, 16
      %v5309 = vpop.permute.xlu0 %5308
      %5310 = vrot.lane.b32.xlu0 %v5006, 16
      %v5311 = vpop.permute.xlu0 %5310
      %5312 = vrot.lane.b32.xlu0 %v5016, 16
      %v5313 = vpop.permute.xlu0 %5312
      %5314 = vrot.lane.b32.xlu0 %v5026, 16
      %v5315 = vpop.permute.xlu0 %5314
      %5316 = vrot.lane.b32.xlu0 %v5036, 16
      %v5317 = vpop.permute.xlu0 %5316
      %5318 = vrot.lane.b32.xlu0 %v5046, 16
      %v5319 = vpop.permute.xlu0 %5318
      %5320 = vrot.lane.b32.xlu0 %v5056, 16
      %v5321 = vpop.permute.xlu0 %5320
      %5322 = vrot.lane.b32.xlu0 %v5066, 16
      %v5323 = vpop.permute.xlu0 %5322
      %5324 = vrot.lane.b32.xlu0 %v5076, 16
      %v5325 = vpop.permute.xlu0 %5324
      %5326 = vrot.lane.b32.xlu0 %v5086, 16
      %v5327 = vpop.permute.xlu0 %5326
      %5328 = vrot.lane.b32.xlu0 %v5096, 16
      %v5329 = vpop.permute.xlu0 %5328
      %5330 = vrot.lane.b32.xlu0 %v5106, 16
      %v5331 = vpop.permute.xlu0 %5330
      %5332 = vrot.lane.b32.xlu0 %v5116, 16
      %v5333 = vpop.permute.xlu0 %5332
      %5334 = vrot.lane.b32.xlu0 %v5126, 16
      %v5335 = vpop.permute.xlu0 %5334
      %5336 = vrot.lane.b32.xlu0 %v5136, 16
      %v5337 = vpop.permute.xlu0 %5336
      %5338 = vrot.lane.b32.xlu0 %v5146, 16
      %v5339 = vpop.permute.xlu0 %5338
      %5340 = vrot.lane.b32.xlu0 %v5156, 16
      %v5341 = vpop.permute.xlu0 %5340
      %5342 = vrot.lane.b32.xlu0 %v5166, 16
      %v5343 = vpop.permute.xlu0 %5342
      %5344 = vrot.lane.b32.xlu0 %v5176, 16
      %v5345 = vpop.permute.xlu0 %5344
      %5346 = vrot.lane.b32.xlu0 %v5186, 16
      %v5347 = vpop.permute.xlu0 %5346
      %5348 = vrot.lane.b32.xlu0 %v5196, 16
      %v5349 = vpop.permute.xlu0 %5348
      %5350 = vrot.lane.b32.xlu0 %v5206, 16
      %v5351 = vpop.permute.xlu0 %5350
      %5352 = vrot.lane.b32.xlu0 %v5216, 16
      %v5353 = vpop.permute.xlu0 %5352
      %5354 = vrot.lane.b32.xlu0 %v5226, 16
      %v5355 = vpop.permute.xlu0 %5354
      %5356 = vrot.lane.b32.xlu0 %v5236, 16
      %v5357 = vpop.permute.xlu0 %5356
      %5358 = vrot.lane.b32.xlu0 %v5246, 16
      %v5359 = vpop.permute.xlu0 %5358
      %5360 = vrot.lane.b32.xlu0 %v5256, 16
      %v5361 = vpop.permute.xlu0 %5360
      %5362 = vrot.lane.b32.xlu0 %v5266, 16
      %v5363 = vpop.permute.xlu0 %5362
      %5364 = vrot.lane.b32.xlu0 %v5276, 16
      %v5365 = vpop.permute.xlu0 %5364
      %5366 = vrot.lane.b32.xlu0 %v5286, 16
      %v5367 = vpop.permute.xlu0 %5366
      %5368 = vrot.lane.b32.xlu0 %v5296, 16
      %v5369 = vpop.permute.xlu0 %5368
      %5370 = vrot.lane.b32.xlu0 %v5306, 16
      %v5371 = vpop.permute.xlu0 %5370
      %5372 = vst [vmem:[#allocation1] ss:$9 sm:$0xff] %v2135
      %s5373 = scalar_lea.vmem [#allocation1], 1
      %5374 = vst [vmem:[%s5373] ss:$9 sm:$0xff] %v2143
      %s5375 = scalar_lea.vmem [#allocation1], 2
      %5376 = vst [vmem:[%s5375] ss:$9 sm:$0xff] %v2151
      %s5377 = scalar_lea.vmem [#allocation1], 3
      %5378 = vst [vmem:[%s5377] ss:$9 sm:$0xff] %v2159
      %s5379 = scalar_lea.vmem [#allocation1], 4
      %5380 = vst [vmem:[%s5379] ss:$9 sm:$0xff] %v2167
      %s5381 = scalar_lea.vmem [#allocation1], 5
      %5382 = vst [vmem:[%s5381] ss:$9 sm:$0xff] %v2175
      %s5383 = scalar_lea.vmem [#allocation1], 6
      %5384 = vst [vmem:[%s5383] ss:$9 sm:$0xff] %v2183
      %s5385 = scalar_lea.vmem [#allocation1], 7
      %5386 = vst [vmem:[%s5385] ss:$9 sm:$0xff] %v2191
      %v5387 = vld [vmem:[#allocation1] sm:$0xff]
      %5389 = vst [vmem:[#allocation1] ss:$9 sm:$0xff] %v2199
      %5390 = vst [vmem:[%s5373] ss:$9 sm:$0xff] %v2207
      %5391 = vst [vmem:[%s5375] ss:$9 sm:$0xff] %v2215
      %5392 = vst [vmem:[%s5377] ss:$9 sm:$0xff] %v2223
      %5393 = vst [vmem:[%s5379] ss:$9 sm:$0xff] %v2231
      %5394 = vst [vmem:[%s5381] ss:$9 sm:$0xff] %v2239
      %5395 = vst [vmem:[%s5383] ss:$9 sm:$0xff] %v2247
      %5396 = vst [vmem:[%s5385] ss:$9 sm:$0xff] %v3166
      %v5397 = vld [vmem:[#allocation1] sm:$0xff]
      %5399 = vst [vmem:[#allocation1] ss:$9 sm:$0xff] %v2135
      %5400 = vst [vmem:[%s5373] ss:$9 sm:$0xff] %v2143
      %5401 = vst [vmem:[%s5375] ss:$9 sm:$0xff] %v2151
      %5402 = vst [vmem:[%s5377] ss:$9 sm:$0xff] %v2159
      %5403 = vst [vmem:[%s5379] ss:$9 sm:$0xff] %v2167
      %5404 = vst [vmem:[%s5381] ss:$9 sm:$0xff] %v2175
      %5405 = vst [vmem:[%s5383] ss:$9 sm:$0xff] %v2183
      %5406 = vst [vmem:[%s5385] ss:$9 sm:$0xff] %v2191
      %v5407 = vld [vmem:[#allocation1] sm:$0xff]
      %5409 = vst [vmem:[#allocation1] ss:$9 sm:$0xff] %v2199
      %5410 = vst [vmem:[%s5373] ss:$9 sm:$0xff] %v2207
      %5411 = vst [vmem:[%s5375] ss:$9 sm:$0xff] %v2215
      %5412 = vst [vmem:[%s5377] ss:$9 sm:$0xff] %v2223
      %5413 = vst [vmem:[%s5379] ss:$9 sm:$0xff] %v2231
      %5414 = vst [vmem:[%s5381] ss:$9 sm:$0xff] %v2239
      %5415 = vst [vmem:[%s5383] ss:$9 sm:$0xff] %v2247
      %5416 = vst [vmem:[%s5385] ss:$9 sm:$0xff] %v3166
      %v5417 = vld [vmem:[#allocation1] sm:$0xff]
      %5419 = vst [vmem:[#allocation1] ss:$9 sm:$0xff] %v2264
      %5420 = vst [vmem:[%s5373] ss:$9 sm:$0xff] %v2272
      %5421 = vst [vmem:[%s5375] ss:$9 sm:$0xff] %v2280
      %5422 = vst [vmem:[%s5377] ss:$9 sm:$0xff] %v2288
      %5423 = vst [vmem:[%s5379] ss:$9 sm:$0xff] %v2296
      %5424 = vst [vmem:[%s5381] ss:$9 sm:$0xff] %v2304
      %5425 = vst [vmem:[%s5383] ss:$9 sm:$0xff] %v2312
      %5426 = vst [vmem:[%s5385] ss:$9 sm:$0xff] %v2320
      %v5427 = vld [vmem:[#allocation1] sm:$0xff]
      %5429 = vst [vmem:[#allocation1] ss:$9 sm:$0xff] %v2328
      %5430 = vst [vmem:[%s5373] ss:$9 sm:$0xff] %v2336
      %5431 = vst [vmem:[%s5375] ss:$9 sm:$0xff] %v2344
      %5432 = vst [vmem:[%s5377] ss:$9 sm:$0xff] %v2352
      %5433 = vst [vmem:[%s5379] ss:$9 sm:$0xff] %v2360
      %5434 = vst [vmem:[%s5381] ss:$9 sm:$0xff] %v2368
      %5435 = vst [vmem:[%s5383] ss:$9 sm:$0xff] %v2376
      %5436 = vst [vmem:[%s5385] ss:$9 sm:$0xff] %v3174
      %v5437 = vld [vmem:[#allocation1] sm:$0xff]
      %5439 = vst [vmem:[#allocation1] ss:$9 sm:$0xff] %v2264
      %5440 = vst [vmem:[%s5373] ss:$9 sm:$0xff] %v2272
      %5441 = vst [vmem:[%s5375] ss:$9 sm:$0xff] %v2280
      %5442 = vst [vmem:[%s5377] ss:$9 sm:$0xff] %v2288
      %5443 = vst [vmem:[%s5379] ss:$9 sm:$0xff] %v2296
      %5444 = vst [vmem:[%s5381] ss:$9 sm:$0xff] %v2304
      %5445 = vst [vmem:[%s5383] ss:$9 sm:$0xff] %v2312
      %5446 = vst [vmem:[%s5385] ss:$9 sm:$0xff] %v2320
      %v5447 = vld [vmem:[#allocation1] sm:$0xff]
      %5449 = vst [vmem:[#allocation1] ss:$9 sm:$0xff] %v2328
      %5450 = vst [vmem:[%s5373] ss:$9 sm:$0xff] %v2336
      %5451 = vst [vmem:[%s5375] ss:$9 sm:$0xff] %v2344
      %5452 = vst [vmem:[%s5377] ss:$9 sm:$0xff] %v2352
      %5453 = vst [vmem:[%s5379] ss:$9 sm:$0xff] %v2360
      %5454 = vst [vmem:[%s5381] ss:$9 sm:$0xff] %v2368
      %5455 = vst [vmem:[%s5383] ss:$9 sm:$0xff] %v2376
      %5456 = vst [vmem:[%s5385] ss:$9 sm:$0xff] %v3174
      %v5457 = vld [vmem:[#allocation1] sm:$0xff]
      %5459 = vst [vmem:[#allocation1] ss:$9 sm:$0xff] %v2393
      %5460 = vst [vmem:[%s5373] ss:$9 sm:$0xff] %v2401
      %5461 = vst [vmem:[%s5375] ss:$9 sm:$0xff] %v2409
      %5462 = vst [vmem:[%s5377] ss:$9 sm:$0xff] %v2417
      %5463 = vst [vmem:[%s5379] ss:$9 sm:$0xff] %v2425
      %5464 = vst [vmem:[%s5381] ss:$9 sm:$0xff] %v2433
      %5465 = vst [vmem:[%s5383] ss:$9 sm:$0xff] %v2441
      %5466 = vst [vmem:[%s5385] ss:$9 sm:$0xff] %v2449
      %v5467 = vld [vmem:[#allocation1] sm:$0xff]
      %5469 = vst [vmem:[#allocation1] ss:$9 sm:$0xff] %v2457
      %5470 = vst [vmem:[%s5373] ss:$9 sm:$0xff] %v2465
      %5471 = vst [vmem:[%s5375] ss:$9 sm:$0xff] %v2473
      %5472 = vst [vmem:[%s5377] ss:$9 sm:$0xff] %v2481
      %5473 = vst [vmem:[%s5379] ss:$9 sm:$0xff] %v2489
      %5474 = vst [vmem:[%s5381] ss:$9 sm:$0xff] %v2497
      %5475 = vst [vmem:[%s5383] ss:$9 sm:$0xff] %v2505
      %5476 = vst [vmem:[%s5385] ss:$9 sm:$0xff] %v3182
      %v5477 = vld [vmem:[#allocation1] sm:$0xff]
      %5479 = vst [vmem:[#allocation1] ss:$9 sm:$0xff] %v2393
      %5480 = vst [vmem:[%s5373] ss:$9 sm:$0xff] %v2401
      %5481 = vst [vmem:[%s5375] ss:$9 sm:$0xff] %v2409
      %5482 = vst [vmem:[%s5377] ss:$9 sm:$0xff] %v2417
      %5483 = vst [vmem:[%s5379] ss:$9 sm:$0xff] %v2425
      %5484 = vst [vmem:[%s5381] ss:$9 sm:$0xff] %v2433
      %5485 = vst [vmem:[%s5383] ss:$9 sm:$0xff] %v2441
      %5486 = vst [vmem:[%s5385] ss:$9 sm:$0xff] %v2449
      %v5487 = vld [vmem:[#allocation1] sm:$0xff]
      %5489 = vst [vmem:[#allocation1] ss:$9 sm:$0xff] %v2457
      %5490 = vst [vmem:[%s5373] ss:$9 sm:$0xff] %v2465
      %5491 = vst [vmem:[%s5375] ss:$9 sm:$0xff] %v2473
      %5492 = vst [vmem:[%s5377] ss:$9 sm:$0xff] %v2481
      %5493 = vst [vmem:[%s5379] ss:$9 sm:$0xff] %v2489
      %5494 = vst [vmem:[%s5381] ss:$9 sm:$0xff] %v2497
      %5495 = vst [vmem:[%s5383] ss:$9 sm:$0xff] %v2505
      %5496 = vst [vmem:[%s5385] ss:$9 sm:$0xff] %v3182
      %v5497 = vld [vmem:[#allocation1] sm:$0xff]
      %5499 = vst [vmem:[#allocation1] ss:$9 sm:$0xff] %v2522
      %5500 = vst [vmem:[%s5373] ss:$9 sm:$0xff] %v2530
      %5501 = vst [vmem:[%s5375] ss:$9 sm:$0xff] %v2538
      %5502 = vst [vmem:[%s5377] ss:$9 sm:$0xff] %v2546
      %5503 = vst [vmem:[%s5379] ss:$9 sm:$0xff] %v2554
      %5504 = vst [vmem:[%s5381] ss:$9 sm:$0xff] %v2562
      %5505 = vst [vmem:[%s5383] ss:$9 sm:$0xff] %v2570
      %5506 = vst [vmem:[%s5385] ss:$9 sm:$0xff] %v2578
      %v5507 = vld [vmem:[#allocation1] sm:$0xff]
      %5509 = vst [vmem:[#allocation1] ss:$9 sm:$0xff] %v2586
      %5510 = vst [vmem:[%s5373] ss:$9 sm:$0xff] %v2594
      %5511 = vst [vmem:[%s5375] ss:$9 sm:$0xff] %v2602
      %5512 = vst [vmem:[%s5377] ss:$9 sm:$0xff] %v2610
      %5513 = vst [vmem:[%s5379] ss:$9 sm:$0xff] %v2618
      %5514 = vst [vmem:[%s5381] ss:$9 sm:$0xff] %v2626
      %5515 = vst [vmem:[%s5383] ss:$9 sm:$0xff] %v2634
      %5516 = vst [vmem:[%s5385] ss:$9 sm:$0xff] %v3190
      %v5517 = vld [vmem:[#allocation1] sm:$0xff]
      %5519 = vst [vmem:[#allocation1] ss:$9 sm:$0xff] %v2522
      %5520 = vst [vmem:[%s5373] ss:$9 sm:$0xff] %v2530
      %5521 = vst [vmem:[%s5375] ss:$9 sm:$0xff] %v2538
      %5522 = vst [vmem:[%s5377] ss:$9 sm:$0xff] %v2546
      %5523 = vst [vmem:[%s5379] ss:$9 sm:$0xff] %v2554
      %5524 = vst [vmem:[%s5381] ss:$9 sm:$0xff] %v2562
      %5525 = vst [vmem:[%s5383] ss:$9 sm:$0xff] %v2570
      %5526 = vst [vmem:[%s5385] ss:$9 sm:$0xff] %v2578
      %v5527 = vld [vmem:[#allocation1] sm:$0xff]
      %5529 = vst [vmem:[#allocation1] ss:$9 sm:$0xff] %v2586
      %5530 = vst [vmem:[%s5373] ss:$9 sm:$0xff] %v2594
      %5531 = vst [vmem:[%s5375] ss:$9 sm:$0xff] %v2602
      %5532 = vst [vmem:[%s5377] ss:$9 sm:$0xff] %v2610
      %5533 = vst [vmem:[%s5379] ss:$9 sm:$0xff] %v2618
      %5534 = vst [vmem:[%s5381] ss:$9 sm:$0xff] %v2626
      %5535 = vst [vmem:[%s5383] ss:$9 sm:$0xff] %v2634
      %5536 = vst [vmem:[%s5385] ss:$9 sm:$0xff] %v3190
      %v5537 = vld [vmem:[#allocation1] sm:$0xff]
      %5539 = vst [vmem:[#allocation1] ss:$9 sm:$0xff] %v2651
      %5540 = vst [vmem:[%s5373] ss:$9 sm:$0xff] %v2659
      %5541 = vst [vmem:[%s5375] ss:$9 sm:$0xff] %v2667
      %5542 = vst [vmem:[%s5377] ss:$9 sm:$0xff] %v2675
      %5543 = vst [vmem:[%s5379] ss:$9 sm:$0xff] %v2683
      %5544 = vst [vmem:[%s5381] ss:$9 sm:$0xff] %v2691
      %5545 = vst [vmem:[%s5383] ss:$9 sm:$0xff] %v2699
      %5546 = vst [vmem:[%s5385] ss:$9 sm:$0xff] %v2707
      %v5547 = vld [vmem:[#allocation1] sm:$0xff]
      %5549 = vst [vmem:[#allocation1] ss:$9 sm:$0xff] %v2715
      %5550 = vst [vmem:[%s5373] ss:$9 sm:$0xff] %v2723
      %5551 = vst [vmem:[%s5375] ss:$9 sm:$0xff] %v2731
      %5552 = vst [vmem:[%s5377] ss:$9 sm:$0xff] %v2739
      %5553 = vst [vmem:[%s5379] ss:$9 sm:$0xff] %v2747
      %5554 = vst [vmem:[%s5381] ss:$9 sm:$0xff] %v2755
      %5555 = vst [vmem:[%s5383] ss:$9 sm:$0xff] %v2763
      %5556 = vst [vmem:[%s5385] ss:$9 sm:$0xff] %v3198
      %v5557 = vld [vmem:[#allocation1] sm:$0xff]
      %5559 = vst [vmem:[#allocation1] ss:$9 sm:$0xff] %v2651
      %5560 = vst [vmem:[%s5373] ss:$9 sm:$0xff] %v2659
      %5561 = vst [vmem:[%s5375] ss:$9 sm:$0xff] %v2667
      %5562 = vst [vmem:[%s5377] ss:$9 sm:$0xff] %v2675
      %5563 = vst [vmem:[%s5379] ss:$9 sm:$0xff] %v2683
      %5564 = vst [vmem:[%s5381] ss:$9 sm:$0xff] %v2691
      %5565 = vst [vmem:[%s5383] ss:$9 sm:$0xff] %v2699
      %5566 = vst [vmem:[%s5385] ss:$9 sm:$0xff] %v2707
      %v5567 = vld [vmem:[#allocation1] sm:$0xff]
      %5569 = vst [vmem:[#allocation1] ss:$9 sm:$0xff] %v2715
      %5570 = vst [vmem:[%s5373] ss:$9 sm:$0xff] %v2723
      %5571 = vst [vmem:[%s5375] ss:$9 sm:$0xff] %v2731
      %5572 = vst [vmem:[%s5377] ss:$9 sm:$0xff] %v2739
      %5573 = vst [vmem:[%s5379] ss:$9 sm:$0xff] %v2747
      %5574 = vst [vmem:[%s5381] ss:$9 sm:$0xff] %v2755
      %5575 = vst [vmem:[%s5383] ss:$9 sm:$0xff] %v2763
      %5576 = vst [vmem:[%s5385] ss:$9 sm:$0xff] %v3198
      %v5577 = vld [vmem:[#allocation1] sm:$0xff]
      %5579 = vst [vmem:[#allocation1] ss:$9 sm:$0xff] %v2780
      %5580 = vst [vmem:[%s5373] ss:$9 sm:$0xff] %v2788
      %5581 = vst [vmem:[%s5375] ss:$9 sm:$0xff] %v2796
      %5582 = vst [vmem:[%s5377] ss:$9 sm:$0xff] %v2804
      %5583 = vst [vmem:[%s5379] ss:$9 sm:$0xff] %v2812
      %5584 = vst [vmem:[%s5381] ss:$9 sm:$0xff] %v2820
      %5585 = vst [vmem:[%s5383] ss:$9 sm:$0xff] %v2828
      %5586 = vst [vmem:[%s5385] ss:$9 sm:$0xff] %v2836
      %v5587 = vld [vmem:[#allocation1] sm:$0xff]
      %5589 = vst [vmem:[#allocation1] ss:$9 sm:$0xff] %v2844
      %5590 = vst [vmem:[%s5373] ss:$9 sm:$0xff] %v2852
      %5591 = vst [vmem:[%s5375] ss:$9 sm:$0xff] %v2860
      %5592 = vst [vmem:[%s5377] ss:$9 sm:$0xff] %v2868
      %5593 = vst [vmem:[%s5379] ss:$9 sm:$0xff] %v2876
      %5594 = vst [vmem:[%s5381] ss:$9 sm:$0xff] %v2884
      %5595 = vst [vmem:[%s5383] ss:$9 sm:$0xff] %v2892
      %5596 = vst [vmem:[%s5385] ss:$9 sm:$0xff] %v3206
      %v5597 = vld [vmem:[#allocation1] sm:$0xff]
      %5599 = vst [vmem:[#allocation1] ss:$9 sm:$0xff] %v2780
      %5600 = vst [vmem:[%s5373] ss:$9 sm:$0xff] %v2788
      %5601 = vst [vmem:[%s5375] ss:$9 sm:$0xff] %v2796
      %5602 = vst [vmem:[%s5377] ss:$9 sm:$0xff] %v2804
      %5603 = vst [vmem:[%s5379] ss:$9 sm:$0xff] %v2812
      %5604 = vst [vmem:[%s5381] ss:$9 sm:$0xff] %v2820
      %5605 = vst [vmem:[%s5383] ss:$9 sm:$0xff] %v2828
      %5606 = vst [vmem:[%s5385] ss:$9 sm:$0xff] %v2836
      %v5607 = vld [vmem:[#allocation1] sm:$0xff]
      %5609 = vst [vmem:[#allocation1] ss:$9 sm:$0xff] %v2844
      %5610 = vst [vmem:[%s5373] ss:$9 sm:$0xff] %v2852
      %5611 = vst [vmem:[%s5375] ss:$9 sm:$0xff] %v2860
      %5612 = vst [vmem:[%s5377] ss:$9 sm:$0xff] %v2868
      %5613 = vst [vmem:[%s5379] ss:$9 sm:$0xff] %v2876
      %5614 = vst [vmem:[%s5381] ss:$9 sm:$0xff] %v2884
      %5615 = vst [vmem:[%s5383] ss:$9 sm:$0xff] %v2892
      %5616 = vst [vmem:[%s5385] ss:$9 sm:$0xff] %v3206
      %v5617 = vld [vmem:[#allocation1] sm:$0xff]
      %5619 = vst [vmem:[#allocation1] ss:$9 sm:$0xff] %v2909
      %5620 = vst [vmem:[%s5373] ss:$9 sm:$0xff] %v2917
      %5621 = vst [vmem:[%s5375] ss:$9 sm:$0xff] %v2925
      %5622 = vst [vmem:[%s5377] ss:$9 sm:$0xff] %v2933
      %5623 = vst [vmem:[%s5379] ss:$9 sm:$0xff] %v2941
      %5624 = vst [vmem:[%s5381] ss:$9 sm:$0xff] %v2949
      %5625 = vst [vmem:[%s5383] ss:$9 sm:$0xff] %v2957
      %5626 = vst [vmem:[%s5385] ss:$9 sm:$0xff] %v2965
      %v5627 = vld [vmem:[#allocation1] sm:$0xff]
      %5629 = vst [vmem:[#allocation1] ss:$9 sm:$0xff] %v2973
      %5630 = vst [vmem:[%s5373] ss:$9 sm:$0xff] %v2981
      %5631 = vst [vmem:[%s5375] ss:$9 sm:$0xff] %v2989
      %5632 = vst [vmem:[%s5377] ss:$9 sm:$0xff] %v2997
      %5633 = vst [vmem:[%s5379] ss:$9 sm:$0xff] %v3005
      %5634 = vst [vmem:[%s5381] ss:$9 sm:$0xff] %v3013
      %5635 = vst [vmem:[%s5383] ss:$9 sm:$0xff] %v3021
      %5636 = vst [vmem:[%s5385] ss:$9 sm:$0xff] %v3214
      %v5637 = vld [vmem:[#allocation1] sm:$0xff]
      %5639 = vst [vmem:[#allocation1] ss:$9 sm:$0xff] %v2909
      %5640 = vst [vmem:[%s5373] ss:$9 sm:$0xff] %v2917
      %5641 = vst [vmem:[%s5375] ss:$9 sm:$0xff] %v2925
      %5642 = vst [vmem:[%s5377] ss:$9 sm:$0xff] %v2933
      %5643 = vst [vmem:[%s5379] ss:$9 sm:$0xff] %v2941
      %5644 = vst [vmem:[%s5381] ss:$9 sm:$0xff] %v2949
      %5645 = vst [vmem:[%s5383] ss:$9 sm:$0xff] %v2957
      %5646 = vst [vmem:[%s5385] ss:$9 sm:$0xff] %v2965
      %v5647 = vld [vmem:[#allocation1] sm:$0xff]
      %5649 = vst [vmem:[#allocation1] ss:$9 sm:$0xff] %v2973
      %5650 = vst [vmem:[%s5373] ss:$9 sm:$0xff] %v2981
      %5651 = vst [vmem:[%s5375] ss:$9 sm:$0xff] %v2989
      %5652 = vst [vmem:[%s5377] ss:$9 sm:$0xff] %v2997
      %5653 = vst [vmem:[%s5379] ss:$9 sm:$0xff] %v3005
      %5654 = vst [vmem:[%s5381] ss:$9 sm:$0xff] %v3013
      %5655 = vst [vmem:[%s5383] ss:$9 sm:$0xff] %v3021
      %5656 = vst [vmem:[%s5385] ss:$9 sm:$0xff] %v3214
      %v5657 = vld [vmem:[#allocation1] sm:$0xff]
      %5659 = vst [vmem:[#allocation1] ss:$9 sm:$0xff] %v3038
      %5660 = vst [vmem:[%s5373] ss:$9 sm:$0xff] %v3046
      %5661 = vst [vmem:[%s5375] ss:$9 sm:$0xff] %v3054
      %5662 = vst [vmem:[%s5377] ss:$9 sm:$0xff] %v3062
      %5663 = vst [vmem:[%s5379] ss:$9 sm:$0xff] %v3070
      %5664 = vst [vmem:[%s5381] ss:$9 sm:$0xff] %v3078
      %5665 = vst [vmem:[%s5383] ss:$9 sm:$0xff] %v3086
      %5666 = vst [vmem:[%s5385] ss:$9 sm:$0xff] %v3094
      %v5667 = vld [vmem:[#allocation1] sm:$0xff]
      %5669 = vst [vmem:[#allocation1] ss:$9 sm:$0xff] %v3102
      %5670 = vst [vmem:[%s5373] ss:$9 sm:$0xff] %v3110
      %5671 = vst [vmem:[%s5375] ss:$9 sm:$0xff] %v3118
      %5672 = vst [vmem:[%s5377] ss:$9 sm:$0xff] %v3126
      %5673 = vst [vmem:[%s5379] ss:$9 sm:$0xff] %v3134
      %5674 = vst [vmem:[%s5381] ss:$9 sm:$0xff] %v3142
      %5675 = vst [vmem:[%s5383] ss:$9 sm:$0xff] %v3150
      %5676 = vst [vmem:[%s5385] ss:$9 sm:$0xff] %v3222
      %v5677 = vld [vmem:[#allocation1] sm:$0xff]
      %5679 = vst [vmem:[#allocation1] ss:$9 sm:$0xff] %v3038
      %5680 = vst [vmem:[%s5373] ss:$9 sm:$0xff] %v3046
      %5681 = vst [vmem:[%s5375] ss:$9 sm:$0xff] %v3054
      %5682 = vst [vmem:[%s5377] ss:$9 sm:$0xff] %v3062
      %5683 = vst [vmem:[%s5379] ss:$9 sm:$0xff] %v3070
      %5684 = vst [vmem:[%s5381] ss:$9 sm:$0xff] %v3078
      %5685 = vst [vmem:[%s5383] ss:$9 sm:$0xff] %v3086
      %5686 = vst [vmem:[%s5385] ss:$9 sm:$0xff] %v3094
      %v5687 = vld [vmem:[#allocation1] sm:$0xff]
      %5689 = vst [vmem:[#allocation1] ss:$9 sm:$0xff] %v3102
      %5690 = vst [vmem:[%s5373] ss:$9 sm:$0xff] %v3110
      %5691 = vst [vmem:[%s5375] ss:$9 sm:$0xff] %v3118
      %5692 = vst [vmem:[%s5377] ss:$9 sm:$0xff] %v3126
      %5693 = vst [vmem:[%s5379] ss:$9 sm:$0xff] %v3134
      %5694 = vst [vmem:[%s5381] ss:$9 sm:$0xff] %v3142
      %5695 = vst [vmem:[%s5383] ss:$9 sm:$0xff] %v3150
      %5696 = vst [vmem:[%s5385] ss:$9 sm:$0xff] %v3222
      %v5697 = vld [vmem:[#allocation1] sm:$0xff]
      %5699 = vrot.lane.b32.xlu0 %v5387, 20
      %v5700 = vpop.permute.xlu0 %5699
      %5701 = vrot.lane.b32.xlu0 %v5397, 20
      %v5702 = vpop.permute.xlu0 %5701
      %5703 = vrot.lane.b32.xlu0 %v5407, 20
      %v5704 = vpop.permute.xlu0 %5703
      %5705 = vrot.lane.b32.xlu0 %v5417, 20
      %v5706 = vpop.permute.xlu0 %5705
      %5707 = vrot.lane.b32.xlu0 %v5427, 20
      %v5708 = vpop.permute.xlu0 %5707
      %5709 = vrot.lane.b32.xlu0 %v5437, 20
      %v5710 = vpop.permute.xlu0 %5709
      %5711 = vrot.lane.b32.xlu0 %v5447, 20
      %v5712 = vpop.permute.xlu0 %5711
      %5713 = vrot.lane.b32.xlu0 %v5457, 20
      %v5714 = vpop.permute.xlu0 %5713
      %5715 = vrot.lane.b32.xlu0 %v5467, 20
      %v5716 = vpop.permute.xlu0 %5715
      %5717 = vrot.lane.b32.xlu0 %v5477, 20
      %v5718 = vpop.permute.xlu0 %5717
      %5719 = vrot.lane.b32.xlu0 %v5487, 20
      %v5720 = vpop.permute.xlu0 %5719
      %5721 = vrot.lane.b32.xlu0 %v5497, 20
      %v5722 = vpop.permute.xlu0 %5721
      %5723 = vrot.lane.b32.xlu0 %v5507, 20
      %v5724 = vpop.permute.xlu0 %5723
      %5725 = vrot.lane.b32.xlu0 %v5517, 20
      %v5726 = vpop.permute.xlu0 %5725
      %5727 = vrot.lane.b32.xlu0 %v5527, 20
      %v5728 = vpop.permute.xlu0 %5727
      %5729 = vrot.lane.b32.xlu0 %v5537, 20
      %v5730 = vpop.permute.xlu0 %5729
      %5731 = vrot.lane.b32.xlu0 %v5547, 20
      %v5732 = vpop.permute.xlu0 %5731
      %5733 = vrot.lane.b32.xlu0 %v5557, 20
      %v5734 = vpop.permute.xlu0 %5733
      %5735 = vrot.lane.b32.xlu0 %v5567, 20
      %v5736 = vpop.permute.xlu0 %5735
      %5737 = vrot.lane.b32.xlu0 %v5577, 20
      %v5738 = vpop.permute.xlu0 %5737
      %5739 = vrot.lane.b32.xlu0 %v5587, 20
      %v5740 = vpop.permute.xlu0 %5739
      %5741 = vrot.lane.b32.xlu0 %v5597, 20
      %v5742 = vpop.permute.xlu0 %5741
      %5743 = vrot.lane.b32.xlu0 %v5607, 20
      %v5744 = vpop.permute.xlu0 %5743
      %5745 = vrot.lane.b32.xlu0 %v5617, 20
      %v5746 = vpop.permute.xlu0 %5745
      %5747 = vrot.lane.b32.xlu0 %v5627, 20
      %v5748 = vpop.permute.xlu0 %5747
      %5749 = vrot.lane.b32.xlu0 %v5637, 20
      %v5750 = vpop.permute.xlu0 %5749
      %5751 = vrot.lane.b32.xlu0 %v5647, 20
      %v5752 = vpop.permute.xlu0 %5751
      %5753 = vrot.lane.b32.xlu0 %v5657, 20
      %v5754 = vpop.permute.xlu0 %5753
      %5755 = vrot.lane.b32.xlu0 %v5667, 20
      %v5756 = vpop.permute.xlu0 %5755
      %5757 = vrot.lane.b32.xlu0 %v5677, 20
      %v5758 = vpop.permute.xlu0 %5757
      %5759 = vrot.lane.b32.xlu0 %v5687, 20
      %v5760 = vpop.permute.xlu0 %5759
      %5761 = vrot.lane.b32.xlu0 %v5697, 20
      %v5762 = vpop.permute.xlu0 %5761
      %5763 = vst [vmem:[#allocation1] ss:$9 sm:$0xff] %v2127
      %s5764 = scalar_lea.vmem [#allocation1], 1
      %5765 = vst [vmem:[%s5764] ss:$9 sm:$0xff] %v2135
      %s5766 = scalar_lea.vmem [#allocation1], 2
      %5767 = vst [vmem:[%s5766] ss:$9 sm:$0xff] %v2143
      %s5768 = scalar_lea.vmem [#allocation1], 3
      %5769 = vst [vmem:[%s5768] ss:$9 sm:$0xff] %v2151
      %s5770 = scalar_lea.vmem [#allocation1], 4
      %5771 = vst [vmem:[%s5770] ss:$9 sm:$0xff] %v2159
      %s5772 = scalar_lea.vmem [#allocation1], 5
      %5773 = vst [vmem:[%s5772] ss:$9 sm:$0xff] %v2167
      %s5774 = scalar_lea.vmem [#allocation1], 6
      %5775 = vst [vmem:[%s5774] ss:$9 sm:$0xff] %v2175
      %s5776 = scalar_lea.vmem [#allocation1], 7
      %5777 = vst [vmem:[%s5776] ss:$9 sm:$0xff] %v2183
      %v5778 = vld [vmem:[#allocation1] sm:$0xff]
      %5780 = vst [vmem:[#allocation1] ss:$9 sm:$0xff] %v2191
      %5781 = vst [vmem:[%s5764] ss:$9 sm:$0xff] %v2199
      %5782 = vst [vmem:[%s5766] ss:$9 sm:$0xff] %v2207
      %5783 = vst [vmem:[%s5768] ss:$9 sm:$0xff] %v2215
      %5784 = vst [vmem:[%s5770] ss:$9 sm:$0xff] %v2223
      %5785 = vst [vmem:[%s5772] ss:$9 sm:$0xff] %v2231
      %5786 = vst [vmem:[%s5774] ss:$9 sm:$0xff] %v2239
      %5787 = vst [vmem:[%s5776] ss:$9 sm:$0xff] %v2247
      %v5788 = vld [vmem:[#allocation1] sm:$0xff]
      %5790 = vst [vmem:[#allocation1] ss:$9 sm:$0xff] %v2256
      %5791 = vst [vmem:[%s5764] ss:$9 sm:$0xff] %v2264
      %5792 = vst [vmem:[%s5766] ss:$9 sm:$0xff] %v2272
      %5793 = vst [vmem:[%s5768] ss:$9 sm:$0xff] %v2280
      %5794 = vst [vmem:[%s5770] ss:$9 sm:$0xff] %v2288
      %5795 = vst [vmem:[%s5772] ss:$9 sm:$0xff] %v2296
      %5796 = vst [vmem:[%s5774] ss:$9 sm:$0xff] %v2304
      %5797 = vst [vmem:[%s5776] ss:$9 sm:$0xff] %v2312
      %v5798 = vld [vmem:[#allocation1] sm:$0xff]
      %5800 = vst [vmem:[#allocation1] ss:$9 sm:$0xff] %v2320
      %5801 = vst [vmem:[%s5764] ss:$9 sm:$0xff] %v2328
      %5802 = vst [vmem:[%s5766] ss:$9 sm:$0xff] %v2336
      %5803 = vst [vmem:[%s5768] ss:$9 sm:$0xff] %v2344
      %5804 = vst [vmem:[%s5770] ss:$9 sm:$0xff] %v2352
      %5805 = vst [vmem:[%s5772] ss:$9 sm:$0xff] %v2360
      %5806 = vst [vmem:[%s5774] ss:$9 sm:$0xff] %v2368
      %5807 = vst [vmem:[%s5776] ss:$9 sm:$0xff] %v2376
      %v5808 = vld [vmem:[#allocation1] sm:$0xff]
      %5810 = vst [vmem:[#allocation1] ss:$9 sm:$0xff] %v2256
      %5811 = vst [vmem:[%s5764] ss:$9 sm:$0xff] %v2264
      %5812 = vst [vmem:[%s5766] ss:$9 sm:$0xff] %v2272
      %5813 = vst [vmem:[%s5768] ss:$9 sm:$0xff] %v2280
      %5814 = vst [vmem:[%s5770] ss:$9 sm:$0xff] %v2288
      %5815 = vst [vmem:[%s5772] ss:$9 sm:$0xff] %v2296
      %5816 = vst [vmem:[%s5774] ss:$9 sm:$0xff] %v2304
      %5817 = vst [vmem:[%s5776] ss:$9 sm:$0xff] %v2312
      %v5818 = vld [vmem:[#allocation1] sm:$0xff]
      %5820 = vst [vmem:[#allocation1] ss:$9 sm:$0xff] %v2320
      %5821 = vst [vmem:[%s5764] ss:$9 sm:$0xff] %v2328
      %5822 = vst [vmem:[%s5766] ss:$9 sm:$0xff] %v2336
      %5823 = vst [vmem:[%s5768] ss:$9 sm:$0xff] %v2344
      %5824 = vst [vmem:[%s5770] ss:$9 sm:$0xff] %v2352
      %5825 = vst [vmem:[%s5772] ss:$9 sm:$0xff] %v2360
      %5826 = vst [vmem:[%s5774] ss:$9 sm:$0xff] %v2368
      %5827 = vst [vmem:[%s5776] ss:$9 sm:$0xff] %v2376
      %v5828 = vld [vmem:[#allocation1] sm:$0xff]
      %5830 = vst [vmem:[#allocation1] ss:$9 sm:$0xff] %v2385
      %5831 = vst [vmem:[%s5764] ss:$9 sm:$0xff] %v2393
      %5832 = vst [vmem:[%s5766] ss:$9 sm:$0xff] %v2401
      %5833 = vst [vmem:[%s5768] ss:$9 sm:$0xff] %v2409
      %5834 = vst [vmem:[%s5770] ss:$9 sm:$0xff] %v2417
      %5835 = vst [vmem:[%s5772] ss:$9 sm:$0xff] %v2425
      %5836 = vst [vmem:[%s5774] ss:$9 sm:$0xff] %v2433
      %5837 = vst [vmem:[%s5776] ss:$9 sm:$0xff] %v2441
      %v5838 = vld [vmem:[#allocation1] sm:$0xff]
      %5840 = vst [vmem:[#allocation1] ss:$9 sm:$0xff] %v2449
      %5841 = vst [vmem:[%s5764] ss:$9 sm:$0xff] %v2457
      %5842 = vst [vmem:[%s5766] ss:$9 sm:$0xff] %v2465
      %5843 = vst [vmem:[%s5768] ss:$9 sm:$0xff] %v2473
      %5844 = vst [vmem:[%s5770] ss:$9 sm:$0xff] %v2481
      %5845 = vst [vmem:[%s5772] ss:$9 sm:$0xff] %v2489
      %5846 = vst [vmem:[%s5774] ss:$9 sm:$0xff] %v2497
      %5847 = vst [vmem:[%s5776] ss:$9 sm:$0xff] %v2505
      %v5848 = vld [vmem:[#allocation1] sm:$0xff]
      %5850 = vst [vmem:[#allocation1] ss:$9 sm:$0xff] %v2385
      %5851 = vst [vmem:[%s5764] ss:$9 sm:$0xff] %v2393
      %5852 = vst [vmem:[%s5766] ss:$9 sm:$0xff] %v2401
      %5853 = vst [vmem:[%s5768] ss:$9 sm:$0xff] %v2409
      %5854 = vst [vmem:[%s5770] ss:$9 sm:$0xff] %v2417
      %5855 = vst [vmem:[%s5772] ss:$9 sm:$0xff] %v2425
      %5856 = vst [vmem:[%s5774] ss:$9 sm:$0xff] %v2433
      %5857 = vst [vmem:[%s5776] ss:$9 sm:$0xff] %v2441
      %v5858 = vld [vmem:[#allocation1] sm:$0xff]
      %5860 = vst [vmem:[#allocation1] ss:$9 sm:$0xff] %v2449
      %5861 = vst [vmem:[%s5764] ss:$9 sm:$0xff] %v2457
      %5862 = vst [vmem:[%s5766] ss:$9 sm:$0xff] %v2465
      %5863 = vst [vmem:[%s5768] ss:$9 sm:$0xff] %v2473
      %5864 = vst [vmem:[%s5770] ss:$9 sm:$0xff] %v2481
      %5865 = vst [vmem:[%s5772] ss:$9 sm:$0xff] %v2489
      %5866 = vst [vmem:[%s5774] ss:$9 sm:$0xff] %v2497
      %5867 = vst [vmem:[%s5776] ss:$9 sm:$0xff] %v2505
      %v5868 = vld [vmem:[#allocation1] sm:$0xff]
      %5870 = vst [vmem:[#allocation1] ss:$9 sm:$0xff] %v2514
      %5871 = vst [vmem:[%s5764] ss:$9 sm:$0xff] %v2522
      %5872 = vst [vmem:[%s5766] ss:$9 sm:$0xff] %v2530
      %5873 = vst [vmem:[%s5768] ss:$9 sm:$0xff] %v2538
      %5874 = vst [vmem:[%s5770] ss:$9 sm:$0xff] %v2546
      %5875 = vst [vmem:[%s5772] ss:$9 sm:$0xff] %v2554
      %5876 = vst [vmem:[%s5774] ss:$9 sm:$0xff] %v2562
      %5877 = vst [vmem:[%s5776] ss:$9 sm:$0xff] %v2570
      %v5878 = vld [vmem:[#allocation1] sm:$0xff]
      %5880 = vst [vmem:[#allocation1] ss:$9 sm:$0xff] %v2578
      %5881 = vst [vmem:[%s5764] ss:$9 sm:$0xff] %v2586
      %5882 = vst [vmem:[%s5766] ss:$9 sm:$0xff] %v2594
      %5883 = vst [vmem:[%s5768] ss:$9 sm:$0xff] %v2602
      %5884 = vst [vmem:[%s5770] ss:$9 sm:$0xff] %v2610
      %5885 = vst [vmem:[%s5772] ss:$9 sm:$0xff] %v2618
      %5886 = vst [vmem:[%s5774] ss:$9 sm:$0xff] %v2626
      %5887 = vst [vmem:[%s5776] ss:$9 sm:$0xff] %v2634
      %v5888 = vld [vmem:[#allocation1] sm:$0xff]
      %5890 = vst [vmem:[#allocation1] ss:$9 sm:$0xff] %v2514
      %5891 = vst [vmem:[%s5764] ss:$9 sm:$0xff] %v2522
      %5892 = vst [vmem:[%s5766] ss:$9 sm:$0xff] %v2530
      %5893 = vst [vmem:[%s5768] ss:$9 sm:$0xff] %v2538
      %5894 = vst [vmem:[%s5770] ss:$9 sm:$0xff] %v2546
      %5895 = vst [vmem:[%s5772] ss:$9 sm:$0xff] %v2554
      %5896 = vst [vmem:[%s5774] ss:$9 sm:$0xff] %v2562
      %5897 = vst [vmem:[%s5776] ss:$9 sm:$0xff] %v2570
      %v5898 = vld [vmem:[#allocation1] sm:$0xff]
      %5900 = vst [vmem:[#allocation1] ss:$9 sm:$0xff] %v2578
      %5901 = vst [vmem:[%s5764] ss:$9 sm:$0xff] %v2586
      %5902 = vst [vmem:[%s5766] ss:$9 sm:$0xff] %v2594
      %5903 = vst [vmem:[%s5768] ss:$9 sm:$0xff] %v2602
      %5904 = vst [vmem:[%s5770] ss:$9 sm:$0xff] %v2610
      %5905 = vst [vmem:[%s5772] ss:$9 sm:$0xff] %v2618
      %5906 = vst [vmem:[%s5774] ss:$9 sm:$0xff] %v2626
      %5907 = vst [vmem:[%s5776] ss:$9 sm:$0xff] %v2634
      %v5908 = vld [vmem:[#allocation1] sm:$0xff]
      %5910 = vst [vmem:[#allocation1] ss:$9 sm:$0xff] %v2643
      %5911 = vst [vmem:[%s5764] ss:$9 sm:$0xff] %v2651
      %5912 = vst [vmem:[%s5766] ss:$9 sm:$0xff] %v2659
      %5913 = vst [vmem:[%s5768] ss:$9 sm:$0xff] %v2667
      %5914 = vst [vmem:[%s5770] ss:$9 sm:$0xff] %v2675
      %5915 = vst [vmem:[%s5772] ss:$9 sm:$0xff] %v2683
      %5916 = vst [vmem:[%s5774] ss:$9 sm:$0xff] %v2691
      %5917 = vst [vmem:[%s5776] ss:$9 sm:$0xff] %v2699
      %v5918 = vld [vmem:[#allocation1] sm:$0xff]
      %5920 = vst [vmem:[#allocation1] ss:$9 sm:$0xff] %v2707
      %5921 = vst [vmem:[%s5764] ss:$9 sm:$0xff] %v2715
      %5922 = vst [vmem:[%s5766] ss:$9 sm:$0xff] %v2723
      %5923 = vst [vmem:[%s5768] ss:$9 sm:$0xff] %v2731
      %5924 = vst [vmem:[%s5770] ss:$9 sm:$0xff] %v2739
      %5925 = vst [vmem:[%s5772] ss:$9 sm:$0xff] %v2747
      %5926 = vst [vmem:[%s5774] ss:$9 sm:$0xff] %v2755
      %5927 = vst [vmem:[%s5776] ss:$9 sm:$0xff] %v2763
      %v5928 = vld [vmem:[#allocation1] sm:$0xff]
      %5930 = vst [vmem:[#allocation1] ss:$9 sm:$0xff] %v2643
      %5931 = vst [vmem:[%s5764] ss:$9 sm:$0xff] %v2651
      %5932 = vst [vmem:[%s5766] ss:$9 sm:$0xff] %v2659
      %5933 = vst [vmem:[%s5768] ss:$9 sm:$0xff] %v2667
      %5934 = vst [vmem:[%s5770] ss:$9 sm:$0xff] %v2675
      %5935 = vst [vmem:[%s5772] ss:$9 sm:$0xff] %v2683
      %5936 = vst [vmem:[%s5774] ss:$9 sm:$0xff] %v2691
      %5937 = vst [vmem:[%s5776] ss:$9 sm:$0xff] %v2699
      %v5938 = vld [vmem:[#allocation1] sm:$0xff]
      %5940 = vst [vmem:[#allocation1] ss:$9 sm:$0xff] %v2707
      %5941 = vst [vmem:[%s5764] ss:$9 sm:$0xff] %v2715
      %5942 = vst [vmem:[%s5766] ss:$9 sm:$0xff] %v2723
      %5943 = vst [vmem:[%s5768] ss:$9 sm:$0xff] %v2731
      %5944 = vst [vmem:[%s5770] ss:$9 sm:$0xff] %v2739
      %5945 = vst [vmem:[%s5772] ss:$9 sm:$0xff] %v2747
      %5946 = vst [vmem:[%s5774] ss:$9 sm:$0xff] %v2755
      %5947 = vst [vmem:[%s5776] ss:$9 sm:$0xff] %v2763
      %v5948 = vld [vmem:[#allocation1] sm:$0xff]
      %5950 = vst [vmem:[#allocation1] ss:$9 sm:$0xff] %v2772
      %5951 = vst [vmem:[%s5764] ss:$9 sm:$0xff] %v2780
      %5952 = vst [vmem:[%s5766] ss:$9 sm:$0xff] %v2788
      %5953 = vst [vmem:[%s5768] ss:$9 sm:$0xff] %v2796
      %5954 = vst [vmem:[%s5770] ss:$9 sm:$0xff] %v2804
      %5955 = vst [vmem:[%s5772] ss:$9 sm:$0xff] %v2812
      %5956 = vst [vmem:[%s5774] ss:$9 sm:$0xff] %v2820
      %5957 = vst [vmem:[%s5776] ss:$9 sm:$0xff] %v2828
      %v5958 = vld [vmem:[#allocation1] sm:$0xff]
      %5960 = vst [vmem:[#allocation1] ss:$9 sm:$0xff] %v2836
      %5961 = vst [vmem:[%s5764] ss:$9 sm:$0xff] %v2844
      %5962 = vst [vmem:[%s5766] ss:$9 sm:$0xff] %v2852
      %5963 = vst [vmem:[%s5768] ss:$9 sm:$0xff] %v2860
      %5964 = vst [vmem:[%s5770] ss:$9 sm:$0xff] %v2868
      %5965 = vst [vmem:[%s5772] ss:$9 sm:$0xff] %v2876
      %5966 = vst [vmem:[%s5774] ss:$9 sm:$0xff] %v2884
      %5967 = vst [vmem:[%s5776] ss:$9 sm:$0xff] %v2892
      %v5968 = vld [vmem:[#allocation1] sm:$0xff]
      %5970 = vst [vmem:[#allocation1] ss:$9 sm:$0xff] %v2772
      %5971 = vst [vmem:[%s5764] ss:$9 sm:$0xff] %v2780
      %5972 = vst [vmem:[%s5766] ss:$9 sm:$0xff] %v2788
      %5973 = vst [vmem:[%s5768] ss:$9 sm:$0xff] %v2796
      %5974 = vst [vmem:[%s5770] ss:$9 sm:$0xff] %v2804
      %5975 = vst [vmem:[%s5772] ss:$9 sm:$0xff] %v2812
      %5976 = vst [vmem:[%s5774] ss:$9 sm:$0xff] %v2820
      %5977 = vst [vmem:[%s5776] ss:$9 sm:$0xff] %v2828
      %v5978 = vld [vmem:[#allocation1] sm:$0xff]
      %5980 = vst [vmem:[#allocation1] ss:$9 sm:$0xff] %v2836
      %5981 = vst [vmem:[%s5764] ss:$9 sm:$0xff] %v2844
      %5982 = vst [vmem:[%s5766] ss:$9 sm:$0xff] %v2852
      %5983 = vst [vmem:[%s5768] ss:$9 sm:$0xff] %v2860
      %5984 = vst [vmem:[%s5770] ss:$9 sm:$0xff] %v2868
      %5985 = vst [vmem:[%s5772] ss:$9 sm:$0xff] %v2876
      %5986 = vst [vmem:[%s5774] ss:$9 sm:$0xff] %v2884
      %5987 = vst [vmem:[%s5776] ss:$9 sm:$0xff] %v2892
      %v5988 = vld [vmem:[#allocation1] sm:$0xff]
      %5990 = vst [vmem:[#allocation1] ss:$9 sm:$0xff] %v2901
      %5991 = vst [vmem:[%s5764] ss:$9 sm:$0xff] %v2909
      %5992 = vst [vmem:[%s5766] ss:$9 sm:$0xff] %v2917
      %5993 = vst [vmem:[%s5768] ss:$9 sm:$0xff] %v2925
      %5994 = vst [vmem:[%s5770] ss:$9 sm:$0xff] %v2933
      %5995 = vst [vmem:[%s5772] ss:$9 sm:$0xff] %v2941
      %5996 = vst [vmem:[%s5774] ss:$9 sm:$0xff] %v2949
      %5997 = vst [vmem:[%s5776] ss:$9 sm:$0xff] %v2957
      %v5998 = vld [vmem:[#allocation1] sm:$0xff]
      %6000 = vst [vmem:[#allocation1] ss:$9 sm:$0xff] %v2965
      %6001 = vst [vmem:[%s5764] ss:$9 sm:$0xff] %v2973
      %6002 = vst [vmem:[%s5766] ss:$9 sm:$0xff] %v2981
      %6003 = vst [vmem:[%s5768] ss:$9 sm:$0xff] %v2989
      %6004 = vst [vmem:[%s5770] ss:$9 sm:$0xff] %v2997
      %6005 = vst [vmem:[%s5772] ss:$9 sm:$0xff] %v3005
      %6006 = vst [vmem:[%s5774] ss:$9 sm:$0xff] %v3013
      %6007 = vst [vmem:[%s5776] ss:$9 sm:$0xff] %v3021
      %v6008 = vld [vmem:[#allocation1] sm:$0xff]
      %6010 = vst [vmem:[#allocation1] ss:$9 sm:$0xff] %v2901
      %6011 = vst [vmem:[%s5764] ss:$9 sm:$0xff] %v2909
      %6012 = vst [vmem:[%s5766] ss:$9 sm:$0xff] %v2917
      %6013 = vst [vmem:[%s5768] ss:$9 sm:$0xff] %v2925
      %6014 = vst [vmem:[%s5770] ss:$9 sm:$0xff] %v2933
      %6015 = vst [vmem:[%s5772] ss:$9 sm:$0xff] %v2941
      %6016 = vst [vmem:[%s5774] ss:$9 sm:$0xff] %v2949
      %6017 = vst [vmem:[%s5776] ss:$9 sm:$0xff] %v2957
      %v6018 = vld [vmem:[#allocation1] sm:$0xff]
      %6020 = vst [vmem:[#allocation1] ss:$9 sm:$0xff] %v2965
      %6021 = vst [vmem:[%s5764] ss:$9 sm:$0xff] %v2973
      %6022 = vst [vmem:[%s5766] ss:$9 sm:$0xff] %v2981
      %6023 = vst [vmem:[%s5768] ss:$9 sm:$0xff] %v2989
      %6024 = vst [vmem:[%s5770] ss:$9 sm:$0xff] %v2997
      %6025 = vst [vmem:[%s5772] ss:$9 sm:$0xff] %v3005
      %6026 = vst [vmem:[%s5774] ss:$9 sm:$0xff] %v3013
      %6027 = vst [vmem:[%s5776] ss:$9 sm:$0xff] %v3021
      %v6028 = vld [vmem:[#allocation1] sm:$0xff]
      %6030 = vst [vmem:[#allocation1] ss:$9 sm:$0xff] %v3030
      %6031 = vst [vmem:[%s5764] ss:$9 sm:$0xff] %v3038
      %6032 = vst [vmem:[%s5766] ss:$9 sm:$0xff] %v3046
      %6033 = vst [vmem:[%s5768] ss:$9 sm:$0xff] %v3054
      %6034 = vst [vmem:[%s5770] ss:$9 sm:$0xff] %v3062
      %6035 = vst [vmem:[%s5772] ss:$9 sm:$0xff] %v3070
      %6036 = vst [vmem:[%s5774] ss:$9 sm:$0xff] %v3078
      %6037 = vst [vmem:[%s5776] ss:$9 sm:$0xff] %v3086
      %v6038 = vld [vmem:[#allocation1] sm:$0xff]
      %6040 = vst [vmem:[#allocation1] ss:$9 sm:$0xff] %v3094
      %6041 = vst [vmem:[%s5764] ss:$9 sm:$0xff] %v3102
      %6042 = vst [vmem:[%s5766] ss:$9 sm:$0xff] %v3110
      %6043 = vst [vmem:[%s5768] ss:$9 sm:$0xff] %v3118
      %6044 = vst [vmem:[%s5770] ss:$9 sm:$0xff] %v3126
      %6045 = vst [vmem:[%s5772] ss:$9 sm:$0xff] %v3134
      %6046 = vst [vmem:[%s5774] ss:$9 sm:$0xff] %v3142
      %6047 = vst [vmem:[%s5776] ss:$9 sm:$0xff] %v3150
      %v6048 = vld [vmem:[#allocation1] sm:$0xff]
      %6050 = vst [vmem:[#allocation1] ss:$9 sm:$0xff] %v3030
      %6051 = vst [vmem:[%s5764] ss:$9 sm:$0xff] %v3038
      %6052 = vst [vmem:[%s5766] ss:$9 sm:$0xff] %v3046
      %6053 = vst [vmem:[%s5768] ss:$9 sm:$0xff] %v3054
      %6054 = vst [vmem:[%s5770] ss:$9 sm:$0xff] %v3062
      %6055 = vst [vmem:[%s5772] ss:$9 sm:$0xff] %v3070
      %6056 = vst [vmem:[%s5774] ss:$9 sm:$0xff] %v3078
      %6057 = vst [vmem:[%s5776] ss:$9 sm:$0xff] %v3086
      %v6058 = vld [vmem:[#allocation1] sm:$0xff]
      %6060 = vst [vmem:[#allocation1] ss:$9 sm:$0xff] %v3094
      %6061 = vst [vmem:[%s5764] ss:$9 sm:$0xff] %v3102
      %6062 = vst [vmem:[%s5766] ss:$9 sm:$0xff] %v3110
      %6063 = vst [vmem:[%s5768] ss:$9 sm:$0xff] %v3118
      %6064 = vst [vmem:[%s5770] ss:$9 sm:$0xff] %v3126
      %6065 = vst [vmem:[%s5772] ss:$9 sm:$0xff] %v3134
      %6066 = vst [vmem:[%s5774] ss:$9 sm:$0xff] %v3142
      %6067 = vst [vmem:[%s5776] ss:$9 sm:$0xff] %v3150
      %v6068 = vld [vmem:[#allocation1] sm:$0xff]
      %6071 = vst [vmem:[#allocation1] ss:$9 sm:$0xff] %v3231
      %6073 = vst [vmem:[%s5764] ss:$9 sm:$0xff] %v3239
      %6075 = vst [vmem:[%s5766] ss:$9 sm:$0xff] %v3247
      %6077 = vst [vmem:[%s5768] ss:$9 sm:$0xff] %v3255
      %6079 = vst [vmem:[%s5770] ss:$9 sm:$0xff] %v3263
      %6081 = vst [vmem:[%s5772] ss:$9 sm:$0xff] %v3271
      %6083 = vst [vmem:[%s5774] ss:$9 sm:$0xff] %v3279
      %6085 = vst [vmem:[%s5776] ss:$9 sm:$0xff] %v3287
      %v6086 = vld [vmem:[#allocation1] sm:$0xff]
      %6089 = vst [vmem:[#allocation1] ss:$9 sm:$0xff] %v3295
      %6091 = vst [vmem:[%s5764] ss:$9 sm:$0xff] %v3303
      %6093 = vst [vmem:[%s5766] ss:$9 sm:$0xff] %v3311
      %6095 = vst [vmem:[%s5768] ss:$9 sm:$0xff] %v3319
      %6097 = vst [vmem:[%s5770] ss:$9 sm:$0xff] %v3327
      %6099 = vst [vmem:[%s5772] ss:$9 sm:$0xff] %v3335
      %6101 = vst [vmem:[%s5774] ss:$9 sm:$0xff] %v3343
      %6103 = vst [vmem:[%s5776] ss:$9 sm:$0xff] %v3351
      %v6104 = vld [vmem:[#allocation1] sm:$0xff]
      %6106 = vrot.lane.b32.xlu0 %v5778, 24
      %v6107 = vpop.permute.xlu0 %6106
      %6108 = vrot.lane.b32.xlu0 %v5788, 24
      %v6109 = vpop.permute.xlu0 %6108
      %6110 = vrot.lane.b32.xlu0 %v5798, 24
      %v6111 = vpop.permute.xlu0 %6110
      %6112 = vrot.lane.b32.xlu0 %v5808, 24
      %v6113 = vpop.permute.xlu0 %6112
      %6114 = vrot.lane.b32.xlu0 %v5818, 24
      %v6115 = vpop.permute.xlu0 %6114
      %6116 = vrot.lane.b32.xlu0 %v5828, 24
      %v6117 = vpop.permute.xlu0 %6116
      %6118 = vrot.lane.b32.xlu0 %v5838, 24
      %v6119 = vpop.permute.xlu0 %6118
      %6120 = vrot.lane.b32.xlu0 %v5848, 24
      %v6121 = vpop.permute.xlu0 %6120
      %6122 = vrot.lane.b32.xlu0 %v5858, 24
      %v6123 = vpop.permute.xlu0 %6122
      %6124 = vrot.lane.b32.xlu0 %v5868, 24
      %v6125 = vpop.permute.xlu0 %6124
      %6126 = vrot.lane.b32.xlu0 %v5878, 24
      %v6127 = vpop.permute.xlu0 %6126
      %6128 = vrot.lane.b32.xlu0 %v5888, 24
      %v6129 = vpop.permute.xlu0 %6128
      %6130 = vrot.lane.b32.xlu0 %v5898, 24
      %v6131 = vpop.permute.xlu0 %6130
      %6132 = vrot.lane.b32.xlu0 %v5908, 24
      %v6133 = vpop.permute.xlu0 %6132
      %6134 = vrot.lane.b32.xlu0 %v5918, 24
      %v6135 = vpop.permute.xlu0 %6134
      %6136 = vrot.lane.b32.xlu0 %v5928, 24
      %v6137 = vpop.permute.xlu0 %6136
      %6138 = vrot.lane.b32.xlu0 %v5938, 24
      %v6139 = vpop.permute.xlu0 %6138
      %6140 = vrot.lane.b32.xlu0 %v5948, 24
      %v6141 = vpop.permute.xlu0 %6140
      %6142 = vrot.lane.b32.xlu0 %v5958, 24
      %v6143 = vpop.permute.xlu0 %6142
      %6144 = vrot.lane.b32.xlu0 %v5968, 24
      %v6145 = vpop.permute.xlu0 %6144
      %6146 = vrot.lane.b32.xlu0 %v5978, 24
      %v6147 = vpop.permute.xlu0 %6146
      %6148 = vrot.lane.b32.xlu0 %v5988, 24
      %v6149 = vpop.permute.xlu0 %6148
      %6150 = vrot.lane.b32.xlu0 %v5998, 24
      %v6151 = vpop.permute.xlu0 %6150
      %6152 = vrot.lane.b32.xlu0 %v6008, 24
      %v6153 = vpop.permute.xlu0 %6152
      %6154 = vrot.lane.b32.xlu0 %v6018, 24
      %v6155 = vpop.permute.xlu0 %6154
      %6156 = vrot.lane.b32.xlu0 %v6028, 24
      %v6157 = vpop.permute.xlu0 %6156
      %6158 = vrot.lane.b32.xlu0 %v6038, 24
      %v6159 = vpop.permute.xlu0 %6158
      %6160 = vrot.lane.b32.xlu0 %v6048, 24
      %v6161 = vpop.permute.xlu0 %6160
      %6162 = vrot.lane.b32.xlu0 %v6058, 24
      %v6163 = vpop.permute.xlu0 %6162
      %6164 = vrot.lane.b32.xlu0 %v6068, 24
      %v6165 = vpop.permute.xlu0 %6164
      %6166 = vrot.lane.b32.xlu0 %v6086, 24
      %v6167 = vpop.permute.xlu0 %6166
      %6168 = vrot.lane.b32.xlu0 %v6104, 24
      %v6169 = vpop.permute.xlu0 %6168
      %6170 = vst [vmem:[#allocation1] ss:$9 sm:$0xff] %v1334
      %s6171 = scalar_lea.vmem [#allocation1], 1
      %6172 = vst [vmem:[%s6171] ss:$9 sm:$0xff] %v1338
      %s6173 = scalar_lea.vmem [#allocation1], 2
      %6174 = vst [vmem:[%s6173] ss:$9 sm:$0xff] %v1342
      %s6175 = scalar_lea.vmem [#allocation1], 3
      %6176 = vst [vmem:[%s6175] ss:$9 sm:$0xff] %v1346
      %s6177 = scalar_lea.vmem [#allocation1], 4
      %6178 = vst [vmem:[%s6177] ss:$9 sm:$0xff] %v1350
      %s6179 = scalar_lea.vmem [#allocation1], 5
      %6180 = vst [vmem:[%s6179] ss:$9 sm:$0xff] %v1354
      %s6181 = scalar_lea.vmem [#allocation1], 6
      %6182 = vst [vmem:[%s6181] ss:$9 sm:$0xff] %v1358
      %s6183 = scalar_lea.vmem [#allocation1], 7
      %6184 = vst [vmem:[%s6183] ss:$9 sm:$0xff] %v1362
      %v6185 = vld [vmem:[#allocation1] sm:$0xff]
      %6187 = vst [vmem:[#allocation1] ss:$9 sm:$0xff] %v1366
      %6188 = vst [vmem:[%s6171] ss:$9 sm:$0xff] %v1370
      %6189 = vst [vmem:[%s6173] ss:$9 sm:$0xff] %v1374
      %6190 = vst [vmem:[%s6175] ss:$9 sm:$0xff] %v1378
      %6191 = vst [vmem:[%s6177] ss:$9 sm:$0xff] %v1382
      %6192 = vst [vmem:[%s6179] ss:$9 sm:$0xff] %v1386
      %6193 = vst [vmem:[%s6181] ss:$9 sm:$0xff] %v1390
      %6194 = vst [vmem:[%s6183] ss:$9 sm:$0xff] %v1394
      %v6195 = vld [vmem:[#allocation1] sm:$0xff]
      %6197 = vst [vmem:[#allocation1] ss:$9 sm:$0xff] %v1406
      %6198 = vst [vmem:[%s6171] ss:$9 sm:$0xff] %v1410
      %6199 = vst [vmem:[%s6173] ss:$9 sm:$0xff] %v1414
      %6200 = vst [vmem:[%s6175] ss:$9 sm:$0xff] %v1418
      %6201 = vst [vmem:[%s6177] ss:$9 sm:$0xff] %v1422
      %6202 = vst [vmem:[%s6179] ss:$9 sm:$0xff] %v1426
      %6203 = vst [vmem:[%s6181] ss:$9 sm:$0xff] %v1430
      %6204 = vst [vmem:[%s6183] ss:$9 sm:$0xff] %v1434
      %v6205 = vld [vmem:[#allocation1] sm:$0xff]
      %6207 = vst [vmem:[#allocation1] ss:$9 sm:$0xff] %v1438
      %6208 = vst [vmem:[%s6171] ss:$9 sm:$0xff] %v1442
      %6209 = vst [vmem:[%s6173] ss:$9 sm:$0xff] %v1446
      %6210 = vst [vmem:[%s6175] ss:$9 sm:$0xff] %v1450
      %6211 = vst [vmem:[%s6177] ss:$9 sm:$0xff] %v1454
      %6212 = vst [vmem:[%s6179] ss:$9 sm:$0xff] %v1458
      %6213 = vst [vmem:[%s6181] ss:$9 sm:$0xff] %v1462
      %6214 = vst [vmem:[%s6183] ss:$9 sm:$0xff] %v1466
      %v6215 = vld [vmem:[#allocation1] sm:$0xff]
      %6217 = vst [vmem:[#allocation1] ss:$9 sm:$0xff] %v1406
      %6218 = vst [vmem:[%s6171] ss:$9 sm:$0xff] %v1410
      %6219 = vst [vmem:[%s6173] ss:$9 sm:$0xff] %v1414
      %6220 = vst [vmem:[%s6175] ss:$9 sm:$0xff] %v1418
      %6221 = vst [vmem:[%s6177] ss:$9 sm:$0xff] %v1422
      %6222 = vst [vmem:[%s6179] ss:$9 sm:$0xff] %v1426
      %6223 = vst [vmem:[%s6181] ss:$9 sm:$0xff] %v1430
      %6224 = vst [vmem:[%s6183] ss:$9 sm:$0xff] %v1434
      %v6225 = vld [vmem:[#allocation1] sm:$0xff]
      %6227 = vst [vmem:[#allocation1] ss:$9 sm:$0xff] %v1438
      %6228 = vst [vmem:[%s6171] ss:$9 sm:$0xff] %v1442
      %6229 = vst [vmem:[%s6173] ss:$9 sm:$0xff] %v1446
      %6230 = vst [vmem:[%s6175] ss:$9 sm:$0xff] %v1450
      %6231 = vst [vmem:[%s6177] ss:$9 sm:$0xff] %v1454
      %6232 = vst [vmem:[%s6179] ss:$9 sm:$0xff] %v1458
      %6233 = vst [vmem:[%s6181] ss:$9 sm:$0xff] %v1462
      %6234 = vst [vmem:[%s6183] ss:$9 sm:$0xff] %v1466
      %v6235 = vld [vmem:[#allocation1] sm:$0xff]
      %6237 = vst [vmem:[#allocation1] ss:$9 sm:$0xff] %v1478
      %6238 = vst [vmem:[%s6171] ss:$9 sm:$0xff] %v1482
      %6239 = vst [vmem:[%s6173] ss:$9 sm:$0xff] %v1486
      %6240 = vst [vmem:[%s6175] ss:$9 sm:$0xff] %v1490
      %6241 = vst [vmem:[%s6177] ss:$9 sm:$0xff] %v1494
      %6242 = vst [vmem:[%s6179] ss:$9 sm:$0xff] %v1498
      %6243 = vst [vmem:[%s6181] ss:$9 sm:$0xff] %v1502
      %6244 = vst [vmem:[%s6183] ss:$9 sm:$0xff] %v1506
      %v6245 = vld [vmem:[#allocation1] sm:$0xff]
      %6247 = vst [vmem:[#allocation1] ss:$9 sm:$0xff] %v1510
      %6248 = vst [vmem:[%s6171] ss:$9 sm:$0xff] %v1514
      %6249 = vst [vmem:[%s6173] ss:$9 sm:$0xff] %v1518
      %6250 = vst [vmem:[%s6175] ss:$9 sm:$0xff] %v1522
      %6251 = vst [vmem:[%s6177] ss:$9 sm:$0xff] %v1526
      %6252 = vst [vmem:[%s6179] ss:$9 sm:$0xff] %v1530
      %6253 = vst [vmem:[%s6181] ss:$9 sm:$0xff] %v1534
      %6254 = vst [vmem:[%s6183] ss:$9 sm:$0xff] %v1538
      %v6255 = vld [vmem:[#allocation1] sm:$0xff]
      %6257 = vst [vmem:[#allocation1] ss:$9 sm:$0xff] %v1478
      %6258 = vst [vmem:[%s6171] ss:$9 sm:$0xff] %v1482
      %6259 = vst [vmem:[%s6173] ss:$9 sm:$0xff] %v1486
      %6260 = vst [vmem:[%s6175] ss:$9 sm:$0xff] %v1490
      %6261 = vst [vmem:[%s6177] ss:$9 sm:$0xff] %v1494
      %6262 = vst [vmem:[%s6179] ss:$9 sm:$0xff] %v1498
      %6263 = vst [vmem:[%s6181] ss:$9 sm:$0xff] %v1502
      %6264 = vst [vmem:[%s6183] ss:$9 sm:$0xff] %v1506
      %v6265 = vld [vmem:[#allocation1] sm:$0xff]
      %6267 = vst [vmem:[#allocation1] ss:$9 sm:$0xff] %v1510
      %6268 = vst [vmem:[%s6171] ss:$9 sm:$0xff] %v1514
      %6269 = vst [vmem:[%s6173] ss:$9 sm:$0xff] %v1518
      %6270 = vst [vmem:[%s6175] ss:$9 sm:$0xff] %v1522
      %6271 = vst [vmem:[%s6177] ss:$9 sm:$0xff] %v1526
      %6272 = vst [vmem:[%s6179] ss:$9 sm:$0xff] %v1530
      %6273 = vst [vmem:[%s6181] ss:$9 sm:$0xff] %v1534
      %6274 = vst [vmem:[%s6183] ss:$9 sm:$0xff] %v1538
      %v6275 = vld [vmem:[#allocation1] sm:$0xff]
      %6277 = vst [vmem:[#allocation1] ss:$9 sm:$0xff] %v1550
      %6278 = vst [vmem:[%s6171] ss:$9 sm:$0xff] %v1554
      %6279 = vst [vmem:[%s6173] ss:$9 sm:$0xff] %v1558
      %6280 = vst [vmem:[%s6175] ss:$9 sm:$0xff] %v1562
      %6281 = vst [vmem:[%s6177] ss:$9 sm:$0xff] %v1566
      %6282 = vst [vmem:[%s6179] ss:$9 sm:$0xff] %v1570
      %6283 = vst [vmem:[%s6181] ss:$9 sm:$0xff] %v1574
      %6284 = vst [vmem:[%s6183] ss:$9 sm:$0xff] %v1578
      %v6285 = vld [vmem:[#allocation1] sm:$0xff]
      %6287 = vst [vmem:[#allocation1] ss:$9 sm:$0xff] %v1582
      %6288 = vst [vmem:[%s6171] ss:$9 sm:$0xff] %v1586
      %6289 = vst [vmem:[%s6173] ss:$9 sm:$0xff] %v1590
      %6290 = vst [vmem:[%s6175] ss:$9 sm:$0xff] %v1594
      %6291 = vst [vmem:[%s6177] ss:$9 sm:$0xff] %v1598
      %6292 = vst [vmem:[%s6179] ss:$9 sm:$0xff] %v1602
      %6293 = vst [vmem:[%s6181] ss:$9 sm:$0xff] %v1606
      %6294 = vst [vmem:[%s6183] ss:$9 sm:$0xff] %v1610
      %v6295 = vld [vmem:[#allocation1] sm:$0xff]
      %6297 = vst [vmem:[#allocation1] ss:$9 sm:$0xff] %v1550
      %6298 = vst [vmem:[%s6171] ss:$9 sm:$0xff] %v1554
      %6299 = vst [vmem:[%s6173] ss:$9 sm:$0xff] %v1558
      %6300 = vst [vmem:[%s6175] ss:$9 sm:$0xff] %v1562
      %6301 = vst [vmem:[%s6177] ss:$9 sm:$0xff] %v1566
      %6302 = vst [vmem:[%s6179] ss:$9 sm:$0xff] %v1570
      %6303 = vst [vmem:[%s6181] ss:$9 sm:$0xff] %v1574
      %6304 = vst [vmem:[%s6183] ss:$9 sm:$0xff] %v1578
      %v6305 = vld [vmem:[#allocation1] sm:$0xff]
      %6307 = vst [vmem:[#allocation1] ss:$9 sm:$0xff] %v1582
      %6308 = vst [vmem:[%s6171] ss:$9 sm:$0xff] %v1586
      %6309 = vst [vmem:[%s6173] ss:$9 sm:$0xff] %v1590
      %6310 = vst [vmem:[%s6175] ss:$9 sm:$0xff] %v1594
      %6311 = vst [vmem:[%s6177] ss:$9 sm:$0xff] %v1598
      %6312 = vst [vmem:[%s6179] ss:$9 sm:$0xff] %v1602
      %6313 = vst [vmem:[%s6181] ss:$9 sm:$0xff] %v1606
      %6314 = vst [vmem:[%s6183] ss:$9 sm:$0xff] %v1610
      %v6315 = vld [vmem:[#allocation1] sm:$0xff]
      %6317 = vst [vmem:[#allocation1] ss:$9 sm:$0xff] %v1622
      %6318 = vst [vmem:[%s6171] ss:$9 sm:$0xff] %v1626
      %6319 = vst [vmem:[%s6173] ss:$9 sm:$0xff] %v1630
      %6320 = vst [vmem:[%s6175] ss:$9 sm:$0xff] %v1634
      %6321 = vst [vmem:[%s6177] ss:$9 sm:$0xff] %v1638
      %6322 = vst [vmem:[%s6179] ss:$9 sm:$0xff] %v1642
      %6323 = vst [vmem:[%s6181] ss:$9 sm:$0xff] %v1646
      %6324 = vst [vmem:[%s6183] ss:$9 sm:$0xff] %v1650
      %v6325 = vld [vmem:[#allocation1] sm:$0xff]
      %6327 = vst [vmem:[#allocation1] ss:$9 sm:$0xff] %v1654
      %6328 = vst [vmem:[%s6171] ss:$9 sm:$0xff] %v1658
      %6329 = vst [vmem:[%s6173] ss:$9 sm:$0xff] %v1662
      %6330 = vst [vmem:[%s6175] ss:$9 sm:$0xff] %v1666
      %6331 = vst [vmem:[%s6177] ss:$9 sm:$0xff] %v1670
      %6332 = vst [vmem:[%s6179] ss:$9 sm:$0xff] %v1674
      %6333 = vst [vmem:[%s6181] ss:$9 sm:$0xff] %v1678
      %6334 = vst [vmem:[%s6183] ss:$9 sm:$0xff] %v1682
      %v6335 = vld [vmem:[#allocation1] sm:$0xff]
      %6337 = vst [vmem:[#allocation1] ss:$9 sm:$0xff] %v1622
      %6338 = vst [vmem:[%s6171] ss:$9 sm:$0xff] %v1626
      %6339 = vst [vmem:[%s6173] ss:$9 sm:$0xff] %v1630
      %6340 = vst [vmem:[%s6175] ss:$9 sm:$0xff] %v1634
      %6341 = vst [vmem:[%s6177] ss:$9 sm:$0xff] %v1638
      %6342 = vst [vmem:[%s6179] ss:$9 sm:$0xff] %v1642
      %6343 = vst [vmem:[%s6181] ss:$9 sm:$0xff] %v1646
      %6344 = vst [vmem:[%s6183] ss:$9 sm:$0xff] %v1650
      %v6345 = vld [vmem:[#allocation1] sm:$0xff]
      %6347 = vst [vmem:[#allocation1] ss:$9 sm:$0xff] %v1654
      %6348 = vst [vmem:[%s6171] ss:$9 sm:$0xff] %v1658
      %6349 = vst [vmem:[%s6173] ss:$9 sm:$0xff] %v1662
      %6350 = vst [vmem:[%s6175] ss:$9 sm:$0xff] %v1666
      %6351 = vst [vmem:[%s6177] ss:$9 sm:$0xff] %v1670
      %6352 = vst [vmem:[%s6179] ss:$9 sm:$0xff] %v1674
      %6353 = vst [vmem:[%s6181] ss:$9 sm:$0xff] %v1678
      %6354 = vst [vmem:[%s6183] ss:$9 sm:$0xff] %v1682
      %v6355 = vld [vmem:[#allocation1] sm:$0xff]
      %6357 = vst [vmem:[#allocation1] ss:$9 sm:$0xff] %v1694
      %6358 = vst [vmem:[%s6171] ss:$9 sm:$0xff] %v1698
      %6359 = vst [vmem:[%s6173] ss:$9 sm:$0xff] %v1702
      %6360 = vst [vmem:[%s6175] ss:$9 sm:$0xff] %v1706
      %6361 = vst [vmem:[%s6177] ss:$9 sm:$0xff] %v1710
      %6362 = vst [vmem:[%s6179] ss:$9 sm:$0xff] %v1714
      %6363 = vst [vmem:[%s6181] ss:$9 sm:$0xff] %v1718
      %6364 = vst [vmem:[%s6183] ss:$9 sm:$0xff] %v1722
      %v6365 = vld [vmem:[#allocation1] sm:$0xff]
      %6367 = vst [vmem:[#allocation1] ss:$9 sm:$0xff] %v1726
      %6368 = vst [vmem:[%s6171] ss:$9 sm:$0xff] %v1730
      %6369 = vst [vmem:[%s6173] ss:$9 sm:$0xff] %v1734
      %6370 = vst [vmem:[%s6175] ss:$9 sm:$0xff] %v1738
      %6371 = vst [vmem:[%s6177] ss:$9 sm:$0xff] %v1742
      %6372 = vst [vmem:[%s6179] ss:$9 sm:$0xff] %v1746
      %6373 = vst [vmem:[%s6181] ss:$9 sm:$0xff] %v1750
      %6374 = vst [vmem:[%s6183] ss:$9 sm:$0xff] %v1754
      %v6375 = vld [vmem:[#allocation1] sm:$0xff]
      %6377 = vst [vmem:[#allocation1] ss:$9 sm:$0xff] %v1694
      %6378 = vst [vmem:[%s6171] ss:$9 sm:$0xff] %v1698
      %6379 = vst [vmem:[%s6173] ss:$9 sm:$0xff] %v1702
      %6380 = vst [vmem:[%s6175] ss:$9 sm:$0xff] %v1706
      %6381 = vst [vmem:[%s6177] ss:$9 sm:$0xff] %v1710
      %6382 = vst [vmem:[%s6179] ss:$9 sm:$0xff] %v1714
      %6383 = vst [vmem:[%s6181] ss:$9 sm:$0xff] %v1718
      %6384 = vst [vmem:[%s6183] ss:$9 sm:$0xff] %v1722
      %v6385 = vld [vmem:[#allocation1] sm:$0xff]
      %6387 = vst [vmem:[#allocation1] ss:$9 sm:$0xff] %v1726
      %6388 = vst [vmem:[%s6171] ss:$9 sm:$0xff] %v1730
      %6389 = vst [vmem:[%s6173] ss:$9 sm:$0xff] %v1734
      %6390 = vst [vmem:[%s6175] ss:$9 sm:$0xff] %v1738
      %6391 = vst [vmem:[%s6177] ss:$9 sm:$0xff] %v1742
      %6392 = vst [vmem:[%s6179] ss:$9 sm:$0xff] %v1746
      %6393 = vst [vmem:[%s6181] ss:$9 sm:$0xff] %v1750
      %6394 = vst [vmem:[%s6183] ss:$9 sm:$0xff] %v1754
      %v6395 = vld [vmem:[#allocation1] sm:$0xff]
      %6397 = vst [vmem:[#allocation1] ss:$9 sm:$0xff] %v1766
      %6398 = vst [vmem:[%s6171] ss:$9 sm:$0xff] %v1770
      %6399 = vst [vmem:[%s6173] ss:$9 sm:$0xff] %v1774
      %6400 = vst [vmem:[%s6175] ss:$9 sm:$0xff] %v1778
      %6401 = vst [vmem:[%s6177] ss:$9 sm:$0xff] %v1782
      %6402 = vst [vmem:[%s6179] ss:$9 sm:$0xff] %v1786
      %6403 = vst [vmem:[%s6181] ss:$9 sm:$0xff] %v1790
      %6404 = vst [vmem:[%s6183] ss:$9 sm:$0xff] %v1794
      %v6405 = vld [vmem:[#allocation1] sm:$0xff]
      %6407 = vst [vmem:[#allocation1] ss:$9 sm:$0xff] %v1798
      %6408 = vst [vmem:[%s6171] ss:$9 sm:$0xff] %v1802
      %6409 = vst [vmem:[%s6173] ss:$9 sm:$0xff] %v1806
      %6410 = vst [vmem:[%s6175] ss:$9 sm:$0xff] %v1810
      %6411 = vst [vmem:[%s6177] ss:$9 sm:$0xff] %v1814
      %6412 = vst [vmem:[%s6179] ss:$9 sm:$0xff] %v1818
      %6413 = vst [vmem:[%s6181] ss:$9 sm:$0xff] %v1822
      %6414 = vst [vmem:[%s6183] ss:$9 sm:$0xff] %v1826
      %v6415 = vld [vmem:[#allocation1] sm:$0xff]
      %6417 = vst [vmem:[#allocation1] ss:$9 sm:$0xff] %v1766
      %6418 = vst [vmem:[%s6171] ss:$9 sm:$0xff] %v1770
      %6419 = vst [vmem:[%s6173] ss:$9 sm:$0xff] %v1774
      %6420 = vst [vmem:[%s6175] ss:$9 sm:$0xff] %v1778
      %6421 = vst [vmem:[%s6177] ss:$9 sm:$0xff] %v1782
      %6422 = vst [vmem:[%s6179] ss:$9 sm:$0xff] %v1786
      %6423 = vst [vmem:[%s6181] ss:$9 sm:$0xff] %v1790
      %6424 = vst [vmem:[%s6183] ss:$9 sm:$0xff] %v1794
      %v6425 = vld [vmem:[#allocation1] sm:$0xff]
      %6427 = vst [vmem:[#allocation1] ss:$9 sm:$0xff] %v1798
      %6428 = vst [vmem:[%s6171] ss:$9 sm:$0xff] %v1802
      %6429 = vst [vmem:[%s6173] ss:$9 sm:$0xff] %v1806
      %6430 = vst [vmem:[%s6175] ss:$9 sm:$0xff] %v1810
      %6431 = vst [vmem:[%s6177] ss:$9 sm:$0xff] %v1814
      %6432 = vst [vmem:[%s6179] ss:$9 sm:$0xff] %v1818
      %6433 = vst [vmem:[%s6181] ss:$9 sm:$0xff] %v1822
      %6434 = vst [vmem:[%s6183] ss:$9 sm:$0xff] %v1826
      %v6435 = vld [vmem:[#allocation1] sm:$0xff]
      %6437 = vst [vmem:[#allocation1] ss:$9 sm:$0xff] %v1838
      %6438 = vst [vmem:[%s6171] ss:$9 sm:$0xff] %v1842
      %6439 = vst [vmem:[%s6173] ss:$9 sm:$0xff] %v1846
      %6440 = vst [vmem:[%s6175] ss:$9 sm:$0xff] %v1850
      %6441 = vst [vmem:[%s6177] ss:$9 sm:$0xff] %v1854
      %6442 = vst [vmem:[%s6179] ss:$9 sm:$0xff] %v1858
      %6443 = vst [vmem:[%s6181] ss:$9 sm:$0xff] %v1862
      %6444 = vst [vmem:[%s6183] ss:$9 sm:$0xff] %v1866
      %v6445 = vld [vmem:[#allocation1] sm:$0xff]
      %6447 = vst [vmem:[#allocation1] ss:$9 sm:$0xff] %v1870
      %6448 = vst [vmem:[%s6171] ss:$9 sm:$0xff] %v1874
      %6449 = vst [vmem:[%s6173] ss:$9 sm:$0xff] %v1878
      %6450 = vst [vmem:[%s6175] ss:$9 sm:$0xff] %v1882
      %6451 = vst [vmem:[%s6177] ss:$9 sm:$0xff] %v1886
      %6452 = vst [vmem:[%s6179] ss:$9 sm:$0xff] %v1890
      %6453 = vst [vmem:[%s6181] ss:$9 sm:$0xff] %v1894
      %6454 = vst [vmem:[%s6183] ss:$9 sm:$0xff] %v1898
      %v6455 = vld [vmem:[#allocation1] sm:$0xff]
      %6457 = vst [vmem:[#allocation1] ss:$9 sm:$0xff] %v1838
      %6458 = vst [vmem:[%s6171] ss:$9 sm:$0xff] %v1842
      %6459 = vst [vmem:[%s6173] ss:$9 sm:$0xff] %v1846
      %6460 = vst [vmem:[%s6175] ss:$9 sm:$0xff] %v1850
      %6461 = vst [vmem:[%s6177] ss:$9 sm:$0xff] %v1854
      %6462 = vst [vmem:[%s6179] ss:$9 sm:$0xff] %v1858
      %6463 = vst [vmem:[%s6181] ss:$9 sm:$0xff] %v1862
      %6464 = vst [vmem:[%s6183] ss:$9 sm:$0xff] %v1866
      %v6465 = vld [vmem:[#allocation1] sm:$0xff]
      %6467 = vst [vmem:[#allocation1] ss:$9 sm:$0xff] %v1870
      %6468 = vst [vmem:[%s6171] ss:$9 sm:$0xff] %v1874
      %6469 = vst [vmem:[%s6173] ss:$9 sm:$0xff] %v1878
      %6470 = vst [vmem:[%s6175] ss:$9 sm:$0xff] %v1882
      %6471 = vst [vmem:[%s6177] ss:$9 sm:$0xff] %v1886
      %6472 = vst [vmem:[%s6179] ss:$9 sm:$0xff] %v1890
      %6473 = vst [vmem:[%s6181] ss:$9 sm:$0xff] %v1894
      %6474 = vst [vmem:[%s6183] ss:$9 sm:$0xff] %v1898
      %v6475 = vld [vmem:[#allocation1] sm:$0xff]
      %6477 = vst [vmem:[#allocation1] ss:$9 sm:$0xff] %v1910
      %6478 = vst [vmem:[%s6171] ss:$9 sm:$0xff] %v1914
      %6479 = vst [vmem:[%s6173] ss:$9 sm:$0xff] %v1918
      %6480 = vst [vmem:[%s6175] ss:$9 sm:$0xff] %v1922
      %6481 = vst [vmem:[%s6177] ss:$9 sm:$0xff] %v1926
      %6482 = vst [vmem:[%s6179] ss:$9 sm:$0xff] %v1930
      %6483 = vst [vmem:[%s6181] ss:$9 sm:$0xff] %v1934
      %6484 = vst [vmem:[%s6183] ss:$9 sm:$0xff] %v1938
      %v6485 = vld [vmem:[#allocation1] sm:$0xff]
      %6487 = vst [vmem:[#allocation1] ss:$9 sm:$0xff] %v1942
      %6488 = vst [vmem:[%s6171] ss:$9 sm:$0xff] %v1946
      %6489 = vst [vmem:[%s6173] ss:$9 sm:$0xff] %v1950
      %6490 = vst [vmem:[%s6175] ss:$9 sm:$0xff] %v1954
      %6491 = vst [vmem:[%s6177] ss:$9 sm:$0xff] %v1958
      %6492 = vst [vmem:[%s6179] ss:$9 sm:$0xff] %v1962
      %6493 = vst [vmem:[%s6181] ss:$9 sm:$0xff] %v1966
      %6494 = vst [vmem:[%s6183] ss:$9 sm:$0xff] %v1970
      %v6495 = vld [vmem:[#allocation1] sm:$0xff]
      %6497 = vrot.lane.b32.xlu0 %v6185, 28
      %v6498 = vpop.permute.xlu0 %6497
      %6499 = vrot.lane.b32.xlu0 %v6195, 28
      %v6500 = vpop.permute.xlu0 %6499
      %6501 = vrot.lane.b32.xlu0 %v6205, 28
      %v6502 = vpop.permute.xlu0 %6501
      %6503 = vrot.lane.b32.xlu0 %v6215, 28
      %v6504 = vpop.permute.xlu0 %6503
      %6505 = vrot.lane.b32.xlu0 %v6225, 28
      %v6506 = vpop.permute.xlu0 %6505
      %6507 = vrot.lane.b32.xlu0 %v6235, 28
      %v6508 = vpop.permute.xlu0 %6507
      %6509 = vrot.lane.b32.xlu0 %v6245, 28
      %v6510 = vpop.permute.xlu0 %6509
      %6511 = vrot.lane.b32.xlu0 %v6255, 28
      %v6512 = vpop.permute.xlu0 %6511
      %6513 = vrot.lane.b32.xlu0 %v6265, 28
      %v6514 = vpop.permute.xlu0 %6513
      %6515 = vrot.lane.b32.xlu0 %v6275, 28
      %v6516 = vpop.permute.xlu0 %6515
      %6517 = vrot.lane.b32.xlu0 %v6285, 28
      %v6518 = vpop.permute.xlu0 %6517
      %6519 = vrot.lane.b32.xlu0 %v6295, 28
      %v6520 = vpop.permute.xlu0 %6519
      %6521 = vrot.lane.b32.xlu0 %v6305, 28
      %v6522 = vpop.permute.xlu0 %6521
      %6523 = vrot.lane.b32.xlu0 %v6315, 28
      %v6524 = vpop.permute.xlu0 %6523
      %6525 = vrot.lane.b32.xlu0 %v6325, 28
      %v6526 = vpop.permute.xlu0 %6525
      %6527 = vrot.lane.b32.xlu0 %v6335, 28
      %v6528 = vpop.permute.xlu0 %6527
      %6529 = vrot.lane.b32.xlu0 %v6345, 28
      %v6530 = vpop.permute.xlu0 %6529
      %6531 = vrot.lane.b32.xlu0 %v6355, 28
      %v6532 = vpop.permute.xlu0 %6531
      %6533 = vrot.lane.b32.xlu0 %v6365, 28
      %v6534 = vpop.permute.xlu0 %6533
      %6535 = vrot.lane.b32.xlu0 %v6375, 28
      %v6536 = vpop.permute.xlu0 %6535
      %6537 = vrot.lane.b32.xlu0 %v6385, 28
      %v6538 = vpop.permute.xlu0 %6537
      %6539 = vrot.lane.b32.xlu0 %v6395, 28
      %v6540 = vpop.permute.xlu0 %6539
      %6541 = vrot.lane.b32.xlu0 %v6405, 28
      %v6542 = vpop.permute.xlu0 %6541
      %6543 = vrot.lane.b32.xlu0 %v6415, 28
      %v6544 = vpop.permute.xlu0 %6543
      %6545 = vrot.lane.b32.xlu0 %v6425, 28
      %v6546 = vpop.permute.xlu0 %6545
      %6547 = vrot.lane.b32.xlu0 %v6435, 28
      %v6548 = vpop.permute.xlu0 %6547
      %6549 = vrot.lane.b32.xlu0 %v6445, 28
      %v6550 = vpop.permute.xlu0 %6549
      %6551 = vrot.lane.b32.xlu0 %v6455, 28
      %v6552 = vpop.permute.xlu0 %6551
      %6553 = vrot.lane.b32.xlu0 %v6465, 28
      %v6554 = vpop.permute.xlu0 %6553
      %6555 = vrot.lane.b32.xlu0 %v6475, 28
      %v6556 = vpop.permute.xlu0 %6555
      %6557 = vrot.lane.b32.xlu0 %v6485, 28
      %v6558 = vpop.permute.xlu0 %6557
      %6559 = vrot.lane.b32.xlu0 %v6495, 28
      %v6560 = vpop.permute.xlu0 %6559
      %6561 = vst [vmem:[#allocation1] ss:$9 sm:$0xff] %v2135
      %s6562 = scalar_lea.vmem [#allocation1], 1
      %6563 = vst [vmem:[%s6562] ss:$9 sm:$0xff] %v2143
      %s6564 = scalar_lea.vmem [#allocation1], 2
      %6565 = vst [vmem:[%s6564] ss:$9 sm:$0xff] %v2151
      %s6566 = scalar_lea.vmem [#allocation1], 3
      %6567 = vst [vmem:[%s6566] ss:$9 sm:$0xff] %v2159
      %s6568 = scalar_lea.vmem [#allocation1], 4
      %6569 = vst [vmem:[%s6568] ss:$9 sm:$0xff] %v2167
      %s6570 = scalar_lea.vmem [#allocation1], 5
      %6571 = vst [vmem:[%s6570] ss:$9 sm:$0xff] %v2175
      %s6572 = scalar_lea.vmem [#allocation1], 6
      %6573 = vst [vmem:[%s6572] ss:$9 sm:$0xff] %v2183
      %s6574 = scalar_lea.vmem [#allocation1], 7
      %6575 = vst [vmem:[%s6574] ss:$9 sm:$0xff] %v2191
      %v6576 = vld [vmem:[#allocation1] sm:$0xff]
      %6578 = vst [vmem:[#allocation1] ss:$9 sm:$0xff] %v2199
      %6579 = vst [vmem:[%s6562] ss:$9 sm:$0xff] %v2207
      %6580 = vst [vmem:[%s6564] ss:$9 sm:$0xff] %v2215
      %6581 = vst [vmem:[%s6566] ss:$9 sm:$0xff] %v2223
      %6582 = vst [vmem:[%s6568] ss:$9 sm:$0xff] %v2231
      %6583 = vst [vmem:[%s6570] ss:$9 sm:$0xff] %v2239
      %6584 = vst [vmem:[%s6572] ss:$9 sm:$0xff] %v2247
      %6585 = vst [vmem:[%s6574] ss:$9 sm:$0xff] %v3166
      %v6586 = vld [vmem:[#allocation1] sm:$0xff]
      %6588 = vst [vmem:[#allocation1] ss:$9 sm:$0xff] %v2264
      %6589 = vst [vmem:[%s6562] ss:$9 sm:$0xff] %v2272
      %6590 = vst [vmem:[%s6564] ss:$9 sm:$0xff] %v2280
      %6591 = vst [vmem:[%s6566] ss:$9 sm:$0xff] %v2288
      %6592 = vst [vmem:[%s6568] ss:$9 sm:$0xff] %v2296
      %6593 = vst [vmem:[%s6570] ss:$9 sm:$0xff] %v2304
      %6594 = vst [vmem:[%s6572] ss:$9 sm:$0xff] %v2312
      %6595 = vst [vmem:[%s6574] ss:$9 sm:$0xff] %v2320
      %v6596 = vld [vmem:[#allocation1] sm:$0xff]
      %6598 = vst [vmem:[#allocation1] ss:$9 sm:$0xff] %v2328
      %6599 = vst [vmem:[%s6562] ss:$9 sm:$0xff] %v2336
      %6600 = vst [vmem:[%s6564] ss:$9 sm:$0xff] %v2344
      %6601 = vst [vmem:[%s6566] ss:$9 sm:$0xff] %v2352
      %6602 = vst [vmem:[%s6568] ss:$9 sm:$0xff] %v2360
      %6603 = vst [vmem:[%s6570] ss:$9 sm:$0xff] %v2368
      %6604 = vst [vmem:[%s6572] ss:$9 sm:$0xff] %v2376
      %6605 = vst [vmem:[%s6574] ss:$9 sm:$0xff] %v3174
      %v6606 = vld [vmem:[#allocation1] sm:$0xff]
      %6608 = vst [vmem:[#allocation1] ss:$9 sm:$0xff] %v2264
      %6609 = vst [vmem:[%s6562] ss:$9 sm:$0xff] %v2272
      %6610 = vst [vmem:[%s6564] ss:$9 sm:$0xff] %v2280
      %6611 = vst [vmem:[%s6566] ss:$9 sm:$0xff] %v2288
      %6612 = vst [vmem:[%s6568] ss:$9 sm:$0xff] %v2296
      %6613 = vst [vmem:[%s6570] ss:$9 sm:$0xff] %v2304
      %6614 = vst [vmem:[%s6572] ss:$9 sm:$0xff] %v2312
      %6615 = vst [vmem:[%s6574] ss:$9 sm:$0xff] %v2320
      %v6616 = vld [vmem:[#allocation1] sm:$0xff]
      %6618 = vst [vmem:[#allocation1] ss:$9 sm:$0xff] %v2328
      %6619 = vst [vmem:[%s6562] ss:$9 sm:$0xff] %v2336
      %6620 = vst [vmem:[%s6564] ss:$9 sm:$0xff] %v2344
      %6621 = vst [vmem:[%s6566] ss:$9 sm:$0xff] %v2352
      %6622 = vst [vmem:[%s6568] ss:$9 sm:$0xff] %v2360
      %6623 = vst [vmem:[%s6570] ss:$9 sm:$0xff] %v2368
      %6624 = vst [vmem:[%s6572] ss:$9 sm:$0xff] %v2376
      %6625 = vst [vmem:[%s6574] ss:$9 sm:$0xff] %v3174
      %v6626 = vld [vmem:[#allocation1] sm:$0xff]
      %6628 = vst [vmem:[#allocation1] ss:$9 sm:$0xff] %v2393
      %6629 = vst [vmem:[%s6562] ss:$9 sm:$0xff] %v2401
      %6630 = vst [vmem:[%s6564] ss:$9 sm:$0xff] %v2409
      %6631 = vst [vmem:[%s6566] ss:$9 sm:$0xff] %v2417
      %6632 = vst [vmem:[%s6568] ss:$9 sm:$0xff] %v2425
      %6633 = vst [vmem:[%s6570] ss:$9 sm:$0xff] %v2433
      %6634 = vst [vmem:[%s6572] ss:$9 sm:$0xff] %v2441
      %6635 = vst [vmem:[%s6574] ss:$9 sm:$0xff] %v2449
      %v6636 = vld [vmem:[#allocation1] sm:$0xff]
      %6638 = vst [vmem:[#allocation1] ss:$9 sm:$0xff] %v2457
      %6639 = vst [vmem:[%s6562] ss:$9 sm:$0xff] %v2465
      %6640 = vst [vmem:[%s6564] ss:$9 sm:$0xff] %v2473
      %6641 = vst [vmem:[%s6566] ss:$9 sm:$0xff] %v2481
      %6642 = vst [vmem:[%s6568] ss:$9 sm:$0xff] %v2489
      %6643 = vst [vmem:[%s6570] ss:$9 sm:$0xff] %v2497
      %6644 = vst [vmem:[%s6572] ss:$9 sm:$0xff] %v2505
      %6645 = vst [vmem:[%s6574] ss:$9 sm:$0xff] %v3182
      %v6646 = vld [vmem:[#allocation1] sm:$0xff]
      %6648 = vst [vmem:[#allocation1] ss:$9 sm:$0xff] %v2393
      %6649 = vst [vmem:[%s6562] ss:$9 sm:$0xff] %v2401
      %6650 = vst [vmem:[%s6564] ss:$9 sm:$0xff] %v2409
      %6651 = vst [vmem:[%s6566] ss:$9 sm:$0xff] %v2417
      %6652 = vst [vmem:[%s6568] ss:$9 sm:$0xff] %v2425
      %6653 = vst [vmem:[%s6570] ss:$9 sm:$0xff] %v2433
      %6654 = vst [vmem:[%s6572] ss:$9 sm:$0xff] %v2441
      %6655 = vst [vmem:[%s6574] ss:$9 sm:$0xff] %v2449
      %v6656 = vld [vmem:[#allocation1] sm:$0xff]
      %6658 = vst [vmem:[#allocation1] ss:$9 sm:$0xff] %v2457
      %6659 = vst [vmem:[%s6562] ss:$9 sm:$0xff] %v2465
      %6660 = vst [vmem:[%s6564] ss:$9 sm:$0xff] %v2473
      %6661 = vst [vmem:[%s6566] ss:$9 sm:$0xff] %v2481
      %6662 = vst [vmem:[%s6568] ss:$9 sm:$0xff] %v2489
      %6663 = vst [vmem:[%s6570] ss:$9 sm:$0xff] %v2497
      %6664 = vst [vmem:[%s6572] ss:$9 sm:$0xff] %v2505
      %6665 = vst [vmem:[%s6574] ss:$9 sm:$0xff] %v3182
      %v6666 = vld [vmem:[#allocation1] sm:$0xff]
      %6668 = vst [vmem:[#allocation1] ss:$9 sm:$0xff] %v2522
      %6669 = vst [vmem:[%s6562] ss:$9 sm:$0xff] %v2530
      %6670 = vst [vmem:[%s6564] ss:$9 sm:$0xff] %v2538
      %6671 = vst [vmem:[%s6566] ss:$9 sm:$0xff] %v2546
      %6672 = vst [vmem:[%s6568] ss:$9 sm:$0xff] %v2554
      %6673 = vst [vmem:[%s6570] ss:$9 sm:$0xff] %v2562
      %6674 = vst [vmem:[%s6572] ss:$9 sm:$0xff] %v2570
      %6675 = vst [vmem:[%s6574] ss:$9 sm:$0xff] %v2578
      %v6676 = vld [vmem:[#allocation1] sm:$0xff]
      %6678 = vst [vmem:[#allocation1] ss:$9 sm:$0xff] %v2586
      %6679 = vst [vmem:[%s6562] ss:$9 sm:$0xff] %v2594
      %6680 = vst [vmem:[%s6564] ss:$9 sm:$0xff] %v2602
      %6681 = vst [vmem:[%s6566] ss:$9 sm:$0xff] %v2610
      %6682 = vst [vmem:[%s6568] ss:$9 sm:$0xff] %v2618
      %6683 = vst [vmem:[%s6570] ss:$9 sm:$0xff] %v2626
      %6684 = vst [vmem:[%s6572] ss:$9 sm:$0xff] %v2634
      %6685 = vst [vmem:[%s6574] ss:$9 sm:$0xff] %v3190
      %v6686 = vld [vmem:[#allocation1] sm:$0xff]
      %6688 = vst [vmem:[#allocation1] ss:$9 sm:$0xff] %v2522
      %6689 = vst [vmem:[%s6562] ss:$9 sm:$0xff] %v2530
      %6690 = vst [vmem:[%s6564] ss:$9 sm:$0xff] %v2538
      %6691 = vst [vmem:[%s6566] ss:$9 sm:$0xff] %v2546
      %6692 = vst [vmem:[%s6568] ss:$9 sm:$0xff] %v2554
      %6693 = vst [vmem:[%s6570] ss:$9 sm:$0xff] %v2562
      %6694 = vst [vmem:[%s6572] ss:$9 sm:$0xff] %v2570
      %6695 = vst [vmem:[%s6574] ss:$9 sm:$0xff] %v2578
      %v6696 = vld [vmem:[#allocation1] sm:$0xff]
      %6698 = vst [vmem:[#allocation1] ss:$9 sm:$0xff] %v2586
      %6699 = vst [vmem:[%s6562] ss:$9 sm:$0xff] %v2594
      %6700 = vst [vmem:[%s6564] ss:$9 sm:$0xff] %v2602
      %6701 = vst [vmem:[%s6566] ss:$9 sm:$0xff] %v2610
      %6702 = vst [vmem:[%s6568] ss:$9 sm:$0xff] %v2618
      %6703 = vst [vmem:[%s6570] ss:$9 sm:$0xff] %v2626
      %6704 = vst [vmem:[%s6572] ss:$9 sm:$0xff] %v2634
      %6705 = vst [vmem:[%s6574] ss:$9 sm:$0xff] %v3190
      %v6706 = vld [vmem:[#allocation1] sm:$0xff]
      %6708 = vst [vmem:[#allocation1] ss:$9 sm:$0xff] %v2651
      %6709 = vst [vmem:[%s6562] ss:$9 sm:$0xff] %v2659
      %6710 = vst [vmem:[%s6564] ss:$9 sm:$0xff] %v2667
      %6711 = vst [vmem:[%s6566] ss:$9 sm:$0xff] %v2675
      %6712 = vst [vmem:[%s6568] ss:$9 sm:$0xff] %v2683
      %6713 = vst [vmem:[%s6570] ss:$9 sm:$0xff] %v2691
      %6714 = vst [vmem:[%s6572] ss:$9 sm:$0xff] %v2699
      %6715 = vst [vmem:[%s6574] ss:$9 sm:$0xff] %v2707
      %v6716 = vld [vmem:[#allocation1] sm:$0xff]
      %6718 = vst [vmem:[#allocation1] ss:$9 sm:$0xff] %v2715
      %6719 = vst [vmem:[%s6562] ss:$9 sm:$0xff] %v2723
      %6720 = vst [vmem:[%s6564] ss:$9 sm:$0xff] %v2731
      %6721 = vst [vmem:[%s6566] ss:$9 sm:$0xff] %v2739
      %6722 = vst [vmem:[%s6568] ss:$9 sm:$0xff] %v2747
      %6723 = vst [vmem:[%s6570] ss:$9 sm:$0xff] %v2755
      %6724 = vst [vmem:[%s6572] ss:$9 sm:$0xff] %v2763
      %6725 = vst [vmem:[%s6574] ss:$9 sm:$0xff] %v3198
      %v6726 = vld [vmem:[#allocation1] sm:$0xff]
      %6728 = vst [vmem:[#allocation1] ss:$9 sm:$0xff] %v2651
      %6729 = vst [vmem:[%s6562] ss:$9 sm:$0xff] %v2659
      %6730 = vst [vmem:[%s6564] ss:$9 sm:$0xff] %v2667
      %6731 = vst [vmem:[%s6566] ss:$9 sm:$0xff] %v2675
      %6732 = vst [vmem:[%s6568] ss:$9 sm:$0xff] %v2683
      %6733 = vst [vmem:[%s6570] ss:$9 sm:$0xff] %v2691
      %6734 = vst [vmem:[%s6572] ss:$9 sm:$0xff] %v2699
      %6735 = vst [vmem:[%s6574] ss:$9 sm:$0xff] %v2707
      %v6736 = vld [vmem:[#allocation1] sm:$0xff]
      %6738 = vst [vmem:[#allocation1] ss:$9 sm:$0xff] %v2715
      %6739 = vst [vmem:[%s6562] ss:$9 sm:$0xff] %v2723
      %6740 = vst [vmem:[%s6564] ss:$9 sm:$0xff] %v2731
      %6741 = vst [vmem:[%s6566] ss:$9 sm:$0xff] %v2739
      %6742 = vst [vmem:[%s6568] ss:$9 sm:$0xff] %v2747
      %6743 = vst [vmem:[%s6570] ss:$9 sm:$0xff] %v2755
      %6744 = vst [vmem:[%s6572] ss:$9 sm:$0xff] %v2763
      %6745 = vst [vmem:[%s6574] ss:$9 sm:$0xff] %v3198
      %v6746 = vld [vmem:[#allocation1] sm:$0xff]
      %6748 = vst [vmem:[#allocation1] ss:$9 sm:$0xff] %v2780
      %6749 = vst [vmem:[%s6562] ss:$9 sm:$0xff] %v2788
      %6750 = vst [vmem:[%s6564] ss:$9 sm:$0xff] %v2796
      %6751 = vst [vmem:[%s6566] ss:$9 sm:$0xff] %v2804
      %6752 = vst [vmem:[%s6568] ss:$9 sm:$0xff] %v2812
      %6753 = vst [vmem:[%s6570] ss:$9 sm:$0xff] %v2820
      %6754 = vst [vmem:[%s6572] ss:$9 sm:$0xff] %v2828
      %6755 = vst [vmem:[%s6574] ss:$9 sm:$0xff] %v2836
      %v6756 = vld [vmem:[#allocation1] sm:$0xff]
      %6758 = vst [vmem:[#allocation1] ss:$9 sm:$0xff] %v2844
      %6759 = vst [vmem:[%s6562] ss:$9 sm:$0xff] %v2852
      %6760 = vst [vmem:[%s6564] ss:$9 sm:$0xff] %v2860
      %6761 = vst [vmem:[%s6566] ss:$9 sm:$0xff] %v2868
      %6762 = vst [vmem:[%s6568] ss:$9 sm:$0xff] %v2876
      %6763 = vst [vmem:[%s6570] ss:$9 sm:$0xff] %v2884
      %6764 = vst [vmem:[%s6572] ss:$9 sm:$0xff] %v2892
      %6765 = vst [vmem:[%s6574] ss:$9 sm:$0xff] %v3206
      %v6766 = vld [vmem:[#allocation1] sm:$0xff]
      %6768 = vst [vmem:[#allocation1] ss:$9 sm:$0xff] %v2780
      %6769 = vst [vmem:[%s6562] ss:$9 sm:$0xff] %v2788
      %6770 = vst [vmem:[%s6564] ss:$9 sm:$0xff] %v2796
      %6771 = vst [vmem:[%s6566] ss:$9 sm:$0xff] %v2804
      %6772 = vst [vmem:[%s6568] ss:$9 sm:$0xff] %v2812
      %6773 = vst [vmem:[%s6570] ss:$9 sm:$0xff] %v2820
      %6774 = vst [vmem:[%s6572] ss:$9 sm:$0xff] %v2828
      %6775 = vst [vmem:[%s6574] ss:$9 sm:$0xff] %v2836
      %v6776 = vld [vmem:[#allocation1] sm:$0xff]
      %6778 = vst [vmem:[#allocation1] ss:$9 sm:$0xff] %v2844
      %6779 = vst [vmem:[%s6562] ss:$9 sm:$0xff] %v2852
      %6780 = vst [vmem:[%s6564] ss:$9 sm:$0xff] %v2860
      %6781 = vst [vmem:[%s6566] ss:$9 sm:$0xff] %v2868
      %6782 = vst [vmem:[%s6568] ss:$9 sm:$0xff] %v2876
      %6783 = vst [vmem:[%s6570] ss:$9 sm:$0xff] %v2884
      %6784 = vst [vmem:[%s6572] ss:$9 sm:$0xff] %v2892
      %6785 = vst [vmem:[%s6574] ss:$9 sm:$0xff] %v3206
      %v6786 = vld [vmem:[#allocation1] sm:$0xff]
      %6788 = vst [vmem:[#allocation1] ss:$9 sm:$0xff] %v2909
      %6789 = vst [vmem:[%s6562] ss:$9 sm:$0xff] %v2917
      %6790 = vst [vmem:[%s6564] ss:$9 sm:$0xff] %v2925
      %6791 = vst [vmem:[%s6566] ss:$9 sm:$0xff] %v2933
      %6792 = vst [vmem:[%s6568] ss:$9 sm:$0xff] %v2941
      %6793 = vst [vmem:[%s6570] ss:$9 sm:$0xff] %v2949
      %6794 = vst [vmem:[%s6572] ss:$9 sm:$0xff] %v2957
      %6795 = vst [vmem:[%s6574] ss:$9 sm:$0xff] %v2965
      %v6796 = vld [vmem:[#allocation1] sm:$0xff]
      %6798 = vst [vmem:[#allocation1] ss:$9 sm:$0xff] %v2973
      %6799 = vst [vmem:[%s6562] ss:$9 sm:$0xff] %v2981
      %6800 = vst [vmem:[%s6564] ss:$9 sm:$0xff] %v2989
      %6801 = vst [vmem:[%s6566] ss:$9 sm:$0xff] %v2997
      %6802 = vst [vmem:[%s6568] ss:$9 sm:$0xff] %v3005
      %6803 = vst [vmem:[%s6570] ss:$9 sm:$0xff] %v3013
      %6804 = vst [vmem:[%s6572] ss:$9 sm:$0xff] %v3021
      %6805 = vst [vmem:[%s6574] ss:$9 sm:$0xff] %v3214
      %v6806 = vld [vmem:[#allocation1] sm:$0xff]
      %6808 = vst [vmem:[#allocation1] ss:$9 sm:$0xff] %v2909
      %6809 = vst [vmem:[%s6562] ss:$9 sm:$0xff] %v2917
      %6810 = vst [vmem:[%s6564] ss:$9 sm:$0xff] %v2925
      %6811 = vst [vmem:[%s6566] ss:$9 sm:$0xff] %v2933
      %6812 = vst [vmem:[%s6568] ss:$9 sm:$0xff] %v2941
      %6813 = vst [vmem:[%s6570] ss:$9 sm:$0xff] %v2949
      %6814 = vst [vmem:[%s6572] ss:$9 sm:$0xff] %v2957
      %6815 = vst [vmem:[%s6574] ss:$9 sm:$0xff] %v2965
      %v6816 = vld [vmem:[#allocation1] sm:$0xff]
      %6818 = vst [vmem:[#allocation1] ss:$9 sm:$0xff] %v2973
      %6819 = vst [vmem:[%s6562] ss:$9 sm:$0xff] %v2981
      %6820 = vst [vmem:[%s6564] ss:$9 sm:$0xff] %v2989
      %6821 = vst [vmem:[%s6566] ss:$9 sm:$0xff] %v2997
      %6822 = vst [vmem:[%s6568] ss:$9 sm:$0xff] %v3005
      %6823 = vst [vmem:[%s6570] ss:$9 sm:$0xff] %v3013
      %6824 = vst [vmem:[%s6572] ss:$9 sm:$0xff] %v3021
      %6825 = vst [vmem:[%s6574] ss:$9 sm:$0xff] %v3214
      %v6826 = vld [vmem:[#allocation1] sm:$0xff]
      %6828 = vst [vmem:[#allocation1] ss:$9 sm:$0xff] %v3038
      %6829 = vst [vmem:[%s6562] ss:$9 sm:$0xff] %v3046
      %6830 = vst [vmem:[%s6564] ss:$9 sm:$0xff] %v3054
      %6831 = vst [vmem:[%s6566] ss:$9 sm:$0xff] %v3062
      %6832 = vst [vmem:[%s6568] ss:$9 sm:$0xff] %v3070
      %6833 = vst [vmem:[%s6570] ss:$9 sm:$0xff] %v3078
      %6834 = vst [vmem:[%s6572] ss:$9 sm:$0xff] %v3086
      %6835 = vst [vmem:[%s6574] ss:$9 sm:$0xff] %v3094
      %v6836 = vld [vmem:[#allocation1] sm:$0xff]
      %6838 = vst [vmem:[#allocation1] ss:$9 sm:$0xff] %v3102
      %6839 = vst [vmem:[%s6562] ss:$9 sm:$0xff] %v3110
      %6840 = vst [vmem:[%s6564] ss:$9 sm:$0xff] %v3118
      %6841 = vst [vmem:[%s6566] ss:$9 sm:$0xff] %v3126
      %6842 = vst [vmem:[%s6568] ss:$9 sm:$0xff] %v3134
      %6843 = vst [vmem:[%s6570] ss:$9 sm:$0xff] %v3142
      %6844 = vst [vmem:[%s6572] ss:$9 sm:$0xff] %v3150
      %6845 = vst [vmem:[%s6574] ss:$9 sm:$0xff] %v3222
      %v6846 = vld [vmem:[#allocation1] sm:$0xff]
      %6848 = vst [vmem:[#allocation1] ss:$9 sm:$0xff] %v3038
      %6849 = vst [vmem:[%s6562] ss:$9 sm:$0xff] %v3046
      %6850 = vst [vmem:[%s6564] ss:$9 sm:$0xff] %v3054
      %6851 = vst [vmem:[%s6566] ss:$9 sm:$0xff] %v3062
      %6852 = vst [vmem:[%s6568] ss:$9 sm:$0xff] %v3070
      %6853 = vst [vmem:[%s6570] ss:$9 sm:$0xff] %v3078
      %6854 = vst [vmem:[%s6572] ss:$9 sm:$0xff] %v3086
      %6855 = vst [vmem:[%s6574] ss:$9 sm:$0xff] %v3094
      %v6856 = vld [vmem:[#allocation1] sm:$0xff]
      %6858 = vst [vmem:[#allocation1] ss:$9 sm:$0xff] %v3102
      %6859 = vst [vmem:[%s6562] ss:$9 sm:$0xff] %v3110
      %6860 = vst [vmem:[%s6564] ss:$9 sm:$0xff] %v3118
      %6861 = vst [vmem:[%s6566] ss:$9 sm:$0xff] %v3126
      %6862 = vst [vmem:[%s6568] ss:$9 sm:$0xff] %v3134
      %6863 = vst [vmem:[%s6570] ss:$9 sm:$0xff] %v3142
      %6864 = vst [vmem:[%s6572] ss:$9 sm:$0xff] %v3150
      %6865 = vst [vmem:[%s6574] ss:$9 sm:$0xff] %v3222
      %v6866 = vld [vmem:[#allocation1] sm:$0xff]
      %6868 = vst [vmem:[#allocation1] ss:$9 sm:$0xff] %v3239
      %6869 = vst [vmem:[%s6562] ss:$9 sm:$0xff] %v3247
      %6870 = vst [vmem:[%s6564] ss:$9 sm:$0xff] %v3255
      %6871 = vst [vmem:[%s6566] ss:$9 sm:$0xff] %v3263
      %6872 = vst [vmem:[%s6568] ss:$9 sm:$0xff] %v3271
      %6873 = vst [vmem:[%s6570] ss:$9 sm:$0xff] %v3279
      %6874 = vst [vmem:[%s6572] ss:$9 sm:$0xff] %v3287
      %6875 = vst [vmem:[%s6574] ss:$9 sm:$0xff] %v3295
      %v6876 = vld [vmem:[#allocation1] sm:$0xff]
      %6878 = vst [vmem:[#allocation1] ss:$9 sm:$0xff] %v3303
      %6879 = vst [vmem:[%s6562] ss:$9 sm:$0xff] %v3311
      %6880 = vst [vmem:[%s6564] ss:$9 sm:$0xff] %v3319
      %6881 = vst [vmem:[%s6566] ss:$9 sm:$0xff] %v3327
      %6882 = vst [vmem:[%s6568] ss:$9 sm:$0xff] %v3335
      %6883 = vst [vmem:[%s6570] ss:$9 sm:$0xff] %v3343
      %6884 = vst [vmem:[%s6572] ss:$9 sm:$0xff] %v3351
      %6886 = vst [vmem:[%s6574] ss:$9 sm:$0xff] %v3359
      %v6887 = vld [vmem:[#allocation1] sm:$0xff]
      %6889 = vrot.lane.b32.xlu0 %v6576, 32
      %v6890 = vpop.permute.xlu0 %6889
      %6891 = vrot.lane.b32.xlu0 %v6586, 32
      %v6892 = vpop.permute.xlu0 %6891
      %6893 = vrot.lane.b32.xlu0 %v6596, 32
      %v6894 = vpop.permute.xlu0 %6893
      %6895 = vrot.lane.b32.xlu0 %v6606, 32
      %v6896 = vpop.permute.xlu0 %6895
      %6897 = vrot.lane.b32.xlu0 %v6616, 32
      %v6898 = vpop.permute.xlu0 %6897
      %6899 = vrot.lane.b32.xlu0 %v6626, 32
      %v6900 = vpop.permute.xlu0 %6899
      %6901 = vrot.lane.b32.xlu0 %v6636, 32
      %v6902 = vpop.permute.xlu0 %6901
      %6903 = vrot.lane.b32.xlu0 %v6646, 32
      %v6904 = vpop.permute.xlu0 %6903
      %6905 = vrot.lane.b32.xlu0 %v6656, 32
      %v6906 = vpop.permute.xlu0 %6905
      %6907 = vrot.lane.b32.xlu0 %v6666, 32
      %v6908 = vpop.permute.xlu0 %6907
      %6909 = vrot.lane.b32.xlu0 %v6676, 32
      %v6910 = vpop.permute.xlu0 %6909
      %6911 = vrot.lane.b32.xlu0 %v6686, 32
      %v6912 = vpop.permute.xlu0 %6911
      %6913 = vrot.lane.b32.xlu0 %v6696, 32
      %v6914 = vpop.permute.xlu0 %6913
      %6915 = vrot.lane.b32.xlu0 %v6706, 32
      %v6916 = vpop.permute.xlu0 %6915
      %6917 = vrot.lane.b32.xlu0 %v6716, 32
      %v6918 = vpop.permute.xlu0 %6917
      %6919 = vrot.lane.b32.xlu0 %v6726, 32
      %v6920 = vpop.permute.xlu0 %6919
      %6921 = vrot.lane.b32.xlu0 %v6736, 32
      %v6922 = vpop.permute.xlu0 %6921
      %6923 = vrot.lane.b32.xlu0 %v6746, 32
      %v6924 = vpop.permute.xlu0 %6923
      %6925 = vrot.lane.b32.xlu0 %v6756, 32
      %v6926 = vpop.permute.xlu0 %6925
      %6927 = vrot.lane.b32.xlu0 %v6766, 32
      %v6928 = vpop.permute.xlu0 %6927
      %6929 = vrot.lane.b32.xlu0 %v6776, 32
      %v6930 = vpop.permute.xlu0 %6929
      %6931 = vrot.lane.b32.xlu0 %v6786, 32
      %v6932 = vpop.permute.xlu0 %6931
      %6933 = vrot.lane.b32.xlu0 %v6796, 32
      %v6934 = vpop.permute.xlu0 %6933
      %6935 = vrot.lane.b32.xlu0 %v6806, 32
      %v6936 = vpop.permute.xlu0 %6935
      %6937 = vrot.lane.b32.xlu0 %v6816, 32
      %v6938 = vpop.permute.xlu0 %6937
      %6939 = vrot.lane.b32.xlu0 %v6826, 32
      %v6940 = vpop.permute.xlu0 %6939
      %6941 = vrot.lane.b32.xlu0 %v6836, 32
      %v6942 = vpop.permute.xlu0 %6941
      %6943 = vrot.lane.b32.xlu0 %v6846, 32
      %v6944 = vpop.permute.xlu0 %6943
      %6945 = vrot.lane.b32.xlu0 %v6856, 32
      %v6946 = vpop.permute.xlu0 %6945
      %6947 = vrot.lane.b32.xlu0 %v6866, 32
      %v6948 = vpop.permute.xlu0 %6947
      %6949 = vrot.lane.b32.xlu0 %v6876, 32
      %v6950 = vpop.permute.xlu0 %6949
      %6951 = vrot.lane.b32.xlu0 %v6887, 32
      %v6952 = vpop.permute.xlu0 %6951
      %vm6953 = vcmask 31744
      %v6955 = vsel %vm6953, %v3383, %v4127
      %v6957 = vsel %vm6953, %v3400, %v4129
      %v6959 = vsel %vm6953, %v3417, %v4131
      %v6961 = vsel %vm6953, %v3434, %v4133
      %v6963 = vsel %vm6953, %v3443, %v4135
      %v6965 = vsel %vm6953, %v3452, %v4137
      %v6967 = vsel %vm6953, %v3469, %v4139
      %v6969 = vsel %vm6953, %v3486, %v4141
      %v6971 = vsel %vm6953, %v3495, %v4143
      %v6973 = vsel %vm6953, %v3504, %v4145
      %v6975 = vsel %vm6953, %v3521, %v4147
      %v6977 = vsel %vm6953, %v3538, %v4149
      %v6979 = vsel %vm6953, %v3547, %v4151
      %v6981 = vsel %vm6953, %v3556, %v4153
      %v6983 = vsel %vm6953, %v3573, %v4155
      %v6985 = vsel %vm6953, %v3590, %v4157
      %v6987 = vsel %vm6953, %v3599, %v4159
      %v6989 = vsel %vm6953, %v3608, %v4161
      %v6991 = vsel %vm6953, %v3625, %v4163
      %v6993 = vsel %vm6953, %v3642, %v4165
      %v6995 = vsel %vm6953, %v3651, %v4167
      %v6997 = vsel %vm6953, %v3660, %v4169
      %v6999 = vsel %vm6953, %v3677, %v4171
      %v7001 = vsel %vm6953, %v3694, %v4173
      %v7003 = vsel %vm6953, %v3703, %v4175
      %v7005 = vsel %vm6953, %v3712, %v4177
      %v7007 = vsel %vm6953, %v3729, %v4179
      %v7009 = vsel %vm6953, %v3746, %v4181
      %v7011 = vsel %vm6953, %v3755, %v4183
      %v7013 = vsel %vm6953, %v3764, %v4185
      %v7015 = vsel %vm6953, %v3781, %v4187
      %v7017 = vsel %vm6953, %v3798, %v4189
      %vm7018 = vcmask 64512
      %v7020 = vsel %vm7018, %v6955, %v4527
      %v7022 = vsel %vm7018, %v6957, %v4529
      %v7024 = vsel %vm7018, %v6959, %v4531
      %v7026 = vsel %vm7018, %v6961, %v4533
      %v7028 = vsel %vm7018, %v6963, %v4535
      %v7030 = vsel %vm7018, %v6965, %v4537
      %v7032 = vsel %vm7018, %v6967, %v4539
      %v7034 = vsel %vm7018, %v6969, %v4541
      %v7036 = vsel %vm7018, %v6971, %v4543
      %v7038 = vsel %vm7018, %v6973, %v4545
      %v7040 = vsel %vm7018, %v6975, %v4547
      %v7042 = vsel %vm7018, %v6977, %v4549
      %v7044 = vsel %vm7018, %v6979, %v4551
      %v7046 = vsel %vm7018, %v6981, %v4553
      %v7048 = vsel %vm7018, %v6983, %v4555
      %v7050 = vsel %vm7018, %v6985, %v4557
      %v7052 = vsel %vm7018, %v6987, %v4559
      %v7054 = vsel %vm7018, %v6989, %v4561
      %v7056 = vsel %vm7018, %v6991, %v4563
      %v7058 = vsel %vm7018, %v6993, %v4565
      %v7060 = vsel %vm7018, %v6995, %v4567
      %v7062 = vsel %vm7018, %v6997, %v4569
      %v7064 = vsel %vm7018, %v6999, %v4571
      %v7066 = vsel %vm7018, %v7001, %v4573
      %v7068 = vsel %vm7018, %v7003, %v4575
      %v7070 = vsel %vm7018, %v7005, %v4577
      %v7072 = vsel %vm7018, %v7007, %v4579
      %v7074 = vsel %vm7018, %v7009, %v4581
      %v7076 = vsel %vm7018, %v7011, %v4583
      %v7078 = vsel %vm7018, %v7013, %v4585
      %v7080 = vsel %vm7018, %v7015, %v4587
      %v7082 = vsel %vm7018, %v7017, %v4589
      %vm7083 = vcmask 97280
      %v7085 = vsel %vm7083, %v7020, %v4918
      %v7087 = vsel %vm7083, %v7022, %v4920
      %v7089 = vsel %vm7083, %v7024, %v4922
      %v7091 = vsel %vm7083, %v7026, %v4924
      %v7093 = vsel %vm7083, %v7028, %v4926
      %v7095 = vsel %vm7083, %v7030, %v4928
      %v7097 = vsel %vm7083, %v7032, %v4930
      %v7099 = vsel %vm7083, %v7034, %v4932
      %v7101 = vsel %vm7083, %v7036, %v4934
      %v7103 = vsel %vm7083, %v7038, %v4936
      %v7105 = vsel %vm7083, %v7040, %v4938
      %v7107 = vsel %vm7083, %v7042, %v4940
      %v7109 = vsel %vm7083, %v7044, %v4942
      %v7111 = vsel %vm7083, %v7046, %v4944
      %v7113 = vsel %vm7083, %v7048, %v4946
      %v7115 = vsel %vm7083, %v7050, %v4948
      %v7117 = vsel %vm7083, %v7052, %v4950
      %v7119 = vsel %vm7083, %v7054, %v4952
      %v7121 = vsel %vm7083, %v7056, %v4954
      %v7123 = vsel %vm7083, %v7058, %v4956
      %v7125 = vsel %vm7083, %v7060, %v4958
      %v7127 = vsel %vm7083, %v7062, %v4960
      %v7129 = vsel %vm7083, %v7064, %v4962
      %v7131 = vsel %vm7083, %v7066, %v4964
      %v7133 = vsel %vm7083, %v7068, %v4966
      %v7135 = vsel %vm7083, %v7070, %v4968
      %v7137 = vsel %vm7083, %v7072, %v4970
      %v7139 = vsel %vm7083, %v7074, %v4972
      %v7141 = vsel %vm7083, %v7076, %v4974
      %v7143 = vsel %vm7083, %v7078, %v4976
      %v7145 = vsel %vm7083, %v7080, %v4978
      %v7147 = vsel %vm7083, %v7082, %v4980
      %vm7148 = vcmask 130048
      %v7150 = vsel %vm7148, %v7085, %v5309
      %v7152 = vsel %vm7148, %v7087, %v5311
      %v7154 = vsel %vm7148, %v7089, %v5313
      %v7156 = vsel %vm7148, %v7091, %v5315
      %v7158 = vsel %vm7148, %v7093, %v5317
      %v7160 = vsel %vm7148, %v7095, %v5319
      %v7162 = vsel %vm7148, %v7097, %v5321
      %v7164 = vsel %vm7148, %v7099, %v5323
      %v7166 = vsel %vm7148, %v7101, %v5325
      %v7168 = vsel %vm7148, %v7103, %v5327
      %v7170 = vsel %vm7148, %v7105, %v5329
      %v7172 = vsel %vm7148, %v7107, %v5331
      %v7174 = vsel %vm7148, %v7109, %v5333
      %v7176 = vsel %vm7148, %v7111, %v5335
      %v7178 = vsel %vm7148, %v7113, %v5337
      %v7180 = vsel %vm7148, %v7115, %v5339
      %v7182 = vsel %vm7148, %v7117, %v5341
      %v7184 = vsel %vm7148, %v7119, %v5343
      %v7186 = vsel %vm7148, %v7121, %v5345
      %v7188 = vsel %vm7148, %v7123, %v5347
      %v7190 = vsel %vm7148, %v7125, %v5349
      %v7192 = vsel %vm7148, %v7127, %v5351
      %v7194 = vsel %vm7148, %v7129, %v5353
      %v7196 = vsel %vm7148, %v7131, %v5355
      %v7198 = vsel %vm7148, %v7133, %v5357
      %v7200 = vsel %vm7148, %v7135, %v5359
      %v7202 = vsel %vm7148, %v7137, %v5361
      %v7204 = vsel %vm7148, %v7139, %v5363
      %v7206 = vsel %vm7148, %v7141, %v5365
      %v7208 = vsel %vm7148, %v7143, %v5367
      %v7210 = vsel %vm7148, %v7145, %v5369
      %v7212 = vsel %vm7148, %v7147, %v5371
      %vm7213 = vcmask 162816
      %v7215 = vsel %vm7213, %v7150, %v5700
      %v7217 = vsel %vm7213, %v7152, %v5702
      %v7219 = vsel %vm7213, %v7154, %v5704
      %v7221 = vsel %vm7213, %v7156, %v5706
      %v7223 = vsel %vm7213, %v7158, %v5708
      %v7225 = vsel %vm7213, %v7160, %v5710
      %v7227 = vsel %vm7213, %v7162, %v5712
      %v7229 = vsel %vm7213, %v7164, %v5714
      %v7231 = vsel %vm7213, %v7166, %v5716
      %v7233 = vsel %vm7213, %v7168, %v5718
      %v7235 = vsel %vm7213, %v7170, %v5720
      %v7237 = vsel %vm7213, %v7172, %v5722
      %v7239 = vsel %vm7213, %v7174, %v5724
      %v7241 = vsel %vm7213, %v7176, %v5726
      %v7243 = vsel %vm7213, %v7178, %v5728
      %v7245 = vsel %vm7213, %v7180, %v5730
      %v7247 = vsel %vm7213, %v7182, %v5732
      %v7249 = vsel %vm7213, %v7184, %v5734
      %v7251 = vsel %vm7213, %v7186, %v5736
      %v7253 = vsel %vm7213, %v7188, %v5738
      %v7255 = vsel %vm7213, %v7190, %v5740
      %v7257 = vsel %vm7213, %v7192, %v5742
      %v7259 = vsel %vm7213, %v7194, %v5744
      %v7261 = vsel %vm7213, %v7196, %v5746
      %v7263 = vsel %vm7213, %v7198, %v5748
      %v7265 = vsel %vm7213, %v7200, %v5750
      %v7267 = vsel %vm7213, %v7202, %v5752
      %v7269 = vsel %vm7213, %v7204, %v5754
      %v7271 = vsel %vm7213, %v7206, %v5756
      %v7273 = vsel %vm7213, %v7208, %v5758
      %v7275 = vsel %vm7213, %v7210, %v5760
      %v7277 = vsel %vm7213, %v7212, %v5762
      %vm7278 = vcmask 195584
      %v7280 = vsel %vm7278, %v7215, %v6107
      %v7282 = vsel %vm7278, %v7217, %v6109
      %v7284 = vsel %vm7278, %v7219, %v6111
      %v7286 = vsel %vm7278, %v7221, %v6113
      %v7288 = vsel %vm7278, %v7223, %v6115
      %v7290 = vsel %vm7278, %v7225, %v6117
      %v7292 = vsel %vm7278, %v7227, %v6119
      %v7294 = vsel %vm7278, %v7229, %v6121
      %v7296 = vsel %vm7278, %v7231, %v6123
      %v7298 = vsel %vm7278, %v7233, %v6125
      %v7300 = vsel %vm7278, %v7235, %v6127
      %v7302 = vsel %vm7278, %v7237, %v6129
      %v7304 = vsel %vm7278, %v7239, %v6131
      %v7306 = vsel %vm7278, %v7241, %v6133
      %v7308 = vsel %vm7278, %v7243, %v6135
      %v7310 = vsel %vm7278, %v7245, %v6137
      %v7312 = vsel %vm7278, %v7247, %v6139
      %v7314 = vsel %vm7278, %v7249, %v6141
      %v7316 = vsel %vm7278, %v7251, %v6143
      %v7318 = vsel %vm7278, %v7253, %v6145
      %v7320 = vsel %vm7278, %v7255, %v6147
      %v7322 = vsel %vm7278, %v7257, %v6149
      %v7324 = vsel %vm7278, %v7259, %v6151
      %v7326 = vsel %vm7278, %v7261, %v6153
      %v7328 = vsel %vm7278, %v7263, %v6155
      %v7330 = vsel %vm7278, %v7265, %v6157
      %v7332 = vsel %vm7278, %v7267, %v6159
      %v7334 = vsel %vm7278, %v7269, %v6161
      %v7336 = vsel %vm7278, %v7271, %v6163
      %v7338 = vsel %vm7278, %v7273, %v6165
      %v7340 = vsel %vm7278, %v7275, %v6167
      %v7342 = vsel %vm7278, %v7277, %v6169
      %vm7343 = vcmask 228352
      %v7345 = vsel %vm7343, %v7280, %v6498
      %v7347 = vsel %vm7343, %v7282, %v6500
      %v7349 = vsel %vm7343, %v7284, %v6502
      %v7351 = vsel %vm7343, %v7286, %v6504
      %v7353 = vsel %vm7343, %v7288, %v6506
      %v7355 = vsel %vm7343, %v7290, %v6508
      %v7357 = vsel %vm7343, %v7292, %v6510
      %v7359 = vsel %vm7343, %v7294, %v6512
      %v7361 = vsel %vm7343, %v7296, %v6514
      %v7363 = vsel %vm7343, %v7298, %v6516
      %v7365 = vsel %vm7343, %v7300, %v6518
      %v7367 = vsel %vm7343, %v7302, %v6520
      %v7369 = vsel %vm7343, %v7304, %v6522
      %v7371 = vsel %vm7343, %v7306, %v6524
      %v7373 = vsel %vm7343, %v7308, %v6526
      %v7375 = vsel %vm7343, %v7310, %v6528
      %v7377 = vsel %vm7343, %v7312, %v6530
      %v7379 = vsel %vm7343, %v7314, %v6532
      %v7381 = vsel %vm7343, %v7316, %v6534
      %v7383 = vsel %vm7343, %v7318, %v6536
      %v7385 = vsel %vm7343, %v7320, %v6538
      %v7387 = vsel %vm7343, %v7322, %v6540
      %v7389 = vsel %vm7343, %v7324, %v6542
      %v7391 = vsel %vm7343, %v7326, %v6544
      %v7393 = vsel %vm7343, %v7328, %v6546
      %v7395 = vsel %vm7343, %v7330, %v6548
      %v7397 = vsel %vm7343, %v7332, %v6550
      %v7399 = vsel %vm7343, %v7334, %v6552
      %v7401 = vsel %vm7343, %v7336, %v6554
      %v7403 = vsel %vm7343, %v7338, %v6556
      %v7405 = vsel %vm7343, %v7340, %v6558
      %v7407 = vsel %vm7343, %v7342, %v6560
      %vm7408 = vcmask 261120
      %v7410 = vsel %vm7408, %v7345, %v6890
      %v7412 = vsel %vm7408, %v7347, %v6892
      %v7414 = vsel %vm7408, %v7349, %v6894
      %v7416 = vsel %vm7408, %v7351, %v6896
      %v7418 = vsel %vm7408, %v7353, %v6898
      %v7420 = vsel %vm7408, %v7355, %v6900
      %v7422 = vsel %vm7408, %v7357, %v6902
      %v7424 = vsel %vm7408, %v7359, %v6904
      %v7426 = vsel %vm7408, %v7361, %v6906
      %v7428 = vsel %vm7408, %v7363, %v6908
      %v7430 = vsel %vm7408, %v7365, %v6910
      %v7432 = vsel %vm7408, %v7367, %v6912
      %v7434 = vsel %vm7408, %v7369, %v6914
      %v7436 = vsel %vm7408, %v7371, %v6916
      %v7438 = vsel %vm7408, %v7373, %v6918
      %v7440 = vsel %vm7408, %v7375, %v6920
      %v7442 = vsel %vm7408, %v7377, %v6922
      %v7444 = vsel %vm7408, %v7379, %v6924
      %v7446 = vsel %vm7408, %v7381, %v6926
      %v7448 = vsel %vm7408, %v7383, %v6928
      %v7450 = vsel %vm7408, %v7385, %v6930
      %v7452 = vsel %vm7408, %v7387, %v6932
      %v7454 = vsel %vm7408, %v7389, %v6934
      %v7456 = vsel %vm7408, %v7391, %v6936
      %v7458 = vsel %vm7408, %v7393, %v6938
      %v7460 = vsel %vm7408, %v7395, %v6940
      %v7462 = vsel %vm7408, %v7397, %v6942
      %v7464 = vsel %vm7408, %v7399, %v6944
      %v7466 = vsel %vm7408, %v7401, %v6946
      %v7468 = vsel %vm7408, %v7403, %v6948
      %v7470 = vsel %vm7408, %v7405, %v6950
      %v7472 = vsel %vm7408, %v7407, %v6952
      %vm7473 = vcmask 293888
      %v7475 = vsel %vm7473, %v7410, 0
      %v7477 = vsel %vm7473, %v7412, 0
      %v7479 = vsel %vm7473, %v7414, 0
      %v7481 = vsel %vm7473, %v7416, 0
      %v7483 = vsel %vm7473, %v7418, 0
      %v7485 = vsel %vm7473, %v7420, 0
      %v7487 = vsel %vm7473, %v7422, 0
      %v7489 = vsel %vm7473, %v7424, 0
      %v7491 = vsel %vm7473, %v7426, 0
      %v7493 = vsel %vm7473, %v7428, 0
      %v7495 = vsel %vm7473, %v7430, 0
      %v7497 = vsel %vm7473, %v7432, 0
      %v7499 = vsel %vm7473, %v7434, 0
      %v7501 = vsel %vm7473, %v7436, 0
      %v7503 = vsel %vm7473, %v7438, 0
      %v7505 = vsel %vm7473, %v7440, 0
      %v7507 = vsel %vm7473, %v7442, 0
      %v7509 = vsel %vm7473, %v7444, 0
      %v7511 = vsel %vm7473, %v7446, 0
      %v7513 = vsel %vm7473, %v7448, 0
      %v7515 = vsel %vm7473, %v7450, 0
      %v7517 = vsel %vm7473, %v7452, 0
      %v7519 = vsel %vm7473, %v7454, 0
      %v7521 = vsel %vm7473, %v7456, 0
      %v7523 = vsel %vm7473, %v7458, 0
      %v7525 = vsel %vm7473, %v7460, 0
      %v7527 = vsel %vm7473, %v7462, 0
      %v7529 = vsel %vm7473, %v7464, 0
      %v7531 = vsel %vm7473, %v7466, 0
      %v7533 = vsel %vm7473, %v7468, 0
      %v7535 = vsel %vm7473, %v7470, 0
      %v7537 = vsel %vm7473, %v7472, 0
      %v7539 = vld [vmem:[%s2] sm:$0xf]
      %v7540 = vld [vmem:[%s2 + $0x4] sm:$0xf]
      %v7541 = vld [vmem:[%s2 + $0x8] sm:$0xf]
      %v7542 = vld [vmem:[%s2 + $0xc] sm:$0xf]
      %v7543 = vld [vmem:[%s2 + $0x10] sm:$0xf]
      %v7544 = vld [vmem:[%s2 + $0x14] sm:$0xf]
      %v7545 = vld [vmem:[%s2 + $0x18] sm:$0xf]
      %v7546 = vld [vmem:[%s2 + $0x1c] sm:$0xf]
      %v7547 = vld [vmem:[%s2 + $0x20] sm:$0xf]
      %v7548 = vld [vmem:[%s2 + $0x24] sm:$0xf]
      %v7549 = vld [vmem:[%s2 + $0x28] sm:$0xf]
      %v7550 = vld [vmem:[%s2 + $0x2c] sm:$0xf]
      %v7551 = vld [vmem:[%s2 + $0x30] sm:$0xf]
      %v7552 = vld [vmem:[%s2 + $0x34] sm:$0xf]
      %v7553 = vld [vmem:[%s2 + $0x38] sm:$0xf]
      %v7554 = vld [vmem:[%s2 + $0x3c] sm:$0xf]
      %v7555 = vld [vmem:[%s3] sm:$0x1]
      %v7557 = vperm.slane %v7555, 0
      %v7575 = vunpack.c.l.b16 %v7539
      %v7576 = vunpack.c.l.b16 %v7540
      %v7577 = vunpack.c.l.b16 %v7541
      %v7578 = vunpack.c.l.b16 %v7542
      %v7579 = vunpack.c.l.b16 %v7543
      %v7580 = vunpack.c.l.b16 %v7544
      %v7581 = vunpack.c.l.b16 %v7545
      %v7582 = vunpack.c.l.b16 %v7546
      %v7583 = vunpack.c.l.b16 %v7547
      %v7584 = vunpack.c.l.b16 %v7548
      %v7585 = vunpack.c.l.b16 %v7549
      %v7586 = vunpack.c.l.b16 %v7550
      %v7587 = vunpack.c.l.b16 %v7551
      %v7588 = vunpack.c.l.b16 %v7552
      %v7589 = vunpack.c.l.b16 %v7553
      %v7590 = vunpack.c.l.b16 %v7554
      %v7591 = vpack.c.b16 %v7576, %v7575
      %v7592 = vpack.c.b16 %v7578, %v7577
      %v7593 = vpack.c.b16 %v7580, %v7579
      %v7594 = vpack.c.b16 %v7582, %v7581
      %v7595 = vpack.c.b16 %v7584, %v7583
      %v7596 = vpack.c.b16 %v7586, %v7585
      %v7597 = vpack.c.b16 %v7588, %v7587
      %v7598 = vpack.c.b16 %v7590, %v7589
      %7607 = vmatpush.bf16.msra.mxu0 %v7598
      %7608 = vmatpush.bf16.msra.mxu0 %v7597
      %7609 = vmatpush.bf16.msra.mxu0 %v7596
      %7610 = vmatpush.bf16.msra.mxu0 %v7595
      %7611 = vmatpush.bf16.msra.mxu0 %v7594
      %7612 = vmatpush.bf16.msra.mxu0 %v7593
      %7613 = vmatpush.bf16.msra.mxu0 %v7592
      %7614 = vmatpush.bf16.msra.mxu0 %v7591
      %7615 = vmatmul.bf16.gmra.mxu0 %v7475
      %v7616 = vpop.f32.mrf.mxu0
      %v7617 = vadd.f32 %v7557, %v7616
      %v7618 = vpop.f32.mrf.mxu0
      %v7619 = vadd.f32 %v7557, %v7618
      %7620 = vmatmul.bf16.gmra.mxu0 %v7477
      %v7621 = vpop.f32.mrf.mxu0
      %v7622 = vadd.f32 %v7557, %v7621
      %v7623 = vpop.f32.mrf.mxu0
      %v7624 = vadd.f32 %v7557, %v7623
      %7625 = vmatmul.bf16.gmra.mxu0 %v7479
      %v7626 = vpop.f32.mrf.mxu0
      %v7627 = vadd.f32 %v7557, %v7626
      %v7628 = vpop.f32.mrf.mxu0
      %v7629 = vadd.f32 %v7557, %v7628
      %7630 = vmatmul.bf16.gmra.mxu0 %v7481
      %v7631 = vpop.f32.mrf.mxu0
      %v7632 = vadd.f32 %v7557, %v7631
      %v7633 = vpop.f32.mrf.mxu0
      %v7634 = vadd.f32 %v7557, %v7633
      %7635 = vmatmul.bf16.gmra.mxu0 %v7483
      %v7636 = vpop.f32.mrf.mxu0
      %v7637 = vadd.f32 %v7557, %v7636
      %v7638 = vpop.f32.mrf.mxu0
      %v7639 = vadd.f32 %v7557, %v7638
      %7640 = vmatmul.bf16.gmra.mxu0 %v7485
      %v7641 = vpop.f32.mrf.mxu0
      %v7642 = vadd.f32 %v7557, %v7641
      %v7643 = vpop.f32.mrf.mxu0
      %v7644 = vadd.f32 %v7557, %v7643
      %7645 = vmatmul.bf16.gmra.mxu0 %v7487
      %v7646 = vpop.f32.mrf.mxu0
      %v7647 = vadd.f32 %v7557, %v7646
      %v7648 = vpop.f32.mrf.mxu0
      %v7649 = vadd.f32 %v7557, %v7648
      %7650 = vmatmul.bf16.gmra.mxu0 %v7489
      %v7651 = vpop.f32.mrf.mxu0
      %v7652 = vadd.f32 %v7557, %v7651
      %v7653 = vpop.f32.mrf.mxu0
      %v7654 = vadd.f32 %v7557, %v7653
      %7655 = vmatmul.bf16.gmra.mxu0 %v7491
      %v7656 = vpop.f32.mrf.mxu0
      %v7657 = vadd.f32 %v7557, %v7656
      %v7658 = vpop.f32.mrf.mxu0
      %v7659 = vadd.f32 %v7557, %v7658
      %7660 = vmatmul.bf16.gmra.mxu0 %v7493
      %v7661 = vpop.f32.mrf.mxu0
      %v7662 = vadd.f32 %v7557, %v7661
      %v7663 = vpop.f32.mrf.mxu0
      %v7664 = vadd.f32 %v7557, %v7663
      %7665 = vmatmul.bf16.gmra.mxu0 %v7495
      %v7666 = vpop.f32.mrf.mxu0
      %v7667 = vadd.f32 %v7557, %v7666
      %v7668 = vpop.f32.mrf.mxu0
      %v7669 = vadd.f32 %v7557, %v7668
      %7670 = vmatmul.bf16.gmra.mxu0 %v7497
      %v7671 = vpop.f32.mrf.mxu0
      %v7672 = vadd.f32 %v7557, %v7671
      %v7673 = vpop.f32.mrf.mxu0
      %v7674 = vadd.f32 %v7557, %v7673
      %7675 = vmatmul.bf16.gmra.mxu0 %v7499
      %v7676 = vpop.f32.mrf.mxu0
      %v7677 = vadd.f32 %v7557, %v7676
      %v7678 = vpop.f32.mrf.mxu0
      %v7679 = vadd.f32 %v7557, %v7678
      %7680 = vmatmul.bf16.gmra.mxu0 %v7501
      %v7681 = vpop.f32.mrf.mxu0
      %v7682 = vadd.f32 %v7557, %v7681
      %v7683 = vpop.f32.mrf.mxu0
      %v7684 = vadd.f32 %v7557, %v7683
      %7685 = vmatmul.bf16.gmra.mxu0 %v7503
      %v7686 = vpop.f32.mrf.mxu0
      %v7687 = vadd.f32 %v7557, %v7686
      %v7688 = vpop.f32.mrf.mxu0
      %v7689 = vadd.f32 %v7557, %v7688
      %7690 = vmatmul.bf16.gmra.mxu0 %v7505
      %v7691 = vpop.f32.mrf.mxu0
      %v7692 = vadd.f32 %v7557, %v7691
      %v7693 = vpop.f32.mrf.mxu0
      %v7694 = vadd.f32 %v7557, %v7693
      %7695 = vmatmul.bf16.gmra.mxu0 %v7507
      %v7696 = vpop.f32.mrf.mxu0
      %v7697 = vadd.f32 %v7557, %v7696
      %v7698 = vpop.f32.mrf.mxu0
      %v7699 = vadd.f32 %v7557, %v7698
      %7700 = vmatmul.bf16.gmra.mxu0 %v7509
      %v7701 = vpop.f32.mrf.mxu0
      %v7702 = vadd.f32 %v7557, %v7701
      %v7703 = vpop.f32.mrf.mxu0
      %v7704 = vadd.f32 %v7557, %v7703
      %7705 = vmatmul.bf16.gmra.mxu0 %v7511
      %v7706 = vpop.f32.mrf.mxu0
      %v7707 = vadd.f32 %v7557, %v7706
      %v7708 = vpop.f32.mrf.mxu0
      %v7709 = vadd.f32 %v7557, %v7708
      %7710 = vmatmul.bf16.gmra.mxu0 %v7513
      %v7711 = vpop.f32.mrf.mxu0
      %v7712 = vadd.f32 %v7557, %v7711
      %v7713 = vpop.f32.mrf.mxu0
      %v7714 = vadd.f32 %v7557, %v7713
      %7715 = vmatmul.bf16.gmra.mxu0 %v7515
      %v7716 = vpop.f32.mrf.mxu0
      %v7717 = vadd.f32 %v7557, %v7716
      %v7718 = vpop.f32.mrf.mxu0
      %v7719 = vadd.f32 %v7557, %v7718
      %7720 = vmatmul.bf16.gmra.mxu0 %v7517
      %v7721 = vpop.f32.mrf.mxu0
      %v7722 = vadd.f32 %v7557, %v7721
      %v7723 = vpop.f32.mrf.mxu0
      %v7724 = vadd.f32 %v7557, %v7723
      %7725 = vmatmul.bf16.gmra.mxu0 %v7519
      %v7726 = vpop.f32.mrf.mxu0
      %v7727 = vadd.f32 %v7557, %v7726
      %v7728 = vpop.f32.mrf.mxu0
      %v7729 = vadd.f32 %v7557, %v7728
      %7730 = vmatmul.bf16.gmra.mxu0 %v7521
      %v7731 = vpop.f32.mrf.mxu0
      %v7732 = vadd.f32 %v7557, %v7731
      %v7733 = vpop.f32.mrf.mxu0
      %v7734 = vadd.f32 %v7557, %v7733
      %7735 = vmatmul.bf16.gmra.mxu0 %v7523
      %v7736 = vpop.f32.mrf.mxu0
      %v7737 = vadd.f32 %v7557, %v7736
      %v7738 = vpop.f32.mrf.mxu0
      %v7739 = vadd.f32 %v7557, %v7738
      %7740 = vmatmul.bf16.gmra.mxu0 %v7525
      %v7741 = vpop.f32.mrf.mxu0
      %v7742 = vadd.f32 %v7557, %v7741
      %v7743 = vpop.f32.mrf.mxu0
      %v7744 = vadd.f32 %v7557, %v7743
      %7745 = vmatmul.bf16.gmra.mxu0 %v7527
      %v7746 = vpop.f32.mrf.mxu0
      %v7747 = vadd.f32 %v7557, %v7746
      %v7748 = vpop.f32.mrf.mxu0
      %v7749 = vadd.f32 %v7557, %v7748
      %7750 = vmatmul.bf16.gmra.mxu0 %v7529
      %v7751 = vpop.f32.mrf.mxu0
      %v7752 = vadd.f32 %v7557, %v7751
      %v7753 = vpop.f32.mrf.mxu0
      %v7754 = vadd.f32 %v7557, %v7753
      %7755 = vmatmul.bf16.gmra.mxu0 %v7531
      %v7756 = vpop.f32.mrf.mxu0
      %v7757 = vadd.f32 %v7557, %v7756
      %v7758 = vpop.f32.mrf.mxu0
      %v7759 = vadd.f32 %v7557, %v7758
      %7760 = vmatmul.bf16.gmra.mxu0 %v7533
      %v7761 = vpop.f32.mrf.mxu0
      %v7762 = vadd.f32 %v7557, %v7761
      %v7763 = vpop.f32.mrf.mxu0
      %v7764 = vadd.f32 %v7557, %v7763
      %7765 = vmatmul.bf16.gmra.mxu0 %v7535
      %v7766 = vpop.f32.mrf.mxu0
      %v7767 = vadd.f32 %v7557, %v7766
      %v7768 = vpop.f32.mrf.mxu0
      %v7769 = vadd.f32 %v7557, %v7768
      %7770 = vmatmul.bf16.gmra.mxu0 %v7537
      %v7771 = vpop.f32.mrf.mxu0
      %v7772 = vadd.f32 %v7557, %v7771
      %v7773 = vpop.f32.mrf.mxu0
      %v7774 = vadd.f32 %v7557, %v7773
      %7775 = vdwg.mxu0
      %v7776 = vpack.c.bf16 %v7617, %v7617
      %v7777 = vpack.c.bf16 %v7619, %v7619
      %v7778 = vpack.c.bf16 %v7622, %v7622
      %v7779 = vpack.c.bf16 %v7624, %v7624
      %v7780 = vpack.c.bf16 %v7627, %v7627
      %v7781 = vpack.c.bf16 %v7629, %v7629
      %v7782 = vpack.c.bf16 %v7632, %v7632
      %v7783 = vpack.c.bf16 %v7634, %v7634
      %v7784 = vpack.c.bf16 %v7637, %v7637
      %v7785 = vpack.c.bf16 %v7639, %v7639
      %v7786 = vpack.c.bf16 %v7642, %v7642
      %v7787 = vpack.c.bf16 %v7644, %v7644
      %v7788 = vpack.c.bf16 %v7647, %v7647
      %v7789 = vpack.c.bf16 %v7649, %v7649
      %v7790 = vpack.c.bf16 %v7652, %v7652
      %v7791 = vpack.c.bf16 %v7654, %v7654
      %v7792 = vpack.c.bf16 %v7657, %v7657
      %v7793 = vpack.c.bf16 %v7659, %v7659
      %v7794 = vpack.c.bf16 %v7662, %v7662
      %v7795 = vpack.c.bf16 %v7664, %v7664
      %v7796 = vpack.c.bf16 %v7667, %v7667
      %v7797 = vpack.c.bf16 %v7669, %v7669
      %v7798 = vpack.c.bf16 %v7672, %v7672
      %v7799 = vpack.c.bf16 %v7674, %v7674
      %v7800 = vpack.c.bf16 %v7677, %v7677
      %v7801 = vpack.c.bf16 %v7679, %v7679
      %v7802 = vpack.c.bf16 %v7682, %v7682
      %v7803 = vpack.c.bf16 %v7684, %v7684
      %v7804 = vpack.c.bf16 %v7687, %v7687
      %v7805 = vpack.c.bf16 %v7689, %v7689
      %v7806 = vpack.c.bf16 %v7692, %v7692
      %v7807 = vpack.c.bf16 %v7694, %v7694
      %v7808 = vpack.c.bf16 %v7697, %v7697
      %v7809 = vpack.c.bf16 %v7699, %v7699
      %v7810 = vpack.c.bf16 %v7702, %v7702
      %v7811 = vpack.c.bf16 %v7704, %v7704
      %v7812 = vpack.c.bf16 %v7707, %v7707
      %v7813 = vpack.c.bf16 %v7709, %v7709
      %v7814 = vpack.c.bf16 %v7712, %v7712
      %v7815 = vpack.c.bf16 %v7714, %v7714
      %v7816 = vpack.c.bf16 %v7717, %v7717
      %v7817 = vpack.c.bf16 %v7719, %v7719
      %v7818 = vpack.c.bf16 %v7722, %v7722
      %v7819 = vpack.c.bf16 %v7724, %v7724
      %v7820 = vpack.c.bf16 %v7727, %v7727
      %v7821 = vpack.c.bf16 %v7729, %v7729
      %v7822 = vpack.c.bf16 %v7732, %v7732
      %v7823 = vpack.c.bf16 %v7734, %v7734
      %v7824 = vpack.c.bf16 %v7737, %v7737
      %v7825 = vpack.c.bf16 %v7739, %v7739
      %v7826 = vpack.c.bf16 %v7742, %v7742
      %v7827 = vpack.c.bf16 %v7744, %v7744
      %v7828 = vpack.c.bf16 %v7747, %v7747
      %v7829 = vpack.c.bf16 %v7749, %v7749
      %v7830 = vpack.c.bf16 %v7752, %v7752
      %v7831 = vpack.c.bf16 %v7754, %v7754
      %v7832 = vpack.c.bf16 %v7757, %v7757
      %v7833 = vpack.c.bf16 %v7759, %v7759
      %v7834 = vpack.c.bf16 %v7762, %v7762
      %v7835 = vpack.c.bf16 %v7764, %v7764
      %v7836 = vpack.c.bf16 %v7767, %v7767
      %v7837 = vpack.c.bf16 %v7769, %v7769
      %v7838 = vpack.c.bf16 %v7772, %v7772
      %v7839 = vpack.c.bf16 %v7774, %v7774
      %vm7840 = vcmask 60416
      %7841 = vst.msk [vmem:[%s318] sm:$0xf] %vm7840, %v7776
      %7842 = vst.msk [vmem:[%s318 + $0x4] sm:$0xf] %vm7840, %v7777
      %7843 = vst.msk [vmem:[%s318 + $0x8] sm:$0xf] %vm7840, %v7778
      %7844 = vst.msk [vmem:[%s318 + $0xc] sm:$0xf] %vm7840, %v7779
      %7845 = vst.msk [vmem:[%s318 + $0x10] sm:$0xf] %vm7840, %v7780
      %7846 = vst.msk [vmem:[%s318 + $0x14] sm:$0xf] %vm7840, %v7781
      %7847 = vst.msk [vmem:[%s318 + $0x18] sm:$0xf] %vm7840, %v7782
      %7848 = vst.msk [vmem:[%s318 + $0x1c] sm:$0xf] %vm7840, %v7783
      %7849 = vst.msk [vmem:[%s318 + $0x20] sm:$0xf] %vm7840, %v7784
      %7850 = vst.msk [vmem:[%s318 + $0x24] sm:$0xf] %vm7840, %v7785
      %7851 = vst.msk [vmem:[%s318 + $0x28] sm:$0xf] %vm7840, %v7786
      %7852 = vst.msk [vmem:[%s318 + $0x2c] sm:$0xf] %vm7840, %v7787
      %7853 = vst.msk [vmem:[%s318 + $0x30] sm:$0xf] %vm7840, %v7788
      %7854 = vst.msk [vmem:[%s318 + $0x34] sm:$0xf] %vm7840, %v7789
      %7855 = vst.msk [vmem:[%s318 + $0x38] sm:$0xf] %vm7840, %v7790
      %7856 = vst.msk [vmem:[%s318 + $0x3c] sm:$0xf] %vm7840, %v7791
      %7857 = vst.msk [vmem:[%s318 + $0x40] sm:$0xf] %vm7840, %v7792
      %7858 = vst.msk [vmem:[%s318 + $0x44] sm:$0xf] %vm7840, %v7793
      %7859 = vst.msk [vmem:[%s318 + $0x48] sm:$0xf] %vm7840, %v7794
      %7860 = vst.msk [vmem:[%s318 + $0x4c] sm:$0xf] %vm7840, %v7795
      %7861 = vst.msk [vmem:[%s318 + $0x50] sm:$0xf] %vm7840, %v7796
      %7862 = vst.msk [vmem:[%s318 + $0x54] sm:$0xf] %vm7840, %v7797
      %7863 = vst.msk [vmem:[%s318 + $0x58] sm:$0xf] %vm7840, %v7798
      %7864 = vst.msk [vmem:[%s318 + $0x5c] sm:$0xf] %vm7840, %v7799
      %7865 = vst.msk [vmem:[%s318 + $0x60] sm:$0xf] %vm7840, %v7800
      %7866 = vst.msk [vmem:[%s318 + $0x64] sm:$0xf] %vm7840, %v7801
      %7867 = vst.msk [vmem:[%s318 + $0x68] sm:$0xf] %vm7840, %v7802
      %7868 = vst.msk [vmem:[%s318 + $0x6c] sm:$0xf] %vm7840, %v7803
      %7869 = vst.msk [vmem:[%s318 + $0x70] sm:$0xf] %vm7840, %v7804
      %7870 = vst.msk [vmem:[%s318 + $0x74] sm:$0xf] %vm7840, %v7805
      %7871 = vst.msk [vmem:[%s318 + $0x78] sm:$0xf] %vm7840, %v7806
      %7872 = vst.msk [vmem:[%s318 + $0x7c] sm:$0xf] %vm7840, %v7807
      %7873 = vst.msk [vmem:[%s318 + $0x80] sm:$0xf] %vm7840, %v7808
      %7874 = vst.msk [vmem:[%s318 + $0x84] sm:$0xf] %vm7840, %v7809
      %7875 = vst.msk [vmem:[%s318 + $0x88] sm:$0xf] %vm7840, %v7810
      %7876 = vst.msk [vmem:[%s318 + $0x8c] sm:$0xf] %vm7840, %v7811
      %7877 = vst.msk [vmem:[%s318 + $0x90] sm:$0xf] %vm7840, %v7812
      %7878 = vst.msk [vmem:[%s318 + $0x94] sm:$0xf] %vm7840, %v7813
      %7879 = vst.msk [vmem:[%s318 + $0x98] sm:$0xf] %vm7840, %v7814
      %7880 = vst.msk [vmem:[%s318 + $0x9c] sm:$0xf] %vm7840, %v7815
      %7881 = vst.msk [vmem:[%s318 + $0xa0] sm:$0xf] %vm7840, %v7816
      %7882 = vst.msk [vmem:[%s318 + $0xa4] sm:$0xf] %vm7840, %v7817
      %7883 = vst.msk [vmem:[%s318 + $0xa8] sm:$0xf] %vm7840, %v7818
      %7884 = vst.msk [vmem:[%s318 + $0xac] sm:$0xf] %vm7840, %v7819
      %7885 = vst.msk [vmem:[%s318 + $0xb0] sm:$0xf] %vm7840, %v7820
      %7886 = vst.msk [vmem:[%s318 + $0xb4] sm:$0xf] %vm7840, %v7821
      %7887 = vst.msk [vmem:[%s318 + $0xb8] sm:$0xf] %vm7840, %v7822
      %7888 = vst.msk [vmem:[%s318 + $0xbc] sm:$0xf] %vm7840, %v7823
      %7889 = vst.msk [vmem:[%s318 + $0xc0] sm:$0xf] %vm7840, %v7824
      %7890 = vst.msk [vmem:[%s318 + $0xc4] sm:$0xf] %vm7840, %v7825
      %7891 = vst.msk [vmem:[%s318 + $0xc8] sm:$0xf] %vm7840, %v7826
      %7892 = vst.msk [vmem:[%s318 + $0xcc] sm:$0xf] %vm7840, %v7827
      %7893 = vst.msk [vmem:[%s318 + $0xd0] sm:$0xf] %vm7840, %v7828
      %7894 = vst.msk [vmem:[%s318 + $0xd4] sm:$0xf] %vm7840, %v7829
      %7895 = vst.msk [vmem:[%s318 + $0xd8] sm:$0xf] %vm7840, %v7830
      %7896 = vst.msk [vmem:[%s318 + $0xdc] sm:$0xf] %vm7840, %v7831
      %7897 = vst.msk [vmem:[%s318 + $0xe0] sm:$0xf] %vm7840, %v7832
      %7898 = vst.msk [vmem:[%s318 + $0xe4] sm:$0xf] %vm7840, %v7833
      %7899 = vst.msk [vmem:[%s318 + $0xe8] sm:$0xf] %vm7840, %v7834
      %7900 = vst.msk [vmem:[%s318 + $0xec] sm:$0xf] %vm7840, %v7835
      %7901 = vst.msk [vmem:[%s318 + $0xf0] sm:$0xf] %vm7840, %v7836
      %7902 = vst.msk [vmem:[%s318 + $0xf4] sm:$0xf] %vm7840, %v7837
      %7903 = vst.msk [vmem:[%s318 + $0xf8] sm:$0xf] %vm7840, %v7838
      %7904 = vst.msk [vmem:[%s318 + $0xfc] sm:$0xf] %vm7840, %v7839
      %s7905 = smul.u32 16, %s20
      %p7906 = scmp.lt.s32.totalorder %s19, 1
      %s7907 = scalar_select %p7906, %s19, 1
      %p7908 = scmp.lt.s32.totalorder %s7905, 31
      %s7909 = scalar_select %p7908, %s7905, 31
      %s7910 = smul.addr %s7909, 4
      %s7911 = smul.addr %s7907, 128
      %s7912 = sadd.s32 %s7910, %s7911
      %s7913 = smul.addr %s7912, 4
      %s7914 = scalar_lea.vmem %s4, %s7913
      // Predicated region
      $region37: #{resize_conv2d_forward.1} parent=35 // pred_check
        %p7915 = pneg %p149
      $region38: #{resize_conv2d_forward.1} parent=35 // pred_check_branch
        %7917 = sbr.rel (%p7915) target = $region40
      $region39: #{resize_conv2d_forward.1} parent=35 // pred_region
        %s7918 = smul.u32 16, %s20
      $region40: #{resize_conv2d_forward.1} parent=35 // pred_fallthru
        _
    $region36: #{resize_conv2d_forward.1} parent=5 // pred_fallthru
      _
    %p7919 = scmp.le.s32.totalorder 2, %s10
    // Predicated region
    $region41: #{resize_conv2d_forward.1} parent=5 // pred_check
      %p7920 = pneg %p7919
    $region42: #{resize_conv2d_forward.1} parent=5 // pred_check_branch
      %7922 = sbr.rel (%p7920) target = $region44
    $region43: #{resize_conv2d_forward.1} parent=5 // pred_region
      %s7923 = ssub.s32 %s10, 2
      // Predicated region
      $region45: #{resize_conv2d_forward.1} parent=43 // pred_check
        %p7924 = pneg %p155
      $region46: #{resize_conv2d_forward.1} parent=43 // pred_check_branch
        %7926 = sbr.rel (%p7924) target = $region48
      $region47: #{resize_conv2d_forward.1} parent=43 // pred_region
        %s7927 = smul.u32 16, %s22
        %p7928 = scmp.lt.s32.totalorder %s21, 1
        %s7929 = scalar_select %p7928, %s21, 1
        %p7930 = scmp.lt.s32.totalorder %s7927, 31
        %s7931 = scalar_select %p7930, %s7927, 31
        %s7932 = smul.addr %s7931, 4
        %s7933 = smul.addr %s7929, 128
        %s7934 = sadd.s32 %s7932, %s7933
        %s7935 = smul.addr %s7934, 4
        %s7936 = scalar_lea.vmem %s4, %s7935
      $region48: #{resize_conv2d_forward.1} parent=43 // pred_fallthru
        _
    $region44: #{resize_conv2d_forward.1} parent=5 // pred_fallthru
      _
  $region6: #{resize_conv2d_forward.1} parent=0 // loop_footer
    %s14 = sadd.s32 1, %s10
  $region7: #{resize_conv2d_forward.1} parent=0 // loop_footer_branch
    %9 = sbr.rel target = $region3
  $region8: #{resize_conv2d_forward.1} parent=0 // loop_exit
    _

</llo_original>
